<compile_context>
chip_gen: v7x
topology: tpu7x:2x2x1
jax: 0.10.0
libtpu: 0.0.40
codegen_flags: <defaults>
</compile_context>

<pallas_src>
import functools

import jax
import jax.numpy as jnp
from jax.experimental import pallas as pl
from jax.experimental.pallas import tpu as pltpu


def _round_up(n, k):
    return (n + k - 1) // k * k


# -----------------------------------------------------------------------------
# Fused LSTNet forward kernel (single invocation, everything resident in VMEM)
# -----------------------------------------------------------------------------
def _make_kernel(*, B, Bp, T, pt, skip, hidR, hidS):
    ps = pt * skip
    SB = skip * Bp
    f32 = jnp.float32

    def kernel(xcol_ref, convw_ref, convb_ref,
               wih1_ref, whh1_ref, bi1_ref, bhn1_ref,
               wihs_ref, whhs_ref, bis_ref, bhns_ref,
               w1r_ref, w1s_ref, b1_ref,
               xhw_ref, whw_ref, bhw_ref,
               out_ref,
               gi1r, gi1z, gi1n, gisr, gisz, gisn):
        # ---- Conv2d(1,hidC,(Ck,m)) + bias + ReLU: one im2col matmul ---------
        c = jnp.dot(xcol_ref[...], convw_ref[...],
                    preferred_element_type=f32) + convb_ref[...]
        c = jnp.maximum(c, 0.0)                      # (T*Bp, hidC), time-major

        # ---- hoisted GRU input projections (all timesteps at once) ----------
        gi1r[...] = jnp.dot(c, wih1_ref[0], preferred_element_type=f32) + bi1_ref[0]
        gi1z[...] = jnp.dot(c, wih1_ref[1], preferred_element_type=f32) + bi1_ref[1]
        gi1n[...] = jnp.dot(c, wih1_ref[2], preferred_element_type=f32) + bi1_ref[2]

        cs = c[(T - ps) * Bp:, :]                    # last pt*skip timesteps
        gisr[...] = jnp.dot(cs, wihs_ref[0], preferred_element_type=f32) + bis_ref[0]
        gisz[...] = jnp.dot(cs, wihs_ref[1], preferred_element_type=f32) + bis_ref[1]
        gisn[...] = jnp.dot(cs, wihs_ref[2], preferred_element_type=f32) + bis_ref[2]

        # ---- GRU1 recurrence (only h @ W_h* is left on the serial path) -----
        w1hr, w1hz, w1hn = whh1_ref[0], whh1_ref[1], whh1_ref[2]
        b1hn = bhn1_ref[...]
        h1 = jnp.zeros((Bp, hidR), f32)
        for t in range(T):                           # static, fully unrolled
            r0 = t * Bp                              # 8-aligned static offset
            hr = jnp.dot(h1, w1hr, preferred_element_type=f32)
            hz = jnp.dot(h1, w1hz, preferred_element_type=f32)
            hn = jnp.dot(h1, w1hn, preferred_element_type=f32) + b1hn
            rg = jax.nn.sigmoid(gi1r[r0:r0 + Bp, :] + hr)
            zg = jax.nn.sigmoid(gi1z[r0:r0 + Bp, :] + hz)
            ng = jnp.tanh(gi1n[r0:r0 + Bp, :] + rg * hn)
            h1 = ng + zg * (h1 - ng)                 # == (1-z)*n + z*h

        # ---- skip GRU recurrence ("batch" = skip*Bp rows per step) ----------
        wshr, wshz, wshn = whhs_ref[0], whhs_ref[1], whhs_ref[2]
        bshn = bhns_ref[...]
        hs = jnp.zeros((SB, hidS), f32)
        for p in range(pt):                          # static, fully unrolled
            r0 = p * SB
            hr = jnp.dot(hs, wshr, preferred_element_type=f32)
            hz = jnp.dot(hs, wshz, preferred_element_type=f32)
            hn = jnp.dot(hs, wshn, preferred_element_type=f32) + bshn
            rg = jax.nn.sigmoid(gisr[r0:r0 + SB, :] + hr)
            zg = jax.nn.sigmoid(gisz[r0:r0 + SB, :] + hz)
            ng = jnp.tanh(gisn[r0:r0 + SB, :] + rg * hn)
            hs = ng + zg * (hs - ng)

        # ---- linear1 over [h1 ; s]: weight pre-split, no lane concat --------
        res = jnp.dot(h1, w1r_ref[...], preferred_element_type=f32) + b1_ref[...]
        for j in range(skip):
            res = res + jnp.dot(hs[j * Bp:(j + 1) * Bp, :], w1s_ref[j],
                                preferred_element_type=f32)

        # ---- highway (per-series AR over last hw steps) + sigmoid output ----
        z = jnp.sum(xhw_ref[...] * whw_ref[...], axis=1) + bhw_ref[...]   # (B, m)
        out_ref[...] = jax.nn.sigmoid(res[:B, :] + z)

    return kernel


# -----------------------------------------------------------------------------
# Forward wrapper: im2col prep (plain JAX) + the single fused pallas_call
# -----------------------------------------------------------------------------
@functools.partial(jax.jit, static_argnames=("skip", "hw", "Ck"))
def lstnet_forward(x, params, *, skip, hw, Ck):
    B, P, m = x.shape
    T = P - Ck + 1
    pt = (P - Ck) // skip
    ps = pt * skip
    Bp = _round_up(B, 8)
    hidR = params["whh1"].shape[1]
    hidS = params["whhs"].shape[1]

    # im2col, time-major, batch padded to Bp rows per timestep:
    #   xcol[t*Bp + b, k*m + j] = x[b, t+k, j]
    windows = jnp.stack([x[:, k:k + T, :] for k in range(Ck)], axis=2)   # (B,T,Ck,m)
    xcol = jnp.transpose(windows.reshape(B, T, Ck * m), (1, 0, 2))       # (T,B,Ck*m)
    xcol = jnp.pad(xcol, ((0, 0), (0, Bp - B), (0, 0))).reshape(T * Bp, Ck * m)

    xhw = x[:, P - hw:, :]                                               # (B,hw,m)

    kernel = _make_kernel(B=B, Bp=Bp, T=T, pt=pt, skip=skip,
                          hidR=hidR, hidS=hidS)
    vmem = pl.BlockSpec(memory_space=pltpu.MemorySpace.VMEM)
    return pl.pallas_call(
        kernel,
        out_shape=jax.ShapeDtypeStruct((B, m), jnp.float32),
        in_specs=[vmem] * 17,
        out_specs=vmem,
        scratch_shapes=[
            pltpu.VMEM((T * Bp, hidR), jnp.float32),   # gi1 r/z/n
            pltpu.VMEM((T * Bp, hidR), jnp.float32),
            pltpu.VMEM((T * Bp, hidR), jnp.float32),
            pltpu.VMEM((ps * Bp, hidS), jnp.float32),  # gis r/z/n
            pltpu.VMEM((ps * Bp, hidS), jnp.float32),
            pltpu.VMEM((ps * Bp, hidS), jnp.float32),
        ],
    )(xcol, params["conv_w2"], params["conv_b2"],
      params["wih1"], params["whh1"], params["bi1"], params["bhn1"],
      params["wihs"], params["whhs"], params["bis"], params["bhns"],
      params["w1r"], params["w1s"], params["b1"],
      xhw, params["whw"], params["bhw"])


# -----------------------------------------------------------------------------
# Parameters: raw (PyTorch layout) + kernel-layout preparation
# -----------------------------------------------------------------------------
def init_raw_params(key, *, m, hidC, hidR, hidS, Ck, skip, hw):
    keys = jax.random.split(key, 14)

    def rn(k, shape, scale=0.1):
        return jax.random.normal(k, shape, jnp.float32) * scale

    return {
        "conv_w": rn(keys[0], (hidC, Ck, m)),    # Conv2d weight (in-channel squeezed)
        "conv_b": rn(keys[1], (hidC,)),
        "gru1_wih": rn(keys[2], (3 * hidR, hidC)),
        "gru1_whh": rn(keys[3], (3 * hidR, hidR)),
        "gru1_bih": rn(keys[4], (3 * hidR,)),
        "gru1_bhh": rn(keys[5], (3 * hidR,)),
        "grus_wih": rn(keys[6], (3 * hidS, hidC)),
        "grus_whh": rn(keys[7], (3 * hidS, hidS)),
        "grus_bih": rn(keys[8], (3 * hidS,)),
        "grus_bhh": rn(keys[9], (3 * hidS,)),
        "lin1_w": rn(keys[10], (m, hidR + skip * hidS)),
        "lin1_b": rn(keys[11], (m,)),
        "hwy_w": rn(keys[12], (1, hw)),
        "hwy_b": rn(keys[13], (1,)),
    }


def prepare_params(raw, *, m, hidC, hidR, hidS, Ck, skip, hw):
    def split_gates_w(w, H):          # (3H, D) -> (3, D, H), PyTorch gate order r,z,n
        return jnp.stack([w[g * H:(g + 1) * H, :].T for g in range(3)], axis=0)

    def fold_bias(bih, bhh, H):       # (3, 1, H): [b_ir+b_hr, b_iz+b_hz, b_in]
        return jnp.stack([(bih[0:H] + bhh[0:H]).reshape(1, H),
                          (bih[H:2 * H] + bhh[H:2 * H]).reshape(1, H),
                          bih[2 * H:3 * H].reshape(1, H)], axis=0)

    lin1_w = raw["lin1_w"]
    return {
        "conv_w2": jnp.transpose(raw["conv_w"], (1, 2, 0)).reshape(Ck * m, hidC),
        "conv_b2": raw["conv_b"].reshape(1, hidC),
        "wih1": split_gates_w(raw["gru1_wih"], hidR),
        "whh1": split_gates_w(raw["gru1_whh"], hidR),
        "bi1": fold_bias(raw["gru1_bih"], raw["gru1_bhh"], hidR),
        "bhn1": raw["gru1_bhh"][2 * hidR:3 * hidR].reshape(1, hidR),
        "wihs": split_gates_w(raw["grus_wih"], hidS),
        "whhs": split_gates_w(raw["grus_whh"], hidS),
        "bis": fold_bias(raw["grus_bih"], raw["grus_bhh"], hidS),
        "bhns": raw["grus_bhh"][2 * hidS:3 * hidS].reshape(1, hidS),
        "w1r": lin1_w[:, :hidR].T,                                   # (hidR, m)
        "w1s": jnp.stack([lin1_w[:, hidR + j * hidS: hidR + (j + 1) * hidS].T
                          for j in range(skip)], axis=0),            # (skip, hidS, m)
        "b1": raw["lin1_b"].reshape(1, m),
        "whw": raw["hwy_w"].reshape(1, hw, 1),
        "bhw": raw["hwy_b"].reshape(1, 1),
    }


# -----------------------------------------------------------------------------
# Pure-JAX reference (mirrors the PyTorch module exactly), for a sanity check
# -----------------------------------------------------------------------------
def lstnet_reference(x, raw, *, skip, hw, Ck):
    hp = jax.lax.Precision.HIGHEST
    B, P, m = x.shape
    hidC = raw["conv_w"].shape[0]
    hidR = raw["gru1_whh"].shape[1]
    hidS = raw["grus_whh"].shape[1]
    T = P - Ck + 1
    pt = (P - Ck) // skip

    c = jnp.stack(
        [jnp.einsum("bkj,okj->bo", x[:, t:t + Ck, :], raw["conv_w"], precision=hp)
         for t in range(T)], axis=2) + raw["conv_b"][None, :, None]   # (B, hidC, T)
    c = jnp.maximum(c, 0.0)

    def gru(seq, wih, whh, bih, bhh, H):
        h = jnp.zeros((seq.shape[1], H), jnp.float32)
        for t in range(seq.shape[0]):
            gi = jnp.dot(seq[t], wih.T, precision=hp) + bih
            gh = jnp.dot(h, whh.T, precision=hp) + bhh
            r = jax.nn.sigmoid(gi[:, :H] + gh[:, :H])
            z = jax.nn.sigmoid(gi[:, H:2 * H] + gh[:, H:2 * H])
            n = jnp.tanh(gi[:, 2 * H:] + r * gh[:, 2 * H:])
            h = (1.0 - z) * n + z * h
        return h

    r = gru(jnp.transpose(c, (2, 0, 1)),
            raw["gru1_wih"], raw["gru1_whh"], raw["gru1_bih"], raw["gru1_bhh"], hidR)

    s = c[:, :, -pt * skip:].reshape(B, hidC, pt, skip)
    s = jnp.transpose(s, (2, 0, 3, 1)).reshape(pt, B * skip, hidC)
    s = gru(s, raw["grus_wih"], raw["grus_whh"], raw["grus_bih"], raw["grus_bhh"], hidS)
    s = s.reshape(B, skip * hidS)

    feat = jnp.concatenate([r, s], axis=1)
    res = jnp.dot(feat, raw["lin1_w"].T, precision=hp) + raw["lin1_b"]

    z = jnp.transpose(x[:, P - hw:, :], (0, 2, 1)).reshape(-1, hw)
    z = jnp.dot(z, raw["hwy_w"].T, precision=hp) + raw["hwy_b"]
    return jax.nn.sigmoid(res + z.reshape(B, m))


if __name__ == "__main__":
    # Small LSTNet config: window P=16, m=8 series, hidCNN=16, hidRNN=16,
    # hidSkip=8, CNN_kernel=4, skip=4 (pt=3), highway_window=4, output='sigmoid'
    B, m, P = 2, 8, 16
    hidC, hidR, hidS = 16, 16, 8
    Ck, skip, hw = 4, 4, 4

    key = jax.random.PRNGKey(0)
    kx, kp = jax.random.split(key)
    x = jax.random.normal(kx, (B, P, m), jnp.float32)

    raw = init_raw_params(kp, m=m, hidC=hidC, hidR=hidR, hidS=hidS,
                          Ck=Ck, skip=skip, hw=hw)
    params = prepare_params(raw, m=m, hidC=hidC, hidR=hidR, hidS=hidS,
                            Ck=Ck, skip=skip, hw=hw)

    out = lstnet_forward(x, params, skip=skip, hw=hw, Ck=Ck)
    out = jax.block_until_ready(out)
    assert out.shape == (B, m), out.shape
    assert bool(jnp.all(jnp.isfinite(out)))

    ref = lstnet_reference(x, raw, skip=skip, hw=hw, Ck=Ck)
    assert bool(jnp.allclose(out, ref, atol=2e-3, rtol=2e-3)), \
        float(jnp.max(jnp.abs(out - ref)))
    print("KERNEL_OK")
</pallas_src>

<mosaic_0001>
module attributes {stable_mosaic.version = 11 : i64} {
  func.func @kernel(%arg0: memref<104x32xf32, #tpu.memory_space<vmem>>, %arg1: memref<32x16xf32, #tpu.memory_space<vmem>>, %arg2: memref<1x16xf32, #tpu.memory_space<vmem>>, %arg3: memref<3x16x16xf32, #tpu.memory_space<vmem>>, %arg4: memref<3x16x16xf32, #tpu.memory_space<vmem>>, %arg5: memref<3x1x16xf32, #tpu.memory_space<vmem>>, %arg6: memref<1x16xf32, #tpu.memory_space<vmem>>, %arg7: memref<3x16x8xf32, #tpu.memory_space<vmem>>, %arg8: memref<3x8x8xf32, #tpu.memory_space<vmem>>, %arg9: memref<3x1x8xf32, #tpu.memory_space<vmem>>, %arg10: memref<1x8xf32, #tpu.memory_space<vmem>>, %arg11: memref<16x8xf32, #tpu.memory_space<vmem>>, %arg12: memref<4x8x8xf32, #tpu.memory_space<vmem>>, %arg13: memref<1x8xf32, #tpu.memory_space<vmem>>, %arg14: memref<2x4x8xf32, #tpu.memory_space<vmem>>, %arg15: memref<1x4x1xf32, #tpu.memory_space<vmem>>, %arg16: memref<1x1xf32, #tpu.memory_space<vmem>>, %arg17: memref<2x8xf32, #tpu.memory_space<vmem>>, %arg18: memref<104x16xf32, #tpu.memory_space<vmem>>, %arg19: memref<104x16xf32, #tpu.memory_space<vmem>>, %arg20: memref<104x16xf32, #tpu.memory_space<vmem>>, %arg21: memref<96x8xf32, #tpu.memory_space<vmem>>, %arg22: memref<96x8xf32, #tpu.memory_space<vmem>>, %arg23: memref<96x8xf32, #tpu.memory_space<vmem>>) attributes {dimension_semantics = [], scalar_prefetch = 0 : i64, scratch_operands = 6 : i64, tpu.core_type = #tpu.core_type<tc>} {
    %c0 = arith.constant 0 : index
    %c0_0 = arith.constant 0 : index
    %0 = vector.load %arg0[%c0, %c0_0] : memref<104x32xf32, #tpu.memory_space<vmem>>, vector<104x32xf32>
    %c0_1 = arith.constant 0 : index
    %c0_2 = arith.constant 0 : index
    %1 = vector.load %arg1[%c0_1, %c0_2] : memref<32x16xf32, #tpu.memory_space<vmem>>, vector<32x16xf32>
    %cst = arith.constant dense<0.000000e+00> : vector<104x16xf32>
    %2 = tpu.matmul %0, %1, %cst {dimension_numbers = #tpu.dot_dimension_numbers<[1], [0], [0], [1], [0, 0, 1, 1], [], []>} : vector<104x32xf32>, vector<32x16xf32>, vector<104x16xf32> -> vector<104x16xf32>
    %c0_3 = arith.constant 0 : index
    %c0_4 = arith.constant 0 : index
    %3 = vector.load %arg2[%c0_3, %c0_4] : memref<1x16xf32, #tpu.memory_space<vmem>>, vector<1x16xf32>
    %4 = vector.broadcast %3 : vector<1x16xf32> to vector<104x16xf32>
    %5 = arith.addf %2, %4 : vector<104x16xf32>
    %cst_5 = arith.constant 0.000000e+00 : f32
    %6 = vector.broadcast %cst_5 : f32 to vector<104x16xf32>
    %7 = arith.maximumf %5, %6 : vector<104x16xf32>
    %c0_6 = arith.constant 0 : index
    %c0_7 = arith.constant 0 : index
    %c0_8 = arith.constant 0 : index
    %8 = vector.load %arg3[%c0_6, %c0_7, %c0_8] : memref<3x16x16xf32, #tpu.memory_space<vmem>>, vector<1x16x16xf32>
    %9 = vector.shape_cast %8 : vector<1x16x16xf32> to vector<16x16xf32>
    %cst_9 = arith.constant dense<0.000000e+00> : vector<104x16xf32>
    %10 = tpu.matmul %7, %9, %cst_9 {dimension_numbers = #tpu.dot_dimension_numbers<[1], [0], [0], [1], [0, 0, 1, 1], [], []>} : vector<104x16xf32>, vector<16x16xf32>, vector<104x16xf32> -> vector<104x16xf32>
    %c0_10 = arith.constant 0 : index
    %c0_11 = arith.constant 0 : index
    %c0_12 = arith.constant 0 : index
    %11 = vector.load %arg5[%c0_10, %c0_11, %c0_12] : memref<3x1x16xf32, #tpu.memory_space<vmem>>, vector<1x1x16xf32>
    %12 = vector.shape_cast %11 : vector<1x1x16xf32> to vector<1x16xf32>
    %13 = vector.broadcast %12 : vector<1x16xf32> to vector<104x16xf32>
    %14 = arith.addf %10, %13 : vector<104x16xf32>
    %c0_13 = arith.constant 0 : index
    %c0_14 = arith.constant 0 : index
    %15 = vector.load %arg18[%c0_13, %c0_14] : memref<104x16xf32, #tpu.memory_space<vmem>>, vector<104x16xf32>
    tpu.vector_store %arg18[%c0_13, %c0_14], %14 {strides = array<i32>} : memref<104x16xf32, #tpu.memory_space<vmem>>, vector<104x16xf32>,
    %c1 = arith.constant 1 : index
    %c0_15 = arith.constant 0 : index
    %c0_16 = arith.constant 0 : index
    %16 = vector.load %arg3[%c1, %c0_15, %c0_16] : memref<3x16x16xf32, #tpu.memory_space<vmem>>, vector<1x16x16xf32>
    %17 = vector.shape_cast %16 : vector<1x16x16xf32> to vector<16x16xf32>
    %cst_17 = arith.constant dense<0.000000e+00> : vector<104x16xf32>
    %18 = tpu.matmul %7, %17, %cst_17 {dimension_numbers = #tpu.dot_dimension_numbers<[1], [0], [0], [1], [0, 0, 1, 1], [], []>} : vector<104x16xf32>, vector<16x16xf32>, vector<104x16xf32> -> vector<104x16xf32>
    %c1_18 = arith.constant 1 : index
    %c0_19 = arith.constant 0 : index
    %c0_20 = arith.constant 0 : index
    %19 = vector.load %arg5[%c1_18, %c0_19, %c0_20] : memref<3x1x16xf32, #tpu.memory_space<vmem>>, vector<1x1x16xf32>
    %20 = vector.shape_cast %19 : vector<1x1x16xf32> to vector<1x16xf32>
    %21 = vector.broadcast %20 : vector<1x16xf32> to vector<104x16xf32>
    %22 = arith.addf %18, %21 : vector<104x16xf32>
    %c0_21 = arith.constant 0 : index
    %c0_22 = arith.constant 0 : index
    %23 = vector.load %arg19[%c0_21, %c0_22] : memref<104x16xf32, #tpu.memory_space<vmem>>, vector<104x16xf32>
    tpu.vector_store %arg19[%c0_21, %c0_22], %22 {strides = array<i32>} : memref<104x16xf32, #tpu.memory_space<vmem>>, vector<104x16xf32>,
    %c2 = arith.constant 2 : index
    %c0_23 = arith.constant 0 : index
    %c0_24 = arith.constant 0 : index
    %24 = vector.load %arg3[%c2, %c0_23, %c0_24] : memref<3x16x16xf32, #tpu.memory_space<vmem>>, vector<1x16x16xf32>
    %25 = vector.shape_cast %24 : vector<1x16x16xf32> to vector<16x16xf32>
    %cst_25 = arith.constant dense<0.000000e+00> : vector<104x16xf32>
    %26 = tpu.matmul %7, %25, %cst_25 {dimension_numbers = #tpu.dot_dimension_numbers<[1], [0], [0], [1], [0, 0, 1, 1], [], []>} : vector<104x16xf32>, vector<16x16xf32>, vector<104x16xf32> -> vector<104x16xf32>
    %c2_26 = arith.constant 2 : index
    %c0_27 = arith.constant 0 : index
    %c0_28 = arith.constant 0 : index
    %27 = vector.load %arg5[%c2_26, %c0_27, %c0_28] : memref<3x1x16xf32, #tpu.memory_space<vmem>>, vector<1x1x16xf32>
    %28 = vector.shape_cast %27 : vector<1x1x16xf32> to vector<1x16xf32>
    %29 = vector.broadcast %28 : vector<1x16xf32> to vector<104x16xf32>
    %30 = arith.addf %26, %29 : vector<104x16xf32>
    %c0_29 = arith.constant 0 : index
    %c0_30 = arith.constant 0 : index
    %31 = vector.load %arg20[%c0_29, %c0_30] : memref<104x16xf32, #tpu.memory_space<vmem>>, vector<104x16xf32>
    tpu.vector_store %arg20[%c0_29, %c0_30], %30 {strides = array<i32>} : memref<104x16xf32, #tpu.memory_space<vmem>>, vector<104x16xf32>,
    %32 = vector.extract_strided_slice %7 {offsets = [8, 0], sizes = [96, 16], strides = [1, 1]} : vector<104x16xf32> to vector<96x16xf32>
    %c0_31 = arith.constant 0 : index
    %c0_32 = arith.constant 0 : index
    %c0_33 = arith.constant 0 : index
    %33 = vector.load %arg7[%c0_31, %c0_32, %c0_33] : memref<3x16x8xf32, #tpu.memory_space<vmem>>, vector<1x16x8xf32>
    %34 = vector.shape_cast %33 : vector<1x16x8xf32> to vector<16x8xf32>
    %cst_34 = arith.constant dense<0.000000e+00> : vector<96x8xf32>
    %35 = tpu.matmul %32, %34, %cst_34 {dimension_numbers = #tpu.dot_dimension_numbers<[1], [0], [0], [1], [0, 0, 1, 1], [], []>} : vector<96x16xf32>, vector<16x8xf32>, vector<96x8xf32> -> vector<96x8xf32>
    %c0_35 = arith.constant 0 : index
    %c0_36 = arith.constant 0 : index
    %c0_37 = arith.constant 0 : index
    %36 = vector.load %arg9[%c0_35, %c0_36, %c0_37] : memref<3x1x8xf32, #tpu.memory_space<vmem>>, vector<1x1x8xf32>
    %37 = vector.shape_cast %36 : vector<1x1x8xf32> to vector<1x8xf32>
    %38 = vector.broadcast %37 : vector<1x8xf32> to vector<96x8xf32>
    %39 = arith.addf %35, %38 : vector<96x8xf32>
    %c0_38 = arith.constant 0 : index
    %c0_39 = arith.constant 0 : index
    %40 = vector.load %arg21[%c0_38, %c0_39] : memref<96x8xf32, #tpu.memory_space<vmem>>, vector<96x8xf32>
    tpu.vector_store %arg21[%c0_38, %c0_39], %39 {strides = array<i32>} : memref<96x8xf32, #tpu.memory_space<vmem>>, vector<96x8xf32>,
    %c1_40 = arith.constant 1 : index
    %c0_41 = arith.constant 0 : index
    %c0_42 = arith.constant 0 : index
    %41 = vector.load %arg7[%c1_40, %c0_41, %c0_42] : memref<3x16x8xf32, #tpu.memory_space<vmem>>, vector<1x16x8xf32>
    %42 = vector.shape_cast %41 : vector<1x16x8xf32> to vector<16x8xf32>
    %cst_43 = arith.constant dense<0.000000e+00> : vector<96x8xf32>
    %43 = tpu.matmul %32, %42, %cst_43 {dimension_numbers = #tpu.dot_dimension_numbers<[1], [0], [0], [1], [0, 0, 1, 1], [], []>} : vector<96x16xf32>, vector<16x8xf32>, vector<96x8xf32> -> vector<96x8xf32>
    %c1_44 = arith.constant 1 : index
    %c0_45 = arith.constant 0 : index
    %c0_46 = arith.constant 0 : index
    %44 = vector.load %arg9[%c1_44, %c0_45, %c0_46] : memref<3x1x8xf32, #tpu.memory_space<vmem>>, vector<1x1x8xf32>
    %45 = vector.shape_cast %44 : vector<1x1x8xf32> to vector<1x8xf32>
    %46 = vector.broadcast %45 : vector<1x8xf32> to vector<96x8xf32>
    %47 = arith.addf %43, %46 : vector<96x8xf32>
    %c0_47 = arith.constant 0 : index
    %c0_48 = arith.constant 0 : index
    %48 = vector.load %arg22[%c0_47, %c0_48] : memref<96x8xf32, #tpu.memory_space<vmem>>, vector<96x8xf32>
    tpu.vector_store %arg22[%c0_47, %c0_48], %47 {strides = array<i32>} : memref<96x8xf32, #tpu.memory_space<vmem>>, vector<96x8xf32>,
    %c2_49 = arith.constant 2 : index
    %c0_50 = arith.constant 0 : index
    %c0_51 = arith.constant 0 : index
    %49 = vector.load %arg7[%c2_49, %c0_50, %c0_51] : memref<3x16x8xf32, #tpu.memory_space<vmem>>, vector<1x16x8xf32>
    %50 = vector.shape_cast %49 : vector<1x16x8xf32> to vector<16x8xf32>
    %cst_52 = arith.constant dense<0.000000e+00> : vector<96x8xf32>
    %51 = tpu.matmul %32, %50, %cst_52 {dimension_numbers = #tpu.dot_dimension_numbers<[1], [0], [0], [1], [0, 0, 1, 1], [], []>} : vector<96x16xf32>, vector<16x8xf32>, vector<96x8xf32> -> vector<96x8xf32>
    %c2_53 = arith.constant 2 : index
    %c0_54 = arith.constant 0 : index
    %c0_55 = arith.constant 0 : index
    %52 = vector.load %arg9[%c2_53, %c0_54, %c0_55] : memref<3x1x8xf32, #tpu.memory_space<vmem>>, vector<1x1x8xf32>
    %53 = vector.shape_cast %52 : vector<1x1x8xf32> to vector<1x8xf32>
    %54 = vector.broadcast %53 : vector<1x8xf32> to vector<96x8xf32>
    %55 = arith.addf %51, %54 : vector<96x8xf32>
    %c0_56 = arith.constant 0 : index
    %c0_57 = arith.constant 0 : index
    %56 = vector.load %arg23[%c0_56, %c0_57] : memref<96x8xf32, #tpu.memory_space<vmem>>, vector<96x8xf32>
    tpu.vector_store %arg23[%c0_56, %c0_57], %55 {strides = array<i32>} : memref<96x8xf32, #tpu.memory_space<vmem>>, vector<96x8xf32>,
    %c0_58 = arith.constant 0 : index
    %c0_59 = arith.constant 0 : index
    %c0_60 = arith.constant 0 : index
    %57 = vector.load %arg4[%c0_58, %c0_59, %c0_60] : memref<3x16x16xf32, #tpu.memory_space<vmem>>, vector<1x16x16xf32>
    %58 = vector.shape_cast %57 : vector<1x16x16xf32> to vector<16x16xf32>
    %c1_61 = arith.constant 1 : index
    %c0_62 = arith.constant 0 : index
    %c0_63 = arith.constant 0 : index
    %59 = vector.load %arg4[%c1_61, %c0_62, %c0_63] : memref<3x16x16xf32, #tpu.memory_space<vmem>>, vector<1x16x16xf32>
    %60 = vector.shape_cast %59 : vector<1x16x16xf32> to vector<16x16xf32>
    %c2_64 = arith.constant 2 : index
    %c0_65 = arith.constant 0 : index
    %c0_66 = arith.constant 0 : index
    %61 = vector.load %arg4[%c2_64, %c0_65, %c0_66] : memref<3x16x16xf32, #tpu.memory_space<vmem>>, vector<1x16x16xf32>
    %62 = vector.shape_cast %61 : vector<1x16x16xf32> to vector<16x16xf32>
    %c0_67 = arith.constant 0 : index
    %c0_68 = arith.constant 0 : index
    %63 = vector.load %arg6[%c0_67, %c0_68] : memref<1x16xf32, #tpu.memory_space<vmem>>, vector<1x16xf32>
    %cst_69 = arith.constant 0.000000e+00 : f32
    %64 = vector.broadcast %cst_69 : f32 to vector<8x16xf32>
    %cst_70 = arith.constant dense<0.000000e+00> : vector<8x16xf32>
    %65 = tpu.matmul %64, %58, %cst_70 {dimension_numbers = #tpu.dot_dimension_numbers<[1], [0], [0], [1], [0, 0, 1, 1], [], []>} : vector<8x16xf32>, vector<16x16xf32>, vector<8x16xf32> -> vector<8x16xf32>
    %cst_71 = arith.constant dense<0.000000e+00> : vector<8x16xf32>
    %66 = tpu.matmul %64, %60, %cst_71 {dimension_numbers = #tpu.dot_dimension_numbers<[1], [0], [0], [1], [0, 0, 1, 1], [], []>} : vector<8x16xf32>, vector<16x16xf32>, vector<8x16xf32> -> vector<8x16xf32>
    %cst_72 = arith.constant dense<0.000000e+00> : vector<8x16xf32>
    %67 = tpu.matmul %64, %62, %cst_72 {dimension_numbers = #tpu.dot_dimension_numbers<[1], [0], [0], [1], [0, 0, 1, 1], [], []>} : vector<8x16xf32>, vector<16x16xf32>, vector<8x16xf32> -> vector<8x16xf32>
    %68 = vector.broadcast %63 : vector<1x16xf32> to vector<8x16xf32>
    %69 = arith.addf %67, %68 : vector<8x16xf32>
    %c0_73 = arith.constant 0 : index
    %c0_74 = arith.constant 0 : index
    %70 = vector.load %arg18[%c0_73, %c0_74] : memref<104x16xf32, #tpu.memory_space<vmem>>, vector<8x16xf32>
    %71 = arith.addf %70, %65 : vector<8x16xf32>
    %72 = arith.negf %71 : vector<8x16xf32>
    %73 = math.exp %72 : vector<8x16xf32>
    %cst_75 = arith.constant 1.000000e+00 : f32
    %74 = vector.broadcast %cst_75 : f32 to vector<8x16xf32>
    %75 = arith.addf %74, %73 : vector<8x16xf32>
    %76 = arith.divf %74, %75 : vector<8x16xf32>
    %c0_76 = arith.constant 0 : index
    %c0_77 = arith.constant 0 : index
    %77 = vector.load %arg19[%c0_76, %c0_77] : memref<104x16xf32, #tpu.memory_space<vmem>>, vector<8x16xf32>
    %78 = arith.addf %77, %66 : vector<8x16xf32>
    %79 = arith.negf %78 : vector<8x16xf32>
    %80 = math.exp %79 : vector<8x16xf32>
    %cst_78 = arith.constant 1.000000e+00 : f32
    %81 = vector.broadcast %cst_78 : f32 to vector<8x16xf32>
    %82 = arith.addf %81, %80 : vector<8x16xf32>
    %83 = arith.divf %81, %82 : vector<8x16xf32>
    %c0_79 = arith.constant 0 : index
    %c0_80 = arith.constant 0 : index
    %84 = vector.load %arg20[%c0_79, %c0_80] : memref<104x16xf32, #tpu.memory_space<vmem>>, vector<8x16xf32>
    %85 = arith.mulf %76, %69 : vector<8x16xf32>
    %86 = arith.addf %84, %85 : vector<8x16xf32>
    %87 = math.tanh %86 : vector<8x16xf32>
    %88 = arith.subf %64, %87 : vector<8x16xf32>
    %89 = arith.mulf %83, %88 : vector<8x16xf32>
    %90 = arith.addf %87, %89 : vector<8x16xf32>
    %cst_81 = arith.constant dense<0.000000e+00> : vector<8x16xf32>
    %91 = tpu.matmul %90, %58, %cst_81 {dimension_numbers = #tpu.dot_dimension_numbers<[1], [0], [0], [1], [0, 0, 1, 1], [], []>} : vector<8x16xf32>, vector<16x16xf32>, vector<8x16xf32> -> vector<8x16xf32>
    %cst_82 = arith.constant dense<0.000000e+00> : vector<8x16xf32>
    %92 = tpu.matmul %90, %60, %cst_82 {dimension_numbers = #tpu.dot_dimension_numbers<[1], [0], [0], [1], [0, 0, 1, 1], [], []>} : vector<8x16xf32>, vector<16x16xf32>, vector<8x16xf32> -> vector<8x16xf32>
    %cst_83 = arith.constant dense<0.000000e+00> : vector<8x16xf32>
    %93 = tpu.matmul %90, %62, %cst_83 {dimension_numbers = #tpu.dot_dimension_numbers<[1], [0], [0], [1], [0, 0, 1, 1], [], []>} : vector<8x16xf32>, vector<16x16xf32>, vector<8x16xf32> -> vector<8x16xf32>
    %94 = vector.broadcast %63 : vector<1x16xf32> to vector<8x16xf32>
    %95 = arith.addf %93, %94 : vector<8x16xf32>
    %c8 = arith.constant 8 : index
    %c0_84 = arith.constant 0 : index
    %96 = vector.load %arg18[%c8, %c0_84] : memref<104x16xf32, #tpu.memory_space<vmem>>, vector<8x16xf32>
    %97 = arith.addf %96, %91 : vector<8x16xf32>
    %98 = arith.negf %97 : vector<8x16xf32>
    %99 = math.exp %98 : vector<8x16xf32>
    %cst_85 = arith.constant 1.000000e+00 : f32
    %100 = vector.broadcast %cst_85 : f32 to vector<8x16xf32>
    %101 = arith.addf %100, %99 : vector<8x16xf32>
    %102 = arith.divf %100, %101 : vector<8x16xf32>
    %c8_86 = arith.constant 8 : index
    %c0_87 = arith.constant 0 : index
    %103 = vector.load %arg19[%c8_86, %c0_87] : memref<104x16xf32, #tpu.memory_space<vmem>>, vector<8x16xf32>
    %104 = arith.addf %103, %92 : vector<8x16xf32>
    %105 = arith.negf %104 : vector<8x16xf32>
    %106 = math.exp %105 : vector<8x16xf32>
    %cst_88 = arith.constant 1.000000e+00 : f32
    %107 = vector.broadcast %cst_88 : f32 to vector<8x16xf32>
    %108 = arith.addf %107, %106 : vector<8x16xf32>
    %109 = arith.divf %107, %108 : vector<8x16xf32>
    %c8_89 = arith.constant 8 : index
    %c0_90 = arith.constant 0 : index
    %110 = vector.load %arg20[%c8_89, %c0_90] : memref<104x16xf32, #tpu.memory_space<vmem>>, vector<8x16xf32>
    %111 = arith.mulf %102, %95 : vector<8x16xf32>
    %112 = arith.addf %110, %111 : vector<8x16xf32>
    %113 = math.tanh %112 : vector<8x16xf32>
    %114 = arith.subf %90, %113 : vector<8x16xf32>
    %115 = arith.mulf %109, %114 : vector<8x16xf32>
    %116 = arith.addf %113, %115 : vector<8x16xf32>
    %cst_91 = arith.constant dense<0.000000e+00> : vector<8x16xf32>
    %117 = tpu.matmul %116, %58, %cst_91 {dimension_numbers = #tpu.dot_dimension_numbers<[1], [0], [0], [1], [0, 0, 1, 1], [], []>} : vector<8x16xf32>, vector<16x16xf32>, vector<8x16xf32> -> vector<8x16xf32>
    %cst_92 = arith.constant dense<0.000000e+00> : vector<8x16xf32>
    %118 = tpu.matmul %116, %60, %cst_92 {dimension_numbers = #tpu.dot_dimension_numbers<[1], [0], [0], [1], [0, 0, 1, 1], [], []>} : vector<8x16xf32>, vector<16x16xf32>, vector<8x16xf32> -> vector<8x16xf32>
    %cst_93 = arith.constant dense<0.000000e+00> : vector<8x16xf32>
    %119 = tpu.matmul %116, %62, %cst_93 {dimension_numbers = #tpu.dot_dimension_numbers<[1], [0], [0], [1], [0, 0, 1, 1], [], []>} : vector<8x16xf32>, vector<16x16xf32>, vector<8x16xf32> -> vector<8x16xf32>
    %120 = vector.broadcast %63 : vector<1x16xf32> to vector<8x16xf32>
    %121 = arith.addf %119, %120 : vector<8x16xf32>
    %c16 = arith.constant 16 : index
    %c0_94 = arith.constant 0 : index
    %122 = vector.load %arg18[%c16, %c0_94] : memref<104x16xf32, #tpu.memory_space<vmem>>, vector<8x16xf32>
    %123 = arith.addf %122, %117 : vector<8x16xf32>
    %124 = arith.negf %123 : vector<8x16xf32>
    %125 = math.exp %124 : vector<8x16xf32>
    %cst_95 = arith.constant 1.000000e+00 : f32
    %126 = vector.broadcast %cst_95 : f32 to vector<8x16xf32>
    %127 = arith.addf %126, %125 : vector<8x16xf32>
    %128 = arith.divf %126, %127 : vector<8x16xf32>
    %c16_96 = arith.constant 16 : index
    %c0_97 = arith.constant 0 : index
    %129 = vector.load %arg19[%c16_96, %c0_97] : memref<104x16xf32, #tpu.memory_space<vmem>>, vector<8x16xf32>
    %130 = arith.addf %129, %118 : vector<8x16xf32>
    %131 = arith.negf %130 : vector<8x16xf32>
    %132 = math.exp %131 : vector<8x16xf32>
    %cst_98 = arith.constant 1.000000e+00 : f32
    %133 = vector.broadcast %cst_98 : f32 to vector<8x16xf32>
    %134 = arith.addf %133, %132 : vector<8x16xf32>
    %135 = arith.divf %133, %134 : vector<8x16xf32>
    %c16_99 = arith.constant 16 : index
    %c0_100 = arith.constant 0 : index
    %136 = vector.load %arg20[%c16_99, %c0_100] : memref<104x16xf32, #tpu.memory_space<vmem>>, vector<8x16xf32>
    %137 = arith.mulf %128, %121 : vector<8x16xf32>
    %138 = arith.addf %136, %137 : vector<8x16xf32>
    %139 = math.tanh %138 : vector<8x16xf32>
    %140 = arith.subf %116, %139 : vector<8x16xf32>
    %141 = arith.mulf %135, %140 : vector<8x16xf32>
    %142 = arith.addf %139, %141 : vector<8x16xf32>
    %cst_101 = arith.constant dense<0.000000e+00> : vector<8x16xf32>
    %143 = tpu.matmul %142, %58, %cst_101 {dimension_numbers = #tpu.dot_dimension_numbers<[1], [0], [0], [1], [0, 0, 1, 1], [], []>} : vector<8x16xf32>, vector<16x16xf32>, vector<8x16xf32> -> vector<8x16xf32>
    %cst_102 = arith.constant dense<0.000000e+00> : vector<8x16xf32>
    %144 = tpu.matmul %142, %60, %cst_102 {dimension_numbers = #tpu.dot_dimension_numbers<[1], [0], [0], [1], [0, 0, 1, 1], [], []>} : vector<8x16xf32>, vector<16x16xf32>, vector<8x16xf32> -> vector<8x16xf32>
    %cst_103 = arith.constant dense<0.000000e+00> : vector<8x16xf32>
    %145 = tpu.matmul %142, %62, %cst_103 {dimension_numbers = #tpu.dot_dimension_numbers<[1], [0], [0], [1], [0, 0, 1, 1], [], []>} : vector<8x16xf32>, vector<16x16xf32>, vector<8x16xf32> -> vector<8x16xf32>
    %146 = vector.broadcast %63 : vector<1x16xf32> to vector<8x16xf32>
    %147 = arith.addf %145, %146 : vector<8x16xf32>
    %c24 = arith.constant 24 : index
    %c0_104 = arith.constant 0 : index
    %148 = vector.load %arg18[%c24, %c0_104] : memref<104x16xf32, #tpu.memory_space<vmem>>, vector<8x16xf32>
    %149 = arith.addf %148, %143 : vector<8x16xf32>
    %150 = arith.negf %149 : vector<8x16xf32>
    %151 = math.exp %150 : vector<8x16xf32>
    %cst_105 = arith.constant 1.000000e+00 : f32
    %152 = vector.broadcast %cst_105 : f32 to vector<8x16xf32>
    %153 = arith.addf %152, %151 : vector<8x16xf32>
    %154 = arith.divf %152, %153 : vector<8x16xf32>
    %c24_106 = arith.constant 24 : index
    %c0_107 = arith.constant 0 : index
    %155 = vector.load %arg19[%c24_106, %c0_107] : memref<104x16xf32, #tpu.memory_space<vmem>>, vector<8x16xf32>
    %156 = arith.addf %155, %144 : vector<8x16xf32>
    %157 = arith.negf %156 : vector<8x16xf32>
    %158 = math.exp %157 : vector<8x16xf32>
    %cst_108 = arith.constant 1.000000e+00 : f32
    %159 = vector.broadcast %cst_108 : f32 to vector<8x16xf32>
    %160 = arith.addf %159, %158 : vector<8x16xf32>
    %161 = arith.divf %159, %160 : vector<8x16xf32>
    %c24_109 = arith.constant 24 : index
    %c0_110 = arith.constant 0 : index
    %162 = vector.load %arg20[%c24_109, %c0_110] : memref<104x16xf32, #tpu.memory_space<vmem>>, vector<8x16xf32>
    %163 = arith.mulf %154, %147 : vector<8x16xf32>
    %164 = arith.addf %162, %163 : vector<8x16xf32>
    %165 = math.tanh %164 : vector<8x16xf32>
    %166 = arith.subf %142, %165 : vector<8x16xf32>
    %167 = arith.mulf %161, %166 : vector<8x16xf32>
    %168 = arith.addf %165, %167 : vector<8x16xf32>
    %cst_111 = arith.constant dense<0.000000e+00> : vector<8x16xf32>
    %169 = tpu.matmul %168, %58, %cst_111 {dimension_numbers = #tpu.dot_dimension_numbers<[1], [0], [0], [1], [0, 0, 1, 1], [], []>} : vector<8x16xf32>, vector<16x16xf32>, vector<8x16xf32> -> vector<8x16xf32>
    %cst_112 = arith.constant dense<0.000000e+00> : vector<8x16xf32>
    %170 = tpu.matmul %168, %60, %cst_112 {dimension_numbers = #tpu.dot_dimension_numbers<[1], [0], [0], [1], [0, 0, 1, 1], [], []>} : vector<8x16xf32>, vector<16x16xf32>, vector<8x16xf32> -> vector<8x16xf32>
    %cst_113 = arith.constant dense<0.000000e+00> : vector<8x16xf32>
    %171 = tpu.matmul %168, %62, %cst_113 {dimension_numbers = #tpu.dot_dimension_numbers<[1], [0], [0], [1], [0, 0, 1, 1], [], []>} : vector<8x16xf32>, vector<16x16xf32>, vector<8x16xf32> -> vector<8x16xf32>
    %172 = vector.broadcast %63 : vector<1x16xf32> to vector<8x16xf32>
    %173 = arith.addf %171, %172 : vector<8x16xf32>
    %c32 = arith.constant 32 : index
    %c0_114 = arith.constant 0 : index
    %174 = vector.load %arg18[%c32, %c0_114] : memref<104x16xf32, #tpu.memory_space<vmem>>, vector<8x16xf32>
    %175 = arith.addf %174, %169 : vector<8x16xf32>
    %176 = arith.negf %175 : vector<8x16xf32>
    %177 = math.exp %176 : vector<8x16xf32>
    %cst_115 = arith.constant 1.000000e+00 : f32
    %178 = vector.broadcast %cst_115 : f32 to vector<8x16xf32>
    %179 = arith.addf %178, %177 : vector<8x16xf32>
    %180 = arith.divf %178, %179 : vector<8x16xf32>
    %c32_116 = arith.constant 32 : index
    %c0_117 = arith.constant 0 : index
    %181 = vector.load %arg19[%c32_116, %c0_117] : memref<104x16xf32, #tpu.memory_space<vmem>>, vector<8x16xf32>
    %182 = arith.addf %181, %170 : vector<8x16xf32>
    %183 = arith.negf %182 : vector<8x16xf32>
    %184 = math.exp %183 : vector<8x16xf32>
    %cst_118 = arith.constant 1.000000e+00 : f32
    %185 = vector.broadcast %cst_118 : f32 to vector<8x16xf32>
    %186 = arith.addf %185, %184 : vector<8x16xf32>
    %187 = arith.divf %185, %186 : vector<8x16xf32>
    %c32_119 = arith.constant 32 : index
    %c0_120 = arith.constant 0 : index
    %188 = vector.load %arg20[%c32_119, %c0_120] : memref<104x16xf32, #tpu.memory_space<vmem>>, vector<8x16xf32>
    %189 = arith.mulf %180, %173 : vector<8x16xf32>
    %190 = arith.addf %188, %189 : vector<8x16xf32>
    %191 = math.tanh %190 : vector<8x16xf32>
    %192 = arith.subf %168, %191 : vector<8x16xf32>
    %193 = arith.mulf %187, %192 : vector<8x16xf32>
    %194 = arith.addf %191, %193 : vector<8x16xf32>
    %cst_121 = arith.constant dense<0.000000e+00> : vector<8x16xf32>
    %195 = tpu.matmul %194, %58, %cst_121 {dimension_numbers = #tpu.dot_dimension_numbers<[1], [0], [0], [1], [0, 0, 1, 1], [], []>} : vector<8x16xf32>, vector<16x16xf32>, vector<8x16xf32> -> vector<8x16xf32>
    %cst_122 = arith.constant dense<0.000000e+00> : vector<8x16xf32>
    %196 = tpu.matmul %194, %60, %cst_122 {dimension_numbers = #tpu.dot_dimension_numbers<[1], [0], [0], [1], [0, 0, 1, 1], [], []>} : vector<8x16xf32>, vector<16x16xf32>, vector<8x16xf32> -> vector<8x16xf32>
    %cst_123 = arith.constant dense<0.000000e+00> : vector<8x16xf32>
    %197 = tpu.matmul %194, %62, %cst_123 {dimension_numbers = #tpu.dot_dimension_numbers<[1], [0], [0], [1], [0, 0, 1, 1], [], []>} : vector<8x16xf32>, vector<16x16xf32>, vector<8x16xf32> -> vector<8x16xf32>
    %198 = vector.broadcast %63 : vector<1x16xf32> to vector<8x16xf32>
    %199 = arith.addf %197, %198 : vector<8x16xf32>
    %c40 = arith.constant 40 : index
    %c0_124 = arith.constant 0 : index
    %200 = vector.load %arg18[%c40, %c0_124] : memref<104x16xf32, #tpu.memory_space<vmem>>, vector<8x16xf32>
    %201 = arith.addf %200, %195 : vector<8x16xf32>
    %202 = arith.negf %201 : vector<8x16xf32>
    %203 = math.exp %202 : vector<8x16xf32>
    %cst_125 = arith.constant 1.000000e+00 : f32
    %204 = vector.broadcast %cst_125 : f32 to vector<8x16xf32>
    %205 = arith.addf %204, %203 : vector<8x16xf32>
    %206 = arith.divf %204, %205 : vector<8x16xf32>
    %c40_126 = arith.constant 40 : index
    %c0_127 = arith.constant 0 : index
    %207 = vector.load %arg19[%c40_126, %c0_127] : memref<104x16xf32, #tpu.memory_space<vmem>>, vector<8x16xf32>
    %208 = arith.addf %207, %196 : vector<8x16xf32>
    %209 = arith.negf %208 : vector<8x16xf32>
    %210 = math.exp %209 : vector<8x16xf32>
    %cst_128 = arith.constant 1.000000e+00 : f32
    %211 = vector.broadcast %cst_128 : f32 to vector<8x16xf32>
    %212 = arith.addf %211, %210 : vector<8x16xf32>
    %213 = arith.divf %211, %212 : vector<8x16xf32>
    %c40_129 = arith.constant 40 : index
    %c0_130 = arith.constant 0 : index
    %214 = vector.load %arg20[%c40_129, %c0_130] : memref<104x16xf32, #tpu.memory_space<vmem>>, vector<8x16xf32>
    %215 = arith.mulf %206, %199 : vector<8x16xf32>
    %216 = arith.addf %214, %215 : vector<8x16xf32>
    %217 = math.tanh %216 : vector<8x16xf32>
    %218 = arith.subf %194, %217 : vector<8x16xf32>
    %219 = arith.mulf %213, %218 : vector<8x16xf32>
    %220 = arith.addf %217, %219 : vector<8x16xf32>
    %cst_131 = arith.constant dense<0.000000e+00> : vector<8x16xf32>
    %221 = tpu.matmul %220, %58, %cst_131 {dimension_numbers = #tpu.dot_dimension_numbers<[1], [0], [0], [1], [0, 0, 1, 1], [], []>} : vector<8x16xf32>, vector<16x16xf32>, vector<8x16xf32> -> vector<8x16xf32>
    %cst_132 = arith.constant dense<0.000000e+00> : vector<8x16xf32>
    %222 = tpu.matmul %220, %60, %cst_132 {dimension_numbers = #tpu.dot_dimension_numbers<[1], [0], [0], [1], [0, 0, 1, 1], [], []>} : vector<8x16xf32>, vector<16x16xf32>, vector<8x16xf32> -> vector<8x16xf32>
    %cst_133 = arith.constant dense<0.000000e+00> : vector<8x16xf32>
    %223 = tpu.matmul %220, %62, %cst_133 {dimension_numbers = #tpu.dot_dimension_numbers<[1], [0], [0], [1], [0, 0, 1, 1], [], []>} : vector<8x16xf32>, vector<16x16xf32>, vector<8x16xf32> -> vector<8x16xf32>
    %224 = vector.broadcast %63 : vector<1x16xf32> to vector<8x16xf32>
    %225 = arith.addf %223, %224 : vector<8x16xf32>
    %c48 = arith.constant 48 : index
    %c0_134 = arith.constant 0 : index
    %226 = vector.load %arg18[%c48, %c0_134] : memref<104x16xf32, #tpu.memory_space<vmem>>, vector<8x16xf32>
    %227 = arith.addf %226, %221 : vector<8x16xf32>
    %228 = arith.negf %227 : vector<8x16xf32>
    %229 = math.exp %228 : vector<8x16xf32>
    %cst_135 = arith.constant 1.000000e+00 : f32
    %230 = vector.broadcast %cst_135 : f32 to vector<8x16xf32>
    %231 = arith.addf %230, %229 : vector<8x16xf32>
    %232 = arith.divf %230, %231 : vector<8x16xf32>
    %c48_136 = arith.constant 48 : index
    %c0_137 = arith.constant 0 : index
    %233 = vector.load %arg19[%c48_136, %c0_137] : memref<104x16xf32, #tpu.memory_space<vmem>>, vector<8x16xf32>
    %234 = arith.addf %233, %222 : vector<8x16xf32>
    %235 = arith.negf %234 : vector<8x16xf32>
    %236 = math.exp %235 : vector<8x16xf32>
    %cst_138 = arith.constant 1.000000e+00 : f32
    %237 = vector.broadcast %cst_138 : f32 to vector<8x16xf32>
    %238 = arith.addf %237, %236 : vector<8x16xf32>
    %239 = arith.divf %237, %238 : vector<8x16xf32>
    %c48_139 = arith.constant 48 : index
    %c0_140 = arith.constant 0 : index
    %240 = vector.load %arg20[%c48_139, %c0_140] : memref<104x16xf32, #tpu.memory_space<vmem>>, vector<8x16xf32>
    %241 = arith.mulf %232, %225 : vector<8x16xf32>
    %242 = arith.addf %240, %241 : vector<8x16xf32>
    %243 = math.tanh %242 : vector<8x16xf32>
    %244 = arith.subf %220, %243 : vector<8x16xf32>
    %245 = arith.mulf %239, %244 : vector<8x16xf32>
    %246 = arith.addf %243, %245 : vector<8x16xf32>
    %cst_141 = arith.constant dense<0.000000e+00> : vector<8x16xf32>
    %247 = tpu.matmul %246, %58, %cst_141 {dimension_numbers = #tpu.dot_dimension_numbers<[1], [0], [0], [1], [0, 0, 1, 1], [], []>} : vector<8x16xf32>, vector<16x16xf32>, vector<8x16xf32> -> vector<8x16xf32>
    %cst_142 = arith.constant dense<0.000000e+00> : vector<8x16xf32>
    %248 = tpu.matmul %246, %60, %cst_142 {dimension_numbers = #tpu.dot_dimension_numbers<[1], [0], [0], [1], [0, 0, 1, 1], [], []>} : vector<8x16xf32>, vector<16x16xf32>, vector<8x16xf32> -> vector<8x16xf32>
    %cst_143 = arith.constant dense<0.000000e+00> : vector<8x16xf32>
    %249 = tpu.matmul %246, %62, %cst_143 {dimension_numbers = #tpu.dot_dimension_numbers<[1], [0], [0], [1], [0, 0, 1, 1], [], []>} : vector<8x16xf32>, vector<16x16xf32>, vector<8x16xf32> -> vector<8x16xf32>
    %250 = vector.broadcast %63 : vector<1x16xf32> to vector<8x16xf32>
    %251 = arith.addf %249, %250 : vector<8x16xf32>
    %c56 = arith.constant 56 : index
    %c0_144 = arith.constant 0 : index
    %252 = vector.load %arg18[%c56, %c0_144] : memref<104x16xf32, #tpu.memory_space<vmem>>, vector<8x16xf32>
    %253 = arith.addf %252, %247 : vector<8x16xf32>
    %254 = arith.negf %253 : vector<8x16xf32>
    %255 = math.exp %254 : vector<8x16xf32>
    %cst_145 = arith.constant 1.000000e+00 : f32
    %256 = vector.broadcast %cst_145 : f32 to vector<8x16xf32>
    %257 = arith.addf %256, %255 : vector<8x16xf32>
    %258 = arith.divf %256, %257 : vector<8x16xf32>
    %c56_146 = arith.constant 56 : index
    %c0_147 = arith.constant 0 : index
    %259 = vector.load %arg19[%c56_146, %c0_147] : memref<104x16xf32, #tpu.memory_space<vmem>>, vector<8x16xf32>
    %260 = arith.addf %259, %248 : vector<8x16xf32>
    %261 = arith.negf %260 : vector<8x16xf32>
    %262 = math.exp %261 : vector<8x16xf32>
    %cst_148 = arith.constant 1.000000e+00 : f32
    %263 = vector.broadcast %cst_148 : f32 to vector<8x16xf32>
    %264 = arith.addf %263, %262 : vector<8x16xf32>
    %265 = arith.divf %263, %264 : vector<8x16xf32>
    %c56_149 = arith.constant 56 : index
    %c0_150 = arith.constant 0 : index
    %266 = vector.load %arg20[%c56_149, %c0_150] : memref<104x16xf32, #tpu.memory_space<vmem>>, vector<8x16xf32>
    %267 = arith.mulf %258, %251 : vector<8x16xf32>
    %268 = arith.addf %266, %267 : vector<8x16xf32>
    %269 = math.tanh %268 : vector<8x16xf32>
    %270 = arith.subf %246, %269 : vector<8x16xf32>
    %271 = arith.mulf %265, %270 : vector<8x16xf32>
    %272 = arith.addf %269, %271 : vector<8x16xf32>
    %cst_151 = arith.constant dense<0.000000e+00> : vector<8x16xf32>
    %273 = tpu.matmul %272, %58, %cst_151 {dimension_numbers = #tpu.dot_dimension_numbers<[1], [0], [0], [1], [0, 0, 1, 1], [], []>} : vector<8x16xf32>, vector<16x16xf32>, vector<8x16xf32> -> vector<8x16xf32>
    %cst_152 = arith.constant dense<0.000000e+00> : vector<8x16xf32>
    %274 = tpu.matmul %272, %60, %cst_152 {dimension_numbers = #tpu.dot_dimension_numbers<[1], [0], [0], [1], [0, 0, 1, 1], [], []>} : vector<8x16xf32>, vector<16x16xf32>, vector<8x16xf32> -> vector<8x16xf32>
    %cst_153 = arith.constant dense<0.000000e+00> : vector<8x16xf32>
    %275 = tpu.matmul %272, %62, %cst_153 {dimension_numbers = #tpu.dot_dimension_numbers<[1], [0], [0], [1], [0, 0, 1, 1], [], []>} : vector<8x16xf32>, vector<16x16xf32>, vector<8x16xf32> -> vector<8x16xf32>
    %276 = vector.broadcast %63 : vector<1x16xf32> to vector<8x16xf32>
    %277 = arith.addf %275, %276 : vector<8x16xf32>
    %c64 = arith.constant 64 : index
    %c0_154 = arith.constant 0 : index
    %278 = vector.load %arg18[%c64, %c0_154] : memref<104x16xf32, #tpu.memory_space<vmem>>, vector<8x16xf32>
    %279 = arith.addf %278, %273 : vector<8x16xf32>
    %280 = arith.negf %279 : vector<8x16xf32>
    %281 = math.exp %280 : vector<8x16xf32>
    %cst_155 = arith.constant 1.000000e+00 : f32
    %282 = vector.broadcast %cst_155 : f32 to vector<8x16xf32>
    %283 = arith.addf %282, %281 : vector<8x16xf32>
    %284 = arith.divf %282, %283 : vector<8x16xf32>
    %c64_156 = arith.constant 64 : index
    %c0_157 = arith.constant 0 : index
    %285 = vector.load %arg19[%c64_156, %c0_157] : memref<104x16xf32, #tpu.memory_space<vmem>>, vector<8x16xf32>
    %286 = arith.addf %285, %274 : vector<8x16xf32>
    %287 = arith.negf %286 : vector<8x16xf32>
    %288 = math.exp %287 : vector<8x16xf32>
    %cst_158 = arith.constant 1.000000e+00 : f32
    %289 = vector.broadcast %cst_158 : f32 to vector<8x16xf32>
    %290 = arith.addf %289, %288 : vector<8x16xf32>
    %291 = arith.divf %289, %290 : vector<8x16xf32>
    %c64_159 = arith.constant 64 : index
    %c0_160 = arith.constant 0 : index
    %292 = vector.load %arg20[%c64_159, %c0_160] : memref<104x16xf32, #tpu.memory_space<vmem>>, vector<8x16xf32>
    %293 = arith.mulf %284, %277 : vector<8x16xf32>
    %294 = arith.addf %292, %293 : vector<8x16xf32>
    %295 = math.tanh %294 : vector<8x16xf32>
    %296 = arith.subf %272, %295 : vector<8x16xf32>
    %297 = arith.mulf %291, %296 : vector<8x16xf32>
    %298 = arith.addf %295, %297 : vector<8x16xf32>
    %cst_161 = arith.constant dense<0.000000e+00> : vector<8x16xf32>
    %299 = tpu.matmul %298, %58, %cst_161 {dimension_numbers = #tpu.dot_dimension_numbers<[1], [0], [0], [1], [0, 0, 1, 1], [], []>} : vector<8x16xf32>, vector<16x16xf32>, vector<8x16xf32> -> vector<8x16xf32>
    %cst_162 = arith.constant dense<0.000000e+00> : vector<8x16xf32>
    %300 = tpu.matmul %298, %60, %cst_162 {dimension_numbers = #tpu.dot_dimension_numbers<[1], [0], [0], [1], [0, 0, 1, 1], [], []>} : vector<8x16xf32>, vector<16x16xf32>, vector<8x16xf32> -> vector<8x16xf32>
    %cst_163 = arith.constant dense<0.000000e+00> : vector<8x16xf32>
    %301 = tpu.matmul %298, %62, %cst_163 {dimension_numbers = #tpu.dot_dimension_numbers<[1], [0], [0], [1], [0, 0, 1, 1], [], []>} : vector<8x16xf32>, vector<16x16xf32>, vector<8x16xf32> -> vector<8x16xf32>
    %302 = vector.broadcast %63 : vector<1x16xf32> to vector<8x16xf32>
    %303 = arith.addf %301, %302 : vector<8x16xf32>
    %c72 = arith.constant 72 : index
    %c0_164 = arith.constant 0 : index
    %304 = vector.load %arg18[%c72, %c0_164] : memref<104x16xf32, #tpu.memory_space<vmem>>, vector<8x16xf32>
    %305 = arith.addf %304, %299 : vector<8x16xf32>
    %306 = arith.negf %305 : vector<8x16xf32>
    %307 = math.exp %306 : vector<8x16xf32>
    %cst_165 = arith.constant 1.000000e+00 : f32
    %308 = vector.broadcast %cst_165 : f32 to vector<8x16xf32>
    %309 = arith.addf %308, %307 : vector<8x16xf32>
    %310 = arith.divf %308, %309 : vector<8x16xf32>
    %c72_166 = arith.constant 72 : index
    %c0_167 = arith.constant 0 : index
    %311 = vector.load %arg19[%c72_166, %c0_167] : memref<104x16xf32, #tpu.memory_space<vmem>>, vector<8x16xf32>
    %312 = arith.addf %311, %300 : vector<8x16xf32>
    %313 = arith.negf %312 : vector<8x16xf32>
    %314 = math.exp %313 : vector<8x16xf32>
    %cst_168 = arith.constant 1.000000e+00 : f32
    %315 = vector.broadcast %cst_168 : f32 to vector<8x16xf32>
    %316 = arith.addf %315, %314 : vector<8x16xf32>
    %317 = arith.divf %315, %316 : vector<8x16xf32>
    %c72_169 = arith.constant 72 : index
    %c0_170 = arith.constant 0 : index
    %318 = vector.load %arg20[%c72_169, %c0_170] : memref<104x16xf32, #tpu.memory_space<vmem>>, vector<8x16xf32>
    %319 = arith.mulf %310, %303 : vector<8x16xf32>
    %320 = arith.addf %318, %319 : vector<8x16xf32>
    %321 = math.tanh %320 : vector<8x16xf32>
    %322 = arith.subf %298, %321 : vector<8x16xf32>
    %323 = arith.mulf %317, %322 : vector<8x16xf32>
    %324 = arith.addf %321, %323 : vector<8x16xf32>
    %cst_171 = arith.constant dense<0.000000e+00> : vector<8x16xf32>
    %325 = tpu.matmul %324, %58, %cst_171 {dimension_numbers = #tpu.dot_dimension_numbers<[1], [0], [0], [1], [0, 0, 1, 1], [], []>} : vector<8x16xf32>, vector<16x16xf32>, vector<8x16xf32> -> vector<8x16xf32>
    %cst_172 = arith.constant dense<0.000000e+00> : vector<8x16xf32>
    %326 = tpu.matmul %324, %60, %cst_172 {dimension_numbers = #tpu.dot_dimension_numbers<[1], [0], [0], [1], [0, 0, 1, 1], [], []>} : vector<8x16xf32>, vector<16x16xf32>, vector<8x16xf32> -> vector<8x16xf32>
    %cst_173 = arith.constant dense<0.000000e+00> : vector<8x16xf32>
    %327 = tpu.matmul %324, %62, %cst_173 {dimension_numbers = #tpu.dot_dimension_numbers<[1], [0], [0], [1], [0, 0, 1, 1], [], []>} : vector<8x16xf32>, vector<16x16xf32>, vector<8x16xf32> -> vector<8x16xf32>
    %328 = vector.broadcast %63 : vector<1x16xf32> to vector<8x16xf32>
    %329 = arith.addf %327, %328 : vector<8x16xf32>
    %c80 = arith.constant 80 : index
    %c0_174 = arith.constant 0 : index
    %330 = vector.load %arg18[%c80, %c0_174] : memref<104x16xf32, #tpu.memory_space<vmem>>, vector<8x16xf32>
    %331 = arith.addf %330, %325 : vector<8x16xf32>
    %332 = arith.negf %331 : vector<8x16xf32>
    %333 = math.exp %332 : vector<8x16xf32>
    %cst_175 = arith.constant 1.000000e+00 : f32
    %334 = vector.broadcast %cst_175 : f32 to vector<8x16xf32>
    %335 = arith.addf %334, %333 : vector<8x16xf32>
    %336 = arith.divf %334, %335 : vector<8x16xf32>
    %c80_176 = arith.constant 80 : index
    %c0_177 = arith.constant 0 : index
    %337 = vector.load %arg19[%c80_176, %c0_177] : memref<104x16xf32, #tpu.memory_space<vmem>>, vector<8x16xf32>
    %338 = arith.addf %337, %326 : vector<8x16xf32>
    %339 = arith.negf %338 : vector<8x16xf32>
    %340 = math.exp %339 : vector<8x16xf32>
    %cst_178 = arith.constant 1.000000e+00 : f32
    %341 = vector.broadcast %cst_178 : f32 to vector<8x16xf32>
    %342 = arith.addf %341, %340 : vector<8x16xf32>
    %343 = arith.divf %341, %342 : vector<8x16xf32>
    %c80_179 = arith.constant 80 : index
    %c0_180 = arith.constant 0 : index
    %344 = vector.load %arg20[%c80_179, %c0_180] : memref<104x16xf32, #tpu.memory_space<vmem>>, vector<8x16xf32>
    %345 = arith.mulf %336, %329 : vector<8x16xf32>
    %346 = arith.addf %344, %345 : vector<8x16xf32>
    %347 = math.tanh %346 : vector<8x16xf32>
    %348 = arith.subf %324, %347 : vector<8x16xf32>
    %349 = arith.mulf %343, %348 : vector<8x16xf32>
    %350 = arith.addf %347, %349 : vector<8x16xf32>
    %cst_181 = arith.constant dense<0.000000e+00> : vector<8x16xf32>
    %351 = tpu.matmul %350, %58, %cst_181 {dimension_numbers = #tpu.dot_dimension_numbers<[1], [0], [0], [1], [0, 0, 1, 1], [], []>} : vector<8x16xf32>, vector<16x16xf32>, vector<8x16xf32> -> vector<8x16xf32>
    %cst_182 = arith.constant dense<0.000000e+00> : vector<8x16xf32>
    %352 = tpu.matmul %350, %60, %cst_182 {dimension_numbers = #tpu.dot_dimension_numbers<[1], [0], [0], [1], [0, 0, 1, 1], [], []>} : vector<8x16xf32>, vector<16x16xf32>, vector<8x16xf32> -> vector<8x16xf32>
    %cst_183 = arith.constant dense<0.000000e+00> : vector<8x16xf32>
    %353 = tpu.matmul %350, %62, %cst_183 {dimension_numbers = #tpu.dot_dimension_numbers<[1], [0], [0], [1], [0, 0, 1, 1], [], []>} : vector<8x16xf32>, vector<16x16xf32>, vector<8x16xf32> -> vector<8x16xf32>
    %354 = vector.broadcast %63 : vector<1x16xf32> to vector<8x16xf32>
    %355 = arith.addf %353, %354 : vector<8x16xf32>
    %c88 = arith.constant 88 : index
    %c0_184 = arith.constant 0 : index
    %356 = vector.load %arg18[%c88, %c0_184] : memref<104x16xf32, #tpu.memory_space<vmem>>, vector<8x16xf32>
    %357 = arith.addf %356, %351 : vector<8x16xf32>
    %358 = arith.negf %357 : vector<8x16xf32>
    %359 = math.exp %358 : vector<8x16xf32>
    %cst_185 = arith.constant 1.000000e+00 : f32
    %360 = vector.broadcast %cst_185 : f32 to vector<8x16xf32>
    %361 = arith.addf %360, %359 : vector<8x16xf32>
    %362 = arith.divf %360, %361 : vector<8x16xf32>
    %c88_186 = arith.constant 88 : index
    %c0_187 = arith.constant 0 : index
    %363 = vector.load %arg19[%c88_186, %c0_187] : memref<104x16xf32, #tpu.memory_space<vmem>>, vector<8x16xf32>
    %364 = arith.addf %363, %352 : vector<8x16xf32>
    %365 = arith.negf %364 : vector<8x16xf32>
    %366 = math.exp %365 : vector<8x16xf32>
    %cst_188 = arith.constant 1.000000e+00 : f32
    %367 = vector.broadcast %cst_188 : f32 to vector<8x16xf32>
    %368 = arith.addf %367, %366 : vector<8x16xf32>
    %369 = arith.divf %367, %368 : vector<8x16xf32>
    %c88_189 = arith.constant 88 : index
    %c0_190 = arith.constant 0 : index
    %370 = vector.load %arg20[%c88_189, %c0_190] : memref<104x16xf32, #tpu.memory_space<vmem>>, vector<8x16xf32>
    %371 = arith.mulf %362, %355 : vector<8x16xf32>
    %372 = arith.addf %370, %371 : vector<8x16xf32>
    %373 = math.tanh %372 : vector<8x16xf32>
    %374 = arith.subf %350, %373 : vector<8x16xf32>
    %375 = arith.mulf %369, %374 : vector<8x16xf32>
    %376 = arith.addf %373, %375 : vector<8x16xf32>
    %cst_191 = arith.constant dense<0.000000e+00> : vector<8x16xf32>
    %377 = tpu.matmul %376, %58, %cst_191 {dimension_numbers = #tpu.dot_dimension_numbers<[1], [0], [0], [1], [0, 0, 1, 1], [], []>} : vector<8x16xf32>, vector<16x16xf32>, vector<8x16xf32> -> vector<8x16xf32>
    %cst_192 = arith.constant dense<0.000000e+00> : vector<8x16xf32>
    %378 = tpu.matmul %376, %60, %cst_192 {dimension_numbers = #tpu.dot_dimension_numbers<[1], [0], [0], [1], [0, 0, 1, 1], [], []>} : vector<8x16xf32>, vector<16x16xf32>, vector<8x16xf32> -> vector<8x16xf32>
    %cst_193 = arith.constant dense<0.000000e+00> : vector<8x16xf32>
    %379 = tpu.matmul %376, %62, %cst_193 {dimension_numbers = #tpu.dot_dimension_numbers<[1], [0], [0], [1], [0, 0, 1, 1], [], []>} : vector<8x16xf32>, vector<16x16xf32>, vector<8x16xf32> -> vector<8x16xf32>
    %380 = vector.broadcast %63 : vector<1x16xf32> to vector<8x16xf32>
    %381 = arith.addf %379, %380 : vector<8x16xf32>
    %c96 = arith.constant 96 : index
    %c0_194 = arith.constant 0 : index
    %382 = vector.load %arg18[%c96, %c0_194] : memref<104x16xf32, #tpu.memory_space<vmem>>, vector<8x16xf32>
    %383 = arith.addf %382, %377 : vector<8x16xf32>
    %384 = arith.negf %383 : vector<8x16xf32>
    %385 = math.exp %384 : vector<8x16xf32>
    %cst_195 = arith.constant 1.000000e+00 : f32
    %386 = vector.broadcast %cst_195 : f32 to vector<8x16xf32>
    %387 = arith.addf %386, %385 : vector<8x16xf32>
    %388 = arith.divf %386, %387 : vector<8x16xf32>
    %c96_196 = arith.constant 96 : index
    %c0_197 = arith.constant 0 : index
    %389 = vector.load %arg19[%c96_196, %c0_197] : memref<104x16xf32, #tpu.memory_space<vmem>>, vector<8x16xf32>
    %390 = arith.addf %389, %378 : vector<8x16xf32>
    %391 = arith.negf %390 : vector<8x16xf32>
    %392 = math.exp %391 : vector<8x16xf32>
    %cst_198 = arith.constant 1.000000e+00 : f32
    %393 = vector.broadcast %cst_198 : f32 to vector<8x16xf32>
    %394 = arith.addf %393, %392 : vector<8x16xf32>
    %395 = arith.divf %393, %394 : vector<8x16xf32>
    %c96_199 = arith.constant 96 : index
    %c0_200 = arith.constant 0 : index
    %396 = vector.load %arg20[%c96_199, %c0_200] : memref<104x16xf32, #tpu.memory_space<vmem>>, vector<8x16xf32>
    %397 = arith.mulf %388, %381 : vector<8x16xf32>
    %398 = arith.addf %396, %397 : vector<8x16xf32>
    %399 = math.tanh %398 : vector<8x16xf32>
    %400 = arith.subf %376, %399 : vector<8x16xf32>
    %401 = arith.mulf %395, %400 : vector<8x16xf32>
    %402 = arith.addf %399, %401 : vector<8x16xf32>
    %c0_201 = arith.constant 0 : index
    %c0_202 = arith.constant 0 : index
    %c0_203 = arith.constant 0 : index
    %403 = vector.load %arg8[%c0_201, %c0_202, %c0_203] : memref<3x8x8xf32, #tpu.memory_space<vmem>>, vector<1x8x8xf32>
    %404 = vector.shape_cast %403 : vector<1x8x8xf32> to vector<8x8xf32>
    %c1_204 = arith.constant 1 : index
    %c0_205 = arith.constant 0 : index
    %c0_206 = arith.constant 0 : index
    %405 = vector.load %arg8[%c1_204, %c0_205, %c0_206] : memref<3x8x8xf32, #tpu.memory_space<vmem>>, vector<1x8x8xf32>
    %406 = vector.shape_cast %405 : vector<1x8x8xf32> to vector<8x8xf32>
    %c2_207 = arith.constant 2 : index
    %c0_208 = arith.constant 0 : index
    %c0_209 = arith.constant 0 : index
    %407 = vector.load %arg8[%c2_207, %c0_208, %c0_209] : memref<3x8x8xf32, #tpu.memory_space<vmem>>, vector<1x8x8xf32>
    %408 = vector.shape_cast %407 : vector<1x8x8xf32> to vector<8x8xf32>
    %c0_210 = arith.constant 0 : index
    %c0_211 = arith.constant 0 : index
    %409 = vector.load %arg10[%c0_210, %c0_211] : memref<1x8xf32, #tpu.memory_space<vmem>>, vector<1x8xf32>
    %cst_212 = arith.constant 0.000000e+00 : f32
    %410 = vector.broadcast %cst_212 : f32 to vector<32x8xf32>
    %cst_213 = arith.constant dense<0.000000e+00> : vector<32x8xf32>
    %411 = tpu.matmul %410, %404, %cst_213 {dimension_numbers = #tpu.dot_dimension_numbers<[1], [0], [0], [1], [0, 0, 1, 1], [], []>} : vector<32x8xf32>, vector<8x8xf32>, vector<32x8xf32> -> vector<32x8xf32>
    %cst_214 = arith.constant dense<0.000000e+00> : vector<32x8xf32>
    %412 = tpu.matmul %410, %406, %cst_214 {dimension_numbers = #tpu.dot_dimension_numbers<[1], [0], [0], [1], [0, 0, 1, 1], [], []>} : vector<32x8xf32>, vector<8x8xf32>, vector<32x8xf32> -> vector<32x8xf32>
    %cst_215 = arith.constant dense<0.000000e+00> : vector<32x8xf32>
    %413 = tpu.matmul %410, %408, %cst_215 {dimension_numbers = #tpu.dot_dimension_numbers<[1], [0], [0], [1], [0, 0, 1, 1], [], []>} : vector<32x8xf32>, vector<8x8xf32>, vector<32x8xf32> -> vector<32x8xf32>
    %414 = vector.broadcast %409 : vector<1x8xf32> to vector<32x8xf32>
    %415 = arith.addf %413, %414 : vector<32x8xf32>
    %c0_216 = arith.constant 0 : index
    %c0_217 = arith.constant 0 : index
    %416 = vector.load %arg21[%c0_216, %c0_217] : memref<96x8xf32, #tpu.memory_space<vmem>>, vector<32x8xf32>
    %417 = arith.addf %416, %411 : vector<32x8xf32>
    %418 = arith.negf %417 : vector<32x8xf32>
    %419 = math.exp %418 : vector<32x8xf32>
    %cst_218 = arith.constant 1.000000e+00 : f32
    %420 = vector.broadcast %cst_218 : f32 to vector<32x8xf32>
    %421 = arith.addf %420, %419 : vector<32x8xf32>
    %422 = arith.divf %420, %421 : vector<32x8xf32>
    %c0_219 = arith.constant 0 : index
    %c0_220 = arith.constant 0 : index
    %423 = vector.load %arg22[%c0_219, %c0_220] : memref<96x8xf32, #tpu.memory_space<vmem>>, vector<32x8xf32>
    %424 = arith.addf %423, %412 : vector<32x8xf32>
    %425 = arith.negf %424 : vector<32x8xf32>
    %426 = math.exp %425 : vector<32x8xf32>
    %cst_221 = arith.constant 1.000000e+00 : f32
    %427 = vector.broadcast %cst_221 : f32 to vector<32x8xf32>
    %428 = arith.addf %427, %426 : vector<32x8xf32>
    %429 = arith.divf %427, %428 : vector<32x8xf32>
    %c0_222 = arith.constant 0 : index
    %c0_223 = arith.constant 0 : index
    %430 = vector.load %arg23[%c0_222, %c0_223] : memref<96x8xf32, #tpu.memory_space<vmem>>, vector<32x8xf32>
    %431 = arith.mulf %422, %415 : vector<32x8xf32>
    %432 = arith.addf %430, %431 : vector<32x8xf32>
    %433 = math.tanh %432 : vector<32x8xf32>
    %434 = arith.subf %410, %433 : vector<32x8xf32>
    %435 = arith.mulf %429, %434 : vector<32x8xf32>
    %436 = arith.addf %433, %435 : vector<32x8xf32>
    %cst_224 = arith.constant dense<0.000000e+00> : vector<32x8xf32>
    %437 = tpu.matmul %436, %404, %cst_224 {dimension_numbers = #tpu.dot_dimension_numbers<[1], [0], [0], [1], [0, 0, 1, 1], [], []>} : vector<32x8xf32>, vector<8x8xf32>, vector<32x8xf32> -> vector<32x8xf32>
    %cst_225 = arith.constant dense<0.000000e+00> : vector<32x8xf32>
    %438 = tpu.matmul %436, %406, %cst_225 {dimension_numbers = #tpu.dot_dimension_numbers<[1], [0], [0], [1], [0, 0, 1, 1], [], []>} : vector<32x8xf32>, vector<8x8xf32>, vector<32x8xf32> -> vector<32x8xf32>
    %cst_226 = arith.constant dense<0.000000e+00> : vector<32x8xf32>
    %439 = tpu.matmul %436, %408, %cst_226 {dimension_numbers = #tpu.dot_dimension_numbers<[1], [0], [0], [1], [0, 0, 1, 1], [], []>} : vector<32x8xf32>, vector<8x8xf32>, vector<32x8xf32> -> vector<32x8xf32>
    %440 = vector.broadcast %409 : vector<1x8xf32> to vector<32x8xf32>
    %441 = arith.addf %439, %440 : vector<32x8xf32>
    %c32_227 = arith.constant 32 : index
    %c0_228 = arith.constant 0 : index
    %442 = vector.load %arg21[%c32_227, %c0_228] : memref<96x8xf32, #tpu.memory_space<vmem>>, vector<32x8xf32>
    %443 = arith.addf %442, %437 : vector<32x8xf32>
    %444 = arith.negf %443 : vector<32x8xf32>
    %445 = math.exp %444 : vector<32x8xf32>
    %cst_229 = arith.constant 1.000000e+00 : f32
    %446 = vector.broadcast %cst_229 : f32 to vector<32x8xf32>
    %447 = arith.addf %446, %445 : vector<32x8xf32>
    %448 = arith.divf %446, %447 : vector<32x8xf32>
    %c32_230 = arith.constant 32 : index
    %c0_231 = arith.constant 0 : index
    %449 = vector.load %arg22[%c32_230, %c0_231] : memref<96x8xf32, #tpu.memory_space<vmem>>, vector<32x8xf32>
    %450 = arith.addf %449, %438 : vector<32x8xf32>
    %451 = arith.negf %450 : vector<32x8xf32>
    %452 = math.exp %451 : vector<32x8xf32>
    %cst_232 = arith.constant 1.000000e+00 : f32
    %453 = vector.broadcast %cst_232 : f32 to vector<32x8xf32>
    %454 = arith.addf %453, %452 : vector<32x8xf32>
    %455 = arith.divf %453, %454 : vector<32x8xf32>
    %c32_233 = arith.constant 32 : index
    %c0_234 = arith.constant 0 : index
    %456 = vector.load %arg23[%c32_233, %c0_234] : memref<96x8xf32, #tpu.memory_space<vmem>>, vector<32x8xf32>
    %457 = arith.mulf %448, %441 : vector<32x8xf32>
    %458 = arith.addf %456, %457 : vector<32x8xf32>
    %459 = math.tanh %458 : vector<32x8xf32>
    %460 = arith.subf %436, %459 : vector<32x8xf32>
    %461 = arith.mulf %455, %460 : vector<32x8xf32>
    %462 = arith.addf %459, %461 : vector<32x8xf32>
    %cst_235 = arith.constant dense<0.000000e+00> : vector<32x8xf32>
    %463 = tpu.matmul %462, %404, %cst_235 {dimension_numbers = #tpu.dot_dimension_numbers<[1], [0], [0], [1], [0, 0, 1, 1], [], []>} : vector<32x8xf32>, vector<8x8xf32>, vector<32x8xf32> -> vector<32x8xf32>
    %cst_236 = arith.constant dense<0.000000e+00> : vector<32x8xf32>
    %464 = tpu.matmul %462, %406, %cst_236 {dimension_numbers = #tpu.dot_dimension_numbers<[1], [0], [0], [1], [0, 0, 1, 1], [], []>} : vector<32x8xf32>, vector<8x8xf32>, vector<32x8xf32> -> vector<32x8xf32>
    %cst_237 = arith.constant dense<0.000000e+00> : vector<32x8xf32>
    %465 = tpu.matmul %462, %408, %cst_237 {dimension_numbers = #tpu.dot_dimension_numbers<[1], [0], [0], [1], [0, 0, 1, 1], [], []>} : vector<32x8xf32>, vector<8x8xf32>, vector<32x8xf32> -> vector<32x8xf32>
    %466 = vector.broadcast %409 : vector<1x8xf32> to vector<32x8xf32>
    %467 = arith.addf %465, %466 : vector<32x8xf32>
    %c64_238 = arith.constant 64 : index
    %c0_239 = arith.constant 0 : index
    %468 = vector.load %arg21[%c64_238, %c0_239] : memref<96x8xf32, #tpu.memory_space<vmem>>, vector<32x8xf32>
    %469 = arith.addf %468, %463 : vector<32x8xf32>
    %470 = arith.negf %469 : vector<32x8xf32>
    %471 = math.exp %470 : vector<32x8xf32>
    %cst_240 = arith.constant 1.000000e+00 : f32
    %472 = vector.broadcast %cst_240 : f32 to vector<32x8xf32>
    %473 = arith.addf %472, %471 : vector<32x8xf32>
    %474 = arith.divf %472, %473 : vector<32x8xf32>
    %c64_241 = arith.constant 64 : index
    %c0_242 = arith.constant 0 : index
    %475 = vector.load %arg22[%c64_241, %c0_242] : memref<96x8xf32, #tpu.memory_space<vmem>>, vector<32x8xf32>
    %476 = arith.addf %475, %464 : vector<32x8xf32>
    %477 = arith.negf %476 : vector<32x8xf32>
    %478 = math.exp %477 : vector<32x8xf32>
    %cst_243 = arith.constant 1.000000e+00 : f32
    %479 = vector.broadcast %cst_243 : f32 to vector<32x8xf32>
    %480 = arith.addf %479, %478 : vector<32x8xf32>
    %481 = arith.divf %479, %480 : vector<32x8xf32>
    %c64_244 = arith.constant 64 : index
    %c0_245 = arith.constant 0 : index
    %482 = vector.load %arg23[%c64_244, %c0_245] : memref<96x8xf32, #tpu.memory_space<vmem>>, vector<32x8xf32>
    %483 = arith.mulf %474, %467 : vector<32x8xf32>
    %484 = arith.addf %482, %483 : vector<32x8xf32>
    %485 = math.tanh %484 : vector<32x8xf32>
    %486 = arith.subf %462, %485 : vector<32x8xf32>
    %487 = arith.mulf %481, %486 : vector<32x8xf32>
    %488 = arith.addf %485, %487 : vector<32x8xf32>
    %c0_246 = arith.constant 0 : index
    %c0_247 = arith.constant 0 : index
    %489 = vector.load %arg11[%c0_246, %c0_247] : memref<16x8xf32, #tpu.memory_space<vmem>>, vector<16x8xf32>
    %cst_248 = arith.constant dense<0.000000e+00> : vector<8x8xf32>
    %490 = tpu.matmul %402, %489, %cst_248 {dimension_numbers = #tpu.dot_dimension_numbers<[1], [0], [0], [1], [0, 0, 1, 1], [], []>} : vector<8x16xf32>, vector<16x8xf32>, vector<8x8xf32> -> vector<8x8xf32>
    %c0_249 = arith.constant 0 : index
    %c0_250 = arith.constant 0 : index
    %491 = vector.load %arg13[%c0_249, %c0_250] : memref<1x8xf32, #tpu.memory_space<vmem>>, vector<1x8xf32>
    %492 = vector.broadcast %491 : vector<1x8xf32> to vector<8x8xf32>
    %493 = arith.addf %490, %492 : vector<8x8xf32>
    %494 = vector.extract_strided_slice %488 {offsets = [0, 0], sizes = [8, 8], strides = [1, 1]} : vector<32x8xf32> to vector<8x8xf32>
    %c0_251 = arith.constant 0 : index
    %c0_252 = arith.constant 0 : index
    %c0_253 = arith.constant 0 : index
    %495 = vector.load %arg12[%c0_251, %c0_252, %c0_253] : memref<4x8x8xf32, #tpu.memory_space<vmem>>, vector<1x8x8xf32>
    %496 = vector.shape_cast %495 : vector<1x8x8xf32> to vector<8x8xf32>
    %cst_254 = arith.constant dense<0.000000e+00> : vector<8x8xf32>
    %497 = tpu.matmul %494, %496, %cst_254 {dimension_numbers = #tpu.dot_dimension_numbers<[1], [0], [0], [1], [0, 0, 1, 1], [], []>} : vector<8x8xf32>, vector<8x8xf32>, vector<8x8xf32> -> vector<8x8xf32>
    %498 = arith.addf %493, %497 : vector<8x8xf32>
    %499 = vector.extract_strided_slice %488 {offsets = [8, 0], sizes = [8, 8], strides = [1, 1]} : vector<32x8xf32> to vector<8x8xf32>
    %c1_255 = arith.constant 1 : index
    %c0_256 = arith.constant 0 : index
    %c0_257 = arith.constant 0 : index
    %500 = vector.load %arg12[%c1_255, %c0_256, %c0_257] : memref<4x8x8xf32, #tpu.memory_space<vmem>>, vector<1x8x8xf32>
    %501 = vector.shape_cast %500 : vector<1x8x8xf32> to vector<8x8xf32>
    %cst_258 = arith.constant dense<0.000000e+00> : vector<8x8xf32>
    %502 = tpu.matmul %499, %501, %cst_258 {dimension_numbers = #tpu.dot_dimension_numbers<[1], [0], [0], [1], [0, 0, 1, 1], [], []>} : vector<8x8xf32>, vector<8x8xf32>, vector<8x8xf32> -> vector<8x8xf32>
    %503 = arith.addf %498, %502 : vector<8x8xf32>
    %504 = vector.extract_strided_slice %488 {offsets = [16, 0], sizes = [8, 8], strides = [1, 1]} : vector<32x8xf32> to vector<8x8xf32>
    %c2_259 = arith.constant 2 : index
    %c0_260 = arith.constant 0 : index
    %c0_261 = arith.constant 0 : index
    %505 = vector.load %arg12[%c2_259, %c0_260, %c0_261] : memref<4x8x8xf32, #tpu.memory_space<vmem>>, vector<1x8x8xf32>
    %506 = vector.shape_cast %505 : vector<1x8x8xf32> to vector<8x8xf32>
    %cst_262 = arith.constant dense<0.000000e+00> : vector<8x8xf32>
    %507 = tpu.matmul %504, %506, %cst_262 {dimension_numbers = #tpu.dot_dimension_numbers<[1], [0], [0], [1], [0, 0, 1, 1], [], []>} : vector<8x8xf32>, vector<8x8xf32>, vector<8x8xf32> -> vector<8x8xf32>
    %508 = arith.addf %503, %507 : vector<8x8xf32>
    %509 = vector.extract_strided_slice %488 {offsets = [24, 0], sizes = [8, 8], strides = [1, 1]} : vector<32x8xf32> to vector<8x8xf32>
    %c3 = arith.constant 3 : index
    %c0_263 = arith.constant 0 : index
    %c0_264 = arith.constant 0 : index
    %510 = vector.load %arg12[%c3, %c0_263, %c0_264] : memref<4x8x8xf32, #tpu.memory_space<vmem>>, vector<1x8x8xf32>
    %511 = vector.shape_cast %510 : vector<1x8x8xf32> to vector<8x8xf32>
    %cst_265 = arith.constant dense<0.000000e+00> : vector<8x8xf32>
    %512 = tpu.matmul %509, %511, %cst_265 {dimension_numbers = #tpu.dot_dimension_numbers<[1], [0], [0], [1], [0, 0, 1, 1], [], []>} : vector<8x8xf32>, vector<8x8xf32>, vector<8x8xf32> -> vector<8x8xf32>
    %513 = arith.addf %508, %512 : vector<8x8xf32>
    %c0_266 = arith.constant 0 : index
    %c0_267 = arith.constant 0 : index
    %c0_268 = arith.constant 0 : index
    %514 = vector.load %arg14[%c0_266, %c0_267, %c0_268] : memref<2x4x8xf32, #tpu.memory_space<vmem>>, vector<2x4x8xf32>
    %c0_269 = arith.constant 0 : index
    %c0_270 = arith.constant 0 : index
    %c0_271 = arith.constant 0 : index
    %515 = vector.load %arg15[%c0_269, %c0_270, %c0_271] : memref<1x4x1xf32, #tpu.memory_space<vmem>>, vector<1x4x1xf32>
    %516 = vector.broadcast %515 : vector<1x4x1xf32> to vector<2x4x8xf32>
    %517 = arith.mulf %514, %516 : vector<2x4x8xf32>
    %cst_272 = arith.constant dense<0.000000e+00> : vector<2x8xf32>
    %518 = vector.multi_reduction <add>, %517, %cst_272 [1] : vector<2x4x8xf32> to vector<2x8xf32>
    %c0_273 = arith.constant 0 : index
    %c0_274 = arith.constant 0 : index
    %519 = vector.load %arg16[%c0_273, %c0_274] : memref<1x1xf32, #tpu.memory_space<vmem>>, vector<1x1xf32>
    %520 = vector.broadcast %519 : vector<1x1xf32> to vector<2x8xf32>
    %521 = arith.addf %518, %520 : vector<2x8xf32>
    %522 = vector.extract_strided_slice %513 {offsets = [0, 0], sizes = [2, 8], strides = [1, 1]} : vector<8x8xf32> to vector<2x8xf32>
    %523 = arith.addf %522, %521 : vector<2x8xf32>
    %524 = arith.negf %523 : vector<2x8xf32>
    %525 = math.exp %524 : vector<2x8xf32>
    %cst_275 = arith.constant 1.000000e+00 : f32
    %526 = vector.broadcast %cst_275 : f32 to vector<2x8xf32>
    %527 = arith.addf %526, %525 : vector<2x8xf32>
    %528 = arith.divf %526, %527 : vector<2x8xf32>
    %c0_276 = arith.constant 0 : index
    %c0_277 = arith.constant 0 : index
    %529 = vector.load %arg17[%c0_276, %c0_277] : memref<2x8xf32, #tpu.memory_space<vmem>>, vector<2x8xf32>
    tpu.vector_store %arg17[%c0_276, %c0_277], %528 {strides = array<i32>} : memref<2x8xf32, #tpu.memory_space<vmem>>, vector<2x8xf32>,
    return
  }
}

</mosaic_0001>

<llo_original>
// kernel: lstnet_forward.1
$region0: #{lstnet_forward.1}
  #allocation0 [shape = 'u32[]', space=smem, size = 0x4, offset = 0x4, fixed_abs, tag = 'smem constant byte address 0x4 - core index']
  #allocation1 [shape = 'u32[144,128]{1,0:T(1,128)}', space=vmem, size = 0x12000, scoped, tag = 'internal scratch']
  #allocation2 [shape = 'f32[104,16]{1,0:T(8,128)}', space=vmem, size = 0xd000, scoped, tag = 'scratch operand']
  #allocation3 [shape = 'f32[104,16]{1,0:T(8,128)}', space=vmem, size = 0xd000, scoped, tag = 'scratch operand']
  #allocation4 [shape = 'f32[104,16]{1,0:T(8,128)}', space=vmem, size = 0xd000, scoped, tag = 'scratch operand']
  #allocation5 [shape = 'f32[96,8]{1,0:T(8,128)}', space=vmem, size = 0xc000, scoped, tag = 'scratch operand']
  #allocation6 [shape = 'f32[96,8]{1,0:T(8,128)}', space=vmem, size = 0xc000, scoped, tag = 'scratch operand']
  #allocation7 [shape = 'f32[96,8]{1,0:T(8,128)}', space=vmem, size = 0xc000, scoped, tag = 'scratch operand']
  #allocation8 [shape = 'f32[1,1]{1,0:T(1,128)S(1)}', space=vmem, size = 0x200, scoped, tag = 'scoped memory for lstnet_forward.1']
  %s0 = inlined_call_operand.vmem [shape: f32[104,32], index: 0, kind: input, shape index: {}]
  %s1 = inlined_call_operand.vmem [shape: f32[32,16], index: 1, kind: input, shape index: {}]
  %s2 = inlined_call_operand.vmem [shape: f32[1,16], index: 2, kind: input, shape index: {}]
  %s3 = inlined_call_operand.vmem [shape: f32[3,16,16], index: 3, kind: input, shape index: {}]
  %s4 = inlined_call_operand.vmem [shape: f32[3,16,16], index: 4, kind: input, shape index: {}]
  %s5 = inlined_call_operand.vmem [shape: f32[3,1,16], index: 5, kind: input, shape index: {}]
  %s6 = inlined_call_operand.vmem [shape: f32[1,16], index: 6, kind: input, shape index: {}]
  %s7 = inlined_call_operand.vmem [shape: f32[3,16,8], index: 7, kind: input, shape index: {}]
  %s8 = inlined_call_operand.vmem [shape: f32[3,8,8], index: 8, kind: input, shape index: {}]
  %s9 = inlined_call_operand.vmem [shape: f32[3,1,8], index: 9, kind: input, shape index: {}]
  %s10 = inlined_call_operand.vmem [shape: f32[1,8], index: 10, kind: input, shape index: {}]
  %s11 = inlined_call_operand.vmem [shape: f32[16,8], index: 11, kind: input, shape index: {}]
  %s12 = inlined_call_operand.vmem [shape: f32[4,8,8], index: 12, kind: input, shape index: {}]
  %s13 = inlined_call_operand.vmem [shape: f32[1,8], index: 13, kind: input, shape index: {}]
  %s14 = inlined_call_operand.vmem [shape: f32[2,4,8], index: 14, kind: input, shape index: {}]
  %s15 = inlined_call_operand.vmem [shape: f32[1,4,1], index: 15, kind: input, shape index: {}]
  %s16 = inlined_call_operand.<no memory space> [shape: f32[1,1], index: 16, kind: input, shape index: {}]
  %s17 = inlined_call_operand.hbm [shape: f32[2,8], index: 17, kind: output, shape index: {}]
  %s18 = sld [smem:[#allocation0]]
  $region78: #{lstnet_forward.1} parent=0
    _
  %s20 = ssub.s32 1, %s18
  %s21 = scalar_select 0, %s20, %s18
  %v22 = vstv %s16
  %23 = vst [vmem:[#allocation8] sm:$0x1] %v22
  $region1: #{lstnet_forward.1} parent=0
    #allocation9 [shape = 'u8[1024]{0}', space=vmem, size = 0x400, scoped, tag = 'output window, operand 0, single buffered']
    #allocation10 [shape = 's32[1]{0}', space=sflag, size = 0x4, scoped, tag = 'scoped memory for lstnet_forward.1']
    %24 = vsyncpa [#allocation10], 0
    // Predicated region
    $region2: #{lstnet_forward.1} parent=1 // pred_check
      _
    $region3: #{lstnet_forward.1} parent=1 // pred_check_branch
      %26 = sbr.rel (0) target = $region5
    $region4: #{lstnet_forward.1} parent=1 // pred_region
      _
    $region5: #{lstnet_forward.1} parent=1 // pred_fallthru
      _
    // Predicated region
    $region6: #{lstnet_forward.1} parent=1 // pred_check
      _
    $region7: #{lstnet_forward.1} parent=1 // pred_check_branch
      %28 = sbr.rel (0) target = $region9
    $region8: #{lstnet_forward.1} parent=1 // pred_region
      _
    $region9: #{lstnet_forward.1} parent=1 // pred_fallthru
      _
    // Predicated region
    $region10: #{lstnet_forward.1} parent=1 // pred_check
      _
    $region11: #{lstnet_forward.1} parent=1 // pred_check_branch
      %30 = sbr.rel (0) target = $region13
    $region12: #{lstnet_forward.1} parent=1 // pred_region
      _
    $region13: #{lstnet_forward.1} parent=1 // pred_fallthru
      _
    // Predicated region
    $region14: #{lstnet_forward.1} parent=1 // pred_check
      _
    $region15: #{lstnet_forward.1} parent=1 // pred_check_branch
      %32 = sbr.rel (0) target = $region17
    $region16: #{lstnet_forward.1} parent=1 // pred_region
      _
    $region17: #{lstnet_forward.1} parent=1 // pred_fallthru
      _
    // Predicated region
    $region18: #{lstnet_forward.1} parent=1 // pred_check
      _
    $region19: #{lstnet_forward.1} parent=1 // pred_check_branch
      %34 = sbr.rel (0) target = $region21
    $region20: #{lstnet_forward.1} parent=1 // pred_region
      _
    $region21: #{lstnet_forward.1} parent=1 // pred_fallthru
      _
    // Predicated region
    $region22: #{lstnet_forward.1} parent=1 // pred_check
      _
    $region23: #{lstnet_forward.1} parent=1 // pred_check_branch
      %36 = sbr.rel (0) target = $region25
    $region24: #{lstnet_forward.1} parent=1 // pred_region
      _
    $region25: #{lstnet_forward.1} parent=1 // pred_fallthru
      _
    // Predicated region
    $region26: #{lstnet_forward.1} parent=1 // pred_check
      _
    $region27: #{lstnet_forward.1} parent=1 // pred_check_branch
      %38 = sbr.rel (0) target = $region29
    $region28: #{lstnet_forward.1} parent=1 // pred_region
      _
    $region29: #{lstnet_forward.1} parent=1 // pred_fallthru
      _
    // Predicated region
    $region30: #{lstnet_forward.1} parent=1 // pred_check
      _
    $region31: #{lstnet_forward.1} parent=1 // pred_check_branch
      %40 = sbr.rel (0) target = $region33
    $region32: #{lstnet_forward.1} parent=1 // pred_region
      _
    $region33: #{lstnet_forward.1} parent=1 // pred_fallthru
      _
    // Predicated region
    $region34: #{lstnet_forward.1} parent=1 // pred_check
      _
    $region35: #{lstnet_forward.1} parent=1 // pred_check_branch
      %42 = sbr.rel (0) target = $region37
    $region36: #{lstnet_forward.1} parent=1 // pred_region
      _
    $region37: #{lstnet_forward.1} parent=1 // pred_fallthru
      _
    // Predicated region
    $region38: #{lstnet_forward.1} parent=1 // pred_check
      _
    $region39: #{lstnet_forward.1} parent=1 // pred_check_branch
      %44 = sbr.rel (0) target = $region41
    $region40: #{lstnet_forward.1} parent=1 // pred_region
      _
    $region41: #{lstnet_forward.1} parent=1 // pred_fallthru
      _
    // Predicated region
    $region42: #{lstnet_forward.1} parent=1 // pred_check
      _
    $region43: #{lstnet_forward.1} parent=1 // pred_check_branch
      %46 = sbr.rel (0) target = $region45
    $region44: #{lstnet_forward.1} parent=1 // pred_region
      _
    $region45: #{lstnet_forward.1} parent=1 // pred_fallthru
      _
    // Predicated region
    $region46: #{lstnet_forward.1} parent=1 // pred_check
      _
    $region47: #{lstnet_forward.1} parent=1 // pred_check_branch
      %48 = sbr.rel (0) target = $region49
    $region48: #{lstnet_forward.1} parent=1 // pred_region
      _
    $region49: #{lstnet_forward.1} parent=1 // pred_fallthru
      _
    // Predicated region
    $region50: #{lstnet_forward.1} parent=1 // pred_check
      _
    $region51: #{lstnet_forward.1} parent=1 // pred_check_branch
      %50 = sbr.rel (0) target = $region53
    $region52: #{lstnet_forward.1} parent=1 // pred_region
      _
    $region53: #{lstnet_forward.1} parent=1 // pred_fallthru
      _
    // Predicated region
    $region54: #{lstnet_forward.1} parent=1 // pred_check
      _
    $region55: #{lstnet_forward.1} parent=1 // pred_check_branch
      %52 = sbr.rel (0) target = $region57
    $region56: #{lstnet_forward.1} parent=1 // pred_region
      _
    $region57: #{lstnet_forward.1} parent=1 // pred_fallthru
      _
    // Predicated region
    $region58: #{lstnet_forward.1} parent=1 // pred_check
      _
    $region59: #{lstnet_forward.1} parent=1 // pred_check_branch
      %54 = sbr.rel (0) target = $region61
    $region60: #{lstnet_forward.1} parent=1 // pred_region
      _
    $region61: #{lstnet_forward.1} parent=1 // pred_fallthru
      _
    // Predicated region
    $region62: #{lstnet_forward.1} parent=1 // pred_check
      _
    $region63: #{lstnet_forward.1} parent=1 // pred_check_branch
      %56 = sbr.rel (0) target = $region65
    $region64: #{lstnet_forward.1} parent=1 // pred_region
      _
    $region65: #{lstnet_forward.1} parent=1 // pred_fallthru
      _
    // Predicated region
    $region66: #{lstnet_forward.1} parent=1 // pred_check
      _
    $region67: #{lstnet_forward.1} parent=1 // pred_check_branch
      %58 = sbr.rel (0) target = $region69
    $region68: #{lstnet_forward.1} parent=1 // pred_region
      _
    $region69: #{lstnet_forward.1} parent=1 // pred_fallthru
      _
    %v59 = vld [vmem:[%s0] sm:$0xff]
    %v60 = vld [vmem:[%s0 + $0x8] sm:$0xff]
    %v61 = vld [vmem:[%s0 + $0x10] sm:$0xff]
    %v62 = vld [vmem:[%s0 + $0x18] sm:$0xff]
    %v63 = vld [vmem:[%s0 + $0x20] sm:$0xff]
    %v64 = vld [vmem:[%s0 + $0x28] sm:$0xff]
    %v65 = vld [vmem:[%s0 + $0x30] sm:$0xff]
    %v66 = vld [vmem:[%s0 + $0x38] sm:$0xff]
    %v67 = vld [vmem:[%s0 + $0x40] sm:$0xff]
    %v68 = vld [vmem:[%s0 + $0x48] sm:$0xff]
    %v69 = vld [vmem:[%s0 + $0x50] sm:$0xff]
    %v70 = vld [vmem:[%s0 + $0x58] sm:$0xff]
    %v71 = vld [vmem:[%s0 + $0x60] sm:$0xff]
    %v72 = vld [vmem:[%s1] sm:$0xff]
    %v73 = vld [vmem:[%s1 + $0x8] sm:$0xff]
    %v74 = vld [vmem:[%s1 + $0x10] sm:$0xff]
    %v75 = vld [vmem:[%s1 + $0x18] sm:$0xff]
    %v76 = vld [vmem:[%s2] sm:$0x1]
    %v78 = vlaneseq
    %v79 = vshrl.u32 %v78, 7
    %v80 = vsub.s32 0, %v79
    %v81 = vrot.slane %v76, %v80
    %vm83 = vcmask 261120
    %v85 = vsel %vm83, %v59, 0
    %v88 = vsel %vm83, %v60, 0
    %v91 = vsel %vm83, %v61, 0
    %v94 = vsel %vm83, %v62, 0
    %v97 = vsel %vm83, %v63, 0
    %v100 = vsel %vm83, %v64, 0
    %v103 = vsel %vm83, %v65, 0
    %v106 = vsel %vm83, %v66, 0
    %v109 = vsel %vm83, %v67, 0
    %v112 = vsel %vm83, %v68, 0
    %v115 = vsel %vm83, %v69, 0
    %v118 = vsel %vm83, %v70, 0
    %v121 = vsel %vm83, %v71, 0
    %123 = vmatprep.subr.mxu0 0.0
    %124 = vmatpush1.msra.mxu0 %v72
    %125 = vmatprep.subr.mxu0 0.0
    %126 = vmatpush1.msra.mxu0 %v73
    %127 = vmatprep.subr.mxu0 0.0
    %128 = vmatpush1.msra.mxu0 %v74
    %129 = vmatprep.subr.mxu0 0.0
    %130 = vmatpush1.msra.mxu0 %v75
    %131 = vmatprep.subr.mxu0 0.0
    %132 = vmatpush1.msra.mxu0 0.0
    %133 = vmatprep.subr.mxu0 0.0
    %134 = vmatpush1.msra.mxu0 0.0
    %135 = vmatprep.subr.mxu0 0.0
    %136 = vmatpush1.msra.mxu0 0.0
    %137 = vmatprep.subr.mxu0 0.0
    %138 = vmatpush1.msra.mxu0 0.0
    %139 = vmatprep.subr.mxu0 0.0
    %140 = vmatpush1.msra.mxu0 0.0
    %141 = vmatprep.subr.mxu0 0.0
    %142 = vmatpush1.msra.mxu0 0.0
    %143 = vmatprep.subr.mxu0 0.0
    %144 = vmatpush1.msra.mxu0 0.0
    %145 = vmatprep.subr.mxu0 0.0
    %146 = vmatpush1.msra.mxu0 0.0
    %147 = vmatprep.subr.mxu0 0.0
    %148 = vmatpush1.msra.mxu0 0.0
    %149 = vmatprep.subr.mxu0 0.0
    %150 = vmatpush1.msra.mxu0 0.0
    %151 = vmatprep.subr.mxu0 0.0
    %152 = vmatpush1.msra.mxu0 0.0
    %153 = vmatprep.subr.mxu0 0.0
    %154 = vmatpush1.msra.mxu0 0.0
    %155 = vmatprep.subr.mxu0 0.0
    %156 = vmatpush1.msra.mxu0 0.0
    %157 = vmatprep.subr.mxu0 0.0
    %158 = vmatpush1.msra.mxu0 0.0
    %159 = vmatprep.subr.mxu0 0.0
    %160 = vmatpush1.msra.mxu0 0.0
    %161 = vmatprep.subr.mxu0 0.0
    %162 = vmatpush1.msra.mxu0 0.0
    %163 = vmatprep.subr.mxu0 0.0
    %164 = vmatpush1.msra.mxu0 0.0
    %165 = vmatprep.subr.mxu0 0.0
    %166 = vmatpush1.msra.mxu0 0.0
    %167 = vmatprep.subr.mxu0 0.0
    %168 = vmatpush1.msra.mxu0 0.0
    %169 = vmatprep.subr.mxu0 0.0
    %170 = vmatpush1.msra.mxu0 0.0
    %171 = vmatprep.subr.mxu0 0.0
    %172 = vmatpush1.msra.mxu0 0.0
    %173 = vmatprep.subr.mxu0 0.0
    %174 = vmatpush1.msra.mxu0 0.0
    %175 = vmatprep.subr.mxu0 0.0
    %176 = vmatpush1.msra.mxu0 0.0
    %177 = vmatprep.subr.mxu0 0.0
    %178 = vmatpush1.msra.mxu0 0.0
    %179 = vmatprep.subr.mxu0 0.0
    %180 = vmatpush1.msra.mxu0 0.0
    %181 = vmatprep.subr.mxu0 0.0
    %182 = vmatpush1.msra.mxu0 0.0
    %183 = vmatprep.subr.mxu0 0.0
    %184 = vmatpush1.msra.mxu0 0.0
    %185 = vmatprep.subr.mxu0 0.0
    %186 = vmatpush1.msra.mxu0 0.0
    %187 = vmatprep.mubr.f32.mxu0 0.0
    %188 = vmatmul.mubr.f32.gmra.mrb[0].mxu0 %v85
    %v189 = vpop.f32.mrb[0].mxu0
    %v190 = vadd.f32 %v81, %v189
    %v191 = vpop.f32.mrb[0].mxu0
    %192 = vmatprep.mubr.f32.mxu0 0.0
    %193 = vmatmul.mubr.f32.gmra.mrb[0].mxu0 %v88
    %v194 = vpop.f32.mrb[0].mxu0
    %v195 = vadd.f32 %v81, %v194
    %v196 = vpop.f32.mrb[0].mxu0
    %197 = vmatprep.mubr.f32.mxu0 0.0
    %198 = vmatmul.mubr.f32.gmra.mrb[0].mxu0 %v91
    %v199 = vpop.f32.mrb[0].mxu0
    %v200 = vadd.f32 %v81, %v199
    %v201 = vpop.f32.mrb[0].mxu0
    %202 = vmatprep.mubr.f32.mxu0 0.0
    %203 = vmatmul.mubr.f32.gmra.mrb[0].mxu0 %v94
    %v204 = vpop.f32.mrb[0].mxu0
    %v205 = vadd.f32 %v81, %v204
    %v206 = vpop.f32.mrb[0].mxu0
    %207 = vmatprep.mubr.f32.mxu0 0.0
    %208 = vmatmul.mubr.f32.gmra.mrb[0].mxu0 %v97
    %v209 = vpop.f32.mrb[0].mxu0
    %v210 = vadd.f32 %v81, %v209
    %v211 = vpop.f32.mrb[0].mxu0
    %212 = vmatprep.mubr.f32.mxu0 0.0
    %213 = vmatmul.mubr.f32.gmra.mrb[0].mxu0 %v100
    %v214 = vpop.f32.mrb[0].mxu0
    %v215 = vadd.f32 %v81, %v214
    %v216 = vpop.f32.mrb[0].mxu0
    %217 = vmatprep.mubr.f32.mxu0 0.0
    %218 = vmatmul.mubr.f32.gmra.mrb[0].mxu0 %v103
    %v219 = vpop.f32.mrb[0].mxu0
    %v220 = vadd.f32 %v81, %v219
    %v221 = vpop.f32.mrb[0].mxu0
    %222 = vmatprep.mubr.f32.mxu0 0.0
    %223 = vmatmul.mubr.f32.gmra.mrb[0].mxu0 %v106
    %v224 = vpop.f32.mrb[0].mxu0
    %v225 = vadd.f32 %v81, %v224
    %v226 = vpop.f32.mrb[0].mxu0
    %227 = vmatprep.mubr.f32.mxu0 0.0
    %228 = vmatmul.mubr.f32.gmra.mrb[0].mxu0 %v109
    %v229 = vpop.f32.mrb[0].mxu0
    %v230 = vadd.f32 %v81, %v229
    %v231 = vpop.f32.mrb[0].mxu0
    %232 = vmatprep.mubr.f32.mxu0 0.0
    %233 = vmatmul.mubr.f32.gmra.mrb[0].mxu0 %v112
    %v234 = vpop.f32.mrb[0].mxu0
    %v235 = vadd.f32 %v81, %v234
    %v236 = vpop.f32.mrb[0].mxu0
    %237 = vmatprep.mubr.f32.mxu0 0.0
    %238 = vmatmul.mubr.f32.gmra.mrb[0].mxu0 %v115
    %v239 = vpop.f32.mrb[0].mxu0
    %v240 = vadd.f32 %v81, %v239
    %v241 = vpop.f32.mrb[0].mxu0
    %242 = vmatprep.mubr.f32.mxu0 0.0
    %243 = vmatmul.mubr.f32.gmra.mrb[0].mxu0 %v118
    %v244 = vpop.f32.mrb[0].mxu0
    %v245 = vadd.f32 %v81, %v244
    %v246 = vpop.f32.mrb[0].mxu0
    %247 = vmatprep.mubr.f32.mxu0 0.0
    %248 = vmatmul.mubr.f32.gmra.mrb[0].mxu0 %v121
    %v249 = vpop.f32.mrb[0].mxu0
    %v250 = vadd.f32 %v81, %v249
    %v251 = vpop.f32.mrb[0].mxu0
    %252 = vdwg.mxu0
    %v253 = vmax.f32 %v190, 0.0
    %v254 = vmax.f32 %v195, 0.0
    %v255 = vmax.f32 %v200, 0.0
    %v256 = vmax.f32 %v205, 0.0
    %v257 = vmax.f32 %v210, 0.0
    %v258 = vmax.f32 %v215, 0.0
    %v259 = vmax.f32 %v220, 0.0
    %v260 = vmax.f32 %v225, 0.0
    %v261 = vmax.f32 %v230, 0.0
    %v262 = vmax.f32 %v235, 0.0
    %v263 = vmax.f32 %v240, 0.0
    %v264 = vmax.f32 %v245, 0.0
    %v265 = vmax.f32 %v250, 0.0
    %v266 = vld [vmem:[%s3] sm:$0xff]
    %v267 = vld [vmem:[%s3 + $0x8] sm:$0xff]
    %v268 = vld [vmem:[%s5] sm:$0x1]
    %v270 = vlaneseq
    %v271 = vshrl.u32 %v270, 7
    %v272 = vsub.s32 0, %v271
    %v273 = vrot.slane %v268, %v272
    %vm275 = vcmask 130048
    %v277 = vsel %vm275, %v253, 0
    %v280 = vsel %vm275, %v254, 0
    %v283 = vsel %vm275, %v255, 0
    %v286 = vsel %vm275, %v256, 0
    %v289 = vsel %vm275, %v257, 0
    %v292 = vsel %vm275, %v258, 0
    %v295 = vsel %vm275, %v259, 0
    %v298 = vsel %vm275, %v260, 0
    %v301 = vsel %vm275, %v261, 0
    %v304 = vsel %vm275, %v262, 0
    %v307 = vsel %vm275, %v263, 0
    %v310 = vsel %vm275, %v264, 0
    %v313 = vsel %vm275, %v265, 0
    %315 = vmatprep.subr.mxu0 0.0
    %316 = vmatpush1.msra.mxu0 %v266
    %317 = vmatprep.subr.mxu0 0.0
    %318 = vmatpush1.msra.mxu0 %v267
    %319 = vmatprep.subr.mxu0 0.0
    %320 = vmatpush1.msra.mxu0 0.0
    %321 = vmatprep.subr.mxu0 0.0
    %322 = vmatpush1.msra.mxu0 0.0
    %323 = vmatprep.subr.mxu0 0.0
    %324 = vmatpush1.msra.mxu0 0.0
    %325 = vmatprep.subr.mxu0 0.0
    %326 = vmatpush1.msra.mxu0 0.0
    %327 = vmatprep.subr.mxu0 0.0
    %328 = vmatpush1.msra.mxu0 0.0
    %329 = vmatprep.subr.mxu0 0.0
    %330 = vmatpush1.msra.mxu0 0.0
    %331 = vmatprep.subr.mxu0 0.0
    %332 = vmatpush1.msra.mxu0 0.0
    %333 = vmatprep.subr.mxu0 0.0
    %334 = vmatpush1.msra.mxu0 0.0
    %335 = vmatprep.subr.mxu0 0.0
    %336 = vmatpush1.msra.mxu0 0.0
    %337 = vmatprep.subr.mxu0 0.0
    %338 = vmatpush1.msra.mxu0 0.0
    %339 = vmatprep.subr.mxu0 0.0
    %340 = vmatpush1.msra.mxu0 0.0
    %341 = vmatprep.subr.mxu0 0.0
    %342 = vmatpush1.msra.mxu0 0.0
    %343 = vmatprep.subr.mxu0 0.0
    %344 = vmatpush1.msra.mxu0 0.0
    %345 = vmatprep.subr.mxu0 0.0
    %346 = vmatpush1.msra.mxu0 0.0
    %347 = vmatprep.subr.mxu0 0.0
    %348 = vmatpush1.msra.mxu0 0.0
    %349 = vmatprep.subr.mxu0 0.0
    %350 = vmatpush1.msra.mxu0 0.0
    %351 = vmatprep.subr.mxu0 0.0
    %352 = vmatpush1.msra.mxu0 0.0
    %353 = vmatprep.subr.mxu0 0.0
    %354 = vmatpush1.msra.mxu0 0.0
    %355 = vmatprep.subr.mxu0 0.0
    %356 = vmatpush1.msra.mxu0 0.0
    %357 = vmatprep.subr.mxu0 0.0
    %358 = vmatpush1.msra.mxu0 0.0
    %359 = vmatprep.subr.mxu0 0.0
    %360 = vmatpush1.msra.mxu0 0.0
    %361 = vmatprep.subr.mxu0 0.0
    %362 = vmatpush1.msra.mxu0 0.0
    %363 = vmatprep.subr.mxu0 0.0
    %364 = vmatpush1.msra.mxu0 0.0
    %365 = vmatprep.subr.mxu0 0.0
    %366 = vmatpush1.msra.mxu0 0.0
    %367 = vmatprep.subr.mxu0 0.0
    %368 = vmatpush1.msra.mxu0 0.0
    %369 = vmatprep.subr.mxu0 0.0
    %370 = vmatpush1.msra.mxu0 0.0
    %371 = vmatprep.subr.mxu0 0.0
    %372 = vmatpush1.msra.mxu0 0.0
    %373 = vmatprep.subr.mxu0 0.0
    %374 = vmatpush1.msra.mxu0 0.0
    %375 = vmatprep.subr.mxu0 0.0
    %376 = vmatpush1.msra.mxu0 0.0
    %377 = vmatprep.subr.mxu0 0.0
    %378 = vmatpush1.msra.mxu0 0.0
    %379 = vmatprep.mubr.f32.mxu0 0.0
    %380 = vmatmul.mubr.f32.gmra.mrb[0].mxu0 %v277
    %v381 = vpop.f32.mrb[0].mxu0
    %v382 = vadd.f32 %v273, %v381
    %v383 = vpop.f32.mrb[0].mxu0
    %384 = vmatprep.mubr.f32.mxu0 0.0
    %385 = vmatmul.mubr.f32.gmra.mrb[0].mxu0 %v280
    %v386 = vpop.f32.mrb[0].mxu0
    %v387 = vadd.f32 %v273, %v386
    %v388 = vpop.f32.mrb[0].mxu0
    %389 = vmatprep.mubr.f32.mxu0 0.0
    %390 = vmatmul.mubr.f32.gmra.mrb[0].mxu0 %v283
    %v391 = vpop.f32.mrb[0].mxu0
    %v392 = vadd.f32 %v273, %v391
    %v393 = vpop.f32.mrb[0].mxu0
    %394 = vmatprep.mubr.f32.mxu0 0.0
    %395 = vmatmul.mubr.f32.gmra.mrb[0].mxu0 %v286
    %v396 = vpop.f32.mrb[0].mxu0
    %v397 = vadd.f32 %v273, %v396
    %v398 = vpop.f32.mrb[0].mxu0
    %399 = vmatprep.mubr.f32.mxu0 0.0
    %400 = vmatmul.mubr.f32.gmra.mrb[0].mxu0 %v289
    %v401 = vpop.f32.mrb[0].mxu0
    %v402 = vadd.f32 %v273, %v401
    %v403 = vpop.f32.mrb[0].mxu0
    %404 = vmatprep.mubr.f32.mxu0 0.0
    %405 = vmatmul.mubr.f32.gmra.mrb[0].mxu0 %v292
    %v406 = vpop.f32.mrb[0].mxu0
    %v407 = vadd.f32 %v273, %v406
    %v408 = vpop.f32.mrb[0].mxu0
    %409 = vmatprep.mubr.f32.mxu0 0.0
    %410 = vmatmul.mubr.f32.gmra.mrb[0].mxu0 %v295
    %v411 = vpop.f32.mrb[0].mxu0
    %v412 = vadd.f32 %v273, %v411
    %v413 = vpop.f32.mrb[0].mxu0
    %414 = vmatprep.mubr.f32.mxu0 0.0
    %415 = vmatmul.mubr.f32.gmra.mrb[0].mxu0 %v298
    %v416 = vpop.f32.mrb[0].mxu0
    %v417 = vadd.f32 %v273, %v416
    %v418 = vpop.f32.mrb[0].mxu0
    %419 = vmatprep.mubr.f32.mxu0 0.0
    %420 = vmatmul.mubr.f32.gmra.mrb[0].mxu0 %v301
    %v421 = vpop.f32.mrb[0].mxu0
    %v422 = vadd.f32 %v273, %v421
    %v423 = vpop.f32.mrb[0].mxu0
    %424 = vmatprep.mubr.f32.mxu0 0.0
    %425 = vmatmul.mubr.f32.gmra.mrb[0].mxu0 %v304
    %v426 = vpop.f32.mrb[0].mxu0
    %v427 = vadd.f32 %v273, %v426
    %v428 = vpop.f32.mrb[0].mxu0
    %429 = vmatprep.mubr.f32.mxu0 0.0
    %430 = vmatmul.mubr.f32.gmra.mrb[0].mxu0 %v307
    %v431 = vpop.f32.mrb[0].mxu0
    %v432 = vadd.f32 %v273, %v431
    %v433 = vpop.f32.mrb[0].mxu0
    %434 = vmatprep.mubr.f32.mxu0 0.0
    %435 = vmatmul.mubr.f32.gmra.mrb[0].mxu0 %v310
    %v436 = vpop.f32.mrb[0].mxu0
    %v437 = vadd.f32 %v273, %v436
    %v438 = vpop.f32.mrb[0].mxu0
    %439 = vmatprep.mubr.f32.mxu0 0.0
    %440 = vmatmul.mubr.f32.gmra.mrb[0].mxu0 %v313
    %v441 = vpop.f32.mrb[0].mxu0
    %v442 = vadd.f32 %v273, %v441
    %v443 = vpop.f32.mrb[0].mxu0
    %444 = vdwg.mxu0
    %445 = vst.msk [vmem:[#allocation2] sm:$0xff] %vm275, %v382
    %446 = vst.msk [vmem:[#allocation2 + $0x8] sm:$0xff] %vm275, %v387
    %447 = vst.msk [vmem:[#allocation2 + $0x10] sm:$0xff] %vm275, %v392
    %448 = vst.msk [vmem:[#allocation2 + $0x18] sm:$0xff] %vm275, %v397
    %449 = vst.msk [vmem:[#allocation2 + $0x20] sm:$0xff] %vm275, %v402
    %450 = vst.msk [vmem:[#allocation2 + $0x28] sm:$0xff] %vm275, %v407
    %451 = vst.msk [vmem:[#allocation2 + $0x30] sm:$0xff] %vm275, %v412
    %452 = vst.msk [vmem:[#allocation2 + $0x38] sm:$0xff] %vm275, %v417
    %453 = vst.msk [vmem:[#allocation2 + $0x40] sm:$0xff] %vm275, %v422
    %454 = vst.msk [vmem:[#allocation2 + $0x48] sm:$0xff] %vm275, %v427
    %455 = vst.msk [vmem:[#allocation2 + $0x50] sm:$0xff] %vm275, %v432
    %456 = vst.msk [vmem:[#allocation2 + $0x58] sm:$0xff] %vm275, %v437
    %457 = vst.msk [vmem:[#allocation2 + $0x60] sm:$0xff] %vm275, %v442
    %s458 = scalar_lea.vmem %s3, 16
    %v459 = vld [vmem:[%s458] sm:$0xff]
    %v460 = vld [vmem:[%s458 + $0x8] sm:$0xff]
    %s461 = scalar_lea.vmem %s5, 1
    %v462 = vld [vmem:[%s461] sm:$0x1]
    %v464 = vlaneseq
    %v465 = vshrl.u32 %v464, 7
    %v466 = vsub.s32 0, %v465
    %v467 = vrot.slane %v462, %v466
    %469 = vmatprep.subr.mxu0 0.0
    %470 = vmatpush1.msra.mxu0 %v459
    %471 = vmatprep.subr.mxu0 0.0
    %472 = vmatpush1.msra.mxu0 %v460
    %473 = vmatprep.subr.mxu0 0.0
    %474 = vmatpush1.msra.mxu0 0.0
    %475 = vmatprep.subr.mxu0 0.0
    %476 = vmatpush1.msra.mxu0 0.0
    %477 = vmatprep.subr.mxu0 0.0
    %478 = vmatpush1.msra.mxu0 0.0
    %479 = vmatprep.subr.mxu0 0.0
    %480 = vmatpush1.msra.mxu0 0.0
    %481 = vmatprep.subr.mxu0 0.0
    %482 = vmatpush1.msra.mxu0 0.0
    %483 = vmatprep.subr.mxu0 0.0
    %484 = vmatpush1.msra.mxu0 0.0
    %485 = vmatprep.subr.mxu0 0.0
    %486 = vmatpush1.msra.mxu0 0.0
    %487 = vmatprep.subr.mxu0 0.0
    %488 = vmatpush1.msra.mxu0 0.0
    %489 = vmatprep.subr.mxu0 0.0
    %490 = vmatpush1.msra.mxu0 0.0
    %491 = vmatprep.subr.mxu0 0.0
    %492 = vmatpush1.msra.mxu0 0.0
    %493 = vmatprep.subr.mxu0 0.0
    %494 = vmatpush1.msra.mxu0 0.0
    %495 = vmatprep.subr.mxu0 0.0
    %496 = vmatpush1.msra.mxu0 0.0
    %497 = vmatprep.subr.mxu0 0.0
    %498 = vmatpush1.msra.mxu0 0.0
    %499 = vmatprep.subr.mxu0 0.0
    %500 = vmatpush1.msra.mxu0 0.0
    %501 = vmatprep.subr.mxu0 0.0
    %502 = vmatpush1.msra.mxu0 0.0
    %503 = vmatprep.subr.mxu0 0.0
    %504 = vmatpush1.msra.mxu0 0.0
    %505 = vmatprep.subr.mxu0 0.0
    %506 = vmatpush1.msra.mxu0 0.0
    %507 = vmatprep.subr.mxu0 0.0
    %508 = vmatpush1.msra.mxu0 0.0
    %509 = vmatprep.subr.mxu0 0.0
    %510 = vmatpush1.msra.mxu0 0.0
    %511 = vmatprep.subr.mxu0 0.0
    %512 = vmatpush1.msra.mxu0 0.0
    %513 = vmatprep.subr.mxu0 0.0
    %514 = vmatpush1.msra.mxu0 0.0
    %515 = vmatprep.subr.mxu0 0.0
    %516 = vmatpush1.msra.mxu0 0.0
    %517 = vmatprep.subr.mxu0 0.0
    %518 = vmatpush1.msra.mxu0 0.0
    %519 = vmatprep.subr.mxu0 0.0
    %520 = vmatpush1.msra.mxu0 0.0
    %521 = vmatprep.subr.mxu0 0.0
    %522 = vmatpush1.msra.mxu0 0.0
    %523 = vmatprep.subr.mxu0 0.0
    %524 = vmatpush1.msra.mxu0 0.0
    %525 = vmatprep.subr.mxu0 0.0
    %526 = vmatpush1.msra.mxu0 0.0
    %527 = vmatprep.subr.mxu0 0.0
    %528 = vmatpush1.msra.mxu0 0.0
    %529 = vmatprep.subr.mxu0 0.0
    %530 = vmatpush1.msra.mxu0 0.0
    %531 = vmatprep.subr.mxu0 0.0
    %532 = vmatpush1.msra.mxu0 0.0
    %533 = vmatprep.mubr.f32.mxu0 0.0
    %534 = vmatmul.mubr.f32.gmra.mrb[0].mxu0 %v277
    %v535 = vpop.f32.mrb[0].mxu0
    %v536 = vadd.f32 %v467, %v535
    %v537 = vpop.f32.mrb[0].mxu0
    %538 = vmatprep.mubr.f32.mxu0 0.0
    %539 = vmatmul.mubr.f32.gmra.mrb[0].mxu0 %v280
    %v540 = vpop.f32.mrb[0].mxu0
    %v541 = vadd.f32 %v467, %v540
    %v542 = vpop.f32.mrb[0].mxu0
    %543 = vmatprep.mubr.f32.mxu0 0.0
    %544 = vmatmul.mubr.f32.gmra.mrb[0].mxu0 %v283
    %v545 = vpop.f32.mrb[0].mxu0
    %v546 = vadd.f32 %v467, %v545
    %v547 = vpop.f32.mrb[0].mxu0
    %548 = vmatprep.mubr.f32.mxu0 0.0
    %549 = vmatmul.mubr.f32.gmra.mrb[0].mxu0 %v286
    %v550 = vpop.f32.mrb[0].mxu0
    %v551 = vadd.f32 %v467, %v550
    %v552 = vpop.f32.mrb[0].mxu0
    %553 = vmatprep.mubr.f32.mxu0 0.0
    %554 = vmatmul.mubr.f32.gmra.mrb[0].mxu0 %v289
    %v555 = vpop.f32.mrb[0].mxu0
    %v556 = vadd.f32 %v467, %v555
    %v557 = vpop.f32.mrb[0].mxu0
    %558 = vmatprep.mubr.f32.mxu0 0.0
    %559 = vmatmul.mubr.f32.gmra.mrb[0].mxu0 %v292
    %v560 = vpop.f32.mrb[0].mxu0
    %v561 = vadd.f32 %v467, %v560
    %v562 = vpop.f32.mrb[0].mxu0
    %563 = vmatprep.mubr.f32.mxu0 0.0
    %564 = vmatmul.mubr.f32.gmra.mrb[0].mxu0 %v295
    %v565 = vpop.f32.mrb[0].mxu0
    %v566 = vadd.f32 %v467, %v565
    %v567 = vpop.f32.mrb[0].mxu0
    %568 = vmatprep.mubr.f32.mxu0 0.0
    %569 = vmatmul.mubr.f32.gmra.mrb[0].mxu0 %v298
    %v570 = vpop.f32.mrb[0].mxu0
    %v571 = vadd.f32 %v467, %v570
    %v572 = vpop.f32.mrb[0].mxu0
    %573 = vmatprep.mubr.f32.mxu0 0.0
    %574 = vmatmul.mubr.f32.gmra.mrb[0].mxu0 %v301
    %v575 = vpop.f32.mrb[0].mxu0
    %v576 = vadd.f32 %v467, %v575
    %v577 = vpop.f32.mrb[0].mxu0
    %578 = vmatprep.mubr.f32.mxu0 0.0
    %579 = vmatmul.mubr.f32.gmra.mrb[0].mxu0 %v304
    %v580 = vpop.f32.mrb[0].mxu0
    %v581 = vadd.f32 %v467, %v580
    %v582 = vpop.f32.mrb[0].mxu0
    %583 = vmatprep.mubr.f32.mxu0 0.0
    %584 = vmatmul.mubr.f32.gmra.mrb[0].mxu0 %v307
    %v585 = vpop.f32.mrb[0].mxu0
    %v586 = vadd.f32 %v467, %v585
    %v587 = vpop.f32.mrb[0].mxu0
    %588 = vmatprep.mubr.f32.mxu0 0.0
    %589 = vmatmul.mubr.f32.gmra.mrb[0].mxu0 %v310
    %v590 = vpop.f32.mrb[0].mxu0
    %v591 = vadd.f32 %v467, %v590
    %v592 = vpop.f32.mrb[0].mxu0
    %593 = vmatprep.mubr.f32.mxu0 0.0
    %594 = vmatmul.mubr.f32.gmra.mrb[0].mxu0 %v313
    %v595 = vpop.f32.mrb[0].mxu0
    %v596 = vadd.f32 %v467, %v595
    %v597 = vpop.f32.mrb[0].mxu0
    %598 = vdwg.mxu0
    %599 = vst.msk [vmem:[#allocation3] sm:$0xff] %vm275, %v536
    %600 = vst.msk [vmem:[#allocation3 + $0x8] sm:$0xff] %vm275, %v541
    %601 = vst.msk [vmem:[#allocation3 + $0x10] sm:$0xff] %vm275, %v546
    %602 = vst.msk [vmem:[#allocation3 + $0x18] sm:$0xff] %vm275, %v551
    %603 = vst.msk [vmem:[#allocation3 + $0x20] sm:$0xff] %vm275, %v556
    %604 = vst.msk [vmem:[#allocation3 + $0x28] sm:$0xff] %vm275, %v561
    %605 = vst.msk [vmem:[#allocation3 + $0x30] sm:$0xff] %vm275, %v566
    %606 = vst.msk [vmem:[#allocation3 + $0x38] sm:$0xff] %vm275, %v571
    %607 = vst.msk [vmem:[#allocation3 + $0x40] sm:$0xff] %vm275, %v576
    %608 = vst.msk [vmem:[#allocation3 + $0x48] sm:$0xff] %vm275, %v581
    %609 = vst.msk [vmem:[#allocation3 + $0x50] sm:$0xff] %vm275, %v586
    %610 = vst.msk [vmem:[#allocation3 + $0x58] sm:$0xff] %vm275, %v591
    %611 = vst.msk [vmem:[#allocation3 + $0x60] sm:$0xff] %vm275, %v596
    %s612 = scalar_lea.vmem %s3, 32
    %v613 = vld [vmem:[%s612] sm:$0xff]
    %v614 = vld [vmem:[%s612 + $0x8] sm:$0xff]
    %s615 = scalar_lea.vmem %s5, 2
    %v616 = vld [vmem:[%s615] sm:$0x1]
    %v618 = vlaneseq
    %v619 = vshrl.u32 %v618, 7
    %v620 = vsub.s32 0, %v619
    %v621 = vrot.slane %v616, %v620
    %623 = vmatprep.subr.mxu0 0.0
    %624 = vmatpush1.msra.mxu0 %v613
    %625 = vmatprep.subr.mxu0 0.0
    %626 = vmatpush1.msra.mxu0 %v614
    %627 = vmatprep.subr.mxu0 0.0
    %628 = vmatpush1.msra.mxu0 0.0
    %629 = vmatprep.subr.mxu0 0.0
    %630 = vmatpush1.msra.mxu0 0.0
    %631 = vmatprep.subr.mxu0 0.0
    %632 = vmatpush1.msra.mxu0 0.0
    %633 = vmatprep.subr.mxu0 0.0
    %634 = vmatpush1.msra.mxu0 0.0
    %635 = vmatprep.subr.mxu0 0.0
    %636 = vmatpush1.msra.mxu0 0.0
    %637 = vmatprep.subr.mxu0 0.0
    %638 = vmatpush1.msra.mxu0 0.0
    %639 = vmatprep.subr.mxu0 0.0
    %640 = vmatpush1.msra.mxu0 0.0
    %641 = vmatprep.subr.mxu0 0.0
    %642 = vmatpush1.msra.mxu0 0.0
    %643 = vmatprep.subr.mxu0 0.0
    %644 = vmatpush1.msra.mxu0 0.0
    %645 = vmatprep.subr.mxu0 0.0
    %646 = vmatpush1.msra.mxu0 0.0
    %647 = vmatprep.subr.mxu0 0.0
    %648 = vmatpush1.msra.mxu0 0.0
    %649 = vmatprep.subr.mxu0 0.0
    %650 = vmatpush1.msra.mxu0 0.0
    %651 = vmatprep.subr.mxu0 0.0
    %652 = vmatpush1.msra.mxu0 0.0
    %653 = vmatprep.subr.mxu0 0.0
    %654 = vmatpush1.msra.mxu0 0.0
    %655 = vmatprep.subr.mxu0 0.0
    %656 = vmatpush1.msra.mxu0 0.0
    %657 = vmatprep.subr.mxu0 0.0
    %658 = vmatpush1.msra.mxu0 0.0
    %659 = vmatprep.subr.mxu0 0.0
    %660 = vmatpush1.msra.mxu0 0.0
    %661 = vmatprep.subr.mxu0 0.0
    %662 = vmatpush1.msra.mxu0 0.0
    %663 = vmatprep.subr.mxu0 0.0
    %664 = vmatpush1.msra.mxu0 0.0
    %665 = vmatprep.subr.mxu0 0.0
    %666 = vmatpush1.msra.mxu0 0.0
    %667 = vmatprep.subr.mxu0 0.0
    %668 = vmatpush1.msra.mxu0 0.0
    %669 = vmatprep.subr.mxu0 0.0
    %670 = vmatpush1.msra.mxu0 0.0
    %671 = vmatprep.subr.mxu0 0.0
    %672 = vmatpush1.msra.mxu0 0.0
    %673 = vmatprep.subr.mxu0 0.0
    %674 = vmatpush1.msra.mxu0 0.0
    %675 = vmatprep.subr.mxu0 0.0
    %676 = vmatpush1.msra.mxu0 0.0
    %677 = vmatprep.subr.mxu0 0.0
    %678 = vmatpush1.msra.mxu0 0.0
    %679 = vmatprep.subr.mxu0 0.0
    %680 = vmatpush1.msra.mxu0 0.0
    %681 = vmatprep.subr.mxu0 0.0
    %682 = vmatpush1.msra.mxu0 0.0
    %683 = vmatprep.subr.mxu0 0.0
    %684 = vmatpush1.msra.mxu0 0.0
    %685 = vmatprep.subr.mxu0 0.0
    %686 = vmatpush1.msra.mxu0 0.0
    %687 = vmatprep.mubr.f32.mxu0 0.0
    %688 = vmatmul.mubr.f32.gmra.mrb[0].mxu0 %v277
    %v689 = vpop.f32.mrb[0].mxu0
    %v690 = vadd.f32 %v621, %v689
    %v691 = vpop.f32.mrb[0].mxu0
    %692 = vmatprep.mubr.f32.mxu0 0.0
    %693 = vmatmul.mubr.f32.gmra.mrb[0].mxu0 %v280
    %v694 = vpop.f32.mrb[0].mxu0
    %v695 = vadd.f32 %v621, %v694
    %v696 = vpop.f32.mrb[0].mxu0
    %697 = vmatprep.mubr.f32.mxu0 0.0
    %698 = vmatmul.mubr.f32.gmra.mrb[0].mxu0 %v283
    %v699 = vpop.f32.mrb[0].mxu0
    %v700 = vadd.f32 %v621, %v699
    %v701 = vpop.f32.mrb[0].mxu0
    %702 = vmatprep.mubr.f32.mxu0 0.0
    %703 = vmatmul.mubr.f32.gmra.mrb[0].mxu0 %v286
    %v704 = vpop.f32.mrb[0].mxu0
    %v705 = vadd.f32 %v621, %v704
    %v706 = vpop.f32.mrb[0].mxu0
    %707 = vmatprep.mubr.f32.mxu0 0.0
    %708 = vmatmul.mubr.f32.gmra.mrb[0].mxu0 %v289
    %v709 = vpop.f32.mrb[0].mxu0
    %v710 = vadd.f32 %v621, %v709
    %v711 = vpop.f32.mrb[0].mxu0
    %712 = vmatprep.mubr.f32.mxu0 0.0
    %713 = vmatmul.mubr.f32.gmra.mrb[0].mxu0 %v292
    %v714 = vpop.f32.mrb[0].mxu0
    %v715 = vadd.f32 %v621, %v714
    %v716 = vpop.f32.mrb[0].mxu0
    %717 = vmatprep.mubr.f32.mxu0 0.0
    %718 = vmatmul.mubr.f32.gmra.mrb[0].mxu0 %v295
    %v719 = vpop.f32.mrb[0].mxu0
    %v720 = vadd.f32 %v621, %v719
    %v721 = vpop.f32.mrb[0].mxu0
    %722 = vmatprep.mubr.f32.mxu0 0.0
    %723 = vmatmul.mubr.f32.gmra.mrb[0].mxu0 %v298
    %v724 = vpop.f32.mrb[0].mxu0
    %v725 = vadd.f32 %v621, %v724
    %v726 = vpop.f32.mrb[0].mxu0
    %727 = vmatprep.mubr.f32.mxu0 0.0
    %728 = vmatmul.mubr.f32.gmra.mrb[0].mxu0 %v301
    %v729 = vpop.f32.mrb[0].mxu0
    %v730 = vadd.f32 %v621, %v729
    %v731 = vpop.f32.mrb[0].mxu0
    %732 = vmatprep.mubr.f32.mxu0 0.0
    %733 = vmatmul.mubr.f32.gmra.mrb[0].mxu0 %v304
    %v734 = vpop.f32.mrb[0].mxu0
    %v735 = vadd.f32 %v621, %v734
    %v736 = vpop.f32.mrb[0].mxu0
    %737 = vmatprep.mubr.f32.mxu0 0.0
    %738 = vmatmul.mubr.f32.gmra.mrb[0].mxu0 %v307
    %v739 = vpop.f32.mrb[0].mxu0
    %v740 = vadd.f32 %v621, %v739
    %v741 = vpop.f32.mrb[0].mxu0
    %742 = vmatprep.mubr.f32.mxu0 0.0
    %743 = vmatmul.mubr.f32.gmra.mrb[0].mxu0 %v310
    %v744 = vpop.f32.mrb[0].mxu0
    %v745 = vadd.f32 %v621, %v744
    %v746 = vpop.f32.mrb[0].mxu0
    %747 = vmatprep.mubr.f32.mxu0 0.0
    %748 = vmatmul.mubr.f32.gmra.mrb[0].mxu0 %v313
    %v749 = vpop.f32.mrb[0].mxu0
    %v750 = vadd.f32 %v621, %v749
    %v751 = vpop.f32.mrb[0].mxu0
    %752 = vdwg.mxu0
    %753 = vst.msk [vmem:[#allocation4] sm:$0xff] %vm275, %v690
    %754 = vst.msk [vmem:[#allocation4 + $0x8] sm:$0xff] %vm275, %v695
    %755 = vst.msk [vmem:[#allocation4 + $0x10] sm:$0xff] %vm275, %v700
    %756 = vst.msk [vmem:[#allocation4 + $0x18] sm:$0xff] %vm275, %v705
    %757 = vst.msk [vmem:[#allocation4 + $0x20] sm:$0xff] %vm275, %v710
    %758 = vst.msk [vmem:[#allocation4 + $0x28] sm:$0xff] %vm275, %v715
    %759 = vst.msk [vmem:[#allocation4 + $0x30] sm:$0xff] %vm275, %v720
    %760 = vst.msk [vmem:[#allocation4 + $0x38] sm:$0xff] %vm275, %v725
    %761 = vst.msk [vmem:[#allocation4 + $0x40] sm:$0xff] %vm275, %v730
    %762 = vst.msk [vmem:[#allocation4 + $0x48] sm:$0xff] %vm275, %v735
    %763 = vst.msk [vmem:[#allocation4 + $0x50] sm:$0xff] %vm275, %v740
    %764 = vst.msk [vmem:[#allocation4 + $0x58] sm:$0xff] %vm275, %v745
    %765 = vst.msk [vmem:[#allocation4 + $0x60] sm:$0xff] %vm275, %v750
    %v766 = vld [vmem:[%s7] sm:$0xff]
    %v767 = vld [vmem:[%s7 + $0x8] sm:$0xff]
    %v768 = vld [vmem:[%s9] sm:$0x1]
    %v770 = vlaneseq
    %v771 = vshrl.u32 %v770, 7
    %v772 = vsub.s32 0, %v771
    %v773 = vrot.slane %v768, %v772
    %775 = vmatprep.subr.mxu0 0.0
    %776 = vmatpush1.msra.mxu0 %v766
    %777 = vmatprep.subr.mxu0 0.0
    %778 = vmatpush1.msra.mxu0 %v767
    %779 = vmatprep.subr.mxu0 0.0
    %780 = vmatpush1.msra.mxu0 0.0
    %781 = vmatprep.subr.mxu0 0.0
    %782 = vmatpush1.msra.mxu0 0.0
    %783 = vmatprep.subr.mxu0 0.0
    %784 = vmatpush1.msra.mxu0 0.0
    %785 = vmatprep.subr.mxu0 0.0
    %786 = vmatpush1.msra.mxu0 0.0
    %787 = vmatprep.subr.mxu0 0.0
    %788 = vmatpush1.msra.mxu0 0.0
    %789 = vmatprep.subr.mxu0 0.0
    %790 = vmatpush1.msra.mxu0 0.0
    %791 = vmatprep.subr.mxu0 0.0
    %792 = vmatpush1.msra.mxu0 0.0
    %793 = vmatprep.subr.mxu0 0.0
    %794 = vmatpush1.msra.mxu0 0.0
    %795 = vmatprep.subr.mxu0 0.0
    %796 = vmatpush1.msra.mxu0 0.0
    %797 = vmatprep.subr.mxu0 0.0
    %798 = vmatpush1.msra.mxu0 0.0
    %799 = vmatprep.subr.mxu0 0.0
    %800 = vmatpush1.msra.mxu0 0.0
    %801 = vmatprep.subr.mxu0 0.0
    %802 = vmatpush1.msra.mxu0 0.0
    %803 = vmatprep.subr.mxu0 0.0
    %804 = vmatpush1.msra.mxu0 0.0
    %805 = vmatprep.subr.mxu0 0.0
    %806 = vmatpush1.msra.mxu0 0.0
    %807 = vmatprep.subr.mxu0 0.0
    %808 = vmatpush1.msra.mxu0 0.0
    %809 = vmatprep.subr.mxu0 0.0
    %810 = vmatpush1.msra.mxu0 0.0
    %811 = vmatprep.subr.mxu0 0.0
    %812 = vmatpush1.msra.mxu0 0.0
    %813 = vmatprep.subr.mxu0 0.0
    %814 = vmatpush1.msra.mxu0 0.0
    %815 = vmatprep.subr.mxu0 0.0
    %816 = vmatpush1.msra.mxu0 0.0
    %817 = vmatprep.subr.mxu0 0.0
    %818 = vmatpush1.msra.mxu0 0.0
    %819 = vmatprep.subr.mxu0 0.0
    %820 = vmatpush1.msra.mxu0 0.0
    %821 = vmatprep.subr.mxu0 0.0
    %822 = vmatpush1.msra.mxu0 0.0
    %823 = vmatprep.subr.mxu0 0.0
    %824 = vmatpush1.msra.mxu0 0.0
    %825 = vmatprep.subr.mxu0 0.0
    %826 = vmatpush1.msra.mxu0 0.0
    %827 = vmatprep.subr.mxu0 0.0
    %828 = vmatpush1.msra.mxu0 0.0
    %829 = vmatprep.subr.mxu0 0.0
    %830 = vmatpush1.msra.mxu0 0.0
    %831 = vmatprep.subr.mxu0 0.0
    %832 = vmatpush1.msra.mxu0 0.0
    %833 = vmatprep.subr.mxu0 0.0
    %834 = vmatpush1.msra.mxu0 0.0
    %835 = vmatprep.subr.mxu0 0.0
    %836 = vmatpush1.msra.mxu0 0.0
    %837 = vmatprep.subr.mxu0 0.0
    %838 = vmatpush1.msra.mxu0 0.0
    %839 = vmatprep.mubr.f32.mxu0 0.0
    %840 = vmatmul.mubr.f32.gmra.mrb[0].mxu0 %v280
    %v841 = vpop.f32.mrb[0].mxu0
    %v842 = vadd.f32 %v773, %v841
    %v843 = vpop.f32.mrb[0].mxu0
    %844 = vmatprep.mubr.f32.mxu0 0.0
    %845 = vmatmul.mubr.f32.gmra.mrb[0].mxu0 %v283
    %v846 = vpop.f32.mrb[0].mxu0
    %v847 = vadd.f32 %v773, %v846
    %v848 = vpop.f32.mrb[0].mxu0
    %849 = vmatprep.mubr.f32.mxu0 0.0
    %850 = vmatmul.mubr.f32.gmra.mrb[0].mxu0 %v286
    %v851 = vpop.f32.mrb[0].mxu0
    %v852 = vadd.f32 %v773, %v851
    %v853 = vpop.f32.mrb[0].mxu0
    %854 = vmatprep.mubr.f32.mxu0 0.0
    %855 = vmatmul.mubr.f32.gmra.mrb[0].mxu0 %v289
    %v856 = vpop.f32.mrb[0].mxu0
    %v857 = vadd.f32 %v773, %v856
    %v858 = vpop.f32.mrb[0].mxu0
    %859 = vmatprep.mubr.f32.mxu0 0.0
    %860 = vmatmul.mubr.f32.gmra.mrb[0].mxu0 %v292
    %v861 = vpop.f32.mrb[0].mxu0
    %v862 = vadd.f32 %v773, %v861
    %v863 = vpop.f32.mrb[0].mxu0
    %864 = vmatprep.mubr.f32.mxu0 0.0
    %865 = vmatmul.mubr.f32.gmra.mrb[0].mxu0 %v295
    %v866 = vpop.f32.mrb[0].mxu0
    %v867 = vadd.f32 %v773, %v866
    %v868 = vpop.f32.mrb[0].mxu0
    %869 = vmatprep.mubr.f32.mxu0 0.0
    %870 = vmatmul.mubr.f32.gmra.mrb[0].mxu0 %v298
    %v871 = vpop.f32.mrb[0].mxu0
    %v872 = vadd.f32 %v773, %v871
    %v873 = vpop.f32.mrb[0].mxu0
    %874 = vmatprep.mubr.f32.mxu0 0.0
    %875 = vmatmul.mubr.f32.gmra.mrb[0].mxu0 %v301
    %v876 = vpop.f32.mrb[0].mxu0
    %v877 = vadd.f32 %v773, %v876
    %v878 = vpop.f32.mrb[0].mxu0
    %879 = vmatprep.mubr.f32.mxu0 0.0
    %880 = vmatmul.mubr.f32.gmra.mrb[0].mxu0 %v304
    %v881 = vpop.f32.mrb[0].mxu0
    %v882 = vadd.f32 %v773, %v881
    %v883 = vpop.f32.mrb[0].mxu0
    %884 = vmatprep.mubr.f32.mxu0 0.0
    %885 = vmatmul.mubr.f32.gmra.mrb[0].mxu0 %v307
    %v886 = vpop.f32.mrb[0].mxu0
    %v887 = vadd.f32 %v773, %v886
    %v888 = vpop.f32.mrb[0].mxu0
    %889 = vmatprep.mubr.f32.mxu0 0.0
    %890 = vmatmul.mubr.f32.gmra.mrb[0].mxu0 %v310
    %v891 = vpop.f32.mrb[0].mxu0
    %v892 = vadd.f32 %v773, %v891
    %v893 = vpop.f32.mrb[0].mxu0
    %894 = vmatprep.mubr.f32.mxu0 0.0
    %895 = vmatmul.mubr.f32.gmra.mrb[0].mxu0 %v313
    %v896 = vpop.f32.mrb[0].mxu0
    %v897 = vadd.f32 %v773, %v896
    %v898 = vpop.f32.mrb[0].mxu0
    %899 = vdwg.mxu0
    %vm900 = vcmask 64512
    %901 = vst.msk [vmem:[#allocation5] sm:$0xff] %vm900, %v842
    %902 = vst.msk [vmem:[#allocation5 + $0x8] sm:$0xff] %vm900, %v847
    %903 = vst.msk [vmem:[#allocation5 + $0x10] sm:$0xff] %vm900, %v852
    %904 = vst.msk [vmem:[#allocation5 + $0x18] sm:$0xff] %vm900, %v857
    %905 = vst.msk [vmem:[#allocation5 + $0x20] sm:$0xff] %vm900, %v862
    %906 = vst.msk [vmem:[#allocation5 + $0x28] sm:$0xff] %vm900, %v867
    %907 = vst.msk [vmem:[#allocation5 + $0x30] sm:$0xff] %vm900, %v872
    %908 = vst.msk [vmem:[#allocation5 + $0x38] sm:$0xff] %vm900, %v877
    %909 = vst.msk [vmem:[#allocation5 + $0x40] sm:$0xff] %vm900, %v882
    %910 = vst.msk [vmem:[#allocation5 + $0x48] sm:$0xff] %vm900, %v887
    %911 = vst.msk [vmem:[#allocation5 + $0x50] sm:$0xff] %vm900, %v892
    %912 = vst.msk [vmem:[#allocation5 + $0x58] sm:$0xff] %vm900, %v897
    %s913 = scalar_lea.vmem %s7, 16
    %v914 = vld [vmem:[%s913] sm:$0xff]
    %v915 = vld [vmem:[%s913 + $0x8] sm:$0xff]
    %s916 = scalar_lea.vmem %s9, 1
    %v917 = vld [vmem:[%s916] sm:$0x1]
    %v919 = vlaneseq
    %v920 = vshrl.u32 %v919, 7
    %v921 = vsub.s32 0, %v920
    %v922 = vrot.slane %v917, %v921
    %924 = vmatprep.subr.mxu0 0.0
    %925 = vmatpush1.msra.mxu0 %v914
    %926 = vmatprep.subr.mxu0 0.0
    %927 = vmatpush1.msra.mxu0 %v915
    %928 = vmatprep.subr.mxu0 0.0
    %929 = vmatpush1.msra.mxu0 0.0
    %930 = vmatprep.subr.mxu0 0.0
    %931 = vmatpush1.msra.mxu0 0.0
    %932 = vmatprep.subr.mxu0 0.0
    %933 = vmatpush1.msra.mxu0 0.0
    %934 = vmatprep.subr.mxu0 0.0
    %935 = vmatpush1.msra.mxu0 0.0
    %936 = vmatprep.subr.mxu0 0.0
    %937 = vmatpush1.msra.mxu0 0.0
    %938 = vmatprep.subr.mxu0 0.0
    %939 = vmatpush1.msra.mxu0 0.0
    %940 = vmatprep.subr.mxu0 0.0
    %941 = vmatpush1.msra.mxu0 0.0
    %942 = vmatprep.subr.mxu0 0.0
    %943 = vmatpush1.msra.mxu0 0.0
    %944 = vmatprep.subr.mxu0 0.0
    %945 = vmatpush1.msra.mxu0 0.0
    %946 = vmatprep.subr.mxu0 0.0
    %947 = vmatpush1.msra.mxu0 0.0
    %948 = vmatprep.subr.mxu0 0.0
    %949 = vmatpush1.msra.mxu0 0.0
    %950 = vmatprep.subr.mxu0 0.0
    %951 = vmatpush1.msra.mxu0 0.0
    %952 = vmatprep.subr.mxu0 0.0
    %953 = vmatpush1.msra.mxu0 0.0
    %954 = vmatprep.subr.mxu0 0.0
    %955 = vmatpush1.msra.mxu0 0.0
    %956 = vmatprep.subr.mxu0 0.0
    %957 = vmatpush1.msra.mxu0 0.0
    %958 = vmatprep.subr.mxu0 0.0
    %959 = vmatpush1.msra.mxu0 0.0
    %960 = vmatprep.subr.mxu0 0.0
    %961 = vmatpush1.msra.mxu0 0.0
    %962 = vmatprep.subr.mxu0 0.0
    %963 = vmatpush1.msra.mxu0 0.0
    %964 = vmatprep.subr.mxu0 0.0
    %965 = vmatpush1.msra.mxu0 0.0
    %966 = vmatprep.subr.mxu0 0.0
    %967 = vmatpush1.msra.mxu0 0.0
    %968 = vmatprep.subr.mxu0 0.0
    %969 = vmatpush1.msra.mxu0 0.0
    %970 = vmatprep.subr.mxu0 0.0
    %971 = vmatpush1.msra.mxu0 0.0
    %972 = vmatprep.subr.mxu0 0.0
    %973 = vmatpush1.msra.mxu0 0.0
    %974 = vmatprep.subr.mxu0 0.0
    %975 = vmatpush1.msra.mxu0 0.0
    %976 = vmatprep.subr.mxu0 0.0
    %977 = vmatpush1.msra.mxu0 0.0
    %978 = vmatprep.subr.mxu0 0.0
    %979 = vmatpush1.msra.mxu0 0.0
    %980 = vmatprep.subr.mxu0 0.0
    %981 = vmatpush1.msra.mxu0 0.0
    %982 = vmatprep.subr.mxu0 0.0
    %983 = vmatpush1.msra.mxu0 0.0
    %984 = vmatprep.subr.mxu0 0.0
    %985 = vmatpush1.msra.mxu0 0.0
    %986 = vmatprep.subr.mxu0 0.0
    %987 = vmatpush1.msra.mxu0 0.0
    %988 = vmatprep.mubr.f32.mxu0 0.0
    %989 = vmatmul.mubr.f32.gmra.mrb[0].mxu0 %v280
    %v990 = vpop.f32.mrb[0].mxu0
    %v991 = vadd.f32 %v922, %v990
    %v992 = vpop.f32.mrb[0].mxu0
    %993 = vmatprep.mubr.f32.mxu0 0.0
    %994 = vmatmul.mubr.f32.gmra.mrb[0].mxu0 %v283
    %v995 = vpop.f32.mrb[0].mxu0
    %v996 = vadd.f32 %v922, %v995
    %v997 = vpop.f32.mrb[0].mxu0
    %998 = vmatprep.mubr.f32.mxu0 0.0
    %999 = vmatmul.mubr.f32.gmra.mrb[0].mxu0 %v286
    %v1000 = vpop.f32.mrb[0].mxu0
    %v1001 = vadd.f32 %v922, %v1000
    %v1002 = vpop.f32.mrb[0].mxu0
    %1003 = vmatprep.mubr.f32.mxu0 0.0
    %1004 = vmatmul.mubr.f32.gmra.mrb[0].mxu0 %v289
    %v1005 = vpop.f32.mrb[0].mxu0
    %v1006 = vadd.f32 %v922, %v1005
    %v1007 = vpop.f32.mrb[0].mxu0
    %1008 = vmatprep.mubr.f32.mxu0 0.0
    %1009 = vmatmul.mubr.f32.gmra.mrb[0].mxu0 %v292
    %v1010 = vpop.f32.mrb[0].mxu0
    %v1011 = vadd.f32 %v922, %v1010
    %v1012 = vpop.f32.mrb[0].mxu0
    %1013 = vmatprep.mubr.f32.mxu0 0.0
    %1014 = vmatmul.mubr.f32.gmra.mrb[0].mxu0 %v295
    %v1015 = vpop.f32.mrb[0].mxu0
    %v1016 = vadd.f32 %v922, %v1015
    %v1017 = vpop.f32.mrb[0].mxu0
    %1018 = vmatprep.mubr.f32.mxu0 0.0
    %1019 = vmatmul.mubr.f32.gmra.mrb[0].mxu0 %v298
    %v1020 = vpop.f32.mrb[0].mxu0
    %v1021 = vadd.f32 %v922, %v1020
    %v1022 = vpop.f32.mrb[0].mxu0
    %1023 = vmatprep.mubr.f32.mxu0 0.0
    %1024 = vmatmul.mubr.f32.gmra.mrb[0].mxu0 %v301
    %v1025 = vpop.f32.mrb[0].mxu0
    %v1026 = vadd.f32 %v922, %v1025
    %v1027 = vpop.f32.mrb[0].mxu0
    %1028 = vmatprep.mubr.f32.mxu0 0.0
    %1029 = vmatmul.mubr.f32.gmra.mrb[0].mxu0 %v304
    %v1030 = vpop.f32.mrb[0].mxu0
    %v1031 = vadd.f32 %v922, %v1030
    %v1032 = vpop.f32.mrb[0].mxu0
    %1033 = vmatprep.mubr.f32.mxu0 0.0
    %1034 = vmatmul.mubr.f32.gmra.mrb[0].mxu0 %v307
    %v1035 = vpop.f32.mrb[0].mxu0
    %v1036 = vadd.f32 %v922, %v1035
    %v1037 = vpop.f32.mrb[0].mxu0
    %1038 = vmatprep.mubr.f32.mxu0 0.0
    %1039 = vmatmul.mubr.f32.gmra.mrb[0].mxu0 %v310
    %v1040 = vpop.f32.mrb[0].mxu0
    %v1041 = vadd.f32 %v922, %v1040
    %v1042 = vpop.f32.mrb[0].mxu0
    %1043 = vmatprep.mubr.f32.mxu0 0.0
    %1044 = vmatmul.mubr.f32.gmra.mrb[0].mxu0 %v313
    %v1045 = vpop.f32.mrb[0].mxu0
    %v1046 = vadd.f32 %v922, %v1045
    %v1047 = vpop.f32.mrb[0].mxu0
    %1048 = vdwg.mxu0
    %1049 = vst.msk [vmem:[#allocation6] sm:$0xff] %vm900, %v991
    %1050 = vst.msk [vmem:[#allocation6 + $0x8] sm:$0xff] %vm900, %v996
    %1051 = vst.msk [vmem:[#allocation6 + $0x10] sm:$0xff] %vm900, %v1001
    %1052 = vst.msk [vmem:[#allocation6 + $0x18] sm:$0xff] %vm900, %v1006
    %1053 = vst.msk [vmem:[#allocation6 + $0x20] sm:$0xff] %vm900, %v1011
    %1054 = vst.msk [vmem:[#allocation6 + $0x28] sm:$0xff] %vm900, %v1016
    %1055 = vst.msk [vmem:[#allocation6 + $0x30] sm:$0xff] %vm900, %v1021
    %1056 = vst.msk [vmem:[#allocation6 + $0x38] sm:$0xff] %vm900, %v1026
    %1057 = vst.msk [vmem:[#allocation6 + $0x40] sm:$0xff] %vm900, %v1031
    %1058 = vst.msk [vmem:[#allocation6 + $0x48] sm:$0xff] %vm900, %v1036
    %1059 = vst.msk [vmem:[#allocation6 + $0x50] sm:$0xff] %vm900, %v1041
    %1060 = vst.msk [vmem:[#allocation6 + $0x58] sm:$0xff] %vm900, %v1046
    %s1061 = scalar_lea.vmem %s7, 32
    %v1062 = vld [vmem:[%s1061] sm:$0xff]
    %v1063 = vld [vmem:[%s1061 + $0x8] sm:$0xff]
    %s1064 = scalar_lea.vmem %s9, 2
    %v1065 = vld [vmem:[%s1064] sm:$0x1]
    %v1067 = vlaneseq
    %v1068 = vshrl.u32 %v1067, 7
    %v1069 = vsub.s32 0, %v1068
    %v1070 = vrot.slane %v1065, %v1069
    %1072 = vmatprep.subr.mxu0 0.0
    %1073 = vmatpush1.msra.mxu0 %v1062
    %1074 = vmatprep.subr.mxu0 0.0
    %1075 = vmatpush1.msra.mxu0 %v1063
    %1076 = vmatprep.subr.mxu0 0.0
    %1077 = vmatpush1.msra.mxu0 0.0
    %1078 = vmatprep.subr.mxu0 0.0
    %1079 = vmatpush1.msra.mxu0 0.0
    %1080 = vmatprep.subr.mxu0 0.0
    %1081 = vmatpush1.msra.mxu0 0.0
    %1082 = vmatprep.subr.mxu0 0.0
    %1083 = vmatpush1.msra.mxu0 0.0
    %1084 = vmatprep.subr.mxu0 0.0
    %1085 = vmatpush1.msra.mxu0 0.0
    %1086 = vmatprep.subr.mxu0 0.0
    %1087 = vmatpush1.msra.mxu0 0.0
    %1088 = vmatprep.subr.mxu0 0.0
    %1089 = vmatpush1.msra.mxu0 0.0
    %1090 = vmatprep.subr.mxu0 0.0
    %1091 = vmatpush1.msra.mxu0 0.0
    %1092 = vmatprep.subr.mxu0 0.0
    %1093 = vmatpush1.msra.mxu0 0.0
    %1094 = vmatprep.subr.mxu0 0.0
    %1095 = vmatpush1.msra.mxu0 0.0
    %1096 = vmatprep.subr.mxu0 0.0
    %1097 = vmatpush1.msra.mxu0 0.0
    %1098 = vmatprep.subr.mxu0 0.0
    %1099 = vmatpush1.msra.mxu0 0.0
    %1100 = vmatprep.subr.mxu0 0.0
    %1101 = vmatpush1.msra.mxu0 0.0
    %1102 = vmatprep.subr.mxu0 0.0
    %1103 = vmatpush1.msra.mxu0 0.0
    %1104 = vmatprep.subr.mxu0 0.0
    %1105 = vmatpush1.msra.mxu0 0.0
    %1106 = vmatprep.subr.mxu0 0.0
    %1107 = vmatpush1.msra.mxu0 0.0
    %1108 = vmatprep.subr.mxu0 0.0
    %1109 = vmatpush1.msra.mxu0 0.0
    %1110 = vmatprep.subr.mxu0 0.0
    %1111 = vmatpush1.msra.mxu0 0.0
    %1112 = vmatprep.subr.mxu0 0.0
    %1113 = vmatpush1.msra.mxu0 0.0
    %1114 = vmatprep.subr.mxu0 0.0
    %1115 = vmatpush1.msra.mxu0 0.0
    %1116 = vmatprep.subr.mxu0 0.0
    %1117 = vmatpush1.msra.mxu0 0.0
    %1118 = vmatprep.subr.mxu0 0.0
    %1119 = vmatpush1.msra.mxu0 0.0
    %1120 = vmatprep.subr.mxu0 0.0
    %1121 = vmatpush1.msra.mxu0 0.0
    %1122 = vmatprep.subr.mxu0 0.0
    %1123 = vmatpush1.msra.mxu0 0.0
    %1124 = vmatprep.subr.mxu0 0.0
    %1125 = vmatpush1.msra.mxu0 0.0
    %1126 = vmatprep.subr.mxu0 0.0
    %1127 = vmatpush1.msra.mxu0 0.0
    %1128 = vmatprep.subr.mxu0 0.0
    %1129 = vmatpush1.msra.mxu0 0.0
    %1130 = vmatprep.subr.mxu0 0.0
    %1131 = vmatpush1.msra.mxu0 0.0
    %1132 = vmatprep.subr.mxu0 0.0
    %1133 = vmatpush1.msra.mxu0 0.0
    %1134 = vmatprep.subr.mxu0 0.0
    %1135 = vmatpush1.msra.mxu0 0.0
    %1136 = vmatprep.mubr.f32.mxu0 0.0
    %1137 = vmatmul.mubr.f32.gmra.mrb[0].mxu0 %v280
    %v1138 = vpop.f32.mrb[0].mxu0
    %v1139 = vadd.f32 %v1070, %v1138
    %v1140 = vpop.f32.mrb[0].mxu0
    %1141 = vmatprep.mubr.f32.mxu0 0.0
    %1142 = vmatmul.mubr.f32.gmra.mrb[0].mxu0 %v283
    %v1143 = vpop.f32.mrb[0].mxu0
    %v1144 = vadd.f32 %v1070, %v1143
    %v1145 = vpop.f32.mrb[0].mxu0
    %1146 = vmatprep.mubr.f32.mxu0 0.0
    %1147 = vmatmul.mubr.f32.gmra.mrb[0].mxu0 %v286
    %v1148 = vpop.f32.mrb[0].mxu0
    %v1149 = vadd.f32 %v1070, %v1148
    %v1150 = vpop.f32.mrb[0].mxu0
    %1151 = vmatprep.mubr.f32.mxu0 0.0
    %1152 = vmatmul.mubr.f32.gmra.mrb[0].mxu0 %v289
    %v1153 = vpop.f32.mrb[0].mxu0
    %v1154 = vadd.f32 %v1070, %v1153
    %v1155 = vpop.f32.mrb[0].mxu0
    %1156 = vmatprep.mubr.f32.mxu0 0.0
    %1157 = vmatmul.mubr.f32.gmra.mrb[0].mxu0 %v292
    %v1158 = vpop.f32.mrb[0].mxu0
    %v1159 = vadd.f32 %v1070, %v1158
    %v1160 = vpop.f32.mrb[0].mxu0
    %1161 = vmatprep.mubr.f32.mxu0 0.0
    %1162 = vmatmul.mubr.f32.gmra.mrb[0].mxu0 %v295
    %v1163 = vpop.f32.mrb[0].mxu0
    %v1164 = vadd.f32 %v1070, %v1163
    %v1165 = vpop.f32.mrb[0].mxu0
    %1166 = vmatprep.mubr.f32.mxu0 0.0
    %1167 = vmatmul.mubr.f32.gmra.mrb[0].mxu0 %v298
    %v1168 = vpop.f32.mrb[0].mxu0
    %v1169 = vadd.f32 %v1070, %v1168
    %v1170 = vpop.f32.mrb[0].mxu0
    %1171 = vmatprep.mubr.f32.mxu0 0.0
    %1172 = vmatmul.mubr.f32.gmra.mrb[0].mxu0 %v301
    %v1173 = vpop.f32.mrb[0].mxu0
    %v1174 = vadd.f32 %v1070, %v1173
    %v1175 = vpop.f32.mrb[0].mxu0
    %1176 = vmatprep.mubr.f32.mxu0 0.0
    %1177 = vmatmul.mubr.f32.gmra.mrb[0].mxu0 %v304
    %v1178 = vpop.f32.mrb[0].mxu0
    %v1179 = vadd.f32 %v1070, %v1178
    %v1180 = vpop.f32.mrb[0].mxu0
    %1181 = vmatprep.mubr.f32.mxu0 0.0
    %1182 = vmatmul.mubr.f32.gmra.mrb[0].mxu0 %v307
    %v1183 = vpop.f32.mrb[0].mxu0
    %v1184 = vadd.f32 %v1070, %v1183
    %v1185 = vpop.f32.mrb[0].mxu0
    %1186 = vmatprep.mubr.f32.mxu0 0.0
    %1187 = vmatmul.mubr.f32.gmra.mrb[0].mxu0 %v310
    %v1188 = vpop.f32.mrb[0].mxu0
    %v1189 = vadd.f32 %v1070, %v1188
    %v1190 = vpop.f32.mrb[0].mxu0
    %1191 = vmatprep.mubr.f32.mxu0 0.0
    %1192 = vmatmul.mubr.f32.gmra.mrb[0].mxu0 %v313
    %v1193 = vpop.f32.mrb[0].mxu0
    %v1194 = vadd.f32 %v1070, %v1193
    %v1195 = vpop.f32.mrb[0].mxu0
    %1196 = vdwg.mxu0
    %1197 = vst.msk [vmem:[#allocation7] sm:$0xff] %vm900, %v1139
    %1198 = vst.msk [vmem:[#allocation7 + $0x8] sm:$0xff] %vm900, %v1144
    %1199 = vst.msk [vmem:[#allocation7 + $0x10] sm:$0xff] %vm900, %v1149
    %1200 = vst.msk [vmem:[#allocation7 + $0x18] sm:$0xff] %vm900, %v1154
    %1201 = vst.msk [vmem:[#allocation7 + $0x20] sm:$0xff] %vm900, %v1159
    %1202 = vst.msk [vmem:[#allocation7 + $0x28] sm:$0xff] %vm900, %v1164
    %1203 = vst.msk [vmem:[#allocation7 + $0x30] sm:$0xff] %vm900, %v1169
    %1204 = vst.msk [vmem:[#allocation7 + $0x38] sm:$0xff] %vm900, %v1174
    %1205 = vst.msk [vmem:[#allocation7 + $0x40] sm:$0xff] %vm900, %v1179
    %1206 = vst.msk [vmem:[#allocation7 + $0x48] sm:$0xff] %vm900, %v1184
    %1207 = vst.msk [vmem:[#allocation7 + $0x50] sm:$0xff] %vm900, %v1189
    %1208 = vst.msk [vmem:[#allocation7 + $0x58] sm:$0xff] %vm900, %v1194
    %v1209 = vld [vmem:[%s4] sm:$0xff]
    %v1210 = vld [vmem:[%s4 + $0x8] sm:$0xff]
    %s1211 = scalar_lea.vmem %s4, 16
    %v1212 = vld [vmem:[%s1211] sm:$0xff]
    %v1213 = vld [vmem:[%s1211 + $0x8] sm:$0xff]
    %s1214 = scalar_lea.vmem %s4, 32
    %v1215 = vld [vmem:[%s1214] sm:$0xff]
    %v1216 = vld [vmem:[%s1214 + $0x8] sm:$0xff]
    %v1217 = vld [vmem:[%s6] sm:$0x1]
    %v1219 = vsel %vm275, 0.0, 0
    %1221 = vmatprep.subr.mxu0 0.0
    %1222 = vmatpush1.msra.mxu0 %v1209
    %1223 = vmatprep.subr.mxu0 0.0
    %1224 = vmatpush1.msra.mxu0 %v1210
    %1225 = vmatprep.subr.mxu0 0.0
    %1226 = vmatpush1.msra.mxu0 0.0
    %1227 = vmatprep.subr.mxu0 0.0
    %1228 = vmatpush1.msra.mxu0 0.0
    %1229 = vmatprep.subr.mxu0 0.0
    %1230 = vmatpush1.msra.mxu0 0.0
    %1231 = vmatprep.subr.mxu0 0.0
    %1232 = vmatpush1.msra.mxu0 0.0
    %1233 = vmatprep.subr.mxu0 0.0
    %1234 = vmatpush1.msra.mxu0 0.0
    %1235 = vmatprep.subr.mxu0 0.0
    %1236 = vmatpush1.msra.mxu0 0.0
    %1237 = vmatprep.subr.mxu0 0.0
    %1238 = vmatpush1.msra.mxu0 0.0
    %1239 = vmatprep.subr.mxu0 0.0
    %1240 = vmatpush1.msra.mxu0 0.0
    %1241 = vmatprep.subr.mxu0 0.0
    %1242 = vmatpush1.msra.mxu0 0.0
    %1243 = vmatprep.subr.mxu0 0.0
    %1244 = vmatpush1.msra.mxu0 0.0
    %1245 = vmatprep.subr.mxu0 0.0
    %1246 = vmatpush1.msra.mxu0 0.0
    %1247 = vmatprep.subr.mxu0 0.0
    %1248 = vmatpush1.msra.mxu0 0.0
    %1249 = vmatprep.subr.mxu0 0.0
    %1250 = vmatpush1.msra.mxu0 0.0
    %1251 = vmatprep.subr.mxu0 0.0
    %1252 = vmatpush1.msra.mxu0 0.0
    %1253 = vmatprep.subr.mxu0 0.0
    %1254 = vmatpush1.msra.mxu0 0.0
    %1255 = vmatprep.subr.mxu0 0.0
    %1256 = vmatpush1.msra.mxu0 0.0
    %1257 = vmatprep.subr.mxu0 0.0
    %1258 = vmatpush1.msra.mxu0 0.0
    %1259 = vmatprep.subr.mxu0 0.0
    %1260 = vmatpush1.msra.mxu0 0.0
    %1261 = vmatprep.subr.mxu0 0.0
    %1262 = vmatpush1.msra.mxu0 0.0
    %1263 = vmatprep.subr.mxu0 0.0
    %1264 = vmatpush1.msra.mxu0 0.0
    %1265 = vmatprep.subr.mxu0 0.0
    %1266 = vmatpush1.msra.mxu0 0.0
    %1267 = vmatprep.subr.mxu0 0.0
    %1268 = vmatpush1.msra.mxu0 0.0
    %1269 = vmatprep.subr.mxu0 0.0
    %1270 = vmatpush1.msra.mxu0 0.0
    %1271 = vmatprep.subr.mxu0 0.0
    %1272 = vmatpush1.msra.mxu0 0.0
    %1273 = vmatprep.subr.mxu0 0.0
    %1274 = vmatpush1.msra.mxu0 0.0
    %1275 = vmatprep.subr.mxu0 0.0
    %1276 = vmatpush1.msra.mxu0 0.0
    %1277 = vmatprep.subr.mxu0 0.0
    %1278 = vmatpush1.msra.mxu0 0.0
    %1279 = vmatprep.subr.mxu0 0.0
    %1280 = vmatpush1.msra.mxu0 0.0
    %1281 = vmatprep.subr.mxu0 0.0
    %1282 = vmatpush1.msra.mxu0 0.0
    %1283 = vmatprep.subr.mxu0 0.0
    %1284 = vmatpush1.msra.mxu0 0.0
    %1285 = vmatprep.mubr.f32.mxu0 0.0
    %1286 = vmatmul.mubr.f32.gmra.mrb[0].mxu0 %v1219
    %v1287 = vpop.f32.mrb[0].mxu0
    %v1288 = vadd.f32 0.0, %v1287
    %v1289 = vpop.f32.mrb[0].mxu0
    %1290 = vdwg.mxu0
    %1291 = vmatprep.subr.mxu0 0.0
    %1292 = vmatpush1.msra.mxu0 %v1212
    %1293 = vmatprep.subr.mxu0 0.0
    %1294 = vmatpush1.msra.mxu0 %v1213
    %1295 = vmatprep.subr.mxu0 0.0
    %1296 = vmatpush1.msra.mxu0 0.0
    %1297 = vmatprep.subr.mxu0 0.0
    %1298 = vmatpush1.msra.mxu0 0.0
    %1299 = vmatprep.subr.mxu0 0.0
    %1300 = vmatpush1.msra.mxu0 0.0
    %1301 = vmatprep.subr.mxu0 0.0
    %1302 = vmatpush1.msra.mxu0 0.0
    %1303 = vmatprep.subr.mxu0 0.0
    %1304 = vmatpush1.msra.mxu0 0.0
    %1305 = vmatprep.subr.mxu0 0.0
    %1306 = vmatpush1.msra.mxu0 0.0
    %1307 = vmatprep.subr.mxu0 0.0
    %1308 = vmatpush1.msra.mxu0 0.0
    %1309 = vmatprep.subr.mxu0 0.0
    %1310 = vmatpush1.msra.mxu0 0.0
    %1311 = vmatprep.subr.mxu0 0.0
    %1312 = vmatpush1.msra.mxu0 0.0
    %1313 = vmatprep.subr.mxu0 0.0
    %1314 = vmatpush1.msra.mxu0 0.0
    %1315 = vmatprep.subr.mxu0 0.0
    %1316 = vmatpush1.msra.mxu0 0.0
    %1317 = vmatprep.subr.mxu0 0.0
    %1318 = vmatpush1.msra.mxu0 0.0
    %1319 = vmatprep.subr.mxu0 0.0
    %1320 = vmatpush1.msra.mxu0 0.0
    %1321 = vmatprep.subr.mxu0 0.0
    %1322 = vmatpush1.msra.mxu0 0.0
    %1323 = vmatprep.subr.mxu0 0.0
    %1324 = vmatpush1.msra.mxu0 0.0
    %1325 = vmatprep.subr.mxu0 0.0
    %1326 = vmatpush1.msra.mxu0 0.0
    %1327 = vmatprep.subr.mxu0 0.0
    %1328 = vmatpush1.msra.mxu0 0.0
    %1329 = vmatprep.subr.mxu0 0.0
    %1330 = vmatpush1.msra.mxu0 0.0
    %1331 = vmatprep.subr.mxu0 0.0
    %1332 = vmatpush1.msra.mxu0 0.0
    %1333 = vmatprep.subr.mxu0 0.0
    %1334 = vmatpush1.msra.mxu0 0.0
    %1335 = vmatprep.subr.mxu0 0.0
    %1336 = vmatpush1.msra.mxu0 0.0
    %1337 = vmatprep.subr.mxu0 0.0
    %1338 = vmatpush1.msra.mxu0 0.0
    %1339 = vmatprep.subr.mxu0 0.0
    %1340 = vmatpush1.msra.mxu0 0.0
    %1341 = vmatprep.subr.mxu0 0.0
    %1342 = vmatpush1.msra.mxu0 0.0
    %1343 = vmatprep.subr.mxu0 0.0
    %1344 = vmatpush1.msra.mxu0 0.0
    %1345 = vmatprep.subr.mxu0 0.0
    %1346 = vmatpush1.msra.mxu0 0.0
    %1347 = vmatprep.subr.mxu0 0.0
    %1348 = vmatpush1.msra.mxu0 0.0
    %1349 = vmatprep.subr.mxu0 0.0
    %1350 = vmatpush1.msra.mxu0 0.0
    %1351 = vmatprep.subr.mxu0 0.0
    %1352 = vmatpush1.msra.mxu0 0.0
    %1353 = vmatprep.subr.mxu0 0.0
    %1354 = vmatpush1.msra.mxu0 0.0
    %1355 = vmatprep.mubr.f32.mxu0 0.0
    %1356 = vmatmul.mubr.f32.gmra.mrb[0].mxu0 %v1219
    %v1357 = vpop.f32.mrb[0].mxu0
    %v1358 = vadd.f32 0.0, %v1357
    %v1359 = vpop.f32.mrb[0].mxu0
    %1360 = vdwg.mxu0
    %v1362 = vlaneseq
    %v1363 = vshrl.u32 %v1362, 7
    %v1364 = vsub.s32 0, %v1363
    %v1365 = vrot.slane %v1217, %v1364
    %1367 = vmatprep.subr.mxu0 0.0
    %1368 = vmatpush1.msra.mxu0 %v1215
    %1369 = vmatprep.subr.mxu0 0.0
    %1370 = vmatpush1.msra.mxu0 %v1216
    %1371 = vmatprep.subr.mxu0 0.0
    %1372 = vmatpush1.msra.mxu0 0.0
    %1373 = vmatprep.subr.mxu0 0.0
    %1374 = vmatpush1.msra.mxu0 0.0
    %1375 = vmatprep.subr.mxu0 0.0
    %1376 = vmatpush1.msra.mxu0 0.0
    %1377 = vmatprep.subr.mxu0 0.0
    %1378 = vmatpush1.msra.mxu0 0.0
    %1379 = vmatprep.subr.mxu0 0.0
    %1380 = vmatpush1.msra.mxu0 0.0
    %1381 = vmatprep.subr.mxu0 0.0
    %1382 = vmatpush1.msra.mxu0 0.0
    %1383 = vmatprep.subr.mxu0 0.0
    %1384 = vmatpush1.msra.mxu0 0.0
    %1385 = vmatprep.subr.mxu0 0.0
    %1386 = vmatpush1.msra.mxu0 0.0
    %1387 = vmatprep.subr.mxu0 0.0
    %1388 = vmatpush1.msra.mxu0 0.0
    %1389 = vmatprep.subr.mxu0 0.0
    %1390 = vmatpush1.msra.mxu0 0.0
    %1391 = vmatprep.subr.mxu0 0.0
    %1392 = vmatpush1.msra.mxu0 0.0
    %1393 = vmatprep.subr.mxu0 0.0
    %1394 = vmatpush1.msra.mxu0 0.0
    %1395 = vmatprep.subr.mxu0 0.0
    %1396 = vmatpush1.msra.mxu0 0.0
    %1397 = vmatprep.subr.mxu0 0.0
    %1398 = vmatpush1.msra.mxu0 0.0
    %1399 = vmatprep.subr.mxu0 0.0
    %1400 = vmatpush1.msra.mxu0 0.0
    %1401 = vmatprep.subr.mxu0 0.0
    %1402 = vmatpush1.msra.mxu0 0.0
    %1403 = vmatprep.subr.mxu0 0.0
    %1404 = vmatpush1.msra.mxu0 0.0
    %1405 = vmatprep.subr.mxu0 0.0
    %1406 = vmatpush1.msra.mxu0 0.0
    %1407 = vmatprep.subr.mxu0 0.0
    %1408 = vmatpush1.msra.mxu0 0.0
    %1409 = vmatprep.subr.mxu0 0.0
    %1410 = vmatpush1.msra.mxu0 0.0
    %1411 = vmatprep.subr.mxu0 0.0
    %1412 = vmatpush1.msra.mxu0 0.0
    %1413 = vmatprep.subr.mxu0 0.0
    %1414 = vmatpush1.msra.mxu0 0.0
    %1415 = vmatprep.subr.mxu0 0.0
    %1416 = vmatpush1.msra.mxu0 0.0
    %1417 = vmatprep.subr.mxu0 0.0
    %1418 = vmatpush1.msra.mxu0 0.0
    %1419 = vmatprep.subr.mxu0 0.0
    %1420 = vmatpush1.msra.mxu0 0.0
    %1421 = vmatprep.subr.mxu0 0.0
    %1422 = vmatpush1.msra.mxu0 0.0
    %1423 = vmatprep.subr.mxu0 0.0
    %1424 = vmatpush1.msra.mxu0 0.0
    %1425 = vmatprep.subr.mxu0 0.0
    %1426 = vmatpush1.msra.mxu0 0.0
    %1427 = vmatprep.subr.mxu0 0.0
    %1428 = vmatpush1.msra.mxu0 0.0
    %1429 = vmatprep.subr.mxu0 0.0
    %1430 = vmatpush1.msra.mxu0 0.0
    %1431 = vmatprep.mubr.f32.mxu0 0.0
    %1432 = vmatmul.mubr.f32.gmra.mrb[0].mxu0 %v1219
    %v1433 = vpop.f32.mrb[0].mxu0
    %v1434 = vadd.f32 %v1365, %v1433
    %v1435 = vpop.f32.mrb[0].mxu0
    %1436 = vdwg.mxu0
    %v1437 = vld [vmem:[#allocation2] sm:$0xff]
    %v1438 = vadd.f32 %v1437, %v1288
    %v1439 = vxor.u32 %v1438, 2147483648
    %v1440 = vmul.f32 %v1439, 1.442695
    %v1441 = vpow.pop %v1440
    %v1442 = vadd.f32 %v1441, 1.0
    %v1443 = vrcp.pop %v1442
    %v1444 = vmul.f32 1.0, %v1443
    %v1445 = vld [vmem:[#allocation3] sm:$0xff]
    %v1446 = vadd.f32 %v1445, %v1358
    %v1447 = vxor.u32 %v1446, 2147483648
    %v1448 = vmul.f32 %v1447, 1.442695
    %v1449 = vpow.pop %v1448
    %v1450 = vadd.f32 %v1449, 1.0
    %v1451 = vrcp.pop %v1450
    %v1452 = vmul.f32 1.0, %v1451
    %v1453 = vld [vmem:[#allocation4] sm:$0xff]
    %v1454 = vmul.f32 %v1444, %v1434
    %v1455 = vadd.f32 %v1453, %v1454
    %v1456 = vtanh.pop %v1455
    %v1457 = vsub.f32 0.0, %v1456
    %v1458 = vmul.f32 %v1452, %v1457
    %v1459 = vadd.f32 %v1456, %v1458
    %v1461 = vsel %vm275, %v1459, 0
    %1463 = vmatprep.subr.mxu0 0.0
    %1464 = vmatpush1.msra.mxu0 %v1209
    %1465 = vmatprep.subr.mxu0 0.0
    %1466 = vmatpush1.msra.mxu0 %v1210
    %1467 = vmatprep.subr.mxu0 0.0
    %1468 = vmatpush1.msra.mxu0 0.0
    %1469 = vmatprep.subr.mxu0 0.0
    %1470 = vmatpush1.msra.mxu0 0.0
    %1471 = vmatprep.subr.mxu0 0.0
    %1472 = vmatpush1.msra.mxu0 0.0
    %1473 = vmatprep.subr.mxu0 0.0
    %1474 = vmatpush1.msra.mxu0 0.0
    %1475 = vmatprep.subr.mxu0 0.0
    %1476 = vmatpush1.msra.mxu0 0.0
    %1477 = vmatprep.subr.mxu0 0.0
    %1478 = vmatpush1.msra.mxu0 0.0
    %1479 = vmatprep.subr.mxu0 0.0
    %1480 = vmatpush1.msra.mxu0 0.0
    %1481 = vmatprep.subr.mxu0 0.0
    %1482 = vmatpush1.msra.mxu0 0.0
    %1483 = vmatprep.subr.mxu0 0.0
    %1484 = vmatpush1.msra.mxu0 0.0
    %1485 = vmatprep.subr.mxu0 0.0
    %1486 = vmatpush1.msra.mxu0 0.0
    %1487 = vmatprep.subr.mxu0 0.0
    %1488 = vmatpush1.msra.mxu0 0.0
    %1489 = vmatprep.subr.mxu0 0.0
    %1490 = vmatpush1.msra.mxu0 0.0
    %1491 = vmatprep.subr.mxu0 0.0
    %1492 = vmatpush1.msra.mxu0 0.0
    %1493 = vmatprep.subr.mxu0 0.0
    %1494 = vmatpush1.msra.mxu0 0.0
    %1495 = vmatprep.subr.mxu0 0.0
    %1496 = vmatpush1.msra.mxu0 0.0
    %1497 = vmatprep.subr.mxu0 0.0
    %1498 = vmatpush1.msra.mxu0 0.0
    %1499 = vmatprep.subr.mxu0 0.0
    %1500 = vmatpush1.msra.mxu0 0.0
    %1501 = vmatprep.subr.mxu0 0.0
    %1502 = vmatpush1.msra.mxu0 0.0
    %1503 = vmatprep.subr.mxu0 0.0
    %1504 = vmatpush1.msra.mxu0 0.0
    %1505 = vmatprep.subr.mxu0 0.0
    %1506 = vmatpush1.msra.mxu0 0.0
    %1507 = vmatprep.subr.mxu0 0.0
    %1508 = vmatpush1.msra.mxu0 0.0
    %1509 = vmatprep.subr.mxu0 0.0
    %1510 = vmatpush1.msra.mxu0 0.0
    %1511 = vmatprep.subr.mxu0 0.0
    %1512 = vmatpush1.msra.mxu0 0.0
    %1513 = vmatprep.subr.mxu0 0.0
    %1514 = vmatpush1.msra.mxu0 0.0
    %1515 = vmatprep.subr.mxu0 0.0
    %1516 = vmatpush1.msra.mxu0 0.0
    %1517 = vmatprep.subr.mxu0 0.0
    %1518 = vmatpush1.msra.mxu0 0.0
    %1519 = vmatprep.subr.mxu0 0.0
    %1520 = vmatpush1.msra.mxu0 0.0
    %1521 = vmatprep.subr.mxu0 0.0
    %1522 = vmatpush1.msra.mxu0 0.0
    %1523 = vmatprep.subr.mxu0 0.0
    %1524 = vmatpush1.msra.mxu0 0.0
    %1525 = vmatprep.subr.mxu0 0.0
    %1526 = vmatpush1.msra.mxu0 0.0
    %1527 = vmatprep.mubr.f32.mxu0 0.0
    %1528 = vmatmul.mubr.f32.gmra.mrb[0].mxu0 %v1461
    %v1529 = vpop.f32.mrb[0].mxu0
    %v1530 = vadd.f32 0.0, %v1529
    %v1531 = vpop.f32.mrb[0].mxu0
    %1532 = vdwg.mxu0
    %1533 = vmatprep.subr.mxu0 0.0
    %1534 = vmatpush1.msra.mxu0 %v1212
    %1535 = vmatprep.subr.mxu0 0.0
    %1536 = vmatpush1.msra.mxu0 %v1213
    %1537 = vmatprep.subr.mxu0 0.0
    %1538 = vmatpush1.msra.mxu0 0.0
    %1539 = vmatprep.subr.mxu0 0.0
    %1540 = vmatpush1.msra.mxu0 0.0
    %1541 = vmatprep.subr.mxu0 0.0
    %1542 = vmatpush1.msra.mxu0 0.0
    %1543 = vmatprep.subr.mxu0 0.0
    %1544 = vmatpush1.msra.mxu0 0.0
    %1545 = vmatprep.subr.mxu0 0.0
    %1546 = vmatpush1.msra.mxu0 0.0
    %1547 = vmatprep.subr.mxu0 0.0
    %1548 = vmatpush1.msra.mxu0 0.0
    %1549 = vmatprep.subr.mxu0 0.0
    %1550 = vmatpush1.msra.mxu0 0.0
    %1551 = vmatprep.subr.mxu0 0.0
    %1552 = vmatpush1.msra.mxu0 0.0
    %1553 = vmatprep.subr.mxu0 0.0
    %1554 = vmatpush1.msra.mxu0 0.0
    %1555 = vmatprep.subr.mxu0 0.0
    %1556 = vmatpush1.msra.mxu0 0.0
    %1557 = vmatprep.subr.mxu0 0.0
    %1558 = vmatpush1.msra.mxu0 0.0
    %1559 = vmatprep.subr.mxu0 0.0
    %1560 = vmatpush1.msra.mxu0 0.0
    %1561 = vmatprep.subr.mxu0 0.0
    %1562 = vmatpush1.msra.mxu0 0.0
    %1563 = vmatprep.subr.mxu0 0.0
    %1564 = vmatpush1.msra.mxu0 0.0
    %1565 = vmatprep.subr.mxu0 0.0
    %1566 = vmatpush1.msra.mxu0 0.0
    %1567 = vmatprep.subr.mxu0 0.0
    %1568 = vmatpush1.msra.mxu0 0.0
    %1569 = vmatprep.subr.mxu0 0.0
    %1570 = vmatpush1.msra.mxu0 0.0
    %1571 = vmatprep.subr.mxu0 0.0
    %1572 = vmatpush1.msra.mxu0 0.0
    %1573 = vmatprep.subr.mxu0 0.0
    %1574 = vmatpush1.msra.mxu0 0.0
    %1575 = vmatprep.subr.mxu0 0.0
    %1576 = vmatpush1.msra.mxu0 0.0
    %1577 = vmatprep.subr.mxu0 0.0
    %1578 = vmatpush1.msra.mxu0 0.0
    %1579 = vmatprep.subr.mxu0 0.0
    %1580 = vmatpush1.msra.mxu0 0.0
    %1581 = vmatprep.subr.mxu0 0.0
    %1582 = vmatpush1.msra.mxu0 0.0
    %1583 = vmatprep.subr.mxu0 0.0
    %1584 = vmatpush1.msra.mxu0 0.0
    %1585 = vmatprep.subr.mxu0 0.0
    %1586 = vmatpush1.msra.mxu0 0.0
    %1587 = vmatprep.subr.mxu0 0.0
    %1588 = vmatpush1.msra.mxu0 0.0
    %1589 = vmatprep.subr.mxu0 0.0
    %1590 = vmatpush1.msra.mxu0 0.0
    %1591 = vmatprep.subr.mxu0 0.0
    %1592 = vmatpush1.msra.mxu0 0.0
    %1593 = vmatprep.subr.mxu0 0.0
    %1594 = vmatpush1.msra.mxu0 0.0
    %1595 = vmatprep.subr.mxu0 0.0
    %1596 = vmatpush1.msra.mxu0 0.0
    %1597 = vmatprep.mubr.f32.mxu0 0.0
    %1598 = vmatmul.mubr.f32.gmra.mrb[0].mxu0 %v1461
    %v1599 = vpop.f32.mrb[0].mxu0
    %v1600 = vadd.f32 0.0, %v1599
    %v1601 = vpop.f32.mrb[0].mxu0
    %1602 = vdwg.mxu0
    %1603 = vmatprep.subr.mxu0 0.0
    %1604 = vmatpush1.msra.mxu0 %v1215
    %1605 = vmatprep.subr.mxu0 0.0
    %1606 = vmatpush1.msra.mxu0 %v1216
    %1607 = vmatprep.subr.mxu0 0.0
    %1608 = vmatpush1.msra.mxu0 0.0
    %1609 = vmatprep.subr.mxu0 0.0
    %1610 = vmatpush1.msra.mxu0 0.0
    %1611 = vmatprep.subr.mxu0 0.0
    %1612 = vmatpush1.msra.mxu0 0.0
    %1613 = vmatprep.subr.mxu0 0.0
    %1614 = vmatpush1.msra.mxu0 0.0
    %1615 = vmatprep.subr.mxu0 0.0
    %1616 = vmatpush1.msra.mxu0 0.0
    %1617 = vmatprep.subr.mxu0 0.0
    %1618 = vmatpush1.msra.mxu0 0.0
    %1619 = vmatprep.subr.mxu0 0.0
    %1620 = vmatpush1.msra.mxu0 0.0
    %1621 = vmatprep.subr.mxu0 0.0
    %1622 = vmatpush1.msra.mxu0 0.0
    %1623 = vmatprep.subr.mxu0 0.0
    %1624 = vmatpush1.msra.mxu0 0.0
    %1625 = vmatprep.subr.mxu0 0.0
    %1626 = vmatpush1.msra.mxu0 0.0
    %1627 = vmatprep.subr.mxu0 0.0
    %1628 = vmatpush1.msra.mxu0 0.0
    %1629 = vmatprep.subr.mxu0 0.0
    %1630 = vmatpush1.msra.mxu0 0.0
    %1631 = vmatprep.subr.mxu0 0.0
    %1632 = vmatpush1.msra.mxu0 0.0
    %1633 = vmatprep.subr.mxu0 0.0
    %1634 = vmatpush1.msra.mxu0 0.0
    %1635 = vmatprep.subr.mxu0 0.0
    %1636 = vmatpush1.msra.mxu0 0.0
    %1637 = vmatprep.subr.mxu0 0.0
    %1638 = vmatpush1.msra.mxu0 0.0
    %1639 = vmatprep.subr.mxu0 0.0
    %1640 = vmatpush1.msra.mxu0 0.0
    %1641 = vmatprep.subr.mxu0 0.0
    %1642 = vmatpush1.msra.mxu0 0.0
    %1643 = vmatprep.subr.mxu0 0.0
    %1644 = vmatpush1.msra.mxu0 0.0
    %1645 = vmatprep.subr.mxu0 0.0
    %1646 = vmatpush1.msra.mxu0 0.0
    %1647 = vmatprep.subr.mxu0 0.0
    %1648 = vmatpush1.msra.mxu0 0.0
    %1649 = vmatprep.subr.mxu0 0.0
    %1650 = vmatpush1.msra.mxu0 0.0
    %1651 = vmatprep.subr.mxu0 0.0
    %1652 = vmatpush1.msra.mxu0 0.0
    %1653 = vmatprep.subr.mxu0 0.0
    %1654 = vmatpush1.msra.mxu0 0.0
    %1655 = vmatprep.subr.mxu0 0.0
    %1656 = vmatpush1.msra.mxu0 0.0
    %1657 = vmatprep.subr.mxu0 0.0
    %1658 = vmatpush1.msra.mxu0 0.0
    %1659 = vmatprep.subr.mxu0 0.0
    %1660 = vmatpush1.msra.mxu0 0.0
    %1661 = vmatprep.subr.mxu0 0.0
    %1662 = vmatpush1.msra.mxu0 0.0
    %1663 = vmatprep.subr.mxu0 0.0
    %1664 = vmatpush1.msra.mxu0 0.0
    %1665 = vmatprep.subr.mxu0 0.0
    %1666 = vmatpush1.msra.mxu0 0.0
    %1667 = vmatprep.mubr.f32.mxu0 0.0
    %1668 = vmatmul.mubr.f32.gmra.mrb[0].mxu0 %v1461
    %v1669 = vpop.f32.mrb[0].mxu0
    %v1670 = vadd.f32 %v1365, %v1669
    %v1671 = vpop.f32.mrb[0].mxu0
    %1672 = vdwg.mxu0
    %v1673 = vld [vmem:[#allocation2 + $0x8] sm:$0xff]
    %v1674 = vadd.f32 %v1673, %v1530
    %v1675 = vxor.u32 %v1674, 2147483648
    %v1676 = vmul.f32 %v1675, 1.442695
    %v1677 = vpow.pop %v1676
    %v1678 = vadd.f32 %v1677, 1.0
    %v1679 = vrcp.pop %v1678
    %v1680 = vmul.f32 1.0, %v1679
    %v1681 = vld [vmem:[#allocation3 + $0x8] sm:$0xff]
    %v1682 = vadd.f32 %v1681, %v1600
    %v1683 = vxor.u32 %v1682, 2147483648
    %v1684 = vmul.f32 %v1683, 1.442695
    %v1685 = vpow.pop %v1684
    %v1686 = vadd.f32 %v1685, 1.0
    %v1687 = vrcp.pop %v1686
    %v1688 = vmul.f32 1.0, %v1687
    %v1689 = vld [vmem:[#allocation4 + $0x8] sm:$0xff]
    %v1690 = vmul.f32 %v1680, %v1670
    %v1691 = vadd.f32 %v1689, %v1690
    %v1692 = vtanh.pop %v1691
    %v1693 = vsub.f32 %v1459, %v1692
    %v1694 = vmul.f32 %v1688, %v1693
    %v1695 = vadd.f32 %v1692, %v1694
    %v1697 = vsel %vm275, %v1695, 0
    %1699 = vmatprep.subr.mxu0 0.0
    %1700 = vmatpush1.msra.mxu0 %v1209
    %1701 = vmatprep.subr.mxu0 0.0
    %1702 = vmatpush1.msra.mxu0 %v1210
    %1703 = vmatprep.subr.mxu0 0.0
    %1704 = vmatpush1.msra.mxu0 0.0
    %1705 = vmatprep.subr.mxu0 0.0
    %1706 = vmatpush1.msra.mxu0 0.0
    %1707 = vmatprep.subr.mxu0 0.0
    %1708 = vmatpush1.msra.mxu0 0.0
    %1709 = vmatprep.subr.mxu0 0.0
    %1710 = vmatpush1.msra.mxu0 0.0
    %1711 = vmatprep.subr.mxu0 0.0
    %1712 = vmatpush1.msra.mxu0 0.0
    %1713 = vmatprep.subr.mxu0 0.0
    %1714 = vmatpush1.msra.mxu0 0.0
    %1715 = vmatprep.subr.mxu0 0.0
    %1716 = vmatpush1.msra.mxu0 0.0
    %1717 = vmatprep.subr.mxu0 0.0
    %1718 = vmatpush1.msra.mxu0 0.0
    %1719 = vmatprep.subr.mxu0 0.0
    %1720 = vmatpush1.msra.mxu0 0.0
    %1721 = vmatprep.subr.mxu0 0.0
    %1722 = vmatpush1.msra.mxu0 0.0
    %1723 = vmatprep.subr.mxu0 0.0
    %1724 = vmatpush1.msra.mxu0 0.0
    %1725 = vmatprep.subr.mxu0 0.0
    %1726 = vmatpush1.msra.mxu0 0.0
    %1727 = vmatprep.subr.mxu0 0.0
    %1728 = vmatpush1.msra.mxu0 0.0
    %1729 = vmatprep.subr.mxu0 0.0
    %1730 = vmatpush1.msra.mxu0 0.0
    %1731 = vmatprep.subr.mxu0 0.0
    %1732 = vmatpush1.msra.mxu0 0.0
    %1733 = vmatprep.subr.mxu0 0.0
    %1734 = vmatpush1.msra.mxu0 0.0
    %1735 = vmatprep.subr.mxu0 0.0
    %1736 = vmatpush1.msra.mxu0 0.0
    %1737 = vmatprep.subr.mxu0 0.0
    %1738 = vmatpush1.msra.mxu0 0.0
    %1739 = vmatprep.subr.mxu0 0.0
    %1740 = vmatpush1.msra.mxu0 0.0
    %1741 = vmatprep.subr.mxu0 0.0
    %1742 = vmatpush1.msra.mxu0 0.0
    %1743 = vmatprep.subr.mxu0 0.0
    %1744 = vmatpush1.msra.mxu0 0.0
    %1745 = vmatprep.subr.mxu0 0.0
    %1746 = vmatpush1.msra.mxu0 0.0
    %1747 = vmatprep.subr.mxu0 0.0
    %1748 = vmatpush1.msra.mxu0 0.0
    %1749 = vmatprep.subr.mxu0 0.0
    %1750 = vmatpush1.msra.mxu0 0.0
    %1751 = vmatprep.subr.mxu0 0.0
    %1752 = vmatpush1.msra.mxu0 0.0
    %1753 = vmatprep.subr.mxu0 0.0
    %1754 = vmatpush1.msra.mxu0 0.0
    %1755 = vmatprep.subr.mxu0 0.0
    %1756 = vmatpush1.msra.mxu0 0.0
    %1757 = vmatprep.subr.mxu0 0.0
    %1758 = vmatpush1.msra.mxu0 0.0
    %1759 = vmatprep.subr.mxu0 0.0
    %1760 = vmatpush1.msra.mxu0 0.0
    %1761 = vmatprep.subr.mxu0 0.0
    %1762 = vmatpush1.msra.mxu0 0.0
    %1763 = vmatprep.mubr.f32.mxu0 0.0
    %1764 = vmatmul.mubr.f32.gmra.mrb[0].mxu0 %v1697
    %v1765 = vpop.f32.mrb[0].mxu0
    %v1766 = vadd.f32 0.0, %v1765
    %v1767 = vpop.f32.mrb[0].mxu0
    %1768 = vdwg.mxu0
    %1769 = vmatprep.subr.mxu0 0.0
    %1770 = vmatpush1.msra.mxu0 %v1212
    %1771 = vmatprep.subr.mxu0 0.0
    %1772 = vmatpush1.msra.mxu0 %v1213
    %1773 = vmatprep.subr.mxu0 0.0
    %1774 = vmatpush1.msra.mxu0 0.0
    %1775 = vmatprep.subr.mxu0 0.0
    %1776 = vmatpush1.msra.mxu0 0.0
    %1777 = vmatprep.subr.mxu0 0.0
    %1778 = vmatpush1.msra.mxu0 0.0
    %1779 = vmatprep.subr.mxu0 0.0
    %1780 = vmatpush1.msra.mxu0 0.0
    %1781 = vmatprep.subr.mxu0 0.0
    %1782 = vmatpush1.msra.mxu0 0.0
    %1783 = vmatprep.subr.mxu0 0.0
    %1784 = vmatpush1.msra.mxu0 0.0
    %1785 = vmatprep.subr.mxu0 0.0
    %1786 = vmatpush1.msra.mxu0 0.0
    %1787 = vmatprep.subr.mxu0 0.0
    %1788 = vmatpush1.msra.mxu0 0.0
    %1789 = vmatprep.subr.mxu0 0.0
    %1790 = vmatpush1.msra.mxu0 0.0
    %1791 = vmatprep.subr.mxu0 0.0
    %1792 = vmatpush1.msra.mxu0 0.0
    %1793 = vmatprep.subr.mxu0 0.0
    %1794 = vmatpush1.msra.mxu0 0.0
    %1795 = vmatprep.subr.mxu0 0.0
    %1796 = vmatpush1.msra.mxu0 0.0
    %1797 = vmatprep.subr.mxu0 0.0
    %1798 = vmatpush1.msra.mxu0 0.0
    %1799 = vmatprep.subr.mxu0 0.0
    %1800 = vmatpush1.msra.mxu0 0.0
    %1801 = vmatprep.subr.mxu0 0.0
    %1802 = vmatpush1.msra.mxu0 0.0
    %1803 = vmatprep.subr.mxu0 0.0
    %1804 = vmatpush1.msra.mxu0 0.0
    %1805 = vmatprep.subr.mxu0 0.0
    %1806 = vmatpush1.msra.mxu0 0.0
    %1807 = vmatprep.subr.mxu0 0.0
    %1808 = vmatpush1.msra.mxu0 0.0
    %1809 = vmatprep.subr.mxu0 0.0
    %1810 = vmatpush1.msra.mxu0 0.0
    %1811 = vmatprep.subr.mxu0 0.0
    %1812 = vmatpush1.msra.mxu0 0.0
    %1813 = vmatprep.subr.mxu0 0.0
    %1814 = vmatpush1.msra.mxu0 0.0
    %1815 = vmatprep.subr.mxu0 0.0
    %1816 = vmatpush1.msra.mxu0 0.0
    %1817 = vmatprep.subr.mxu0 0.0
    %1818 = vmatpush1.msra.mxu0 0.0
    %1819 = vmatprep.subr.mxu0 0.0
    %1820 = vmatpush1.msra.mxu0 0.0
    %1821 = vmatprep.subr.mxu0 0.0
    %1822 = vmatpush1.msra.mxu0 0.0
    %1823 = vmatprep.subr.mxu0 0.0
    %1824 = vmatpush1.msra.mxu0 0.0
    %1825 = vmatprep.subr.mxu0 0.0
    %1826 = vmatpush1.msra.mxu0 0.0
    %1827 = vmatprep.subr.mxu0 0.0
    %1828 = vmatpush1.msra.mxu0 0.0
    %1829 = vmatprep.subr.mxu0 0.0
    %1830 = vmatpush1.msra.mxu0 0.0
    %1831 = vmatprep.subr.mxu0 0.0
    %1832 = vmatpush1.msra.mxu0 0.0
    %1833 = vmatprep.mubr.f32.mxu0 0.0
    %1834 = vmatmul.mubr.f32.gmra.mrb[0].mxu0 %v1697
    %v1835 = vpop.f32.mrb[0].mxu0
    %v1836 = vadd.f32 0.0, %v1835
    %v1837 = vpop.f32.mrb[0].mxu0
    %1838 = vdwg.mxu0
    %1839 = vmatprep.subr.mxu0 0.0
    %1840 = vmatpush1.msra.mxu0 %v1215
    %1841 = vmatprep.subr.mxu0 0.0
    %1842 = vmatpush1.msra.mxu0 %v1216
    %1843 = vmatprep.subr.mxu0 0.0
    %1844 = vmatpush1.msra.mxu0 0.0
    %1845 = vmatprep.subr.mxu0 0.0
    %1846 = vmatpush1.msra.mxu0 0.0
    %1847 = vmatprep.subr.mxu0 0.0
    %1848 = vmatpush1.msra.mxu0 0.0
    %1849 = vmatprep.subr.mxu0 0.0
    %1850 = vmatpush1.msra.mxu0 0.0
    %1851 = vmatprep.subr.mxu0 0.0
    %1852 = vmatpush1.msra.mxu0 0.0
    %1853 = vmatprep.subr.mxu0 0.0
    %1854 = vmatpush1.msra.mxu0 0.0
    %1855 = vmatprep.subr.mxu0 0.0
    %1856 = vmatpush1.msra.mxu0 0.0
    %1857 = vmatprep.subr.mxu0 0.0
    %1858 = vmatpush1.msra.mxu0 0.0
    %1859 = vmatprep.subr.mxu0 0.0
    %1860 = vmatpush1.msra.mxu0 0.0
    %1861 = vmatprep.subr.mxu0 0.0
    %1862 = vmatpush1.msra.mxu0 0.0
    %1863 = vmatprep.subr.mxu0 0.0
    %1864 = vmatpush1.msra.mxu0 0.0
    %1865 = vmatprep.subr.mxu0 0.0
    %1866 = vmatpush1.msra.mxu0 0.0
    %1867 = vmatprep.subr.mxu0 0.0
    %1868 = vmatpush1.msra.mxu0 0.0
    %1869 = vmatprep.subr.mxu0 0.0
    %1870 = vmatpush1.msra.mxu0 0.0
    %1871 = vmatprep.subr.mxu0 0.0
    %1872 = vmatpush1.msra.mxu0 0.0
    %1873 = vmatprep.subr.mxu0 0.0
    %1874 = vmatpush1.msra.mxu0 0.0
    %1875 = vmatprep.subr.mxu0 0.0
    %1876 = vmatpush1.msra.mxu0 0.0
    %1877 = vmatprep.subr.mxu0 0.0
    %1878 = vmatpush1.msra.mxu0 0.0
    %1879 = vmatprep.subr.mxu0 0.0
    %1880 = vmatpush1.msra.mxu0 0.0
    %1881 = vmatprep.subr.mxu0 0.0
    %1882 = vmatpush1.msra.mxu0 0.0
    %1883 = vmatprep.subr.mxu0 0.0
    %1884 = vmatpush1.msra.mxu0 0.0
    %1885 = vmatprep.subr.mxu0 0.0
    %1886 = vmatpush1.msra.mxu0 0.0
    %1887 = vmatprep.subr.mxu0 0.0
    %1888 = vmatpush1.msra.mxu0 0.0
    %1889 = vmatprep.subr.mxu0 0.0
    %1890 = vmatpush1.msra.mxu0 0.0
    %1891 = vmatprep.subr.mxu0 0.0
    %1892 = vmatpush1.msra.mxu0 0.0
    %1893 = vmatprep.subr.mxu0 0.0
    %1894 = vmatpush1.msra.mxu0 0.0
    %1895 = vmatprep.subr.mxu0 0.0
    %1896 = vmatpush1.msra.mxu0 0.0
    %1897 = vmatprep.subr.mxu0 0.0
    %1898 = vmatpush1.msra.mxu0 0.0
    %1899 = vmatprep.subr.mxu0 0.0
    %1900 = vmatpush1.msra.mxu0 0.0
    %1901 = vmatprep.subr.mxu0 0.0
    %1902 = vmatpush1.msra.mxu0 0.0
    %1903 = vmatprep.mubr.f32.mxu0 0.0
    %1904 = vmatmul.mubr.f32.gmra.mrb[0].mxu0 %v1697
    %v1905 = vpop.f32.mrb[0].mxu0
    %v1906 = vadd.f32 %v1365, %v1905
    %v1907 = vpop.f32.mrb[0].mxu0
    %1908 = vdwg.mxu0
    %v1909 = vld [vmem:[#allocation2 + $0x10] sm:$0xff]
    %v1910 = vadd.f32 %v1909, %v1766
    %v1911 = vxor.u32 %v1910, 2147483648
    %v1912 = vmul.f32 %v1911, 1.442695
    %v1913 = vpow.pop %v1912
    %v1914 = vadd.f32 %v1913, 1.0
    %v1915 = vrcp.pop %v1914
    %v1916 = vmul.f32 1.0, %v1915
    %v1917 = vld [vmem:[#allocation3 + $0x10] sm:$0xff]
    %v1918 = vadd.f32 %v1917, %v1836
    %v1919 = vxor.u32 %v1918, 2147483648
    %v1920 = vmul.f32 %v1919, 1.442695
    %v1921 = vpow.pop %v1920
    %v1922 = vadd.f32 %v1921, 1.0
    %v1923 = vrcp.pop %v1922
    %v1924 = vmul.f32 1.0, %v1923
    %v1925 = vld [vmem:[#allocation4 + $0x10] sm:$0xff]
    %v1926 = vmul.f32 %v1916, %v1906
    %v1927 = vadd.f32 %v1925, %v1926
    %v1928 = vtanh.pop %v1927
    %v1929 = vsub.f32 %v1695, %v1928
    %v1930 = vmul.f32 %v1924, %v1929
    %v1931 = vadd.f32 %v1928, %v1930
    %v1933 = vsel %vm275, %v1931, 0
    %1935 = vmatprep.subr.mxu0 0.0
    %1936 = vmatpush1.msra.mxu0 %v1209
    %1937 = vmatprep.subr.mxu0 0.0
    %1938 = vmatpush1.msra.mxu0 %v1210
    %1939 = vmatprep.subr.mxu0 0.0
    %1940 = vmatpush1.msra.mxu0 0.0
    %1941 = vmatprep.subr.mxu0 0.0
    %1942 = vmatpush1.msra.mxu0 0.0
    %1943 = vmatprep.subr.mxu0 0.0
    %1944 = vmatpush1.msra.mxu0 0.0
    %1945 = vmatprep.subr.mxu0 0.0
    %1946 = vmatpush1.msra.mxu0 0.0
    %1947 = vmatprep.subr.mxu0 0.0
    %1948 = vmatpush1.msra.mxu0 0.0
    %1949 = vmatprep.subr.mxu0 0.0
    %1950 = vmatpush1.msra.mxu0 0.0
    %1951 = vmatprep.subr.mxu0 0.0
    %1952 = vmatpush1.msra.mxu0 0.0
    %1953 = vmatprep.subr.mxu0 0.0
    %1954 = vmatpush1.msra.mxu0 0.0
    %1955 = vmatprep.subr.mxu0 0.0
    %1956 = vmatpush1.msra.mxu0 0.0
    %1957 = vmatprep.subr.mxu0 0.0
    %1958 = vmatpush1.msra.mxu0 0.0
    %1959 = vmatprep.subr.mxu0 0.0
    %1960 = vmatpush1.msra.mxu0 0.0
    %1961 = vmatprep.subr.mxu0 0.0
    %1962 = vmatpush1.msra.mxu0 0.0
    %1963 = vmatprep.subr.mxu0 0.0
    %1964 = vmatpush1.msra.mxu0 0.0
    %1965 = vmatprep.subr.mxu0 0.0
    %1966 = vmatpush1.msra.mxu0 0.0
    %1967 = vmatprep.subr.mxu0 0.0
    %1968 = vmatpush1.msra.mxu0 0.0
    %1969 = vmatprep.subr.mxu0 0.0
    %1970 = vmatpush1.msra.mxu0 0.0
    %1971 = vmatprep.subr.mxu0 0.0
    %1972 = vmatpush1.msra.mxu0 0.0
    %1973 = vmatprep.subr.mxu0 0.0
    %1974 = vmatpush1.msra.mxu0 0.0
    %1975 = vmatprep.subr.mxu0 0.0
    %1976 = vmatpush1.msra.mxu0 0.0
    %1977 = vmatprep.subr.mxu0 0.0
    %1978 = vmatpush1.msra.mxu0 0.0
    %1979 = vmatprep.subr.mxu0 0.0
    %1980 = vmatpush1.msra.mxu0 0.0
    %1981 = vmatprep.subr.mxu0 0.0
    %1982 = vmatpush1.msra.mxu0 0.0
    %1983 = vmatprep.subr.mxu0 0.0
    %1984 = vmatpush1.msra.mxu0 0.0
    %1985 = vmatprep.subr.mxu0 0.0
    %1986 = vmatpush1.msra.mxu0 0.0
    %1987 = vmatprep.subr.mxu0 0.0
    %1988 = vmatpush1.msra.mxu0 0.0
    %1989 = vmatprep.subr.mxu0 0.0
    %1990 = vmatpush1.msra.mxu0 0.0
    %1991 = vmatprep.subr.mxu0 0.0
    %1992 = vmatpush1.msra.mxu0 0.0
    %1993 = vmatprep.subr.mxu0 0.0
    %1994 = vmatpush1.msra.mxu0 0.0
    %1995 = vmatprep.subr.mxu0 0.0
    %1996 = vmatpush1.msra.mxu0 0.0
    %1997 = vmatprep.subr.mxu0 0.0
    %1998 = vmatpush1.msra.mxu0 0.0
    %1999 = vmatprep.mubr.f32.mxu0 0.0
    %2000 = vmatmul.mubr.f32.gmra.mrb[0].mxu0 %v1933
    %v2001 = vpop.f32.mrb[0].mxu0
    %v2002 = vadd.f32 0.0, %v2001
    %v2003 = vpop.f32.mrb[0].mxu0
    %2004 = vdwg.mxu0
    %2005 = vmatprep.subr.mxu0 0.0
    %2006 = vmatpush1.msra.mxu0 %v1212
    %2007 = vmatprep.subr.mxu0 0.0
    %2008 = vmatpush1.msra.mxu0 %v1213
    %2009 = vmatprep.subr.mxu0 0.0
    %2010 = vmatpush1.msra.mxu0 0.0
    %2011 = vmatprep.subr.mxu0 0.0
    %2012 = vmatpush1.msra.mxu0 0.0
    %2013 = vmatprep.subr.mxu0 0.0
    %2014 = vmatpush1.msra.mxu0 0.0
    %2015 = vmatprep.subr.mxu0 0.0
    %2016 = vmatpush1.msra.mxu0 0.0
    %2017 = vmatprep.subr.mxu0 0.0
    %2018 = vmatpush1.msra.mxu0 0.0
    %2019 = vmatprep.subr.mxu0 0.0
    %2020 = vmatpush1.msra.mxu0 0.0
    %2021 = vmatprep.subr.mxu0 0.0
    %2022 = vmatpush1.msra.mxu0 0.0
    %2023 = vmatprep.subr.mxu0 0.0
    %2024 = vmatpush1.msra.mxu0 0.0
    %2025 = vmatprep.subr.mxu0 0.0
    %2026 = vmatpush1.msra.mxu0 0.0
    %2027 = vmatprep.subr.mxu0 0.0
    %2028 = vmatpush1.msra.mxu0 0.0
    %2029 = vmatprep.subr.mxu0 0.0
    %2030 = vmatpush1.msra.mxu0 0.0
    %2031 = vmatprep.subr.mxu0 0.0
    %2032 = vmatpush1.msra.mxu0 0.0
    %2033 = vmatprep.subr.mxu0 0.0
    %2034 = vmatpush1.msra.mxu0 0.0
    %2035 = vmatprep.subr.mxu0 0.0
    %2036 = vmatpush1.msra.mxu0 0.0
    %2037 = vmatprep.subr.mxu0 0.0
    %2038 = vmatpush1.msra.mxu0 0.0
    %2039 = vmatprep.subr.mxu0 0.0
    %2040 = vmatpush1.msra.mxu0 0.0
    %2041 = vmatprep.subr.mxu0 0.0
    %2042 = vmatpush1.msra.mxu0 0.0
    %2043 = vmatprep.subr.mxu0 0.0
    %2044 = vmatpush1.msra.mxu0 0.0
    %2045 = vmatprep.subr.mxu0 0.0
    %2046 = vmatpush1.msra.mxu0 0.0
    %2047 = vmatprep.subr.mxu0 0.0
    %2048 = vmatpush1.msra.mxu0 0.0
    %2049 = vmatprep.subr.mxu0 0.0
    %2050 = vmatpush1.msra.mxu0 0.0
    %2051 = vmatprep.subr.mxu0 0.0
    %2052 = vmatpush1.msra.mxu0 0.0
    %2053 = vmatprep.subr.mxu0 0.0
    %2054 = vmatpush1.msra.mxu0 0.0
    %2055 = vmatprep.subr.mxu0 0.0
    %2056 = vmatpush1.msra.mxu0 0.0
    %2057 = vmatprep.subr.mxu0 0.0
    %2058 = vmatpush1.msra.mxu0 0.0
    %2059 = vmatprep.subr.mxu0 0.0
    %2060 = vmatpush1.msra.mxu0 0.0
    %2061 = vmatprep.subr.mxu0 0.0
    %2062 = vmatpush1.msra.mxu0 0.0
    %2063 = vmatprep.subr.mxu0 0.0
    %2064 = vmatpush1.msra.mxu0 0.0
    %2065 = vmatprep.subr.mxu0 0.0
    %2066 = vmatpush1.msra.mxu0 0.0
    %2067 = vmatprep.subr.mxu0 0.0
    %2068 = vmatpush1.msra.mxu0 0.0
    %2069 = vmatprep.mubr.f32.mxu0 0.0
    %2070 = vmatmul.mubr.f32.gmra.mrb[0].mxu0 %v1933
    %v2071 = vpop.f32.mrb[0].mxu0
    %v2072 = vadd.f32 0.0, %v2071
    %v2073 = vpop.f32.mrb[0].mxu0
    %2074 = vdwg.mxu0
    %2075 = vmatprep.subr.mxu0 0.0
    %2076 = vmatpush1.msra.mxu0 %v1215
    %2077 = vmatprep.subr.mxu0 0.0
    %2078 = vmatpush1.msra.mxu0 %v1216
    %2079 = vmatprep.subr.mxu0 0.0
    %2080 = vmatpush1.msra.mxu0 0.0
    %2081 = vmatprep.subr.mxu0 0.0
    %2082 = vmatpush1.msra.mxu0 0.0
    %2083 = vmatprep.subr.mxu0 0.0
    %2084 = vmatpush1.msra.mxu0 0.0
    %2085 = vmatprep.subr.mxu0 0.0
    %2086 = vmatpush1.msra.mxu0 0.0
    %2087 = vmatprep.subr.mxu0 0.0
    %2088 = vmatpush1.msra.mxu0 0.0
    %2089 = vmatprep.subr.mxu0 0.0
    %2090 = vmatpush1.msra.mxu0 0.0
    %2091 = vmatprep.subr.mxu0 0.0
    %2092 = vmatpush1.msra.mxu0 0.0
    %2093 = vmatprep.subr.mxu0 0.0
    %2094 = vmatpush1.msra.mxu0 0.0
    %2095 = vmatprep.subr.mxu0 0.0
    %2096 = vmatpush1.msra.mxu0 0.0
    %2097 = vmatprep.subr.mxu0 0.0
    %2098 = vmatpush1.msra.mxu0 0.0
    %2099 = vmatprep.subr.mxu0 0.0
    %2100 = vmatpush1.msra.mxu0 0.0
    %2101 = vmatprep.subr.mxu0 0.0
    %2102 = vmatpush1.msra.mxu0 0.0
    %2103 = vmatprep.subr.mxu0 0.0
    %2104 = vmatpush1.msra.mxu0 0.0
    %2105 = vmatprep.subr.mxu0 0.0
    %2106 = vmatpush1.msra.mxu0 0.0
    %2107 = vmatprep.subr.mxu0 0.0
    %2108 = vmatpush1.msra.mxu0 0.0
    %2109 = vmatprep.subr.mxu0 0.0
    %2110 = vmatpush1.msra.mxu0 0.0
    %2111 = vmatprep.subr.mxu0 0.0
    %2112 = vmatpush1.msra.mxu0 0.0
    %2113 = vmatprep.subr.mxu0 0.0
    %2114 = vmatpush1.msra.mxu0 0.0
    %2115 = vmatprep.subr.mxu0 0.0
    %2116 = vmatpush1.msra.mxu0 0.0
    %2117 = vmatprep.subr.mxu0 0.0
    %2118 = vmatpush1.msra.mxu0 0.0
    %2119 = vmatprep.subr.mxu0 0.0
    %2120 = vmatpush1.msra.mxu0 0.0
    %2121 = vmatprep.subr.mxu0 0.0
    %2122 = vmatpush1.msra.mxu0 0.0
    %2123 = vmatprep.subr.mxu0 0.0
    %2124 = vmatpush1.msra.mxu0 0.0
    %2125 = vmatprep.subr.mxu0 0.0
    %2126 = vmatpush1.msra.mxu0 0.0
    %2127 = vmatprep.subr.mxu0 0.0
    %2128 = vmatpush1.msra.mxu0 0.0
    %2129 = vmatprep.subr.mxu0 0.0
    %2130 = vmatpush1.msra.mxu0 0.0
    %2131 = vmatprep.subr.mxu0 0.0
    %2132 = vmatpush1.msra.mxu0 0.0
    %2133 = vmatprep.subr.mxu0 0.0
    %2134 = vmatpush1.msra.mxu0 0.0
    %2135 = vmatprep.subr.mxu0 0.0
    %2136 = vmatpush1.msra.mxu0 0.0
    %2137 = vmatprep.subr.mxu0 0.0
    %2138 = vmatpush1.msra.mxu0 0.0
    %2139 = vmatprep.mubr.f32.mxu0 0.0
    %2140 = vmatmul.mubr.f32.gmra.mrb[0].mxu0 %v1933
    %v2141 = vpop.f32.mrb[0].mxu0
    %v2142 = vadd.f32 %v1365, %v2141
    %v2143 = vpop.f32.mrb[0].mxu0
    %2144 = vdwg.mxu0
    %v2145 = vld [vmem:[#allocation2 + $0x18] sm:$0xff]
    %v2146 = vadd.f32 %v2145, %v2002
    %v2147 = vxor.u32 %v2146, 2147483648
    %v2148 = vmul.f32 %v2147, 1.442695
    %v2149 = vpow.pop %v2148
    %v2150 = vadd.f32 %v2149, 1.0
    %v2151 = vrcp.pop %v2150
    %v2152 = vmul.f32 1.0, %v2151
    %v2153 = vld [vmem:[#allocation3 + $0x18] sm:$0xff]
    %v2154 = vadd.f32 %v2153, %v2072
    %v2155 = vxor.u32 %v2154, 2147483648
    %v2156 = vmul.f32 %v2155, 1.442695
    %v2157 = vpow.pop %v2156
    %v2158 = vadd.f32 %v2157, 1.0
    %v2159 = vrcp.pop %v2158
    %v2160 = vmul.f32 1.0, %v2159
    %v2161 = vld [vmem:[#allocation4 + $0x18] sm:$0xff]
    %v2162 = vmul.f32 %v2152, %v2142
    %v2163 = vadd.f32 %v2161, %v2162
    %v2164 = vtanh.pop %v2163
    %v2165 = vsub.f32 %v1931, %v2164
    %v2166 = vmul.f32 %v2160, %v2165
    %v2167 = vadd.f32 %v2164, %v2166
    %v2169 = vsel %vm275, %v2167, 0
    %2171 = vmatprep.subr.mxu0 0.0
    %2172 = vmatpush1.msra.mxu0 %v1209
    %2173 = vmatprep.subr.mxu0 0.0
    %2174 = vmatpush1.msra.mxu0 %v1210
    %2175 = vmatprep.subr.mxu0 0.0
    %2176 = vmatpush1.msra.mxu0 0.0
    %2177 = vmatprep.subr.mxu0 0.0
    %2178 = vmatpush1.msra.mxu0 0.0
    %2179 = vmatprep.subr.mxu0 0.0
    %2180 = vmatpush1.msra.mxu0 0.0
    %2181 = vmatprep.subr.mxu0 0.0
    %2182 = vmatpush1.msra.mxu0 0.0
    %2183 = vmatprep.subr.mxu0 0.0
    %2184 = vmatpush1.msra.mxu0 0.0
    %2185 = vmatprep.subr.mxu0 0.0
    %2186 = vmatpush1.msra.mxu0 0.0
    %2187 = vmatprep.subr.mxu0 0.0
    %2188 = vmatpush1.msra.mxu0 0.0
    %2189 = vmatprep.subr.mxu0 0.0
    %2190 = vmatpush1.msra.mxu0 0.0
    %2191 = vmatprep.subr.mxu0 0.0
    %2192 = vmatpush1.msra.mxu0 0.0
    %2193 = vmatprep.subr.mxu0 0.0
    %2194 = vmatpush1.msra.mxu0 0.0
    %2195 = vmatprep.subr.mxu0 0.0
    %2196 = vmatpush1.msra.mxu0 0.0
    %2197 = vmatprep.subr.mxu0 0.0
    %2198 = vmatpush1.msra.mxu0 0.0
    %2199 = vmatprep.subr.mxu0 0.0
    %2200 = vmatpush1.msra.mxu0 0.0
    %2201 = vmatprep.subr.mxu0 0.0
    %2202 = vmatpush1.msra.mxu0 0.0
    %2203 = vmatprep.subr.mxu0 0.0
    %2204 = vmatpush1.msra.mxu0 0.0
    %2205 = vmatprep.subr.mxu0 0.0
    %2206 = vmatpush1.msra.mxu0 0.0
    %2207 = vmatprep.subr.mxu0 0.0
    %2208 = vmatpush1.msra.mxu0 0.0
    %2209 = vmatprep.subr.mxu0 0.0
    %2210 = vmatpush1.msra.mxu0 0.0
    %2211 = vmatprep.subr.mxu0 0.0
    %2212 = vmatpush1.msra.mxu0 0.0
    %2213 = vmatprep.subr.mxu0 0.0
    %2214 = vmatpush1.msra.mxu0 0.0
    %2215 = vmatprep.subr.mxu0 0.0
    %2216 = vmatpush1.msra.mxu0 0.0
    %2217 = vmatprep.subr.mxu0 0.0
    %2218 = vmatpush1.msra.mxu0 0.0
    %2219 = vmatprep.subr.mxu0 0.0
    %2220 = vmatpush1.msra.mxu0 0.0
    %2221 = vmatprep.subr.mxu0 0.0
    %2222 = vmatpush1.msra.mxu0 0.0
    %2223 = vmatprep.subr.mxu0 0.0
    %2224 = vmatpush1.msra.mxu0 0.0
    %2225 = vmatprep.subr.mxu0 0.0
    %2226 = vmatpush1.msra.mxu0 0.0
    %2227 = vmatprep.subr.mxu0 0.0
    %2228 = vmatpush1.msra.mxu0 0.0
    %2229 = vmatprep.subr.mxu0 0.0
    %2230 = vmatpush1.msra.mxu0 0.0
    %2231 = vmatprep.subr.mxu0 0.0
    %2232 = vmatpush1.msra.mxu0 0.0
    %2233 = vmatprep.subr.mxu0 0.0
    %2234 = vmatpush1.msra.mxu0 0.0
    %2235 = vmatprep.mubr.f32.mxu0 0.0
    %2236 = vmatmul.mubr.f32.gmra.mrb[0].mxu0 %v2169
    %v2237 = vpop.f32.mrb[0].mxu0
    %v2238 = vadd.f32 0.0, %v2237
    %v2239 = vpop.f32.mrb[0].mxu0
    %2240 = vdwg.mxu0
    %2241 = vmatprep.subr.mxu0 0.0
    %2242 = vmatpush1.msra.mxu0 %v1212
    %2243 = vmatprep.subr.mxu0 0.0
    %2244 = vmatpush1.msra.mxu0 %v1213
    %2245 = vmatprep.subr.mxu0 0.0
    %2246 = vmatpush1.msra.mxu0 0.0
    %2247 = vmatprep.subr.mxu0 0.0
    %2248 = vmatpush1.msra.mxu0 0.0
    %2249 = vmatprep.subr.mxu0 0.0
    %2250 = vmatpush1.msra.mxu0 0.0
    %2251 = vmatprep.subr.mxu0 0.0
    %2252 = vmatpush1.msra.mxu0 0.0
    %2253 = vmatprep.subr.mxu0 0.0
    %2254 = vmatpush1.msra.mxu0 0.0
    %2255 = vmatprep.subr.mxu0 0.0
    %2256 = vmatpush1.msra.mxu0 0.0
    %2257 = vmatprep.subr.mxu0 0.0
    %2258 = vmatpush1.msra.mxu0 0.0
    %2259 = vmatprep.subr.mxu0 0.0
    %2260 = vmatpush1.msra.mxu0 0.0
    %2261 = vmatprep.subr.mxu0 0.0
    %2262 = vmatpush1.msra.mxu0 0.0
    %2263 = vmatprep.subr.mxu0 0.0
    %2264 = vmatpush1.msra.mxu0 0.0
    %2265 = vmatprep.subr.mxu0 0.0
    %2266 = vmatpush1.msra.mxu0 0.0
    %2267 = vmatprep.subr.mxu0 0.0
    %2268 = vmatpush1.msra.mxu0 0.0
    %2269 = vmatprep.subr.mxu0 0.0
    %2270 = vmatpush1.msra.mxu0 0.0
    %2271 = vmatprep.subr.mxu0 0.0
    %2272 = vmatpush1.msra.mxu0 0.0
    %2273 = vmatprep.subr.mxu0 0.0
    %2274 = vmatpush1.msra.mxu0 0.0
    %2275 = vmatprep.subr.mxu0 0.0
    %2276 = vmatpush1.msra.mxu0 0.0
    %2277 = vmatprep.subr.mxu0 0.0
    %2278 = vmatpush1.msra.mxu0 0.0
    %2279 = vmatprep.subr.mxu0 0.0
    %2280 = vmatpush1.msra.mxu0 0.0
    %2281 = vmatprep.subr.mxu0 0.0
    %2282 = vmatpush1.msra.mxu0 0.0
    %2283 = vmatprep.subr.mxu0 0.0
    %2284 = vmatpush1.msra.mxu0 0.0
    %2285 = vmatprep.subr.mxu0 0.0
    %2286 = vmatpush1.msra.mxu0 0.0
    %2287 = vmatprep.subr.mxu0 0.0
    %2288 = vmatpush1.msra.mxu0 0.0
    %2289 = vmatprep.subr.mxu0 0.0
    %2290 = vmatpush1.msra.mxu0 0.0
    %2291 = vmatprep.subr.mxu0 0.0
    %2292 = vmatpush1.msra.mxu0 0.0
    %2293 = vmatprep.subr.mxu0 0.0
    %2294 = vmatpush1.msra.mxu0 0.0
    %2295 = vmatprep.subr.mxu0 0.0
    %2296 = vmatpush1.msra.mxu0 0.0
    %2297 = vmatprep.subr.mxu0 0.0
    %2298 = vmatpush1.msra.mxu0 0.0
    %2299 = vmatprep.subr.mxu0 0.0
    %2300 = vmatpush1.msra.mxu0 0.0
    %2301 = vmatprep.subr.mxu0 0.0
    %2302 = vmatpush1.msra.mxu0 0.0
    %2303 = vmatprep.subr.mxu0 0.0
    %2304 = vmatpush1.msra.mxu0 0.0
    %2305 = vmatprep.mubr.f32.mxu0 0.0
    %2306 = vmatmul.mubr.f32.gmra.mrb[0].mxu0 %v2169
    %v2307 = vpop.f32.mrb[0].mxu0
    %v2308 = vadd.f32 0.0, %v2307
    %v2309 = vpop.f32.mrb[0].mxu0
    %2310 = vdwg.mxu0
    %2311 = vmatprep.subr.mxu0 0.0
    %2312 = vmatpush1.msra.mxu0 %v1215
    %2313 = vmatprep.subr.mxu0 0.0
    %2314 = vmatpush1.msra.mxu0 %v1216
    %2315 = vmatprep.subr.mxu0 0.0
    %2316 = vmatpush1.msra.mxu0 0.0
    %2317 = vmatprep.subr.mxu0 0.0
    %2318 = vmatpush1.msra.mxu0 0.0
    %2319 = vmatprep.subr.mxu0 0.0
    %2320 = vmatpush1.msra.mxu0 0.0
    %2321 = vmatprep.subr.mxu0 0.0
    %2322 = vmatpush1.msra.mxu0 0.0
    %2323 = vmatprep.subr.mxu0 0.0
    %2324 = vmatpush1.msra.mxu0 0.0
    %2325 = vmatprep.subr.mxu0 0.0
    %2326 = vmatpush1.msra.mxu0 0.0
    %2327 = vmatprep.subr.mxu0 0.0
    %2328 = vmatpush1.msra.mxu0 0.0
    %2329 = vmatprep.subr.mxu0 0.0
    %2330 = vmatpush1.msra.mxu0 0.0
    %2331 = vmatprep.subr.mxu0 0.0
    %2332 = vmatpush1.msra.mxu0 0.0
    %2333 = vmatprep.subr.mxu0 0.0
    %2334 = vmatpush1.msra.mxu0 0.0
    %2335 = vmatprep.subr.mxu0 0.0
    %2336 = vmatpush1.msra.mxu0 0.0
    %2337 = vmatprep.subr.mxu0 0.0
    %2338 = vmatpush1.msra.mxu0 0.0
    %2339 = vmatprep.subr.mxu0 0.0
    %2340 = vmatpush1.msra.mxu0 0.0
    %2341 = vmatprep.subr.mxu0 0.0
    %2342 = vmatpush1.msra.mxu0 0.0
    %2343 = vmatprep.subr.mxu0 0.0
    %2344 = vmatpush1.msra.mxu0 0.0
    %2345 = vmatprep.subr.mxu0 0.0
    %2346 = vmatpush1.msra.mxu0 0.0
    %2347 = vmatprep.subr.mxu0 0.0
    %2348 = vmatpush1.msra.mxu0 0.0
    %2349 = vmatprep.subr.mxu0 0.0
    %2350 = vmatpush1.msra.mxu0 0.0
    %2351 = vmatprep.subr.mxu0 0.0
    %2352 = vmatpush1.msra.mxu0 0.0
    %2353 = vmatprep.subr.mxu0 0.0
    %2354 = vmatpush1.msra.mxu0 0.0
    %2355 = vmatprep.subr.mxu0 0.0
    %2356 = vmatpush1.msra.mxu0 0.0
    %2357 = vmatprep.subr.mxu0 0.0
    %2358 = vmatpush1.msra.mxu0 0.0
    %2359 = vmatprep.subr.mxu0 0.0
    %2360 = vmatpush1.msra.mxu0 0.0
    %2361 = vmatprep.subr.mxu0 0.0
    %2362 = vmatpush1.msra.mxu0 0.0
    %2363 = vmatprep.subr.mxu0 0.0
    %2364 = vmatpush1.msra.mxu0 0.0
    %2365 = vmatprep.subr.mxu0 0.0
    %2366 = vmatpush1.msra.mxu0 0.0
    %2367 = vmatprep.subr.mxu0 0.0
    %2368 = vmatpush1.msra.mxu0 0.0
    %2369 = vmatprep.subr.mxu0 0.0
    %2370 = vmatpush1.msra.mxu0 0.0
    %2371 = vmatprep.subr.mxu0 0.0
    %2372 = vmatpush1.msra.mxu0 0.0
    %2373 = vmatprep.subr.mxu0 0.0
    %2374 = vmatpush1.msra.mxu0 0.0
    %2375 = vmatprep.mubr.f32.mxu0 0.0
    %2376 = vmatmul.mubr.f32.gmra.mrb[0].mxu0 %v2169
    %v2377 = vpop.f32.mrb[0].mxu0
    %v2378 = vadd.f32 %v1365, %v2377
    %v2379 = vpop.f32.mrb[0].mxu0
    %2380 = vdwg.mxu0
    %v2381 = vld [vmem:[#allocation2 + $0x20] sm:$0xff]
    %v2382 = vadd.f32 %v2381, %v2238
    %v2383 = vxor.u32 %v2382, 2147483648
    %v2384 = vmul.f32 %v2383, 1.442695
    %v2385 = vpow.pop %v2384
    %v2386 = vadd.f32 %v2385, 1.0
    %v2387 = vrcp.pop %v2386
    %v2388 = vmul.f32 1.0, %v2387
    %v2389 = vld [vmem:[#allocation3 + $0x20] sm:$0xff]
    %v2390 = vadd.f32 %v2389, %v2308
    %v2391 = vxor.u32 %v2390, 2147483648
    %v2392 = vmul.f32 %v2391, 1.442695
    %v2393 = vpow.pop %v2392
    %v2394 = vadd.f32 %v2393, 1.0
    %v2395 = vrcp.pop %v2394
    %v2396 = vmul.f32 1.0, %v2395
    %v2397 = vld [vmem:[#allocation4 + $0x20] sm:$0xff]
    %v2398 = vmul.f32 %v2388, %v2378
    %v2399 = vadd.f32 %v2397, %v2398
    %v2400 = vtanh.pop %v2399
    %v2401 = vsub.f32 %v2167, %v2400
    %v2402 = vmul.f32 %v2396, %v2401
    %v2403 = vadd.f32 %v2400, %v2402
    %v2405 = vsel %vm275, %v2403, 0
    %2407 = vmatprep.subr.mxu0 0.0
    %2408 = vmatpush1.msra.mxu0 %v1209
    %2409 = vmatprep.subr.mxu0 0.0
    %2410 = vmatpush1.msra.mxu0 %v1210
    %2411 = vmatprep.subr.mxu0 0.0
    %2412 = vmatpush1.msra.mxu0 0.0
    %2413 = vmatprep.subr.mxu0 0.0
    %2414 = vmatpush1.msra.mxu0 0.0
    %2415 = vmatprep.subr.mxu0 0.0
    %2416 = vmatpush1.msra.mxu0 0.0
    %2417 = vmatprep.subr.mxu0 0.0
    %2418 = vmatpush1.msra.mxu0 0.0
    %2419 = vmatprep.subr.mxu0 0.0
    %2420 = vmatpush1.msra.mxu0 0.0
    %2421 = vmatprep.subr.mxu0 0.0
    %2422 = vmatpush1.msra.mxu0 0.0
    %2423 = vmatprep.subr.mxu0 0.0
    %2424 = vmatpush1.msra.mxu0 0.0
    %2425 = vmatprep.subr.mxu0 0.0
    %2426 = vmatpush1.msra.mxu0 0.0
    %2427 = vmatprep.subr.mxu0 0.0
    %2428 = vmatpush1.msra.mxu0 0.0
    %2429 = vmatprep.subr.mxu0 0.0
    %2430 = vmatpush1.msra.mxu0 0.0
    %2431 = vmatprep.subr.mxu0 0.0
    %2432 = vmatpush1.msra.mxu0 0.0
    %2433 = vmatprep.subr.mxu0 0.0
    %2434 = vmatpush1.msra.mxu0 0.0
    %2435 = vmatprep.subr.mxu0 0.0
    %2436 = vmatpush1.msra.mxu0 0.0
    %2437 = vmatprep.subr.mxu0 0.0
    %2438 = vmatpush1.msra.mxu0 0.0
    %2439 = vmatprep.subr.mxu0 0.0
    %2440 = vmatpush1.msra.mxu0 0.0
    %2441 = vmatprep.subr.mxu0 0.0
    %2442 = vmatpush1.msra.mxu0 0.0
    %2443 = vmatprep.subr.mxu0 0.0
    %2444 = vmatpush1.msra.mxu0 0.0
    %2445 = vmatprep.subr.mxu0 0.0
    %2446 = vmatpush1.msra.mxu0 0.0
    %2447 = vmatprep.subr.mxu0 0.0
    %2448 = vmatpush1.msra.mxu0 0.0
    %2449 = vmatprep.subr.mxu0 0.0
    %2450 = vmatpush1.msra.mxu0 0.0
    %2451 = vmatprep.subr.mxu0 0.0
    %2452 = vmatpush1.msra.mxu0 0.0
    %2453 = vmatprep.subr.mxu0 0.0
    %2454 = vmatpush1.msra.mxu0 0.0
    %2455 = vmatprep.subr.mxu0 0.0
    %2456 = vmatpush1.msra.mxu0 0.0
    %2457 = vmatprep.subr.mxu0 0.0
    %2458 = vmatpush1.msra.mxu0 0.0
    %2459 = vmatprep.subr.mxu0 0.0
    %2460 = vmatpush1.msra.mxu0 0.0
    %2461 = vmatprep.subr.mxu0 0.0
    %2462 = vmatpush1.msra.mxu0 0.0
    %2463 = vmatprep.subr.mxu0 0.0
    %2464 = vmatpush1.msra.mxu0 0.0
    %2465 = vmatprep.subr.mxu0 0.0
    %2466 = vmatpush1.msra.mxu0 0.0
    %2467 = vmatprep.subr.mxu0 0.0
    %2468 = vmatpush1.msra.mxu0 0.0
    %2469 = vmatprep.subr.mxu0 0.0
    %2470 = vmatpush1.msra.mxu0 0.0
    %2471 = vmatprep.mubr.f32.mxu0 0.0
    %2472 = vmatmul.mubr.f32.gmra.mrb[0].mxu0 %v2405
    %v2473 = vpop.f32.mrb[0].mxu0
    %v2474 = vadd.f32 0.0, %v2473
    %v2475 = vpop.f32.mrb[0].mxu0
    %2476 = vdwg.mxu0
    %2477 = vmatprep.subr.mxu0 0.0
    %2478 = vmatpush1.msra.mxu0 %v1212
    %2479 = vmatprep.subr.mxu0 0.0
    %2480 = vmatpush1.msra.mxu0 %v1213
    %2481 = vmatprep.subr.mxu0 0.0
    %2482 = vmatpush1.msra.mxu0 0.0
    %2483 = vmatprep.subr.mxu0 0.0
    %2484 = vmatpush1.msra.mxu0 0.0
    %2485 = vmatprep.subr.mxu0 0.0
    %2486 = vmatpush1.msra.mxu0 0.0
    %2487 = vmatprep.subr.mxu0 0.0
    %2488 = vmatpush1.msra.mxu0 0.0
    %2489 = vmatprep.subr.mxu0 0.0
    %2490 = vmatpush1.msra.mxu0 0.0
    %2491 = vmatprep.subr.mxu0 0.0
    %2492 = vmatpush1.msra.mxu0 0.0
    %2493 = vmatprep.subr.mxu0 0.0
    %2494 = vmatpush1.msra.mxu0 0.0
    %2495 = vmatprep.subr.mxu0 0.0
    %2496 = vmatpush1.msra.mxu0 0.0
    %2497 = vmatprep.subr.mxu0 0.0
    %2498 = vmatpush1.msra.mxu0 0.0
    %2499 = vmatprep.subr.mxu0 0.0
    %2500 = vmatpush1.msra.mxu0 0.0
    %2501 = vmatprep.subr.mxu0 0.0
    %2502 = vmatpush1.msra.mxu0 0.0
    %2503 = vmatprep.subr.mxu0 0.0
    %2504 = vmatpush1.msra.mxu0 0.0
    %2505 = vmatprep.subr.mxu0 0.0
    %2506 = vmatpush1.msra.mxu0 0.0
    %2507 = vmatprep.subr.mxu0 0.0
    %2508 = vmatpush1.msra.mxu0 0.0
    %2509 = vmatprep.subr.mxu0 0.0
    %2510 = vmatpush1.msra.mxu0 0.0
    %2511 = vmatprep.subr.mxu0 0.0
    %2512 = vmatpush1.msra.mxu0 0.0
    %2513 = vmatprep.subr.mxu0 0.0
    %2514 = vmatpush1.msra.mxu0 0.0
    %2515 = vmatprep.subr.mxu0 0.0
    %2516 = vmatpush1.msra.mxu0 0.0
    %2517 = vmatprep.subr.mxu0 0.0
    %2518 = vmatpush1.msra.mxu0 0.0
    %2519 = vmatprep.subr.mxu0 0.0
    %2520 = vmatpush1.msra.mxu0 0.0
    %2521 = vmatprep.subr.mxu0 0.0
    %2522 = vmatpush1.msra.mxu0 0.0
    %2523 = vmatprep.subr.mxu0 0.0
    %2524 = vmatpush1.msra.mxu0 0.0
    %2525 = vmatprep.subr.mxu0 0.0
    %2526 = vmatpush1.msra.mxu0 0.0
    %2527 = vmatprep.subr.mxu0 0.0
    %2528 = vmatpush1.msra.mxu0 0.0
    %2529 = vmatprep.subr.mxu0 0.0
    %2530 = vmatpush1.msra.mxu0 0.0
    %2531 = vmatprep.subr.mxu0 0.0
    %2532 = vmatpush1.msra.mxu0 0.0
    %2533 = vmatprep.subr.mxu0 0.0
    %2534 = vmatpush1.msra.mxu0 0.0
    %2535 = vmatprep.subr.mxu0 0.0
    %2536 = vmatpush1.msra.mxu0 0.0
    %2537 = vmatprep.subr.mxu0 0.0
    %2538 = vmatpush1.msra.mxu0 0.0
    %2539 = vmatprep.subr.mxu0 0.0
    %2540 = vmatpush1.msra.mxu0 0.0
    %2541 = vmatprep.mubr.f32.mxu0 0.0
    %2542 = vmatmul.mubr.f32.gmra.mrb[0].mxu0 %v2405
    %v2543 = vpop.f32.mrb[0].mxu0
    %v2544 = vadd.f32 0.0, %v2543
    %v2545 = vpop.f32.mrb[0].mxu0
    %2546 = vdwg.mxu0
    %2547 = vmatprep.subr.mxu0 0.0
    %2548 = vmatpush1.msra.mxu0 %v1215
    %2549 = vmatprep.subr.mxu0 0.0
    %2550 = vmatpush1.msra.mxu0 %v1216
    %2551 = vmatprep.subr.mxu0 0.0
    %2552 = vmatpush1.msra.mxu0 0.0
    %2553 = vmatprep.subr.mxu0 0.0
    %2554 = vmatpush1.msra.mxu0 0.0
    %2555 = vmatprep.subr.mxu0 0.0
    %2556 = vmatpush1.msra.mxu0 0.0
    %2557 = vmatprep.subr.mxu0 0.0
    %2558 = vmatpush1.msra.mxu0 0.0
    %2559 = vmatprep.subr.mxu0 0.0
    %2560 = vmatpush1.msra.mxu0 0.0
    %2561 = vmatprep.subr.mxu0 0.0
    %2562 = vmatpush1.msra.mxu0 0.0
    %2563 = vmatprep.subr.mxu0 0.0
    %2564 = vmatpush1.msra.mxu0 0.0
    %2565 = vmatprep.subr.mxu0 0.0
    %2566 = vmatpush1.msra.mxu0 0.0
    %2567 = vmatprep.subr.mxu0 0.0
    %2568 = vmatpush1.msra.mxu0 0.0
    %2569 = vmatprep.subr.mxu0 0.0
    %2570 = vmatpush1.msra.mxu0 0.0
    %2571 = vmatprep.subr.mxu0 0.0
    %2572 = vmatpush1.msra.mxu0 0.0
    %2573 = vmatprep.subr.mxu0 0.0
    %2574 = vmatpush1.msra.mxu0 0.0
    %2575 = vmatprep.subr.mxu0 0.0
    %2576 = vmatpush1.msra.mxu0 0.0
    %2577 = vmatprep.subr.mxu0 0.0
    %2578 = vmatpush1.msra.mxu0 0.0
    %2579 = vmatprep.subr.mxu0 0.0
    %2580 = vmatpush1.msra.mxu0 0.0
    %2581 = vmatprep.subr.mxu0 0.0
    %2582 = vmatpush1.msra.mxu0 0.0
    %2583 = vmatprep.subr.mxu0 0.0
    %2584 = vmatpush1.msra.mxu0 0.0
    %2585 = vmatprep.subr.mxu0 0.0
    %2586 = vmatpush1.msra.mxu0 0.0
    %2587 = vmatprep.subr.mxu0 0.0
    %2588 = vmatpush1.msra.mxu0 0.0
    %2589 = vmatprep.subr.mxu0 0.0
    %2590 = vmatpush1.msra.mxu0 0.0
    %2591 = vmatprep.subr.mxu0 0.0
    %2592 = vmatpush1.msra.mxu0 0.0
    %2593 = vmatprep.subr.mxu0 0.0
    %2594 = vmatpush1.msra.mxu0 0.0
    %2595 = vmatprep.subr.mxu0 0.0
    %2596 = vmatpush1.msra.mxu0 0.0
    %2597 = vmatprep.subr.mxu0 0.0
    %2598 = vmatpush1.msra.mxu0 0.0
    %2599 = vmatprep.subr.mxu0 0.0
    %2600 = vmatpush1.msra.mxu0 0.0
    %2601 = vmatprep.subr.mxu0 0.0
    %2602 = vmatpush1.msra.mxu0 0.0
    %2603 = vmatprep.subr.mxu0 0.0
    %2604 = vmatpush1.msra.mxu0 0.0
    %2605 = vmatprep.subr.mxu0 0.0
    %2606 = vmatpush1.msra.mxu0 0.0
    %2607 = vmatprep.subr.mxu0 0.0
    %2608 = vmatpush1.msra.mxu0 0.0
    %2609 = vmatprep.subr.mxu0 0.0
    %2610 = vmatpush1.msra.mxu0 0.0
    %2611 = vmatprep.mubr.f32.mxu0 0.0
    %2612 = vmatmul.mubr.f32.gmra.mrb[0].mxu0 %v2405
    %v2613 = vpop.f32.mrb[0].mxu0
    %v2614 = vadd.f32 %v1365, %v2613
    %v2615 = vpop.f32.mrb[0].mxu0
    %2616 = vdwg.mxu0
    %v2617 = vld [vmem:[#allocation2 + $0x28] sm:$0xff]
    %v2618 = vadd.f32 %v2617, %v2474
    %v2619 = vxor.u32 %v2618, 2147483648
    %v2620 = vmul.f32 %v2619, 1.442695
    %v2621 = vpow.pop %v2620
    %v2622 = vadd.f32 %v2621, 1.0
    %v2623 = vrcp.pop %v2622
    %v2624 = vmul.f32 1.0, %v2623
    %v2625 = vld [vmem:[#allocation3 + $0x28] sm:$0xff]
    %v2626 = vadd.f32 %v2625, %v2544
    %v2627 = vxor.u32 %v2626, 2147483648
    %v2628 = vmul.f32 %v2627, 1.442695
    %v2629 = vpow.pop %v2628
    %v2630 = vadd.f32 %v2629, 1.0
    %v2631 = vrcp.pop %v2630
    %v2632 = vmul.f32 1.0, %v2631
    %v2633 = vld [vmem:[#allocation4 + $0x28] sm:$0xff]
    %v2634 = vmul.f32 %v2624, %v2614
    %v2635 = vadd.f32 %v2633, %v2634
    %v2636 = vtanh.pop %v2635
    %v2637 = vsub.f32 %v2403, %v2636
    %v2638 = vmul.f32 %v2632, %v2637
    %v2639 = vadd.f32 %v2636, %v2638
    %v2641 = vsel %vm275, %v2639, 0
    %2643 = vmatprep.subr.mxu0 0.0
    %2644 = vmatpush1.msra.mxu0 %v1209
    %2645 = vmatprep.subr.mxu0 0.0
    %2646 = vmatpush1.msra.mxu0 %v1210
    %2647 = vmatprep.subr.mxu0 0.0
    %2648 = vmatpush1.msra.mxu0 0.0
    %2649 = vmatprep.subr.mxu0 0.0
    %2650 = vmatpush1.msra.mxu0 0.0
    %2651 = vmatprep.subr.mxu0 0.0
    %2652 = vmatpush1.msra.mxu0 0.0
    %2653 = vmatprep.subr.mxu0 0.0
    %2654 = vmatpush1.msra.mxu0 0.0
    %2655 = vmatprep.subr.mxu0 0.0
    %2656 = vmatpush1.msra.mxu0 0.0
    %2657 = vmatprep.subr.mxu0 0.0
    %2658 = vmatpush1.msra.mxu0 0.0
    %2659 = vmatprep.subr.mxu0 0.0
    %2660 = vmatpush1.msra.mxu0 0.0
    %2661 = vmatprep.subr.mxu0 0.0
    %2662 = vmatpush1.msra.mxu0 0.0
    %2663 = vmatprep.subr.mxu0 0.0
    %2664 = vmatpush1.msra.mxu0 0.0
    %2665 = vmatprep.subr.mxu0 0.0
    %2666 = vmatpush1.msra.mxu0 0.0
    %2667 = vmatprep.subr.mxu0 0.0
    %2668 = vmatpush1.msra.mxu0 0.0
    %2669 = vmatprep.subr.mxu0 0.0
    %2670 = vmatpush1.msra.mxu0 0.0
    %2671 = vmatprep.subr.mxu0 0.0
    %2672 = vmatpush1.msra.mxu0 0.0
    %2673 = vmatprep.subr.mxu0 0.0
    %2674 = vmatpush1.msra.mxu0 0.0
    %2675 = vmatprep.subr.mxu0 0.0
    %2676 = vmatpush1.msra.mxu0 0.0
    %2677 = vmatprep.subr.mxu0 0.0
    %2678 = vmatpush1.msra.mxu0 0.0
    %2679 = vmatprep.subr.mxu0 0.0
    %2680 = vmatpush1.msra.mxu0 0.0
    %2681 = vmatprep.subr.mxu0 0.0
    %2682 = vmatpush1.msra.mxu0 0.0
    %2683 = vmatprep.subr.mxu0 0.0
    %2684 = vmatpush1.msra.mxu0 0.0
    %2685 = vmatprep.subr.mxu0 0.0
    %2686 = vmatpush1.msra.mxu0 0.0
    %2687 = vmatprep.subr.mxu0 0.0
    %2688 = vmatpush1.msra.mxu0 0.0
    %2689 = vmatprep.subr.mxu0 0.0
    %2690 = vmatpush1.msra.mxu0 0.0
    %2691 = vmatprep.subr.mxu0 0.0
    %2692 = vmatpush1.msra.mxu0 0.0
    %2693 = vmatprep.subr.mxu0 0.0
    %2694 = vmatpush1.msra.mxu0 0.0
    %2695 = vmatprep.subr.mxu0 0.0
    %2696 = vmatpush1.msra.mxu0 0.0
    %2697 = vmatprep.subr.mxu0 0.0
    %2698 = vmatpush1.msra.mxu0 0.0
    %2699 = vmatprep.subr.mxu0 0.0
    %2700 = vmatpush1.msra.mxu0 0.0
    %2701 = vmatprep.subr.mxu0 0.0
    %2702 = vmatpush1.msra.mxu0 0.0
    %2703 = vmatprep.subr.mxu0 0.0
    %2704 = vmatpush1.msra.mxu0 0.0
    %2705 = vmatprep.subr.mxu0 0.0
    %2706 = vmatpush1.msra.mxu0 0.0
    %2707 = vmatprep.mubr.f32.mxu0 0.0
    %2708 = vmatmul.mubr.f32.gmra.mrb[0].mxu0 %v2641
    %v2709 = vpop.f32.mrb[0].mxu0
    %v2710 = vadd.f32 0.0, %v2709
    %v2711 = vpop.f32.mrb[0].mxu0
    %2712 = vdwg.mxu0
    %2713 = vmatprep.subr.mxu0 0.0
    %2714 = vmatpush1.msra.mxu0 %v1212
    %2715 = vmatprep.subr.mxu0 0.0
    %2716 = vmatpush1.msra.mxu0 %v1213
    %2717 = vmatprep.subr.mxu0 0.0
    %2718 = vmatpush1.msra.mxu0 0.0
    %2719 = vmatprep.subr.mxu0 0.0
    %2720 = vmatpush1.msra.mxu0 0.0
    %2721 = vmatprep.subr.mxu0 0.0
    %2722 = vmatpush1.msra.mxu0 0.0
    %2723 = vmatprep.subr.mxu0 0.0
    %2724 = vmatpush1.msra.mxu0 0.0
    %2725 = vmatprep.subr.mxu0 0.0
    %2726 = vmatpush1.msra.mxu0 0.0
    %2727 = vmatprep.subr.mxu0 0.0
    %2728 = vmatpush1.msra.mxu0 0.0
    %2729 = vmatprep.subr.mxu0 0.0
    %2730 = vmatpush1.msra.mxu0 0.0
    %2731 = vmatprep.subr.mxu0 0.0
    %2732 = vmatpush1.msra.mxu0 0.0
    %2733 = vmatprep.subr.mxu0 0.0
    %2734 = vmatpush1.msra.mxu0 0.0
    %2735 = vmatprep.subr.mxu0 0.0
    %2736 = vmatpush1.msra.mxu0 0.0
    %2737 = vmatprep.subr.mxu0 0.0
    %2738 = vmatpush1.msra.mxu0 0.0
    %2739 = vmatprep.subr.mxu0 0.0
    %2740 = vmatpush1.msra.mxu0 0.0
    %2741 = vmatprep.subr.mxu0 0.0
    %2742 = vmatpush1.msra.mxu0 0.0
    %2743 = vmatprep.subr.mxu0 0.0
    %2744 = vmatpush1.msra.mxu0 0.0
    %2745 = vmatprep.subr.mxu0 0.0
    %2746 = vmatpush1.msra.mxu0 0.0
    %2747 = vmatprep.subr.mxu0 0.0
    %2748 = vmatpush1.msra.mxu0 0.0
    %2749 = vmatprep.subr.mxu0 0.0
    %2750 = vmatpush1.msra.mxu0 0.0
    %2751 = vmatprep.subr.mxu0 0.0
    %2752 = vmatpush1.msra.mxu0 0.0
    %2753 = vmatprep.subr.mxu0 0.0
    %2754 = vmatpush1.msra.mxu0 0.0
    %2755 = vmatprep.subr.mxu0 0.0
    %2756 = vmatpush1.msra.mxu0 0.0
    %2757 = vmatprep.subr.mxu0 0.0
    %2758 = vmatpush1.msra.mxu0 0.0
    %2759 = vmatprep.subr.mxu0 0.0
    %2760 = vmatpush1.msra.mxu0 0.0
    %2761 = vmatprep.subr.mxu0 0.0
    %2762 = vmatpush1.msra.mxu0 0.0
    %2763 = vmatprep.subr.mxu0 0.0
    %2764 = vmatpush1.msra.mxu0 0.0
    %2765 = vmatprep.subr.mxu0 0.0
    %2766 = vmatpush1.msra.mxu0 0.0
    %2767 = vmatprep.subr.mxu0 0.0
    %2768 = vmatpush1.msra.mxu0 0.0
    %2769 = vmatprep.subr.mxu0 0.0
    %2770 = vmatpush1.msra.mxu0 0.0
    %2771 = vmatprep.subr.mxu0 0.0
    %2772 = vmatpush1.msra.mxu0 0.0
    %2773 = vmatprep.subr.mxu0 0.0
    %2774 = vmatpush1.msra.mxu0 0.0
    %2775 = vmatprep.subr.mxu0 0.0
    %2776 = vmatpush1.msra.mxu0 0.0
    %2777 = vmatprep.mubr.f32.mxu0 0.0
    %2778 = vmatmul.mubr.f32.gmra.mrb[0].mxu0 %v2641
    %v2779 = vpop.f32.mrb[0].mxu0
    %v2780 = vadd.f32 0.0, %v2779
    %v2781 = vpop.f32.mrb[0].mxu0
    %2782 = vdwg.mxu0
    %2783 = vmatprep.subr.mxu0 0.0
    %2784 = vmatpush1.msra.mxu0 %v1215
    %2785 = vmatprep.subr.mxu0 0.0
    %2786 = vmatpush1.msra.mxu0 %v1216
    %2787 = vmatprep.subr.mxu0 0.0
    %2788 = vmatpush1.msra.mxu0 0.0
    %2789 = vmatprep.subr.mxu0 0.0
    %2790 = vmatpush1.msra.mxu0 0.0
    %2791 = vmatprep.subr.mxu0 0.0
    %2792 = vmatpush1.msra.mxu0 0.0
    %2793 = vmatprep.subr.mxu0 0.0
    %2794 = vmatpush1.msra.mxu0 0.0
    %2795 = vmatprep.subr.mxu0 0.0
    %2796 = vmatpush1.msra.mxu0 0.0
    %2797 = vmatprep.subr.mxu0 0.0
    %2798 = vmatpush1.msra.mxu0 0.0
    %2799 = vmatprep.subr.mxu0 0.0
    %2800 = vmatpush1.msra.mxu0 0.0
    %2801 = vmatprep.subr.mxu0 0.0
    %2802 = vmatpush1.msra.mxu0 0.0
    %2803 = vmatprep.subr.mxu0 0.0
    %2804 = vmatpush1.msra.mxu0 0.0
    %2805 = vmatprep.subr.mxu0 0.0
    %2806 = vmatpush1.msra.mxu0 0.0
    %2807 = vmatprep.subr.mxu0 0.0
    %2808 = vmatpush1.msra.mxu0 0.0
    %2809 = vmatprep.subr.mxu0 0.0
    %2810 = vmatpush1.msra.mxu0 0.0
    %2811 = vmatprep.subr.mxu0 0.0
    %2812 = vmatpush1.msra.mxu0 0.0
    %2813 = vmatprep.subr.mxu0 0.0
    %2814 = vmatpush1.msra.mxu0 0.0
    %2815 = vmatprep.subr.mxu0 0.0
    %2816 = vmatpush1.msra.mxu0 0.0
    %2817 = vmatprep.subr.mxu0 0.0
    %2818 = vmatpush1.msra.mxu0 0.0
    %2819 = vmatprep.subr.mxu0 0.0
    %2820 = vmatpush1.msra.mxu0 0.0
    %2821 = vmatprep.subr.mxu0 0.0
    %2822 = vmatpush1.msra.mxu0 0.0
    %2823 = vmatprep.subr.mxu0 0.0
    %2824 = vmatpush1.msra.mxu0 0.0
    %2825 = vmatprep.subr.mxu0 0.0
    %2826 = vmatpush1.msra.mxu0 0.0
    %2827 = vmatprep.subr.mxu0 0.0
    %2828 = vmatpush1.msra.mxu0 0.0
    %2829 = vmatprep.subr.mxu0 0.0
    %2830 = vmatpush1.msra.mxu0 0.0
    %2831 = vmatprep.subr.mxu0 0.0
    %2832 = vmatpush1.msra.mxu0 0.0
    %2833 = vmatprep.subr.mxu0 0.0
    %2834 = vmatpush1.msra.mxu0 0.0
    %2835 = vmatprep.subr.mxu0 0.0
    %2836 = vmatpush1.msra.mxu0 0.0
    %2837 = vmatprep.subr.mxu0 0.0
    %2838 = vmatpush1.msra.mxu0 0.0
    %2839 = vmatprep.subr.mxu0 0.0
    %2840 = vmatpush1.msra.mxu0 0.0
    %2841 = vmatprep.subr.mxu0 0.0
    %2842 = vmatpush1.msra.mxu0 0.0
    %2843 = vmatprep.subr.mxu0 0.0
    %2844 = vmatpush1.msra.mxu0 0.0
    %2845 = vmatprep.subr.mxu0 0.0
    %2846 = vmatpush1.msra.mxu0 0.0
    %2847 = vmatprep.mubr.f32.mxu0 0.0
    %2848 = vmatmul.mubr.f32.gmra.mrb[0].mxu0 %v2641
    %v2849 = vpop.f32.mrb[0].mxu0
    %v2850 = vadd.f32 %v1365, %v2849
    %v2851 = vpop.f32.mrb[0].mxu0
    %2852 = vdwg.mxu0
    %v2853 = vld [vmem:[#allocation2 + $0x30] sm:$0xff]
    %v2854 = vadd.f32 %v2853, %v2710
    %v2855 = vxor.u32 %v2854, 2147483648
    %v2856 = vmul.f32 %v2855, 1.442695
    %v2857 = vpow.pop %v2856
    %v2858 = vadd.f32 %v2857, 1.0
    %v2859 = vrcp.pop %v2858
    %v2860 = vmul.f32 1.0, %v2859
    %v2861 = vld [vmem:[#allocation3 + $0x30] sm:$0xff]
    %v2862 = vadd.f32 %v2861, %v2780
    %v2863 = vxor.u32 %v2862, 2147483648
    %v2864 = vmul.f32 %v2863, 1.442695
    %v2865 = vpow.pop %v2864
    %v2866 = vadd.f32 %v2865, 1.0
    %v2867 = vrcp.pop %v2866
    %v2868 = vmul.f32 1.0, %v2867
    %v2869 = vld [vmem:[#allocation4 + $0x30] sm:$0xff]
    %v2870 = vmul.f32 %v2860, %v2850
    %v2871 = vadd.f32 %v2869, %v2870
    %v2872 = vtanh.pop %v2871
    %v2873 = vsub.f32 %v2639, %v2872
    %v2874 = vmul.f32 %v2868, %v2873
    %v2875 = vadd.f32 %v2872, %v2874
    %v2877 = vsel %vm275, %v2875, 0
    %2879 = vmatprep.subr.mxu0 0.0
    %2880 = vmatpush1.msra.mxu0 %v1209
    %2881 = vmatprep.subr.mxu0 0.0
    %2882 = vmatpush1.msra.mxu0 %v1210
    %2883 = vmatprep.subr.mxu0 0.0
    %2884 = vmatpush1.msra.mxu0 0.0
    %2885 = vmatprep.subr.mxu0 0.0
    %2886 = vmatpush1.msra.mxu0 0.0
    %2887 = vmatprep.subr.mxu0 0.0
    %2888 = vmatpush1.msra.mxu0 0.0
    %2889 = vmatprep.subr.mxu0 0.0
    %2890 = vmatpush1.msra.mxu0 0.0
    %2891 = vmatprep.subr.mxu0 0.0
    %2892 = vmatpush1.msra.mxu0 0.0
    %2893 = vmatprep.subr.mxu0 0.0
    %2894 = vmatpush1.msra.mxu0 0.0
    %2895 = vmatprep.subr.mxu0 0.0
    %2896 = vmatpush1.msra.mxu0 0.0
    %2897 = vmatprep.subr.mxu0 0.0
    %2898 = vmatpush1.msra.mxu0 0.0
    %2899 = vmatprep.subr.mxu0 0.0
    %2900 = vmatpush1.msra.mxu0 0.0
    %2901 = vmatprep.subr.mxu0 0.0
    %2902 = vmatpush1.msra.mxu0 0.0
    %2903 = vmatprep.subr.mxu0 0.0
    %2904 = vmatpush1.msra.mxu0 0.0
    %2905 = vmatprep.subr.mxu0 0.0
    %2906 = vmatpush1.msra.mxu0 0.0
    %2907 = vmatprep.subr.mxu0 0.0
    %2908 = vmatpush1.msra.mxu0 0.0
    %2909 = vmatprep.subr.mxu0 0.0
    %2910 = vmatpush1.msra.mxu0 0.0
    %2911 = vmatprep.subr.mxu0 0.0
    %2912 = vmatpush1.msra.mxu0 0.0
    %2913 = vmatprep.subr.mxu0 0.0
    %2914 = vmatpush1.msra.mxu0 0.0
    %2915 = vmatprep.subr.mxu0 0.0
    %2916 = vmatpush1.msra.mxu0 0.0
    %2917 = vmatprep.subr.mxu0 0.0
    %2918 = vmatpush1.msra.mxu0 0.0
    %2919 = vmatprep.subr.mxu0 0.0
    %2920 = vmatpush1.msra.mxu0 0.0
    %2921 = vmatprep.subr.mxu0 0.0
    %2922 = vmatpush1.msra.mxu0 0.0
    %2923 = vmatprep.subr.mxu0 0.0
    %2924 = vmatpush1.msra.mxu0 0.0
    %2925 = vmatprep.subr.mxu0 0.0
    %2926 = vmatpush1.msra.mxu0 0.0
    %2927 = vmatprep.subr.mxu0 0.0
    %2928 = vmatpush1.msra.mxu0 0.0
    %2929 = vmatprep.subr.mxu0 0.0
    %2930 = vmatpush1.msra.mxu0 0.0
    %2931 = vmatprep.subr.mxu0 0.0
    %2932 = vmatpush1.msra.mxu0 0.0
    %2933 = vmatprep.subr.mxu0 0.0
    %2934 = vmatpush1.msra.mxu0 0.0
    %2935 = vmatprep.subr.mxu0 0.0
    %2936 = vmatpush1.msra.mxu0 0.0
    %2937 = vmatprep.subr.mxu0 0.0
    %2938 = vmatpush1.msra.mxu0 0.0
    %2939 = vmatprep.subr.mxu0 0.0
    %2940 = vmatpush1.msra.mxu0 0.0
    %2941 = vmatprep.subr.mxu0 0.0
    %2942 = vmatpush1.msra.mxu0 0.0
    %2943 = vmatprep.mubr.f32.mxu0 0.0
    %2944 = vmatmul.mubr.f32.gmra.mrb[0].mxu0 %v2877
    %v2945 = vpop.f32.mrb[0].mxu0
    %v2946 = vadd.f32 0.0, %v2945
    %v2947 = vpop.f32.mrb[0].mxu0
    %2948 = vdwg.mxu0
    %2949 = vmatprep.subr.mxu0 0.0
    %2950 = vmatpush1.msra.mxu0 %v1212
    %2951 = vmatprep.subr.mxu0 0.0
    %2952 = vmatpush1.msra.mxu0 %v1213
    %2953 = vmatprep.subr.mxu0 0.0
    %2954 = vmatpush1.msra.mxu0 0.0
    %2955 = vmatprep.subr.mxu0 0.0
    %2956 = vmatpush1.msra.mxu0 0.0
    %2957 = vmatprep.subr.mxu0 0.0
    %2958 = vmatpush1.msra.mxu0 0.0
    %2959 = vmatprep.subr.mxu0 0.0
    %2960 = vmatpush1.msra.mxu0 0.0
    %2961 = vmatprep.subr.mxu0 0.0
    %2962 = vmatpush1.msra.mxu0 0.0
    %2963 = vmatprep.subr.mxu0 0.0
    %2964 = vmatpush1.msra.mxu0 0.0
    %2965 = vmatprep.subr.mxu0 0.0
    %2966 = vmatpush1.msra.mxu0 0.0
    %2967 = vmatprep.subr.mxu0 0.0
    %2968 = vmatpush1.msra.mxu0 0.0
    %2969 = vmatprep.subr.mxu0 0.0
    %2970 = vmatpush1.msra.mxu0 0.0
    %2971 = vmatprep.subr.mxu0 0.0
    %2972 = vmatpush1.msra.mxu0 0.0
    %2973 = vmatprep.subr.mxu0 0.0
    %2974 = vmatpush1.msra.mxu0 0.0
    %2975 = vmatprep.subr.mxu0 0.0
    %2976 = vmatpush1.msra.mxu0 0.0
    %2977 = vmatprep.subr.mxu0 0.0
    %2978 = vmatpush1.msra.mxu0 0.0
    %2979 = vmatprep.subr.mxu0 0.0
    %2980 = vmatpush1.msra.mxu0 0.0
    %2981 = vmatprep.subr.mxu0 0.0
    %2982 = vmatpush1.msra.mxu0 0.0
    %2983 = vmatprep.subr.mxu0 0.0
    %2984 = vmatpush1.msra.mxu0 0.0
    %2985 = vmatprep.subr.mxu0 0.0
    %2986 = vmatpush1.msra.mxu0 0.0
    %2987 = vmatprep.subr.mxu0 0.0
    %2988 = vmatpush1.msra.mxu0 0.0
    %2989 = vmatprep.subr.mxu0 0.0
    %2990 = vmatpush1.msra.mxu0 0.0
    %2991 = vmatprep.subr.mxu0 0.0
    %2992 = vmatpush1.msra.mxu0 0.0
    %2993 = vmatprep.subr.mxu0 0.0
    %2994 = vmatpush1.msra.mxu0 0.0
    %2995 = vmatprep.subr.mxu0 0.0
    %2996 = vmatpush1.msra.mxu0 0.0
    %2997 = vmatprep.subr.mxu0 0.0
    %2998 = vmatpush1.msra.mxu0 0.0
    %2999 = vmatprep.subr.mxu0 0.0
    %3000 = vmatpush1.msra.mxu0 0.0
    %3001 = vmatprep.subr.mxu0 0.0
    %3002 = vmatpush1.msra.mxu0 0.0
    %3003 = vmatprep.subr.mxu0 0.0
    %3004 = vmatpush1.msra.mxu0 0.0
    %3005 = vmatprep.subr.mxu0 0.0
    %3006 = vmatpush1.msra.mxu0 0.0
    %3007 = vmatprep.subr.mxu0 0.0
    %3008 = vmatpush1.msra.mxu0 0.0
    %3009 = vmatprep.subr.mxu0 0.0
    %3010 = vmatpush1.msra.mxu0 0.0
    %3011 = vmatprep.subr.mxu0 0.0
    %3012 = vmatpush1.msra.mxu0 0.0
    %3013 = vmatprep.mubr.f32.mxu0 0.0
    %3014 = vmatmul.mubr.f32.gmra.mrb[0].mxu0 %v2877
    %v3015 = vpop.f32.mrb[0].mxu0
    %v3016 = vadd.f32 0.0, %v3015
    %v3017 = vpop.f32.mrb[0].mxu0
    %3018 = vdwg.mxu0
    %3019 = vmatprep.subr.mxu0 0.0
    %3020 = vmatpush1.msra.mxu0 %v1215
    %3021 = vmatprep.subr.mxu0 0.0
    %3022 = vmatpush1.msra.mxu0 %v1216
    %3023 = vmatprep.subr.mxu0 0.0
    %3024 = vmatpush1.msra.mxu0 0.0
    %3025 = vmatprep.subr.mxu0 0.0
    %3026 = vmatpush1.msra.mxu0 0.0
    %3027 = vmatprep.subr.mxu0 0.0
    %3028 = vmatpush1.msra.mxu0 0.0
    %3029 = vmatprep.subr.mxu0 0.0
    %3030 = vmatpush1.msra.mxu0 0.0
    %3031 = vmatprep.subr.mxu0 0.0
    %3032 = vmatpush1.msra.mxu0 0.0
    %3033 = vmatprep.subr.mxu0 0.0
    %3034 = vmatpush1.msra.mxu0 0.0
    %3035 = vmatprep.subr.mxu0 0.0
    %3036 = vmatpush1.msra.mxu0 0.0
    %3037 = vmatprep.subr.mxu0 0.0
    %3038 = vmatpush1.msra.mxu0 0.0
    %3039 = vmatprep.subr.mxu0 0.0
    %3040 = vmatpush1.msra.mxu0 0.0
    %3041 = vmatprep.subr.mxu0 0.0
    %3042 = vmatpush1.msra.mxu0 0.0
    %3043 = vmatprep.subr.mxu0 0.0
    %3044 = vmatpush1.msra.mxu0 0.0
    %3045 = vmatprep.subr.mxu0 0.0
    %3046 = vmatpush1.msra.mxu0 0.0
    %3047 = vmatprep.subr.mxu0 0.0
    %3048 = vmatpush1.msra.mxu0 0.0
    %3049 = vmatprep.subr.mxu0 0.0
    %3050 = vmatpush1.msra.mxu0 0.0
    %3051 = vmatprep.subr.mxu0 0.0
    %3052 = vmatpush1.msra.mxu0 0.0
    %3053 = vmatprep.subr.mxu0 0.0
    %3054 = vmatpush1.msra.mxu0 0.0
    %3055 = vmatprep.subr.mxu0 0.0
    %3056 = vmatpush1.msra.mxu0 0.0
    %3057 = vmatprep.subr.mxu0 0.0
    %3058 = vmatpush1.msra.mxu0 0.0
    %3059 = vmatprep.subr.mxu0 0.0
    %3060 = vmatpush1.msra.mxu0 0.0
    %3061 = vmatprep.subr.mxu0 0.0
    %3062 = vmatpush1.msra.mxu0 0.0
    %3063 = vmatprep.subr.mxu0 0.0
    %3064 = vmatpush1.msra.mxu0 0.0
    %3065 = vmatprep.subr.mxu0 0.0
    %3066 = vmatpush1.msra.mxu0 0.0
    %3067 = vmatprep.subr.mxu0 0.0
    %3068 = vmatpush1.msra.mxu0 0.0
    %3069 = vmatprep.subr.mxu0 0.0
    %3070 = vmatpush1.msra.mxu0 0.0
    %3071 = vmatprep.subr.mxu0 0.0
    %3072 = vmatpush1.msra.mxu0 0.0
    %3073 = vmatprep.subr.mxu0 0.0
    %3074 = vmatpush1.msra.mxu0 0.0
    %3075 = vmatprep.subr.mxu0 0.0
    %3076 = vmatpush1.msra.mxu0 0.0
    %3077 = vmatprep.subr.mxu0 0.0
    %3078 = vmatpush1.msra.mxu0 0.0
    %3079 = vmatprep.subr.mxu0 0.0
    %3080 = vmatpush1.msra.mxu0 0.0
    %3081 = vmatprep.subr.mxu0 0.0
    %3082 = vmatpush1.msra.mxu0 0.0
    %3083 = vmatprep.mubr.f32.mxu0 0.0
    %3084 = vmatmul.mubr.f32.gmra.mrb[0].mxu0 %v2877
    %v3085 = vpop.f32.mrb[0].mxu0
    %v3086 = vadd.f32 %v1365, %v3085
    %v3087 = vpop.f32.mrb[0].mxu0
    %3088 = vdwg.mxu0
    %v3089 = vld [vmem:[#allocation2 + $0x38] sm:$0xff]
    %v3090 = vadd.f32 %v3089, %v2946
    %v3091 = vxor.u32 %v3090, 2147483648
    %v3092 = vmul.f32 %v3091, 1.442695
    %v3093 = vpow.pop %v3092
    %v3094 = vadd.f32 %v3093, 1.0
    %v3095 = vrcp.pop %v3094
    %v3096 = vmul.f32 1.0, %v3095
    %v3097 = vld [vmem:[#allocation3 + $0x38] sm:$0xff]
    %v3098 = vadd.f32 %v3097, %v3016
    %v3099 = vxor.u32 %v3098, 2147483648
    %v3100 = vmul.f32 %v3099, 1.442695
    %v3101 = vpow.pop %v3100
    %v3102 = vadd.f32 %v3101, 1.0
    %v3103 = vrcp.pop %v3102
    %v3104 = vmul.f32 1.0, %v3103
    %v3105 = vld [vmem:[#allocation4 + $0x38] sm:$0xff]
    %v3106 = vmul.f32 %v3096, %v3086
    %v3107 = vadd.f32 %v3105, %v3106
    %v3108 = vtanh.pop %v3107
    %v3109 = vsub.f32 %v2875, %v3108
    %v3110 = vmul.f32 %v3104, %v3109
    %v3111 = vadd.f32 %v3108, %v3110
    %v3113 = vsel %vm275, %v3111, 0
    %3115 = vmatprep.subr.mxu0 0.0
    %3116 = vmatpush1.msra.mxu0 %v1209
    %3117 = vmatprep.subr.mxu0 0.0
    %3118 = vmatpush1.msra.mxu0 %v1210
    %3119 = vmatprep.subr.mxu0 0.0
    %3120 = vmatpush1.msra.mxu0 0.0
    %3121 = vmatprep.subr.mxu0 0.0
    %3122 = vmatpush1.msra.mxu0 0.0
    %3123 = vmatprep.subr.mxu0 0.0
    %3124 = vmatpush1.msra.mxu0 0.0
    %3125 = vmatprep.subr.mxu0 0.0
    %3126 = vmatpush1.msra.mxu0 0.0
    %3127 = vmatprep.subr.mxu0 0.0
    %3128 = vmatpush1.msra.mxu0 0.0
    %3129 = vmatprep.subr.mxu0 0.0
    %3130 = vmatpush1.msra.mxu0 0.0
    %3131 = vmatprep.subr.mxu0 0.0
    %3132 = vmatpush1.msra.mxu0 0.0
    %3133 = vmatprep.subr.mxu0 0.0
    %3134 = vmatpush1.msra.mxu0 0.0
    %3135 = vmatprep.subr.mxu0 0.0
    %3136 = vmatpush1.msra.mxu0 0.0
    %3137 = vmatprep.subr.mxu0 0.0
    %3138 = vmatpush1.msra.mxu0 0.0
    %3139 = vmatprep.subr.mxu0 0.0
    %3140 = vmatpush1.msra.mxu0 0.0
    %3141 = vmatprep.subr.mxu0 0.0
    %3142 = vmatpush1.msra.mxu0 0.0
    %3143 = vmatprep.subr.mxu0 0.0
    %3144 = vmatpush1.msra.mxu0 0.0
    %3145 = vmatprep.subr.mxu0 0.0
    %3146 = vmatpush1.msra.mxu0 0.0
    %3147 = vmatprep.subr.mxu0 0.0
    %3148 = vmatpush1.msra.mxu0 0.0
    %3149 = vmatprep.subr.mxu0 0.0
    %3150 = vmatpush1.msra.mxu0 0.0
    %3151 = vmatprep.subr.mxu0 0.0
    %3152 = vmatpush1.msra.mxu0 0.0
    %3153 = vmatprep.subr.mxu0 0.0
    %3154 = vmatpush1.msra.mxu0 0.0
    %3155 = vmatprep.subr.mxu0 0.0
    %3156 = vmatpush1.msra.mxu0 0.0
    %3157 = vmatprep.subr.mxu0 0.0
    %3158 = vmatpush1.msra.mxu0 0.0
    %3159 = vmatprep.subr.mxu0 0.0
    %3160 = vmatpush1.msra.mxu0 0.0
    %3161 = vmatprep.subr.mxu0 0.0
    %3162 = vmatpush1.msra.mxu0 0.0
    %3163 = vmatprep.subr.mxu0 0.0
    %3164 = vmatpush1.msra.mxu0 0.0
    %3165 = vmatprep.subr.mxu0 0.0
    %3166 = vmatpush1.msra.mxu0 0.0
    %3167 = vmatprep.subr.mxu0 0.0
    %3168 = vmatpush1.msra.mxu0 0.0
    %3169 = vmatprep.subr.mxu0 0.0
    %3170 = vmatpush1.msra.mxu0 0.0
    %3171 = vmatprep.subr.mxu0 0.0
    %3172 = vmatpush1.msra.mxu0 0.0
    %3173 = vmatprep.subr.mxu0 0.0
    %3174 = vmatpush1.msra.mxu0 0.0
    %3175 = vmatprep.subr.mxu0 0.0
    %3176 = vmatpush1.msra.mxu0 0.0
    %3177 = vmatprep.subr.mxu0 0.0
    %3178 = vmatpush1.msra.mxu0 0.0
    %3179 = vmatprep.mubr.f32.mxu0 0.0
    %3180 = vmatmul.mubr.f32.gmra.mrb[0].mxu0 %v3113
    %v3181 = vpop.f32.mrb[0].mxu0
    %v3182 = vadd.f32 0.0, %v3181
    %v3183 = vpop.f32.mrb[0].mxu0
    %3184 = vdwg.mxu0
    %3185 = vmatprep.subr.mxu0 0.0
    %3186 = vmatpush1.msra.mxu0 %v1212
    %3187 = vmatprep.subr.mxu0 0.0
    %3188 = vmatpush1.msra.mxu0 %v1213
    %3189 = vmatprep.subr.mxu0 0.0
    %3190 = vmatpush1.msra.mxu0 0.0
    %3191 = vmatprep.subr.mxu0 0.0
    %3192 = vmatpush1.msra.mxu0 0.0
    %3193 = vmatprep.subr.mxu0 0.0
    %3194 = vmatpush1.msra.mxu0 0.0
    %3195 = vmatprep.subr.mxu0 0.0
    %3196 = vmatpush1.msra.mxu0 0.0
    %3197 = vmatprep.subr.mxu0 0.0
    %3198 = vmatpush1.msra.mxu0 0.0
    %3199 = vmatprep.subr.mxu0 0.0
    %3200 = vmatpush1.msra.mxu0 0.0
    %3201 = vmatprep.subr.mxu0 0.0
    %3202 = vmatpush1.msra.mxu0 0.0
    %3203 = vmatprep.subr.mxu0 0.0
    %3204 = vmatpush1.msra.mxu0 0.0
    %3205 = vmatprep.subr.mxu0 0.0
    %3206 = vmatpush1.msra.mxu0 0.0
    %3207 = vmatprep.subr.mxu0 0.0
    %3208 = vmatpush1.msra.mxu0 0.0
    %3209 = vmatprep.subr.mxu0 0.0
    %3210 = vmatpush1.msra.mxu0 0.0
    %3211 = vmatprep.subr.mxu0 0.0
    %3212 = vmatpush1.msra.mxu0 0.0
    %3213 = vmatprep.subr.mxu0 0.0
    %3214 = vmatpush1.msra.mxu0 0.0
    %3215 = vmatprep.subr.mxu0 0.0
    %3216 = vmatpush1.msra.mxu0 0.0
    %3217 = vmatprep.subr.mxu0 0.0
    %3218 = vmatpush1.msra.mxu0 0.0
    %3219 = vmatprep.subr.mxu0 0.0
    %3220 = vmatpush1.msra.mxu0 0.0
    %3221 = vmatprep.subr.mxu0 0.0
    %3222 = vmatpush1.msra.mxu0 0.0
    %3223 = vmatprep.subr.mxu0 0.0
    %3224 = vmatpush1.msra.mxu0 0.0
    %3225 = vmatprep.subr.mxu0 0.0
    %3226 = vmatpush1.msra.mxu0 0.0
    %3227 = vmatprep.subr.mxu0 0.0
    %3228 = vmatpush1.msra.mxu0 0.0
    %3229 = vmatprep.subr.mxu0 0.0
    %3230 = vmatpush1.msra.mxu0 0.0
    %3231 = vmatprep.subr.mxu0 0.0
    %3232 = vmatpush1.msra.mxu0 0.0
    %3233 = vmatprep.subr.mxu0 0.0
    %3234 = vmatpush1.msra.mxu0 0.0
    %3235 = vmatprep.subr.mxu0 0.0
    %3236 = vmatpush1.msra.mxu0 0.0
    %3237 = vmatprep.subr.mxu0 0.0
    %3238 = vmatpush1.msra.mxu0 0.0
    %3239 = vmatprep.subr.mxu0 0.0
    %3240 = vmatpush1.msra.mxu0 0.0
    %3241 = vmatprep.subr.mxu0 0.0
    %3242 = vmatpush1.msra.mxu0 0.0
    %3243 = vmatprep.subr.mxu0 0.0
    %3244 = vmatpush1.msra.mxu0 0.0
    %3245 = vmatprep.subr.mxu0 0.0
    %3246 = vmatpush1.msra.mxu0 0.0
    %3247 = vmatprep.subr.mxu0 0.0
    %3248 = vmatpush1.msra.mxu0 0.0
    %3249 = vmatprep.mubr.f32.mxu0 0.0
    %3250 = vmatmul.mubr.f32.gmra.mrb[0].mxu0 %v3113
    %v3251 = vpop.f32.mrb[0].mxu0
    %v3252 = vadd.f32 0.0, %v3251
    %v3253 = vpop.f32.mrb[0].mxu0
    %3254 = vdwg.mxu0
    %3255 = vmatprep.subr.mxu0 0.0
    %3256 = vmatpush1.msra.mxu0 %v1215
    %3257 = vmatprep.subr.mxu0 0.0
    %3258 = vmatpush1.msra.mxu0 %v1216
    %3259 = vmatprep.subr.mxu0 0.0
    %3260 = vmatpush1.msra.mxu0 0.0
    %3261 = vmatprep.subr.mxu0 0.0
    %3262 = vmatpush1.msra.mxu0 0.0
    %3263 = vmatprep.subr.mxu0 0.0
    %3264 = vmatpush1.msra.mxu0 0.0
    %3265 = vmatprep.subr.mxu0 0.0
    %3266 = vmatpush1.msra.mxu0 0.0
    %3267 = vmatprep.subr.mxu0 0.0
    %3268 = vmatpush1.msra.mxu0 0.0
    %3269 = vmatprep.subr.mxu0 0.0
    %3270 = vmatpush1.msra.mxu0 0.0
    %3271 = vmatprep.subr.mxu0 0.0
    %3272 = vmatpush1.msra.mxu0 0.0
    %3273 = vmatprep.subr.mxu0 0.0
    %3274 = vmatpush1.msra.mxu0 0.0
    %3275 = vmatprep.subr.mxu0 0.0
    %3276 = vmatpush1.msra.mxu0 0.0
    %3277 = vmatprep.subr.mxu0 0.0
    %3278 = vmatpush1.msra.mxu0 0.0
    %3279 = vmatprep.subr.mxu0 0.0
    %3280 = vmatpush1.msra.mxu0 0.0
    %3281 = vmatprep.subr.mxu0 0.0
    %3282 = vmatpush1.msra.mxu0 0.0
    %3283 = vmatprep.subr.mxu0 0.0
    %3284 = vmatpush1.msra.mxu0 0.0
    %3285 = vmatprep.subr.mxu0 0.0
    %3286 = vmatpush1.msra.mxu0 0.0
    %3287 = vmatprep.subr.mxu0 0.0
    %3288 = vmatpush1.msra.mxu0 0.0
    %3289 = vmatprep.subr.mxu0 0.0
    %3290 = vmatpush1.msra.mxu0 0.0
    %3291 = vmatprep.subr.mxu0 0.0
    %3292 = vmatpush1.msra.mxu0 0.0
    %3293 = vmatprep.subr.mxu0 0.0
    %3294 = vmatpush1.msra.mxu0 0.0
    %3295 = vmatprep.subr.mxu0 0.0
    %3296 = vmatpush1.msra.mxu0 0.0
    %3297 = vmatprep.subr.mxu0 0.0
    %3298 = vmatpush1.msra.mxu0 0.0
    %3299 = vmatprep.subr.mxu0 0.0
    %3300 = vmatpush1.msra.mxu0 0.0
    %3301 = vmatprep.subr.mxu0 0.0
    %3302 = vmatpush1.msra.mxu0 0.0
    %3303 = vmatprep.subr.mxu0 0.0
    %3304 = vmatpush1.msra.mxu0 0.0
    %3305 = vmatprep.subr.mxu0 0.0
    %3306 = vmatpush1.msra.mxu0 0.0
    %3307 = vmatprep.subr.mxu0 0.0
    %3308 = vmatpush1.msra.mxu0 0.0
    %3309 = vmatprep.subr.mxu0 0.0
    %3310 = vmatpush1.msra.mxu0 0.0
    %3311 = vmatprep.subr.mxu0 0.0
    %3312 = vmatpush1.msra.mxu0 0.0
    %3313 = vmatprep.subr.mxu0 0.0
    %3314 = vmatpush1.msra.mxu0 0.0
    %3315 = vmatprep.subr.mxu0 0.0
    %3316 = vmatpush1.msra.mxu0 0.0
    %3317 = vmatprep.subr.mxu0 0.0
    %3318 = vmatpush1.msra.mxu0 0.0
    %3319 = vmatprep.mubr.f32.mxu0 0.0
    %3320 = vmatmul.mubr.f32.gmra.mrb[0].mxu0 %v3113
    %v3321 = vpop.f32.mrb[0].mxu0
    %v3322 = vadd.f32 %v1365, %v3321
    %v3323 = vpop.f32.mrb[0].mxu0
    %3324 = vdwg.mxu0
    %v3325 = vld [vmem:[#allocation2 + $0x40] sm:$0xff]
    %v3326 = vadd.f32 %v3325, %v3182
    %v3327 = vxor.u32 %v3326, 2147483648
    %v3328 = vmul.f32 %v3327, 1.442695
    %v3329 = vpow.pop %v3328
    %v3330 = vadd.f32 %v3329, 1.0
    %v3331 = vrcp.pop %v3330
    %v3332 = vmul.f32 1.0, %v3331
    %v3333 = vld [vmem:[#allocation3 + $0x40] sm:$0xff]
    %v3334 = vadd.f32 %v3333, %v3252
    %v3335 = vxor.u32 %v3334, 2147483648
    %v3336 = vmul.f32 %v3335, 1.442695
    %v3337 = vpow.pop %v3336
    %v3338 = vadd.f32 %v3337, 1.0
    %v3339 = vrcp.pop %v3338
    %v3340 = vmul.f32 1.0, %v3339
    %v3341 = vld [vmem:[#allocation4 + $0x40] sm:$0xff]
    %v3342 = vmul.f32 %v3332, %v3322
    %v3343 = vadd.f32 %v3341, %v3342
    %v3344 = vtanh.pop %v3343
    %v3345 = vsub.f32 %v3111, %v3344
    %v3346 = vmul.f32 %v3340, %v3345
    %v3347 = vadd.f32 %v3344, %v3346
    %v3349 = vsel %vm275, %v3347, 0
    %3351 = vmatprep.subr.mxu0 0.0
    %3352 = vmatpush1.msra.mxu0 %v1209
    %3353 = vmatprep.subr.mxu0 0.0
    %3354 = vmatpush1.msra.mxu0 %v1210
    %3355 = vmatprep.subr.mxu0 0.0
    %3356 = vmatpush1.msra.mxu0 0.0
    %3357 = vmatprep.subr.mxu0 0.0
    %3358 = vmatpush1.msra.mxu0 0.0
    %3359 = vmatprep.subr.mxu0 0.0
    %3360 = vmatpush1.msra.mxu0 0.0
    %3361 = vmatprep.subr.mxu0 0.0
    %3362 = vmatpush1.msra.mxu0 0.0
    %3363 = vmatprep.subr.mxu0 0.0
    %3364 = vmatpush1.msra.mxu0 0.0
    %3365 = vmatprep.subr.mxu0 0.0
    %3366 = vmatpush1.msra.mxu0 0.0
    %3367 = vmatprep.subr.mxu0 0.0
    %3368 = vmatpush1.msra.mxu0 0.0
    %3369 = vmatprep.subr.mxu0 0.0
    %3370 = vmatpush1.msra.mxu0 0.0
    %3371 = vmatprep.subr.mxu0 0.0
    %3372 = vmatpush1.msra.mxu0 0.0
    %3373 = vmatprep.subr.mxu0 0.0
    %3374 = vmatpush1.msra.mxu0 0.0
    %3375 = vmatprep.subr.mxu0 0.0
    %3376 = vmatpush1.msra.mxu0 0.0
    %3377 = vmatprep.subr.mxu0 0.0
    %3378 = vmatpush1.msra.mxu0 0.0
    %3379 = vmatprep.subr.mxu0 0.0
    %3380 = vmatpush1.msra.mxu0 0.0
    %3381 = vmatprep.subr.mxu0 0.0
    %3382 = vmatpush1.msra.mxu0 0.0
    %3383 = vmatprep.subr.mxu0 0.0
    %3384 = vmatpush1.msra.mxu0 0.0
    %3385 = vmatprep.subr.mxu0 0.0
    %3386 = vmatpush1.msra.mxu0 0.0
    %3387 = vmatprep.subr.mxu0 0.0
    %3388 = vmatpush1.msra.mxu0 0.0
    %3389 = vmatprep.subr.mxu0 0.0
    %3390 = vmatpush1.msra.mxu0 0.0
    %3391 = vmatprep.subr.mxu0 0.0
    %3392 = vmatpush1.msra.mxu0 0.0
    %3393 = vmatprep.subr.mxu0 0.0
    %3394 = vmatpush1.msra.mxu0 0.0
    %3395 = vmatprep.subr.mxu0 0.0
    %3396 = vmatpush1.msra.mxu0 0.0
    %3397 = vmatprep.subr.mxu0 0.0
    %3398 = vmatpush1.msra.mxu0 0.0
    %3399 = vmatprep.subr.mxu0 0.0
    %3400 = vmatpush1.msra.mxu0 0.0
    %3401 = vmatprep.subr.mxu0 0.0
    %3402 = vmatpush1.msra.mxu0 0.0
    %3403 = vmatprep.subr.mxu0 0.0
    %3404 = vmatpush1.msra.mxu0 0.0
    %3405 = vmatprep.subr.mxu0 0.0
    %3406 = vmatpush1.msra.mxu0 0.0
    %3407 = vmatprep.subr.mxu0 0.0
    %3408 = vmatpush1.msra.mxu0 0.0
    %3409 = vmatprep.subr.mxu0 0.0
    %3410 = vmatpush1.msra.mxu0 0.0
    %3411 = vmatprep.subr.mxu0 0.0
    %3412 = vmatpush1.msra.mxu0 0.0
    %3413 = vmatprep.subr.mxu0 0.0
    %3414 = vmatpush1.msra.mxu0 0.0
    %3415 = vmatprep.mubr.f32.mxu0 0.0
    %3416 = vmatmul.mubr.f32.gmra.mrb[0].mxu0 %v3349
    %v3417 = vpop.f32.mrb[0].mxu0
    %v3418 = vadd.f32 0.0, %v3417
    %v3419 = vpop.f32.mrb[0].mxu0
    %3420 = vdwg.mxu0
    %3421 = vmatprep.subr.mxu0 0.0
    %3422 = vmatpush1.msra.mxu0 %v1212
    %3423 = vmatprep.subr.mxu0 0.0
    %3424 = vmatpush1.msra.mxu0 %v1213
    %3425 = vmatprep.subr.mxu0 0.0
    %3426 = vmatpush1.msra.mxu0 0.0
    %3427 = vmatprep.subr.mxu0 0.0
    %3428 = vmatpush1.msra.mxu0 0.0
    %3429 = vmatprep.subr.mxu0 0.0
    %3430 = vmatpush1.msra.mxu0 0.0
    %3431 = vmatprep.subr.mxu0 0.0
    %3432 = vmatpush1.msra.mxu0 0.0
    %3433 = vmatprep.subr.mxu0 0.0
    %3434 = vmatpush1.msra.mxu0 0.0
    %3435 = vmatprep.subr.mxu0 0.0
    %3436 = vmatpush1.msra.mxu0 0.0
    %3437 = vmatprep.subr.mxu0 0.0
    %3438 = vmatpush1.msra.mxu0 0.0
    %3439 = vmatprep.subr.mxu0 0.0
    %3440 = vmatpush1.msra.mxu0 0.0
    %3441 = vmatprep.subr.mxu0 0.0
    %3442 = vmatpush1.msra.mxu0 0.0
    %3443 = vmatprep.subr.mxu0 0.0
    %3444 = vmatpush1.msra.mxu0 0.0
    %3445 = vmatprep.subr.mxu0 0.0
    %3446 = vmatpush1.msra.mxu0 0.0
    %3447 = vmatprep.subr.mxu0 0.0
    %3448 = vmatpush1.msra.mxu0 0.0
    %3449 = vmatprep.subr.mxu0 0.0
    %3450 = vmatpush1.msra.mxu0 0.0
    %3451 = vmatprep.subr.mxu0 0.0
    %3452 = vmatpush1.msra.mxu0 0.0
    %3453 = vmatprep.subr.mxu0 0.0
    %3454 = vmatpush1.msra.mxu0 0.0
    %3455 = vmatprep.subr.mxu0 0.0
    %3456 = vmatpush1.msra.mxu0 0.0
    %3457 = vmatprep.subr.mxu0 0.0
    %3458 = vmatpush1.msra.mxu0 0.0
    %3459 = vmatprep.subr.mxu0 0.0
    %3460 = vmatpush1.msra.mxu0 0.0
    %3461 = vmatprep.subr.mxu0 0.0
    %3462 = vmatpush1.msra.mxu0 0.0
    %3463 = vmatprep.subr.mxu0 0.0
    %3464 = vmatpush1.msra.mxu0 0.0
    %3465 = vmatprep.subr.mxu0 0.0
    %3466 = vmatpush1.msra.mxu0 0.0
    %3467 = vmatprep.subr.mxu0 0.0
    %3468 = vmatpush1.msra.mxu0 0.0
    %3469 = vmatprep.subr.mxu0 0.0
    %3470 = vmatpush1.msra.mxu0 0.0
    %3471 = vmatprep.subr.mxu0 0.0
    %3472 = vmatpush1.msra.mxu0 0.0
    %3473 = vmatprep.subr.mxu0 0.0
    %3474 = vmatpush1.msra.mxu0 0.0
    %3475 = vmatprep.subr.mxu0 0.0
    %3476 = vmatpush1.msra.mxu0 0.0
    %3477 = vmatprep.subr.mxu0 0.0
    %3478 = vmatpush1.msra.mxu0 0.0
    %3479 = vmatprep.subr.mxu0 0.0
    %3480 = vmatpush1.msra.mxu0 0.0
    %3481 = vmatprep.subr.mxu0 0.0
    %3482 = vmatpush1.msra.mxu0 0.0
    %3483 = vmatprep.subr.mxu0 0.0
    %3484 = vmatpush1.msra.mxu0 0.0
    %3485 = vmatprep.mubr.f32.mxu0 0.0
    %3486 = vmatmul.mubr.f32.gmra.mrb[0].mxu0 %v3349
    %v3487 = vpop.f32.mrb[0].mxu0
    %v3488 = vadd.f32 0.0, %v3487
    %v3489 = vpop.f32.mrb[0].mxu0
    %3490 = vdwg.mxu0
    %3491 = vmatprep.subr.mxu0 0.0
    %3492 = vmatpush1.msra.mxu0 %v1215
    %3493 = vmatprep.subr.mxu0 0.0
    %3494 = vmatpush1.msra.mxu0 %v1216
    %3495 = vmatprep.subr.mxu0 0.0
    %3496 = vmatpush1.msra.mxu0 0.0
    %3497 = vmatprep.subr.mxu0 0.0
    %3498 = vmatpush1.msra.mxu0 0.0
    %3499 = vmatprep.subr.mxu0 0.0
    %3500 = vmatpush1.msra.mxu0 0.0
    %3501 = vmatprep.subr.mxu0 0.0
    %3502 = vmatpush1.msra.mxu0 0.0
    %3503 = vmatprep.subr.mxu0 0.0
    %3504 = vmatpush1.msra.mxu0 0.0
    %3505 = vmatprep.subr.mxu0 0.0
    %3506 = vmatpush1.msra.mxu0 0.0
    %3507 = vmatprep.subr.mxu0 0.0
    %3508 = vmatpush1.msra.mxu0 0.0
    %3509 = vmatprep.subr.mxu0 0.0
    %3510 = vmatpush1.msra.mxu0 0.0
    %3511 = vmatprep.subr.mxu0 0.0
    %3512 = vmatpush1.msra.mxu0 0.0
    %3513 = vmatprep.subr.mxu0 0.0
    %3514 = vmatpush1.msra.mxu0 0.0
    %3515 = vmatprep.subr.mxu0 0.0
    %3516 = vmatpush1.msra.mxu0 0.0
    %3517 = vmatprep.subr.mxu0 0.0
    %3518 = vmatpush1.msra.mxu0 0.0
    %3519 = vmatprep.subr.mxu0 0.0
    %3520 = vmatpush1.msra.mxu0 0.0
    %3521 = vmatprep.subr.mxu0 0.0
    %3522 = vmatpush1.msra.mxu0 0.0
    %3523 = vmatprep.subr.mxu0 0.0
    %3524 = vmatpush1.msra.mxu0 0.0
    %3525 = vmatprep.subr.mxu0 0.0
    %3526 = vmatpush1.msra.mxu0 0.0
    %3527 = vmatprep.subr.mxu0 0.0
    %3528 = vmatpush1.msra.mxu0 0.0
    %3529 = vmatprep.subr.mxu0 0.0
    %3530 = vmatpush1.msra.mxu0 0.0
    %3531 = vmatprep.subr.mxu0 0.0
    %3532 = vmatpush1.msra.mxu0 0.0
    %3533 = vmatprep.subr.mxu0 0.0
    %3534 = vmatpush1.msra.mxu0 0.0
    %3535 = vmatprep.subr.mxu0 0.0
    %3536 = vmatpush1.msra.mxu0 0.0
    %3537 = vmatprep.subr.mxu0 0.0
    %3538 = vmatpush1.msra.mxu0 0.0
    %3539 = vmatprep.subr.mxu0 0.0
    %3540 = vmatpush1.msra.mxu0 0.0
    %3541 = vmatprep.subr.mxu0 0.0
    %3542 = vmatpush1.msra.mxu0 0.0
    %3543 = vmatprep.subr.mxu0 0.0
    %3544 = vmatpush1.msra.mxu0 0.0
    %3545 = vmatprep.subr.mxu0 0.0
    %3546 = vmatpush1.msra.mxu0 0.0
    %3547 = vmatprep.subr.mxu0 0.0
    %3548 = vmatpush1.msra.mxu0 0.0
    %3549 = vmatprep.subr.mxu0 0.0
    %3550 = vmatpush1.msra.mxu0 0.0
    %3551 = vmatprep.subr.mxu0 0.0
    %3552 = vmatpush1.msra.mxu0 0.0
    %3553 = vmatprep.subr.mxu0 0.0
    %3554 = vmatpush1.msra.mxu0 0.0
    %3555 = vmatprep.mubr.f32.mxu0 0.0
    %3556 = vmatmul.mubr.f32.gmra.mrb[0].mxu0 %v3349
    %v3557 = vpop.f32.mrb[0].mxu0
    %v3558 = vadd.f32 %v1365, %v3557
    %v3559 = vpop.f32.mrb[0].mxu0
    %3560 = vdwg.mxu0
    %v3561 = vld [vmem:[#allocation2 + $0x48] sm:$0xff]
    %v3562 = vadd.f32 %v3561, %v3418
    %v3563 = vxor.u32 %v3562, 2147483648
    %v3564 = vmul.f32 %v3563, 1.442695
    %v3565 = vpow.pop %v3564
    %v3566 = vadd.f32 %v3565, 1.0
    %v3567 = vrcp.pop %v3566
    %v3568 = vmul.f32 1.0, %v3567
    %v3569 = vld [vmem:[#allocation3 + $0x48] sm:$0xff]
    %v3570 = vadd.f32 %v3569, %v3488
    %v3571 = vxor.u32 %v3570, 2147483648
    %v3572 = vmul.f32 %v3571, 1.442695
    %v3573 = vpow.pop %v3572
    %v3574 = vadd.f32 %v3573, 1.0
    %v3575 = vrcp.pop %v3574
    %v3576 = vmul.f32 1.0, %v3575
    %v3577 = vld [vmem:[#allocation4 + $0x48] sm:$0xff]
    %v3578 = vmul.f32 %v3568, %v3558
    %v3579 = vadd.f32 %v3577, %v3578
    %v3580 = vtanh.pop %v3579
    %v3581 = vsub.f32 %v3347, %v3580
    %v3582 = vmul.f32 %v3576, %v3581
    %v3583 = vadd.f32 %v3580, %v3582
    %v3585 = vsel %vm275, %v3583, 0
    %3587 = vmatprep.subr.mxu0 0.0
    %3588 = vmatpush1.msra.mxu0 %v1209
    %3589 = vmatprep.subr.mxu0 0.0
    %3590 = vmatpush1.msra.mxu0 %v1210
    %3591 = vmatprep.subr.mxu0 0.0
    %3592 = vmatpush1.msra.mxu0 0.0
    %3593 = vmatprep.subr.mxu0 0.0
    %3594 = vmatpush1.msra.mxu0 0.0
    %3595 = vmatprep.subr.mxu0 0.0
    %3596 = vmatpush1.msra.mxu0 0.0
    %3597 = vmatprep.subr.mxu0 0.0
    %3598 = vmatpush1.msra.mxu0 0.0
    %3599 = vmatprep.subr.mxu0 0.0
    %3600 = vmatpush1.msra.mxu0 0.0
    %3601 = vmatprep.subr.mxu0 0.0
    %3602 = vmatpush1.msra.mxu0 0.0
    %3603 = vmatprep.subr.mxu0 0.0
    %3604 = vmatpush1.msra.mxu0 0.0
    %3605 = vmatprep.subr.mxu0 0.0
    %3606 = vmatpush1.msra.mxu0 0.0
    %3607 = vmatprep.subr.mxu0 0.0
    %3608 = vmatpush1.msra.mxu0 0.0
    %3609 = vmatprep.subr.mxu0 0.0
    %3610 = vmatpush1.msra.mxu0 0.0
    %3611 = vmatprep.subr.mxu0 0.0
    %3612 = vmatpush1.msra.mxu0 0.0
    %3613 = vmatprep.subr.mxu0 0.0
    %3614 = vmatpush1.msra.mxu0 0.0
    %3615 = vmatprep.subr.mxu0 0.0
    %3616 = vmatpush1.msra.mxu0 0.0
    %3617 = vmatprep.subr.mxu0 0.0
    %3618 = vmatpush1.msra.mxu0 0.0
    %3619 = vmatprep.subr.mxu0 0.0
    %3620 = vmatpush1.msra.mxu0 0.0
    %3621 = vmatprep.subr.mxu0 0.0
    %3622 = vmatpush1.msra.mxu0 0.0
    %3623 = vmatprep.subr.mxu0 0.0
    %3624 = vmatpush1.msra.mxu0 0.0
    %3625 = vmatprep.subr.mxu0 0.0
    %3626 = vmatpush1.msra.mxu0 0.0
    %3627 = vmatprep.subr.mxu0 0.0
    %3628 = vmatpush1.msra.mxu0 0.0
    %3629 = vmatprep.subr.mxu0 0.0
    %3630 = vmatpush1.msra.mxu0 0.0
    %3631 = vmatprep.subr.mxu0 0.0
    %3632 = vmatpush1.msra.mxu0 0.0
    %3633 = vmatprep.subr.mxu0 0.0
    %3634 = vmatpush1.msra.mxu0 0.0
    %3635 = vmatprep.subr.mxu0 0.0
    %3636 = vmatpush1.msra.mxu0 0.0
    %3637 = vmatprep.subr.mxu0 0.0
    %3638 = vmatpush1.msra.mxu0 0.0
    %3639 = vmatprep.subr.mxu0 0.0
    %3640 = vmatpush1.msra.mxu0 0.0
    %3641 = vmatprep.subr.mxu0 0.0
    %3642 = vmatpush1.msra.mxu0 0.0
    %3643 = vmatprep.subr.mxu0 0.0
    %3644 = vmatpush1.msra.mxu0 0.0
    %3645 = vmatprep.subr.mxu0 0.0
    %3646 = vmatpush1.msra.mxu0 0.0
    %3647 = vmatprep.subr.mxu0 0.0
    %3648 = vmatpush1.msra.mxu0 0.0
    %3649 = vmatprep.subr.mxu0 0.0
    %3650 = vmatpush1.msra.mxu0 0.0
    %3651 = vmatprep.mubr.f32.mxu0 0.0
    %3652 = vmatmul.mubr.f32.gmra.mrb[0].mxu0 %v3585
    %v3653 = vpop.f32.mrb[0].mxu0
    %v3654 = vadd.f32 0.0, %v3653
    %v3655 = vpop.f32.mrb[0].mxu0
    %3656 = vdwg.mxu0
    %3657 = vmatprep.subr.mxu0 0.0
    %3658 = vmatpush1.msra.mxu0 %v1212
    %3659 = vmatprep.subr.mxu0 0.0
    %3660 = vmatpush1.msra.mxu0 %v1213
    %3661 = vmatprep.subr.mxu0 0.0
    %3662 = vmatpush1.msra.mxu0 0.0
    %3663 = vmatprep.subr.mxu0 0.0
    %3664 = vmatpush1.msra.mxu0 0.0
    %3665 = vmatprep.subr.mxu0 0.0
    %3666 = vmatpush1.msra.mxu0 0.0
    %3667 = vmatprep.subr.mxu0 0.0
    %3668 = vmatpush1.msra.mxu0 0.0
    %3669 = vmatprep.subr.mxu0 0.0
    %3670 = vmatpush1.msra.mxu0 0.0
    %3671 = vmatprep.subr.mxu0 0.0
    %3672 = vmatpush1.msra.mxu0 0.0
    %3673 = vmatprep.subr.mxu0 0.0
    %3674 = vmatpush1.msra.mxu0 0.0
    %3675 = vmatprep.subr.mxu0 0.0
    %3676 = vmatpush1.msra.mxu0 0.0
    %3677 = vmatprep.subr.mxu0 0.0
    %3678 = vmatpush1.msra.mxu0 0.0
    %3679 = vmatprep.subr.mxu0 0.0
    %3680 = vmatpush1.msra.mxu0 0.0
    %3681 = vmatprep.subr.mxu0 0.0
    %3682 = vmatpush1.msra.mxu0 0.0
    %3683 = vmatprep.subr.mxu0 0.0
    %3684 = vmatpush1.msra.mxu0 0.0
    %3685 = vmatprep.subr.mxu0 0.0
    %3686 = vmatpush1.msra.mxu0 0.0
    %3687 = vmatprep.subr.mxu0 0.0
    %3688 = vmatpush1.msra.mxu0 0.0
    %3689 = vmatprep.subr.mxu0 0.0
    %3690 = vmatpush1.msra.mxu0 0.0
    %3691 = vmatprep.subr.mxu0 0.0
    %3692 = vmatpush1.msra.mxu0 0.0
    %3693 = vmatprep.subr.mxu0 0.0
    %3694 = vmatpush1.msra.mxu0 0.0
    %3695 = vmatprep.subr.mxu0 0.0
    %3696 = vmatpush1.msra.mxu0 0.0
    %3697 = vmatprep.subr.mxu0 0.0
    %3698 = vmatpush1.msra.mxu0 0.0
    %3699 = vmatprep.subr.mxu0 0.0
    %3700 = vmatpush1.msra.mxu0 0.0
    %3701 = vmatprep.subr.mxu0 0.0
    %3702 = vmatpush1.msra.mxu0 0.0
    %3703 = vmatprep.subr.mxu0 0.0
    %3704 = vmatpush1.msra.mxu0 0.0
    %3705 = vmatprep.subr.mxu0 0.0
    %3706 = vmatpush1.msra.mxu0 0.0
    %3707 = vmatprep.subr.mxu0 0.0
    %3708 = vmatpush1.msra.mxu0 0.0
    %3709 = vmatprep.subr.mxu0 0.0
    %3710 = vmatpush1.msra.mxu0 0.0
    %3711 = vmatprep.subr.mxu0 0.0
    %3712 = vmatpush1.msra.mxu0 0.0
    %3713 = vmatprep.subr.mxu0 0.0
    %3714 = vmatpush1.msra.mxu0 0.0
    %3715 = vmatprep.subr.mxu0 0.0
    %3716 = vmatpush1.msra.mxu0 0.0
    %3717 = vmatprep.subr.mxu0 0.0
    %3718 = vmatpush1.msra.mxu0 0.0
    %3719 = vmatprep.subr.mxu0 0.0
    %3720 = vmatpush1.msra.mxu0 0.0
    %3721 = vmatprep.mubr.f32.mxu0 0.0
    %3722 = vmatmul.mubr.f32.gmra.mrb[0].mxu0 %v3585
    %v3723 = vpop.f32.mrb[0].mxu0
    %v3724 = vadd.f32 0.0, %v3723
    %v3725 = vpop.f32.mrb[0].mxu0
    %3726 = vdwg.mxu0
    %3727 = vmatprep.subr.mxu0 0.0
    %3728 = vmatpush1.msra.mxu0 %v1215
    %3729 = vmatprep.subr.mxu0 0.0
    %3730 = vmatpush1.msra.mxu0 %v1216
    %3731 = vmatprep.subr.mxu0 0.0
    %3732 = vmatpush1.msra.mxu0 0.0
    %3733 = vmatprep.subr.mxu0 0.0
    %3734 = vmatpush1.msra.mxu0 0.0
    %3735 = vmatprep.subr.mxu0 0.0
    %3736 = vmatpush1.msra.mxu0 0.0
    %3737 = vmatprep.subr.mxu0 0.0
    %3738 = vmatpush1.msra.mxu0 0.0
    %3739 = vmatprep.subr.mxu0 0.0
    %3740 = vmatpush1.msra.mxu0 0.0
    %3741 = vmatprep.subr.mxu0 0.0
    %3742 = vmatpush1.msra.mxu0 0.0
    %3743 = vmatprep.subr.mxu0 0.0
    %3744 = vmatpush1.msra.mxu0 0.0
    %3745 = vmatprep.subr.mxu0 0.0
    %3746 = vmatpush1.msra.mxu0 0.0
    %3747 = vmatprep.subr.mxu0 0.0
    %3748 = vmatpush1.msra.mxu0 0.0
    %3749 = vmatprep.subr.mxu0 0.0
    %3750 = vmatpush1.msra.mxu0 0.0
    %3751 = vmatprep.subr.mxu0 0.0
    %3752 = vmatpush1.msra.mxu0 0.0
    %3753 = vmatprep.subr.mxu0 0.0
    %3754 = vmatpush1.msra.mxu0 0.0
    %3755 = vmatprep.subr.mxu0 0.0
    %3756 = vmatpush1.msra.mxu0 0.0
    %3757 = vmatprep.subr.mxu0 0.0
    %3758 = vmatpush1.msra.mxu0 0.0
    %3759 = vmatprep.subr.mxu0 0.0
    %3760 = vmatpush1.msra.mxu0 0.0
    %3761 = vmatprep.subr.mxu0 0.0
    %3762 = vmatpush1.msra.mxu0 0.0
    %3763 = vmatprep.subr.mxu0 0.0
    %3764 = vmatpush1.msra.mxu0 0.0
    %3765 = vmatprep.subr.mxu0 0.0
    %3766 = vmatpush1.msra.mxu0 0.0
    %3767 = vmatprep.subr.mxu0 0.0
    %3768 = vmatpush1.msra.mxu0 0.0
    %3769 = vmatprep.subr.mxu0 0.0
    %3770 = vmatpush1.msra.mxu0 0.0
    %3771 = vmatprep.subr.mxu0 0.0
    %3772 = vmatpush1.msra.mxu0 0.0
    %3773 = vmatprep.subr.mxu0 0.0
    %3774 = vmatpush1.msra.mxu0 0.0
    %3775 = vmatprep.subr.mxu0 0.0
    %3776 = vmatpush1.msra.mxu0 0.0
    %3777 = vmatprep.subr.mxu0 0.0
    %3778 = vmatpush1.msra.mxu0 0.0
    %3779 = vmatprep.subr.mxu0 0.0
    %3780 = vmatpush1.msra.mxu0 0.0
    %3781 = vmatprep.subr.mxu0 0.0
    %3782 = vmatpush1.msra.mxu0 0.0
    %3783 = vmatprep.subr.mxu0 0.0
    %3784 = vmatpush1.msra.mxu0 0.0
    %3785 = vmatprep.subr.mxu0 0.0
    %3786 = vmatpush1.msra.mxu0 0.0
    %3787 = vmatprep.subr.mxu0 0.0
    %3788 = vmatpush1.msra.mxu0 0.0
    %3789 = vmatprep.subr.mxu0 0.0
    %3790 = vmatpush1.msra.mxu0 0.0
    %3791 = vmatprep.mubr.f32.mxu0 0.0
    %3792 = vmatmul.mubr.f32.gmra.mrb[0].mxu0 %v3585
    %v3793 = vpop.f32.mrb[0].mxu0
    %v3794 = vadd.f32 %v1365, %v3793
    %v3795 = vpop.f32.mrb[0].mxu0
    %3796 = vdwg.mxu0
    %v3797 = vld [vmem:[#allocation2 + $0x50] sm:$0xff]
    %v3798 = vadd.f32 %v3797, %v3654
    %v3799 = vxor.u32 %v3798, 2147483648
    %v3800 = vmul.f32 %v3799, 1.442695
    %v3801 = vpow.pop %v3800
    %v3802 = vadd.f32 %v3801, 1.0
    %v3803 = vrcp.pop %v3802
    %v3804 = vmul.f32 1.0, %v3803
    %v3805 = vld [vmem:[#allocation3 + $0x50] sm:$0xff]
    %v3806 = vadd.f32 %v3805, %v3724
    %v3807 = vxor.u32 %v3806, 2147483648
    %v3808 = vmul.f32 %v3807, 1.442695
    %v3809 = vpow.pop %v3808
    %v3810 = vadd.f32 %v3809, 1.0
    %v3811 = vrcp.pop %v3810
    %v3812 = vmul.f32 1.0, %v3811
    %v3813 = vld [vmem:[#allocation4 + $0x50] sm:$0xff]
    %v3814 = vmul.f32 %v3804, %v3794
    %v3815 = vadd.f32 %v3813, %v3814
    %v3816 = vtanh.pop %v3815
    %v3817 = vsub.f32 %v3583, %v3816
    %v3818 = vmul.f32 %v3812, %v3817
    %v3819 = vadd.f32 %v3816, %v3818
    %v3821 = vsel %vm275, %v3819, 0
    %3823 = vmatprep.subr.mxu0 0.0
    %3824 = vmatpush1.msra.mxu0 %v1209
    %3825 = vmatprep.subr.mxu0 0.0
    %3826 = vmatpush1.msra.mxu0 %v1210
    %3827 = vmatprep.subr.mxu0 0.0
    %3828 = vmatpush1.msra.mxu0 0.0
    %3829 = vmatprep.subr.mxu0 0.0
    %3830 = vmatpush1.msra.mxu0 0.0
    %3831 = vmatprep.subr.mxu0 0.0
    %3832 = vmatpush1.msra.mxu0 0.0
    %3833 = vmatprep.subr.mxu0 0.0
    %3834 = vmatpush1.msra.mxu0 0.0
    %3835 = vmatprep.subr.mxu0 0.0
    %3836 = vmatpush1.msra.mxu0 0.0
    %3837 = vmatprep.subr.mxu0 0.0
    %3838 = vmatpush1.msra.mxu0 0.0
    %3839 = vmatprep.subr.mxu0 0.0
    %3840 = vmatpush1.msra.mxu0 0.0
    %3841 = vmatprep.subr.mxu0 0.0
    %3842 = vmatpush1.msra.mxu0 0.0
    %3843 = vmatprep.subr.mxu0 0.0
    %3844 = vmatpush1.msra.mxu0 0.0
    %3845 = vmatprep.subr.mxu0 0.0
    %3846 = vmatpush1.msra.mxu0 0.0
    %3847 = vmatprep.subr.mxu0 0.0
    %3848 = vmatpush1.msra.mxu0 0.0
    %3849 = vmatprep.subr.mxu0 0.0
    %3850 = vmatpush1.msra.mxu0 0.0
    %3851 = vmatprep.subr.mxu0 0.0
    %3852 = vmatpush1.msra.mxu0 0.0
    %3853 = vmatprep.subr.mxu0 0.0
    %3854 = vmatpush1.msra.mxu0 0.0
    %3855 = vmatprep.subr.mxu0 0.0
    %3856 = vmatpush1.msra.mxu0 0.0
    %3857 = vmatprep.subr.mxu0 0.0
    %3858 = vmatpush1.msra.mxu0 0.0
    %3859 = vmatprep.subr.mxu0 0.0
    %3860 = vmatpush1.msra.mxu0 0.0
    %3861 = vmatprep.subr.mxu0 0.0
    %3862 = vmatpush1.msra.mxu0 0.0
    %3863 = vmatprep.subr.mxu0 0.0
    %3864 = vmatpush1.msra.mxu0 0.0
    %3865 = vmatprep.subr.mxu0 0.0
    %3866 = vmatpush1.msra.mxu0 0.0
    %3867 = vmatprep.subr.mxu0 0.0
    %3868 = vmatpush1.msra.mxu0 0.0
    %3869 = vmatprep.subr.mxu0 0.0
    %3870 = vmatpush1.msra.mxu0 0.0
    %3871 = vmatprep.subr.mxu0 0.0
    %3872 = vmatpush1.msra.mxu0 0.0
    %3873 = vmatprep.subr.mxu0 0.0
    %3874 = vmatpush1.msra.mxu0 0.0
    %3875 = vmatprep.subr.mxu0 0.0
    %3876 = vmatpush1.msra.mxu0 0.0
    %3877 = vmatprep.subr.mxu0 0.0
    %3878 = vmatpush1.msra.mxu0 0.0
    %3879 = vmatprep.subr.mxu0 0.0
    %3880 = vmatpush1.msra.mxu0 0.0
    %3881 = vmatprep.subr.mxu0 0.0
    %3882 = vmatpush1.msra.mxu0 0.0
    %3883 = vmatprep.subr.mxu0 0.0
    %3884 = vmatpush1.msra.mxu0 0.0
    %3885 = vmatprep.subr.mxu0 0.0
    %3886 = vmatpush1.msra.mxu0 0.0
    %3887 = vmatprep.mubr.f32.mxu0 0.0
    %3888 = vmatmul.mubr.f32.gmra.mrb[0].mxu0 %v3821
    %v3889 = vpop.f32.mrb[0].mxu0
    %v3890 = vadd.f32 0.0, %v3889
    %v3891 = vpop.f32.mrb[0].mxu0
    %3892 = vdwg.mxu0
    %3893 = vmatprep.subr.mxu0 0.0
    %3894 = vmatpush1.msra.mxu0 %v1212
    %3895 = vmatprep.subr.mxu0 0.0
    %3896 = vmatpush1.msra.mxu0 %v1213
    %3897 = vmatprep.subr.mxu0 0.0
    %3898 = vmatpush1.msra.mxu0 0.0
    %3899 = vmatprep.subr.mxu0 0.0
    %3900 = vmatpush1.msra.mxu0 0.0
    %3901 = vmatprep.subr.mxu0 0.0
    %3902 = vmatpush1.msra.mxu0 0.0
    %3903 = vmatprep.subr.mxu0 0.0
    %3904 = vmatpush1.msra.mxu0 0.0
    %3905 = vmatprep.subr.mxu0 0.0
    %3906 = vmatpush1.msra.mxu0 0.0
    %3907 = vmatprep.subr.mxu0 0.0
    %3908 = vmatpush1.msra.mxu0 0.0
    %3909 = vmatprep.subr.mxu0 0.0
    %3910 = vmatpush1.msra.mxu0 0.0
    %3911 = vmatprep.subr.mxu0 0.0
    %3912 = vmatpush1.msra.mxu0 0.0
    %3913 = vmatprep.subr.mxu0 0.0
    %3914 = vmatpush1.msra.mxu0 0.0
    %3915 = vmatprep.subr.mxu0 0.0
    %3916 = vmatpush1.msra.mxu0 0.0
    %3917 = vmatprep.subr.mxu0 0.0
    %3918 = vmatpush1.msra.mxu0 0.0
    %3919 = vmatprep.subr.mxu0 0.0
    %3920 = vmatpush1.msra.mxu0 0.0
    %3921 = vmatprep.subr.mxu0 0.0
    %3922 = vmatpush1.msra.mxu0 0.0
    %3923 = vmatprep.subr.mxu0 0.0
    %3924 = vmatpush1.msra.mxu0 0.0
    %3925 = vmatprep.subr.mxu0 0.0
    %3926 = vmatpush1.msra.mxu0 0.0
    %3927 = vmatprep.subr.mxu0 0.0
    %3928 = vmatpush1.msra.mxu0 0.0
    %3929 = vmatprep.subr.mxu0 0.0
    %3930 = vmatpush1.msra.mxu0 0.0
    %3931 = vmatprep.subr.mxu0 0.0
    %3932 = vmatpush1.msra.mxu0 0.0
    %3933 = vmatprep.subr.mxu0 0.0
    %3934 = vmatpush1.msra.mxu0 0.0
    %3935 = vmatprep.subr.mxu0 0.0
    %3936 = vmatpush1.msra.mxu0 0.0
    %3937 = vmatprep.subr.mxu0 0.0
    %3938 = vmatpush1.msra.mxu0 0.0
    %3939 = vmatprep.subr.mxu0 0.0
    %3940 = vmatpush1.msra.mxu0 0.0
    %3941 = vmatprep.subr.mxu0 0.0
    %3942 = vmatpush1.msra.mxu0 0.0
    %3943 = vmatprep.subr.mxu0 0.0
    %3944 = vmatpush1.msra.mxu0 0.0
    %3945 = vmatprep.subr.mxu0 0.0
    %3946 = vmatpush1.msra.mxu0 0.0
    %3947 = vmatprep.subr.mxu0 0.0
    %3948 = vmatpush1.msra.mxu0 0.0
    %3949 = vmatprep.subr.mxu0 0.0
    %3950 = vmatpush1.msra.mxu0 0.0
    %3951 = vmatprep.subr.mxu0 0.0
    %3952 = vmatpush1.msra.mxu0 0.0
    %3953 = vmatprep.subr.mxu0 0.0
    %3954 = vmatpush1.msra.mxu0 0.0
    %3955 = vmatprep.subr.mxu0 0.0
    %3956 = vmatpush1.msra.mxu0 0.0
    %3957 = vmatprep.mubr.f32.mxu0 0.0
    %3958 = vmatmul.mubr.f32.gmra.mrb[0].mxu0 %v3821
    %v3959 = vpop.f32.mrb[0].mxu0
    %v3960 = vadd.f32 0.0, %v3959
    %v3961 = vpop.f32.mrb[0].mxu0
    %3962 = vdwg.mxu0
    %3963 = vmatprep.subr.mxu0 0.0
    %3964 = vmatpush1.msra.mxu0 %v1215
    %3965 = vmatprep.subr.mxu0 0.0
    %3966 = vmatpush1.msra.mxu0 %v1216
    %3967 = vmatprep.subr.mxu0 0.0
    %3968 = vmatpush1.msra.mxu0 0.0
    %3969 = vmatprep.subr.mxu0 0.0
    %3970 = vmatpush1.msra.mxu0 0.0
    %3971 = vmatprep.subr.mxu0 0.0
    %3972 = vmatpush1.msra.mxu0 0.0
    %3973 = vmatprep.subr.mxu0 0.0
    %3974 = vmatpush1.msra.mxu0 0.0
    %3975 = vmatprep.subr.mxu0 0.0
    %3976 = vmatpush1.msra.mxu0 0.0
    %3977 = vmatprep.subr.mxu0 0.0
    %3978 = vmatpush1.msra.mxu0 0.0
    %3979 = vmatprep.subr.mxu0 0.0
    %3980 = vmatpush1.msra.mxu0 0.0
    %3981 = vmatprep.subr.mxu0 0.0
    %3982 = vmatpush1.msra.mxu0 0.0
    %3983 = vmatprep.subr.mxu0 0.0
    %3984 = vmatpush1.msra.mxu0 0.0
    %3985 = vmatprep.subr.mxu0 0.0
    %3986 = vmatpush1.msra.mxu0 0.0
    %3987 = vmatprep.subr.mxu0 0.0
    %3988 = vmatpush1.msra.mxu0 0.0
    %3989 = vmatprep.subr.mxu0 0.0
    %3990 = vmatpush1.msra.mxu0 0.0
    %3991 = vmatprep.subr.mxu0 0.0
    %3992 = vmatpush1.msra.mxu0 0.0
    %3993 = vmatprep.subr.mxu0 0.0
    %3994 = vmatpush1.msra.mxu0 0.0
    %3995 = vmatprep.subr.mxu0 0.0
    %3996 = vmatpush1.msra.mxu0 0.0
    %3997 = vmatprep.subr.mxu0 0.0
    %3998 = vmatpush1.msra.mxu0 0.0
    %3999 = vmatprep.subr.mxu0 0.0
    %4000 = vmatpush1.msra.mxu0 0.0
    %4001 = vmatprep.subr.mxu0 0.0
    %4002 = vmatpush1.msra.mxu0 0.0
    %4003 = vmatprep.subr.mxu0 0.0
    %4004 = vmatpush1.msra.mxu0 0.0
    %4005 = vmatprep.subr.mxu0 0.0
    %4006 = vmatpush1.msra.mxu0 0.0
    %4007 = vmatprep.subr.mxu0 0.0
    %4008 = vmatpush1.msra.mxu0 0.0
    %4009 = vmatprep.subr.mxu0 0.0
    %4010 = vmatpush1.msra.mxu0 0.0
    %4011 = vmatprep.subr.mxu0 0.0
    %4012 = vmatpush1.msra.mxu0 0.0
    %4013 = vmatprep.subr.mxu0 0.0
    %4014 = vmatpush1.msra.mxu0 0.0
    %4015 = vmatprep.subr.mxu0 0.0
    %4016 = vmatpush1.msra.mxu0 0.0
    %4017 = vmatprep.subr.mxu0 0.0
    %4018 = vmatpush1.msra.mxu0 0.0
    %4019 = vmatprep.subr.mxu0 0.0
    %4020 = vmatpush1.msra.mxu0 0.0
    %4021 = vmatprep.subr.mxu0 0.0
    %4022 = vmatpush1.msra.mxu0 0.0
    %4023 = vmatprep.subr.mxu0 0.0
    %4024 = vmatpush1.msra.mxu0 0.0
    %4025 = vmatprep.subr.mxu0 0.0
    %4026 = vmatpush1.msra.mxu0 0.0
    %4027 = vmatprep.mubr.f32.mxu0 0.0
    %4028 = vmatmul.mubr.f32.gmra.mrb[0].mxu0 %v3821
    %v4029 = vpop.f32.mrb[0].mxu0
    %v4030 = vadd.f32 %v1365, %v4029
    %v4031 = vpop.f32.mrb[0].mxu0
    %4032 = vdwg.mxu0
    %v4033 = vld [vmem:[#allocation2 + $0x58] sm:$0xff]
    %v4034 = vadd.f32 %v4033, %v3890
    %v4035 = vxor.u32 %v4034, 2147483648
    %v4036 = vmul.f32 %v4035, 1.442695
    %v4037 = vpow.pop %v4036
    %v4038 = vadd.f32 %v4037, 1.0
    %v4039 = vrcp.pop %v4038
    %v4040 = vmul.f32 1.0, %v4039
    %v4041 = vld [vmem:[#allocation3 + $0x58] sm:$0xff]
    %v4042 = vadd.f32 %v4041, %v3960
    %v4043 = vxor.u32 %v4042, 2147483648
    %v4044 = vmul.f32 %v4043, 1.442695
    %v4045 = vpow.pop %v4044
    %v4046 = vadd.f32 %v4045, 1.0
    %v4047 = vrcp.pop %v4046
    %v4048 = vmul.f32 1.0, %v4047
    %v4049 = vld [vmem:[#allocation4 + $0x58] sm:$0xff]
    %v4050 = vmul.f32 %v4040, %v4030
    %v4051 = vadd.f32 %v4049, %v4050
    %v4052 = vtanh.pop %v4051
    %v4053 = vsub.f32 %v3819, %v4052
    %v4054 = vmul.f32 %v4048, %v4053
    %v4055 = vadd.f32 %v4052, %v4054
    %v4057 = vsel %vm275, %v4055, 0
    %4059 = vmatprep.subr.mxu0 0.0
    %4060 = vmatpush1.msra.mxu0 %v1209
    %4061 = vmatprep.subr.mxu0 0.0
    %4062 = vmatpush1.msra.mxu0 %v1210
    %4063 = vmatprep.subr.mxu0 0.0
    %4064 = vmatpush1.msra.mxu0 0.0
    %4065 = vmatprep.subr.mxu0 0.0
    %4066 = vmatpush1.msra.mxu0 0.0
    %4067 = vmatprep.subr.mxu0 0.0
    %4068 = vmatpush1.msra.mxu0 0.0
    %4069 = vmatprep.subr.mxu0 0.0
    %4070 = vmatpush1.msra.mxu0 0.0
    %4071 = vmatprep.subr.mxu0 0.0
    %4072 = vmatpush1.msra.mxu0 0.0
    %4073 = vmatprep.subr.mxu0 0.0
    %4074 = vmatpush1.msra.mxu0 0.0
    %4075 = vmatprep.subr.mxu0 0.0
    %4076 = vmatpush1.msra.mxu0 0.0
    %4077 = vmatprep.subr.mxu0 0.0
    %4078 = vmatpush1.msra.mxu0 0.0
    %4079 = vmatprep.subr.mxu0 0.0
    %4080 = vmatpush1.msra.mxu0 0.0
    %4081 = vmatprep.subr.mxu0 0.0
    %4082 = vmatpush1.msra.mxu0 0.0
    %4083 = vmatprep.subr.mxu0 0.0
    %4084 = vmatpush1.msra.mxu0 0.0
    %4085 = vmatprep.subr.mxu0 0.0
    %4086 = vmatpush1.msra.mxu0 0.0
    %4087 = vmatprep.subr.mxu0 0.0
    %4088 = vmatpush1.msra.mxu0 0.0
    %4089 = vmatprep.subr.mxu0 0.0
    %4090 = vmatpush1.msra.mxu0 0.0
    %4091 = vmatprep.subr.mxu0 0.0
    %4092 = vmatpush1.msra.mxu0 0.0
    %4093 = vmatprep.subr.mxu0 0.0
    %4094 = vmatpush1.msra.mxu0 0.0
    %4095 = vmatprep.subr.mxu0 0.0
    %4096 = vmatpush1.msra.mxu0 0.0
    %4097 = vmatprep.subr.mxu0 0.0
    %4098 = vmatpush1.msra.mxu0 0.0
    %4099 = vmatprep.subr.mxu0 0.0
    %4100 = vmatpush1.msra.mxu0 0.0
    %4101 = vmatprep.subr.mxu0 0.0
    %4102 = vmatpush1.msra.mxu0 0.0
    %4103 = vmatprep.subr.mxu0 0.0
    %4104 = vmatpush1.msra.mxu0 0.0
    %4105 = vmatprep.subr.mxu0 0.0
    %4106 = vmatpush1.msra.mxu0 0.0
    %4107 = vmatprep.subr.mxu0 0.0
    %4108 = vmatpush1.msra.mxu0 0.0
    %4109 = vmatprep.subr.mxu0 0.0
    %4110 = vmatpush1.msra.mxu0 0.0
    %4111 = vmatprep.subr.mxu0 0.0
    %4112 = vmatpush1.msra.mxu0 0.0
    %4113 = vmatprep.subr.mxu0 0.0
    %4114 = vmatpush1.msra.mxu0 0.0
    %4115 = vmatprep.subr.mxu0 0.0
    %4116 = vmatpush1.msra.mxu0 0.0
    %4117 = vmatprep.subr.mxu0 0.0
    %4118 = vmatpush1.msra.mxu0 0.0
    %4119 = vmatprep.subr.mxu0 0.0
    %4120 = vmatpush1.msra.mxu0 0.0
    %4121 = vmatprep.subr.mxu0 0.0
    %4122 = vmatpush1.msra.mxu0 0.0
    %4123 = vmatprep.mubr.f32.mxu0 0.0
    %4124 = vmatmul.mubr.f32.gmra.mrb[0].mxu0 %v4057
    %v4125 = vpop.f32.mrb[0].mxu0
    %v4126 = vadd.f32 0.0, %v4125
    %v4127 = vpop.f32.mrb[0].mxu0
    %4128 = vdwg.mxu0
    %4129 = vmatprep.subr.mxu0 0.0
    %4130 = vmatpush1.msra.mxu0 %v1212
    %4131 = vmatprep.subr.mxu0 0.0
    %4132 = vmatpush1.msra.mxu0 %v1213
    %4133 = vmatprep.subr.mxu0 0.0
    %4134 = vmatpush1.msra.mxu0 0.0
    %4135 = vmatprep.subr.mxu0 0.0
    %4136 = vmatpush1.msra.mxu0 0.0
    %4137 = vmatprep.subr.mxu0 0.0
    %4138 = vmatpush1.msra.mxu0 0.0
    %4139 = vmatprep.subr.mxu0 0.0
    %4140 = vmatpush1.msra.mxu0 0.0
    %4141 = vmatprep.subr.mxu0 0.0
    %4142 = vmatpush1.msra.mxu0 0.0
    %4143 = vmatprep.subr.mxu0 0.0
    %4144 = vmatpush1.msra.mxu0 0.0
    %4145 = vmatprep.subr.mxu0 0.0
    %4146 = vmatpush1.msra.mxu0 0.0
    %4147 = vmatprep.subr.mxu0 0.0
    %4148 = vmatpush1.msra.mxu0 0.0
    %4149 = vmatprep.subr.mxu0 0.0
    %4150 = vmatpush1.msra.mxu0 0.0
    %4151 = vmatprep.subr.mxu0 0.0
    %4152 = vmatpush1.msra.mxu0 0.0
    %4153 = vmatprep.subr.mxu0 0.0
    %4154 = vmatpush1.msra.mxu0 0.0
    %4155 = vmatprep.subr.mxu0 0.0
    %4156 = vmatpush1.msra.mxu0 0.0
    %4157 = vmatprep.subr.mxu0 0.0
    %4158 = vmatpush1.msra.mxu0 0.0
    %4159 = vmatprep.subr.mxu0 0.0
    %4160 = vmatpush1.msra.mxu0 0.0
    %4161 = vmatprep.subr.mxu0 0.0
    %4162 = vmatpush1.msra.mxu0 0.0
    %4163 = vmatprep.subr.mxu0 0.0
    %4164 = vmatpush1.msra.mxu0 0.0
    %4165 = vmatprep.subr.mxu0 0.0
    %4166 = vmatpush1.msra.mxu0 0.0
    %4167 = vmatprep.subr.mxu0 0.0
    %4168 = vmatpush1.msra.mxu0 0.0
    %4169 = vmatprep.subr.mxu0 0.0
    %4170 = vmatpush1.msra.mxu0 0.0
    %4171 = vmatprep.subr.mxu0 0.0
    %4172 = vmatpush1.msra.mxu0 0.0
    %4173 = vmatprep.subr.mxu0 0.0
    %4174 = vmatpush1.msra.mxu0 0.0
    %4175 = vmatprep.subr.mxu0 0.0
    %4176 = vmatpush1.msra.mxu0 0.0
    %4177 = vmatprep.subr.mxu0 0.0
    %4178 = vmatpush1.msra.mxu0 0.0
    %4179 = vmatprep.subr.mxu0 0.0
    %4180 = vmatpush1.msra.mxu0 0.0
    %4181 = vmatprep.subr.mxu0 0.0
    %4182 = vmatpush1.msra.mxu0 0.0
    %4183 = vmatprep.subr.mxu0 0.0
    %4184 = vmatpush1.msra.mxu0 0.0
    %4185 = vmatprep.subr.mxu0 0.0
    %4186 = vmatpush1.msra.mxu0 0.0
    %4187 = vmatprep.subr.mxu0 0.0
    %4188 = vmatpush1.msra.mxu0 0.0
    %4189 = vmatprep.subr.mxu0 0.0
    %4190 = vmatpush1.msra.mxu0 0.0
    %4191 = vmatprep.subr.mxu0 0.0
    %4192 = vmatpush1.msra.mxu0 0.0
    %4193 = vmatprep.mubr.f32.mxu0 0.0
    %4194 = vmatmul.mubr.f32.gmra.mrb[0].mxu0 %v4057
    %v4195 = vpop.f32.mrb[0].mxu0
    %v4196 = vadd.f32 0.0, %v4195
    %v4197 = vpop.f32.mrb[0].mxu0
    %4198 = vdwg.mxu0
    %4199 = vmatprep.subr.mxu0 0.0
    %4200 = vmatpush1.msra.mxu0 %v1215
    %4201 = vmatprep.subr.mxu0 0.0
    %4202 = vmatpush1.msra.mxu0 %v1216
    %4203 = vmatprep.subr.mxu0 0.0
    %4204 = vmatpush1.msra.mxu0 0.0
    %4205 = vmatprep.subr.mxu0 0.0
    %4206 = vmatpush1.msra.mxu0 0.0
    %4207 = vmatprep.subr.mxu0 0.0
    %4208 = vmatpush1.msra.mxu0 0.0
    %4209 = vmatprep.subr.mxu0 0.0
    %4210 = vmatpush1.msra.mxu0 0.0
    %4211 = vmatprep.subr.mxu0 0.0
    %4212 = vmatpush1.msra.mxu0 0.0
    %4213 = vmatprep.subr.mxu0 0.0
    %4214 = vmatpush1.msra.mxu0 0.0
    %4215 = vmatprep.subr.mxu0 0.0
    %4216 = vmatpush1.msra.mxu0 0.0
    %4217 = vmatprep.subr.mxu0 0.0
    %4218 = vmatpush1.msra.mxu0 0.0
    %4219 = vmatprep.subr.mxu0 0.0
    %4220 = vmatpush1.msra.mxu0 0.0
    %4221 = vmatprep.subr.mxu0 0.0
    %4222 = vmatpush1.msra.mxu0 0.0
    %4223 = vmatprep.subr.mxu0 0.0
    %4224 = vmatpush1.msra.mxu0 0.0
    %4225 = vmatprep.subr.mxu0 0.0
    %4226 = vmatpush1.msra.mxu0 0.0
    %4227 = vmatprep.subr.mxu0 0.0
    %4228 = vmatpush1.msra.mxu0 0.0
    %4229 = vmatprep.subr.mxu0 0.0
    %4230 = vmatpush1.msra.mxu0 0.0
    %4231 = vmatprep.subr.mxu0 0.0
    %4232 = vmatpush1.msra.mxu0 0.0
    %4233 = vmatprep.subr.mxu0 0.0
    %4234 = vmatpush1.msra.mxu0 0.0
    %4235 = vmatprep.subr.mxu0 0.0
    %4236 = vmatpush1.msra.mxu0 0.0
    %4237 = vmatprep.subr.mxu0 0.0
    %4238 = vmatpush1.msra.mxu0 0.0
    %4239 = vmatprep.subr.mxu0 0.0
    %4240 = vmatpush1.msra.mxu0 0.0
    %4241 = vmatprep.subr.mxu0 0.0
    %4242 = vmatpush1.msra.mxu0 0.0
    %4243 = vmatprep.subr.mxu0 0.0
    %4244 = vmatpush1.msra.mxu0 0.0
    %4245 = vmatprep.subr.mxu0 0.0
    %4246 = vmatpush1.msra.mxu0 0.0
    %4247 = vmatprep.subr.mxu0 0.0
    %4248 = vmatpush1.msra.mxu0 0.0
    %4249 = vmatprep.subr.mxu0 0.0
    %4250 = vmatpush1.msra.mxu0 0.0
    %4251 = vmatprep.subr.mxu0 0.0
    %4252 = vmatpush1.msra.mxu0 0.0
    %4253 = vmatprep.subr.mxu0 0.0
    %4254 = vmatpush1.msra.mxu0 0.0
    %4255 = vmatprep.subr.mxu0 0.0
    %4256 = vmatpush1.msra.mxu0 0.0
    %4257 = vmatprep.subr.mxu0 0.0
    %4258 = vmatpush1.msra.mxu0 0.0
    %4259 = vmatprep.subr.mxu0 0.0
    %4260 = vmatpush1.msra.mxu0 0.0
    %4261 = vmatprep.subr.mxu0 0.0
    %4262 = vmatpush1.msra.mxu0 0.0
    %4263 = vmatprep.mubr.f32.mxu0 0.0
    %4264 = vmatmul.mubr.f32.gmra.mrb[0].mxu0 %v4057
    %v4265 = vpop.f32.mrb[0].mxu0
    %v4266 = vadd.f32 %v1365, %v4265
    %v4267 = vpop.f32.mrb[0].mxu0
    %4268 = vdwg.mxu0
    %v4269 = vld [vmem:[#allocation2 + $0x60] sm:$0xff]
    %v4270 = vadd.f32 %v4269, %v4126
    %v4271 = vxor.u32 %v4270, 2147483648
    %v4272 = vmul.f32 %v4271, 1.442695
    %v4273 = vpow.pop %v4272
    %v4274 = vadd.f32 %v4273, 1.0
    %v4275 = vrcp.pop %v4274
    %v4276 = vmul.f32 1.0, %v4275
    %v4277 = vld [vmem:[#allocation3 + $0x60] sm:$0xff]
    %v4278 = vadd.f32 %v4277, %v4196
    %v4279 = vxor.u32 %v4278, 2147483648
    %v4280 = vmul.f32 %v4279, 1.442695
    %v4281 = vpow.pop %v4280
    %v4282 = vadd.f32 %v4281, 1.0
    %v4283 = vrcp.pop %v4282
    %v4284 = vmul.f32 1.0, %v4283
    %v4285 = vld [vmem:[#allocation4 + $0x60] sm:$0xff]
    %v4286 = vmul.f32 %v4276, %v4266
    %v4287 = vadd.f32 %v4285, %v4286
    %v4288 = vtanh.pop %v4287
    %v4289 = vsub.f32 %v4055, %v4288
    %v4290 = vmul.f32 %v4284, %v4289
    %v4291 = vadd.f32 %v4288, %v4290
    %v4292 = vld [vmem:[%s8] sm:$0xff]
    %s4293 = scalar_lea.vmem %s8, 8
    %v4294 = vld [vmem:[%s4293] sm:$0xff]
    %s4295 = scalar_lea.vmem %s8, 16
    %v4296 = vld [vmem:[%s4295] sm:$0xff]
    %v4297 = vld [vmem:[%s10] sm:$0x1]
    %v4298 = vsel %vm900, 0.0, 0
    %4300 = vmatprep.subr.mxu0 0.0
    %4301 = vmatpush1.msra.mxu0 %v4292
    %4302 = vmatprep.subr.mxu0 0.0
    %4303 = vmatpush1.msra.mxu0 0.0
    %4304 = vmatprep.subr.mxu0 0.0
    %4305 = vmatpush1.msra.mxu0 0.0
    %4306 = vmatprep.subr.mxu0 0.0
    %4307 = vmatpush1.msra.mxu0 0.0
    %4308 = vmatprep.subr.mxu0 0.0
    %4309 = vmatpush1.msra.mxu0 0.0
    %4310 = vmatprep.subr.mxu0 0.0
    %4311 = vmatpush1.msra.mxu0 0.0
    %4312 = vmatprep.subr.mxu0 0.0
    %4313 = vmatpush1.msra.mxu0 0.0
    %4314 = vmatprep.subr.mxu0 0.0
    %4315 = vmatpush1.msra.mxu0 0.0
    %4316 = vmatprep.subr.mxu0 0.0
    %4317 = vmatpush1.msra.mxu0 0.0
    %4318 = vmatprep.subr.mxu0 0.0
    %4319 = vmatpush1.msra.mxu0 0.0
    %4320 = vmatprep.subr.mxu0 0.0
    %4321 = vmatpush1.msra.mxu0 0.0
    %4322 = vmatprep.subr.mxu0 0.0
    %4323 = vmatpush1.msra.mxu0 0.0
    %4324 = vmatprep.subr.mxu0 0.0
    %4325 = vmatpush1.msra.mxu0 0.0
    %4326 = vmatprep.subr.mxu0 0.0
    %4327 = vmatpush1.msra.mxu0 0.0
    %4328 = vmatprep.subr.mxu0 0.0
    %4329 = vmatpush1.msra.mxu0 0.0
    %4330 = vmatprep.subr.mxu0 0.0
    %4331 = vmatpush1.msra.mxu0 0.0
    %4332 = vmatprep.subr.mxu0 0.0
    %4333 = vmatpush1.msra.mxu0 0.0
    %4334 = vmatprep.subr.mxu0 0.0
    %4335 = vmatpush1.msra.mxu0 0.0
    %4336 = vmatprep.subr.mxu0 0.0
    %4337 = vmatpush1.msra.mxu0 0.0
    %4338 = vmatprep.subr.mxu0 0.0
    %4339 = vmatpush1.msra.mxu0 0.0
    %4340 = vmatprep.subr.mxu0 0.0
    %4341 = vmatpush1.msra.mxu0 0.0
    %4342 = vmatprep.subr.mxu0 0.0
    %4343 = vmatpush1.msra.mxu0 0.0
    %4344 = vmatprep.subr.mxu0 0.0
    %4345 = vmatpush1.msra.mxu0 0.0
    %4346 = vmatprep.subr.mxu0 0.0
    %4347 = vmatpush1.msra.mxu0 0.0
    %4348 = vmatprep.subr.mxu0 0.0
    %4349 = vmatpush1.msra.mxu0 0.0
    %4350 = vmatprep.subr.mxu0 0.0
    %4351 = vmatpush1.msra.mxu0 0.0
    %4352 = vmatprep.subr.mxu0 0.0
    %4353 = vmatpush1.msra.mxu0 0.0
    %4354 = vmatprep.subr.mxu0 0.0
    %4355 = vmatpush1.msra.mxu0 0.0
    %4356 = vmatprep.subr.mxu0 0.0
    %4357 = vmatpush1.msra.mxu0 0.0
    %4358 = vmatprep.subr.mxu0 0.0
    %4359 = vmatpush1.msra.mxu0 0.0
    %4360 = vmatprep.subr.mxu0 0.0
    %4361 = vmatpush1.msra.mxu0 0.0
    %4362 = vmatprep.subr.mxu0 0.0
    %4363 = vmatpush1.msra.mxu0 0.0
    %4364 = vmatprep.mubr.f32.mxu0 0.0
    %4365 = vmatmul.mubr.f32.gmra.mrb[0].mxu0 %v4298
    %v4366 = vpop.f32.mrb[0].mxu0
    %v4367 = vadd.f32 0.0, %v4366
    %v4368 = vpop.f32.mrb[0].mxu0
    %4369 = vmatprep.mubr.f32.mxu0 0.0
    %4370 = vmatmul.mubr.f32.gmra.mrb[0].mxu0 %v4298
    %v4371 = vpop.f32.mrb[0].mxu0
    %v4372 = vadd.f32 0.0, %v4371
    %v4373 = vpop.f32.mrb[0].mxu0
    %4374 = vmatprep.mubr.f32.mxu0 0.0
    %4375 = vmatmul.mubr.f32.gmra.mrb[0].mxu0 %v4298
    %v4376 = vpop.f32.mrb[0].mxu0
    %v4377 = vadd.f32 0.0, %v4376
    %v4378 = vpop.f32.mrb[0].mxu0
    %4379 = vmatprep.mubr.f32.mxu0 0.0
    %4380 = vmatmul.mubr.f32.gmra.mrb[0].mxu0 %v4298
    %v4381 = vpop.f32.mrb[0].mxu0
    %v4382 = vadd.f32 0.0, %v4381
    %v4383 = vpop.f32.mrb[0].mxu0
    %4384 = vdwg.mxu0
    %4385 = vmatprep.subr.mxu0 0.0
    %4386 = vmatpush1.msra.mxu0 %v4294
    %4387 = vmatprep.subr.mxu0 0.0
    %4388 = vmatpush1.msra.mxu0 0.0
    %4389 = vmatprep.subr.mxu0 0.0
    %4390 = vmatpush1.msra.mxu0 0.0
    %4391 = vmatprep.subr.mxu0 0.0
    %4392 = vmatpush1.msra.mxu0 0.0
    %4393 = vmatprep.subr.mxu0 0.0
    %4394 = vmatpush1.msra.mxu0 0.0
    %4395 = vmatprep.subr.mxu0 0.0
    %4396 = vmatpush1.msra.mxu0 0.0
    %4397 = vmatprep.subr.mxu0 0.0
    %4398 = vmatpush1.msra.mxu0 0.0
    %4399 = vmatprep.subr.mxu0 0.0
    %4400 = vmatpush1.msra.mxu0 0.0
    %4401 = vmatprep.subr.mxu0 0.0
    %4402 = vmatpush1.msra.mxu0 0.0
    %4403 = vmatprep.subr.mxu0 0.0
    %4404 = vmatpush1.msra.mxu0 0.0
    %4405 = vmatprep.subr.mxu0 0.0
    %4406 = vmatpush1.msra.mxu0 0.0
    %4407 = vmatprep.subr.mxu0 0.0
    %4408 = vmatpush1.msra.mxu0 0.0
    %4409 = vmatprep.subr.mxu0 0.0
    %4410 = vmatpush1.msra.mxu0 0.0
    %4411 = vmatprep.subr.mxu0 0.0
    %4412 = vmatpush1.msra.mxu0 0.0
    %4413 = vmatprep.subr.mxu0 0.0
    %4414 = vmatpush1.msra.mxu0 0.0
    %4415 = vmatprep.subr.mxu0 0.0
    %4416 = vmatpush1.msra.mxu0 0.0
    %4417 = vmatprep.subr.mxu0 0.0
    %4418 = vmatpush1.msra.mxu0 0.0
    %4419 = vmatprep.subr.mxu0 0.0
    %4420 = vmatpush1.msra.mxu0 0.0
    %4421 = vmatprep.subr.mxu0 0.0
    %4422 = vmatpush1.msra.mxu0 0.0
    %4423 = vmatprep.subr.mxu0 0.0
    %4424 = vmatpush1.msra.mxu0 0.0
    %4425 = vmatprep.subr.mxu0 0.0
    %4426 = vmatpush1.msra.mxu0 0.0
    %4427 = vmatprep.subr.mxu0 0.0
    %4428 = vmatpush1.msra.mxu0 0.0
    %4429 = vmatprep.subr.mxu0 0.0
    %4430 = vmatpush1.msra.mxu0 0.0
    %4431 = vmatprep.subr.mxu0 0.0
    %4432 = vmatpush1.msra.mxu0 0.0
    %4433 = vmatprep.subr.mxu0 0.0
    %4434 = vmatpush1.msra.mxu0 0.0
    %4435 = vmatprep.subr.mxu0 0.0
    %4436 = vmatpush1.msra.mxu0 0.0
    %4437 = vmatprep.subr.mxu0 0.0
    %4438 = vmatpush1.msra.mxu0 0.0
    %4439 = vmatprep.subr.mxu0 0.0
    %4440 = vmatpush1.msra.mxu0 0.0
    %4441 = vmatprep.subr.mxu0 0.0
    %4442 = vmatpush1.msra.mxu0 0.0
    %4443 = vmatprep.subr.mxu0 0.0
    %4444 = vmatpush1.msra.mxu0 0.0
    %4445 = vmatprep.subr.mxu0 0.0
    %4446 = vmatpush1.msra.mxu0 0.0
    %4447 = vmatprep.subr.mxu0 0.0
    %4448 = vmatpush1.msra.mxu0 0.0
    %4449 = vmatprep.mubr.f32.mxu0 0.0
    %4450 = vmatmul.mubr.f32.gmra.mrb[0].mxu0 %v4298
    %v4451 = vpop.f32.mrb[0].mxu0
    %v4452 = vadd.f32 0.0, %v4451
    %v4453 = vpop.f32.mrb[0].mxu0
    %4454 = vmatprep.mubr.f32.mxu0 0.0
    %4455 = vmatmul.mubr.f32.gmra.mrb[0].mxu0 %v4298
    %v4456 = vpop.f32.mrb[0].mxu0
    %v4457 = vadd.f32 0.0, %v4456
    %v4458 = vpop.f32.mrb[0].mxu0
    %4459 = vmatprep.mubr.f32.mxu0 0.0
    %4460 = vmatmul.mubr.f32.gmra.mrb[0].mxu0 %v4298
    %v4461 = vpop.f32.mrb[0].mxu0
    %v4462 = vadd.f32 0.0, %v4461
    %v4463 = vpop.f32.mrb[0].mxu0
    %4464 = vmatprep.mubr.f32.mxu0 0.0
    %4465 = vmatmul.mubr.f32.gmra.mrb[0].mxu0 %v4298
    %v4466 = vpop.f32.mrb[0].mxu0
    %v4467 = vadd.f32 0.0, %v4466
    %v4468 = vpop.f32.mrb[0].mxu0
    %4469 = vdwg.mxu0
    %v4471 = vlaneseq
    %v4472 = vshrl.u32 %v4471, 7
    %v4473 = vsub.s32 0, %v4472
    %v4474 = vrot.slane %v4297, %v4473
    %4476 = vmatprep.subr.mxu0 0.0
    %4477 = vmatpush1.msra.mxu0 %v4296
    %4478 = vmatprep.subr.mxu0 0.0
    %4479 = vmatpush1.msra.mxu0 0.0
    %4480 = vmatprep.subr.mxu0 0.0
    %4481 = vmatpush1.msra.mxu0 0.0
    %4482 = vmatprep.subr.mxu0 0.0
    %4483 = vmatpush1.msra.mxu0 0.0
    %4484 = vmatprep.subr.mxu0 0.0
    %4485 = vmatpush1.msra.mxu0 0.0
    %4486 = vmatprep.subr.mxu0 0.0
    %4487 = vmatpush1.msra.mxu0 0.0
    %4488 = vmatprep.subr.mxu0 0.0
    %4489 = vmatpush1.msra.mxu0 0.0
    %4490 = vmatprep.subr.mxu0 0.0
    %4491 = vmatpush1.msra.mxu0 0.0
    %4492 = vmatprep.subr.mxu0 0.0
    %4493 = vmatpush1.msra.mxu0 0.0
    %4494 = vmatprep.subr.mxu0 0.0
    %4495 = vmatpush1.msra.mxu0 0.0
    %4496 = vmatprep.subr.mxu0 0.0
    %4497 = vmatpush1.msra.mxu0 0.0
    %4498 = vmatprep.subr.mxu0 0.0
    %4499 = vmatpush1.msra.mxu0 0.0
    %4500 = vmatprep.subr.mxu0 0.0
    %4501 = vmatpush1.msra.mxu0 0.0
    %4502 = vmatprep.subr.mxu0 0.0
    %4503 = vmatpush1.msra.mxu0 0.0
    %4504 = vmatprep.subr.mxu0 0.0
    %4505 = vmatpush1.msra.mxu0 0.0
    %4506 = vmatprep.subr.mxu0 0.0
    %4507 = vmatpush1.msra.mxu0 0.0
    %4508 = vmatprep.subr.mxu0 0.0
    %4509 = vmatpush1.msra.mxu0 0.0
    %4510 = vmatprep.subr.mxu0 0.0
    %4511 = vmatpush1.msra.mxu0 0.0
    %4512 = vmatprep.subr.mxu0 0.0
    %4513 = vmatpush1.msra.mxu0 0.0
    %4514 = vmatprep.subr.mxu0 0.0
    %4515 = vmatpush1.msra.mxu0 0.0
    %4516 = vmatprep.subr.mxu0 0.0
    %4517 = vmatpush1.msra.mxu0 0.0
    %4518 = vmatprep.subr.mxu0 0.0
    %4519 = vmatpush1.msra.mxu0 0.0
    %4520 = vmatprep.subr.mxu0 0.0
    %4521 = vmatpush1.msra.mxu0 0.0
    %4522 = vmatprep.subr.mxu0 0.0
    %4523 = vmatpush1.msra.mxu0 0.0
    %4524 = vmatprep.subr.mxu0 0.0
    %4525 = vmatpush1.msra.mxu0 0.0
    %4526 = vmatprep.subr.mxu0 0.0
    %4527 = vmatpush1.msra.mxu0 0.0
    %4528 = vmatprep.subr.mxu0 0.0
    %4529 = vmatpush1.msra.mxu0 0.0
    %4530 = vmatprep.subr.mxu0 0.0
    %4531 = vmatpush1.msra.mxu0 0.0
    %4532 = vmatprep.subr.mxu0 0.0
    %4533 = vmatpush1.msra.mxu0 0.0
    %4534 = vmatprep.subr.mxu0 0.0
    %4535 = vmatpush1.msra.mxu0 0.0
    %4536 = vmatprep.subr.mxu0 0.0
    %4537 = vmatpush1.msra.mxu0 0.0
    %4538 = vmatprep.subr.mxu0 0.0
    %4539 = vmatpush1.msra.mxu0 0.0
    %4540 = vmatprep.mubr.f32.mxu0 0.0
    %4541 = vmatmul.mubr.f32.gmra.mrb[0].mxu0 %v4298
    %v4542 = vpop.f32.mrb[0].mxu0
    %v4543 = vadd.f32 %v4474, %v4542
    %v4544 = vpop.f32.mrb[0].mxu0
    %4545 = vmatprep.mubr.f32.mxu0 0.0
    %4546 = vmatmul.mubr.f32.gmra.mrb[0].mxu0 %v4298
    %v4547 = vpop.f32.mrb[0].mxu0
    %v4548 = vadd.f32 %v4474, %v4547
    %v4549 = vpop.f32.mrb[0].mxu0
    %4550 = vmatprep.mubr.f32.mxu0 0.0
    %4551 = vmatmul.mubr.f32.gmra.mrb[0].mxu0 %v4298
    %v4552 = vpop.f32.mrb[0].mxu0
    %v4553 = vadd.f32 %v4474, %v4552
    %v4554 = vpop.f32.mrb[0].mxu0
    %4555 = vmatprep.mubr.f32.mxu0 0.0
    %4556 = vmatmul.mubr.f32.gmra.mrb[0].mxu0 %v4298
    %v4557 = vpop.f32.mrb[0].mxu0
    %v4558 = vadd.f32 %v4474, %v4557
    %v4559 = vpop.f32.mrb[0].mxu0
    %4560 = vdwg.mxu0
    %v4561 = vld [vmem:[#allocation5] sm:$0xff]
    %v4562 = vld [vmem:[#allocation5 + $0x8] sm:$0xff]
    %v4563 = vld [vmem:[#allocation5 + $0x10] sm:$0xff]
    %v4564 = vld [vmem:[#allocation5 + $0x18] sm:$0xff]
    %v4565 = vadd.f32 %v4561, %v4367
    %v4566 = vadd.f32 %v4562, %v4372
    %v4567 = vadd.f32 %v4563, %v4377
    %v4568 = vadd.f32 %v4564, %v4382
    %v4569 = vxor.u32 %v4565, 2147483648
    %v4570 = vxor.u32 %v4566, 2147483648
    %v4571 = vxor.u32 %v4567, 2147483648
    %v4572 = vxor.u32 %v4568, 2147483648
    %v4573 = vmul.f32 %v4569, 1.442695
    %v4574 = vpow.pop %v4573
    %v4575 = vmul.f32 %v4570, 1.442695
    %v4576 = vpow.pop %v4575
    %v4577 = vmul.f32 %v4571, 1.442695
    %v4578 = vpow.pop %v4577
    %v4579 = vmul.f32 %v4572, 1.442695
    %v4580 = vpow.pop %v4579
    %v4581 = vadd.f32 %v4574, 1.0
    %v4582 = vadd.f32 %v4576, 1.0
    %v4583 = vadd.f32 %v4578, 1.0
    %v4584 = vadd.f32 %v4580, 1.0
    %v4585 = vrcp.pop %v4581
    %v4586 = vmul.f32 1.0, %v4585
    %v4587 = vrcp.pop %v4582
    %v4588 = vmul.f32 1.0, %v4587
    %v4589 = vrcp.pop %v4583
    %v4590 = vmul.f32 1.0, %v4589
    %v4591 = vrcp.pop %v4584
    %v4592 = vmul.f32 1.0, %v4591
    %v4593 = vld [vmem:[#allocation6] sm:$0xff]
    %v4594 = vld [vmem:[#allocation6 + $0x8] sm:$0xff]
    %v4595 = vld [vmem:[#allocation6 + $0x10] sm:$0xff]
    %v4596 = vld [vmem:[#allocation6 + $0x18] sm:$0xff]
    %v4597 = vadd.f32 %v4593, %v4452
    %v4598 = vadd.f32 %v4594, %v4457
    %v4599 = vadd.f32 %v4595, %v4462
    %v4600 = vadd.f32 %v4596, %v4467
    %v4601 = vxor.u32 %v4597, 2147483648
    %v4602 = vxor.u32 %v4598, 2147483648
    %v4603 = vxor.u32 %v4599, 2147483648
    %v4604 = vxor.u32 %v4600, 2147483648
    %v4605 = vmul.f32 %v4601, 1.442695
    %v4606 = vpow.pop %v4605
    %v4607 = vmul.f32 %v4602, 1.442695
    %v4608 = vpow.pop %v4607
    %v4609 = vmul.f32 %v4603, 1.442695
    %v4610 = vpow.pop %v4609
    %v4611 = vmul.f32 %v4604, 1.442695
    %v4612 = vpow.pop %v4611
    %v4613 = vadd.f32 %v4606, 1.0
    %v4614 = vadd.f32 %v4608, 1.0
    %v4615 = vadd.f32 %v4610, 1.0
    %v4616 = vadd.f32 %v4612, 1.0
    %v4617 = vrcp.pop %v4613
    %v4618 = vmul.f32 1.0, %v4617
    %v4619 = vrcp.pop %v4614
    %v4620 = vmul.f32 1.0, %v4619
    %v4621 = vrcp.pop %v4615
    %v4622 = vmul.f32 1.0, %v4621
    %v4623 = vrcp.pop %v4616
    %v4624 = vmul.f32 1.0, %v4623
    %v4625 = vld [vmem:[#allocation7] sm:$0xff]
    %v4626 = vld [vmem:[#allocation7 + $0x8] sm:$0xff]
    %v4627 = vld [vmem:[#allocation7 + $0x10] sm:$0xff]
    %v4628 = vld [vmem:[#allocation7 + $0x18] sm:$0xff]
    %v4629 = vmul.f32 %v4586, %v4543
    %v4630 = vmul.f32 %v4588, %v4548
    %v4631 = vmul.f32 %v4590, %v4553
    %v4632 = vmul.f32 %v4592, %v4558
    %v4633 = vadd.f32 %v4625, %v4629
    %v4634 = vadd.f32 %v4626, %v4630
    %v4635 = vadd.f32 %v4627, %v4631
    %v4636 = vadd.f32 %v4628, %v4632
    %v4637 = vtanh.pop %v4633
    %v4638 = vtanh.pop %v4634
    %v4639 = vtanh.pop %v4635
    %v4640 = vtanh.pop %v4636
    %v4641 = vsub.f32 0.0, %v4637
    %v4642 = vsub.f32 0.0, %v4638
    %v4643 = vsub.f32 0.0, %v4639
    %v4644 = vsub.f32 0.0, %v4640
    %v4645 = vmul.f32 %v4618, %v4641
    %v4646 = vmul.f32 %v4620, %v4642
    %v4647 = vmul.f32 %v4622, %v4643
    %v4648 = vmul.f32 %v4624, %v4644
    %v4649 = vadd.f32 %v4637, %v4645
    %v4650 = vadd.f32 %v4638, %v4646
    %v4651 = vadd.f32 %v4639, %v4647
    %v4652 = vadd.f32 %v4640, %v4648
    %v4654 = vsel %vm900, %v4649, 0
    %v4657 = vsel %vm900, %v4650, 0
    %v4660 = vsel %vm900, %v4651, 0
    %v4663 = vsel %vm900, %v4652, 0
    %4665 = vmatprep.subr.mxu0 0.0
    %4666 = vmatpush1.msra.mxu0 %v4292
    %4667 = vmatprep.subr.mxu0 0.0
    %4668 = vmatpush1.msra.mxu0 0.0
    %4669 = vmatprep.subr.mxu0 0.0
    %4670 = vmatpush1.msra.mxu0 0.0
    %4671 = vmatprep.subr.mxu0 0.0
    %4672 = vmatpush1.msra.mxu0 0.0
    %4673 = vmatprep.subr.mxu0 0.0
    %4674 = vmatpush1.msra.mxu0 0.0
    %4675 = vmatprep.subr.mxu0 0.0
    %4676 = vmatpush1.msra.mxu0 0.0
    %4677 = vmatprep.subr.mxu0 0.0
    %4678 = vmatpush1.msra.mxu0 0.0
    %4679 = vmatprep.subr.mxu0 0.0
    %4680 = vmatpush1.msra.mxu0 0.0
    %4681 = vmatprep.subr.mxu0 0.0
    %4682 = vmatpush1.msra.mxu0 0.0
    %4683 = vmatprep.subr.mxu0 0.0
    %4684 = vmatpush1.msra.mxu0 0.0
    %4685 = vmatprep.subr.mxu0 0.0
    %4686 = vmatpush1.msra.mxu0 0.0
    %4687 = vmatprep.subr.mxu0 0.0
    %4688 = vmatpush1.msra.mxu0 0.0
    %4689 = vmatprep.subr.mxu0 0.0
    %4690 = vmatpush1.msra.mxu0 0.0
    %4691 = vmatprep.subr.mxu0 0.0
    %4692 = vmatpush1.msra.mxu0 0.0
    %4693 = vmatprep.subr.mxu0 0.0
    %4694 = vmatpush1.msra.mxu0 0.0
    %4695 = vmatprep.subr.mxu0 0.0
    %4696 = vmatpush1.msra.mxu0 0.0
    %4697 = vmatprep.subr.mxu0 0.0
    %4698 = vmatpush1.msra.mxu0 0.0
    %4699 = vmatprep.subr.mxu0 0.0
    %4700 = vmatpush1.msra.mxu0 0.0
    %4701 = vmatprep.subr.mxu0 0.0
    %4702 = vmatpush1.msra.mxu0 0.0
    %4703 = vmatprep.subr.mxu0 0.0
    %4704 = vmatpush1.msra.mxu0 0.0
    %4705 = vmatprep.subr.mxu0 0.0
    %4706 = vmatpush1.msra.mxu0 0.0
    %4707 = vmatprep.subr.mxu0 0.0
    %4708 = vmatpush1.msra.mxu0 0.0
    %4709 = vmatprep.subr.mxu0 0.0
    %4710 = vmatpush1.msra.mxu0 0.0
    %4711 = vmatprep.subr.mxu0 0.0
    %4712 = vmatpush1.msra.mxu0 0.0
    %4713 = vmatprep.subr.mxu0 0.0
    %4714 = vmatpush1.msra.mxu0 0.0
    %4715 = vmatprep.subr.mxu0 0.0
    %4716 = vmatpush1.msra.mxu0 0.0
    %4717 = vmatprep.subr.mxu0 0.0
    %4718 = vmatpush1.msra.mxu0 0.0
    %4719 = vmatprep.subr.mxu0 0.0
    %4720 = vmatpush1.msra.mxu0 0.0
    %4721 = vmatprep.subr.mxu0 0.0
    %4722 = vmatpush1.msra.mxu0 0.0
    %4723 = vmatprep.subr.mxu0 0.0
    %4724 = vmatpush1.msra.mxu0 0.0
    %4725 = vmatprep.subr.mxu0 0.0
    %4726 = vmatpush1.msra.mxu0 0.0
    %4727 = vmatprep.subr.mxu0 0.0
    %4728 = vmatpush1.msra.mxu0 0.0
    %4729 = vmatprep.mubr.f32.mxu0 0.0
    %4730 = vmatmul.mubr.f32.gmra.mrb[0].mxu0 %v4654
    %v4731 = vpop.f32.mrb[0].mxu0
    %v4732 = vadd.f32 0.0, %v4731
    %v4733 = vpop.f32.mrb[0].mxu0
    %4734 = vmatprep.mubr.f32.mxu0 0.0
    %4735 = vmatmul.mubr.f32.gmra.mrb[0].mxu0 %v4657
    %v4736 = vpop.f32.mrb[0].mxu0
    %v4737 = vadd.f32 0.0, %v4736
    %v4738 = vpop.f32.mrb[0].mxu0
    %4739 = vmatprep.mubr.f32.mxu0 0.0
    %4740 = vmatmul.mubr.f32.gmra.mrb[0].mxu0 %v4660
    %v4741 = vpop.f32.mrb[0].mxu0
    %v4742 = vadd.f32 0.0, %v4741
    %v4743 = vpop.f32.mrb[0].mxu0
    %4744 = vmatprep.mubr.f32.mxu0 0.0
    %4745 = vmatmul.mubr.f32.gmra.mrb[0].mxu0 %v4663
    %v4746 = vpop.f32.mrb[0].mxu0
    %v4747 = vadd.f32 0.0, %v4746
    %v4748 = vpop.f32.mrb[0].mxu0
    %4749 = vdwg.mxu0
    %4750 = vmatprep.subr.mxu0 0.0
    %4751 = vmatpush1.msra.mxu0 %v4294
    %4752 = vmatprep.subr.mxu0 0.0
    %4753 = vmatpush1.msra.mxu0 0.0
    %4754 = vmatprep.subr.mxu0 0.0
    %4755 = vmatpush1.msra.mxu0 0.0
    %4756 = vmatprep.subr.mxu0 0.0
    %4757 = vmatpush1.msra.mxu0 0.0
    %4758 = vmatprep.subr.mxu0 0.0
    %4759 = vmatpush1.msra.mxu0 0.0
    %4760 = vmatprep.subr.mxu0 0.0
    %4761 = vmatpush1.msra.mxu0 0.0
    %4762 = vmatprep.subr.mxu0 0.0
    %4763 = vmatpush1.msra.mxu0 0.0
    %4764 = vmatprep.subr.mxu0 0.0
    %4765 = vmatpush1.msra.mxu0 0.0
    %4766 = vmatprep.subr.mxu0 0.0
    %4767 = vmatpush1.msra.mxu0 0.0
    %4768 = vmatprep.subr.mxu0 0.0
    %4769 = vmatpush1.msra.mxu0 0.0
    %4770 = vmatprep.subr.mxu0 0.0
    %4771 = vmatpush1.msra.mxu0 0.0
    %4772 = vmatprep.subr.mxu0 0.0
    %4773 = vmatpush1.msra.mxu0 0.0
    %4774 = vmatprep.subr.mxu0 0.0
    %4775 = vmatpush1.msra.mxu0 0.0
    %4776 = vmatprep.subr.mxu0 0.0
    %4777 = vmatpush1.msra.mxu0 0.0
    %4778 = vmatprep.subr.mxu0 0.0
    %4779 = vmatpush1.msra.mxu0 0.0
    %4780 = vmatprep.subr.mxu0 0.0
    %4781 = vmatpush1.msra.mxu0 0.0
    %4782 = vmatprep.subr.mxu0 0.0
    %4783 = vmatpush1.msra.mxu0 0.0
    %4784 = vmatprep.subr.mxu0 0.0
    %4785 = vmatpush1.msra.mxu0 0.0
    %4786 = vmatprep.subr.mxu0 0.0
    %4787 = vmatpush1.msra.mxu0 0.0
    %4788 = vmatprep.subr.mxu0 0.0
    %4789 = vmatpush1.msra.mxu0 0.0
    %4790 = vmatprep.subr.mxu0 0.0
    %4791 = vmatpush1.msra.mxu0 0.0
    %4792 = vmatprep.subr.mxu0 0.0
    %4793 = vmatpush1.msra.mxu0 0.0
    %4794 = vmatprep.subr.mxu0 0.0
    %4795 = vmatpush1.msra.mxu0 0.0
    %4796 = vmatprep.subr.mxu0 0.0
    %4797 = vmatpush1.msra.mxu0 0.0
    %4798 = vmatprep.subr.mxu0 0.0
    %4799 = vmatpush1.msra.mxu0 0.0
    %4800 = vmatprep.subr.mxu0 0.0
    %4801 = vmatpush1.msra.mxu0 0.0
    %4802 = vmatprep.subr.mxu0 0.0
    %4803 = vmatpush1.msra.mxu0 0.0
    %4804 = vmatprep.subr.mxu0 0.0
    %4805 = vmatpush1.msra.mxu0 0.0
    %4806 = vmatprep.subr.mxu0 0.0
    %4807 = vmatpush1.msra.mxu0 0.0
    %4808 = vmatprep.subr.mxu0 0.0
    %4809 = vmatpush1.msra.mxu0 0.0
    %4810 = vmatprep.subr.mxu0 0.0
    %4811 = vmatpush1.msra.mxu0 0.0
    %4812 = vmatprep.subr.mxu0 0.0
    %4813 = vmatpush1.msra.mxu0 0.0
    %4814 = vmatprep.mubr.f32.mxu0 0.0
    %4815 = vmatmul.mubr.f32.gmra.mrb[0].mxu0 %v4654
    %v4816 = vpop.f32.mrb[0].mxu0
    %v4817 = vadd.f32 0.0, %v4816
    %v4818 = vpop.f32.mrb[0].mxu0
    %4819 = vmatprep.mubr.f32.mxu0 0.0
    %4820 = vmatmul.mubr.f32.gmra.mrb[0].mxu0 %v4657
    %v4821 = vpop.f32.mrb[0].mxu0
    %v4822 = vadd.f32 0.0, %v4821
    %v4823 = vpop.f32.mrb[0].mxu0
    %4824 = vmatprep.mubr.f32.mxu0 0.0
    %4825 = vmatmul.mubr.f32.gmra.mrb[0].mxu0 %v4660
    %v4826 = vpop.f32.mrb[0].mxu0
    %v4827 = vadd.f32 0.0, %v4826
    %v4828 = vpop.f32.mrb[0].mxu0
    %4829 = vmatprep.mubr.f32.mxu0 0.0
    %4830 = vmatmul.mubr.f32.gmra.mrb[0].mxu0 %v4663
    %v4831 = vpop.f32.mrb[0].mxu0
    %v4832 = vadd.f32 0.0, %v4831
    %v4833 = vpop.f32.mrb[0].mxu0
    %4834 = vdwg.mxu0
    %4835 = vmatprep.subr.mxu0 0.0
    %4836 = vmatpush1.msra.mxu0 %v4296
    %4837 = vmatprep.subr.mxu0 0.0
    %4838 = vmatpush1.msra.mxu0 0.0
    %4839 = vmatprep.subr.mxu0 0.0
    %4840 = vmatpush1.msra.mxu0 0.0
    %4841 = vmatprep.subr.mxu0 0.0
    %4842 = vmatpush1.msra.mxu0 0.0
    %4843 = vmatprep.subr.mxu0 0.0
    %4844 = vmatpush1.msra.mxu0 0.0
    %4845 = vmatprep.subr.mxu0 0.0
    %4846 = vmatpush1.msra.mxu0 0.0
    %4847 = vmatprep.subr.mxu0 0.0
    %4848 = vmatpush1.msra.mxu0 0.0
    %4849 = vmatprep.subr.mxu0 0.0
    %4850 = vmatpush1.msra.mxu0 0.0
    %4851 = vmatprep.subr.mxu0 0.0
    %4852 = vmatpush1.msra.mxu0 0.0
    %4853 = vmatprep.subr.mxu0 0.0
    %4854 = vmatpush1.msra.mxu0 0.0
    %4855 = vmatprep.subr.mxu0 0.0
    %4856 = vmatpush1.msra.mxu0 0.0
    %4857 = vmatprep.subr.mxu0 0.0
    %4858 = vmatpush1.msra.mxu0 0.0
    %4859 = vmatprep.subr.mxu0 0.0
    %4860 = vmatpush1.msra.mxu0 0.0
    %4861 = vmatprep.subr.mxu0 0.0
    %4862 = vmatpush1.msra.mxu0 0.0
    %4863 = vmatprep.subr.mxu0 0.0
    %4864 = vmatpush1.msra.mxu0 0.0
    %4865 = vmatprep.subr.mxu0 0.0
    %4866 = vmatpush1.msra.mxu0 0.0
    %4867 = vmatprep.subr.mxu0 0.0
    %4868 = vmatpush1.msra.mxu0 0.0
    %4869 = vmatprep.subr.mxu0 0.0
    %4870 = vmatpush1.msra.mxu0 0.0
    %4871 = vmatprep.subr.mxu0 0.0
    %4872 = vmatpush1.msra.mxu0 0.0
    %4873 = vmatprep.subr.mxu0 0.0
    %4874 = vmatpush1.msra.mxu0 0.0
    %4875 = vmatprep.subr.mxu0 0.0
    %4876 = vmatpush1.msra.mxu0 0.0
    %4877 = vmatprep.subr.mxu0 0.0
    %4878 = vmatpush1.msra.mxu0 0.0
    %4879 = vmatprep.subr.mxu0 0.0
    %4880 = vmatpush1.msra.mxu0 0.0
    %4881 = vmatprep.subr.mxu0 0.0
    %4882 = vmatpush1.msra.mxu0 0.0
    %4883 = vmatprep.subr.mxu0 0.0
    %4884 = vmatpush1.msra.mxu0 0.0
    %4885 = vmatprep.subr.mxu0 0.0
    %4886 = vmatpush1.msra.mxu0 0.0
    %4887 = vmatprep.subr.mxu0 0.0
    %4888 = vmatpush1.msra.mxu0 0.0
    %4889 = vmatprep.subr.mxu0 0.0
    %4890 = vmatpush1.msra.mxu0 0.0
    %4891 = vmatprep.subr.mxu0 0.0
    %4892 = vmatpush1.msra.mxu0 0.0
    %4893 = vmatprep.subr.mxu0 0.0
    %4894 = vmatpush1.msra.mxu0 0.0
    %4895 = vmatprep.subr.mxu0 0.0
    %4896 = vmatpush1.msra.mxu0 0.0
    %4897 = vmatprep.subr.mxu0 0.0
    %4898 = vmatpush1.msra.mxu0 0.0
    %4899 = vmatprep.mubr.f32.mxu0 0.0
    %4900 = vmatmul.mubr.f32.gmra.mrb[0].mxu0 %v4654
    %v4901 = vpop.f32.mrb[0].mxu0
    %v4902 = vadd.f32 %v4474, %v4901
    %v4903 = vpop.f32.mrb[0].mxu0
    %4904 = vmatprep.mubr.f32.mxu0 0.0
    %4905 = vmatmul.mubr.f32.gmra.mrb[0].mxu0 %v4657
    %v4906 = vpop.f32.mrb[0].mxu0
    %v4907 = vadd.f32 %v4474, %v4906
    %v4908 = vpop.f32.mrb[0].mxu0
    %4909 = vmatprep.mubr.f32.mxu0 0.0
    %4910 = vmatmul.mubr.f32.gmra.mrb[0].mxu0 %v4660
    %v4911 = vpop.f32.mrb[0].mxu0
    %v4912 = vadd.f32 %v4474, %v4911
    %v4913 = vpop.f32.mrb[0].mxu0
    %4914 = vmatprep.mubr.f32.mxu0 0.0
    %4915 = vmatmul.mubr.f32.gmra.mrb[0].mxu0 %v4663
    %v4916 = vpop.f32.mrb[0].mxu0
    %v4917 = vadd.f32 %v4474, %v4916
    %v4918 = vpop.f32.mrb[0].mxu0
    %4919 = vdwg.mxu0
    %v4920 = vld [vmem:[#allocation5 + $0x20] sm:$0xff]
    %v4921 = vld [vmem:[#allocation5 + $0x28] sm:$0xff]
    %v4922 = vld [vmem:[#allocation5 + $0x30] sm:$0xff]
    %v4923 = vld [vmem:[#allocation5 + $0x38] sm:$0xff]
    %v4924 = vadd.f32 %v4920, %v4732
    %v4925 = vadd.f32 %v4921, %v4737
    %v4926 = vadd.f32 %v4922, %v4742
    %v4927 = vadd.f32 %v4923, %v4747
    %v4928 = vxor.u32 %v4924, 2147483648
    %v4929 = vxor.u32 %v4925, 2147483648
    %v4930 = vxor.u32 %v4926, 2147483648
    %v4931 = vxor.u32 %v4927, 2147483648
    %v4932 = vmul.f32 %v4928, 1.442695
    %v4933 = vpow.pop %v4932
    %v4934 = vmul.f32 %v4929, 1.442695
    %v4935 = vpow.pop %v4934
    %v4936 = vmul.f32 %v4930, 1.442695
    %v4937 = vpow.pop %v4936
    %v4938 = vmul.f32 %v4931, 1.442695
    %v4939 = vpow.pop %v4938
    %v4940 = vadd.f32 %v4933, 1.0
    %v4941 = vadd.f32 %v4935, 1.0
    %v4942 = vadd.f32 %v4937, 1.0
    %v4943 = vadd.f32 %v4939, 1.0
    %v4944 = vrcp.pop %v4940
    %v4945 = vmul.f32 1.0, %v4944
    %v4946 = vrcp.pop %v4941
    %v4947 = vmul.f32 1.0, %v4946
    %v4948 = vrcp.pop %v4942
    %v4949 = vmul.f32 1.0, %v4948
    %v4950 = vrcp.pop %v4943
    %v4951 = vmul.f32 1.0, %v4950
    %v4952 = vld [vmem:[#allocation6 + $0x20] sm:$0xff]
    %v4953 = vld [vmem:[#allocation6 + $0x28] sm:$0xff]
    %v4954 = vld [vmem:[#allocation6 + $0x30] sm:$0xff]
    %v4955 = vld [vmem:[#allocation6 + $0x38] sm:$0xff]
    %v4956 = vadd.f32 %v4952, %v4817
    %v4957 = vadd.f32 %v4953, %v4822
    %v4958 = vadd.f32 %v4954, %v4827
    %v4959 = vadd.f32 %v4955, %v4832
    %v4960 = vxor.u32 %v4956, 2147483648
    %v4961 = vxor.u32 %v4957, 2147483648
    %v4962 = vxor.u32 %v4958, 2147483648
    %v4963 = vxor.u32 %v4959, 2147483648
    %v4964 = vmul.f32 %v4960, 1.442695
    %v4965 = vpow.pop %v4964
    %v4966 = vmul.f32 %v4961, 1.442695
    %v4967 = vpow.pop %v4966
    %v4968 = vmul.f32 %v4962, 1.442695
    %v4969 = vpow.pop %v4968
    %v4970 = vmul.f32 %v4963, 1.442695
    %v4971 = vpow.pop %v4970
    %v4972 = vadd.f32 %v4965, 1.0
    %v4973 = vadd.f32 %v4967, 1.0
    %v4974 = vadd.f32 %v4969, 1.0
    %v4975 = vadd.f32 %v4971, 1.0
    %v4976 = vrcp.pop %v4972
    %v4977 = vmul.f32 1.0, %v4976
    %v4978 = vrcp.pop %v4973
    %v4979 = vmul.f32 1.0, %v4978
    %v4980 = vrcp.pop %v4974
    %v4981 = vmul.f32 1.0, %v4980
    %v4982 = vrcp.pop %v4975
    %v4983 = vmul.f32 1.0, %v4982
    %v4984 = vld [vmem:[#allocation7 + $0x20] sm:$0xff]
    %v4985 = vld [vmem:[#allocation7 + $0x28] sm:$0xff]
    %v4986 = vld [vmem:[#allocation7 + $0x30] sm:$0xff]
    %v4987 = vld [vmem:[#allocation7 + $0x38] sm:$0xff]
    %v4988 = vmul.f32 %v4945, %v4902
    %v4989 = vmul.f32 %v4947, %v4907
    %v4990 = vmul.f32 %v4949, %v4912
    %v4991 = vmul.f32 %v4951, %v4917
    %v4992 = vadd.f32 %v4984, %v4988
    %v4993 = vadd.f32 %v4985, %v4989
    %v4994 = vadd.f32 %v4986, %v4990
    %v4995 = vadd.f32 %v4987, %v4991
    %v4996 = vtanh.pop %v4992
    %v4997 = vtanh.pop %v4993
    %v4998 = vtanh.pop %v4994
    %v4999 = vtanh.pop %v4995
    %v5000 = vsub.f32 %v4649, %v4996
    %v5001 = vsub.f32 %v4650, %v4997
    %v5002 = vsub.f32 %v4651, %v4998
    %v5003 = vsub.f32 %v4652, %v4999
    %v5004 = vmul.f32 %v4977, %v5000
    %v5005 = vmul.f32 %v4979, %v5001
    %v5006 = vmul.f32 %v4981, %v5002
    %v5007 = vmul.f32 %v4983, %v5003
    %v5008 = vadd.f32 %v4996, %v5004
    %v5009 = vadd.f32 %v4997, %v5005
    %v5010 = vadd.f32 %v4998, %v5006
    %v5011 = vadd.f32 %v4999, %v5007
    %v5013 = vsel %vm900, %v5008, 0
    %v5016 = vsel %vm900, %v5009, 0
    %v5019 = vsel %vm900, %v5010, 0
    %v5022 = vsel %vm900, %v5011, 0
    %5024 = vmatprep.subr.mxu0 0.0
    %5025 = vmatpush1.msra.mxu0 %v4292
    %5026 = vmatprep.subr.mxu0 0.0
    %5027 = vmatpush1.msra.mxu0 0.0
    %5028 = vmatprep.subr.mxu0 0.0
    %5029 = vmatpush1.msra.mxu0 0.0
    %5030 = vmatprep.subr.mxu0 0.0
    %5031 = vmatpush1.msra.mxu0 0.0
    %5032 = vmatprep.subr.mxu0 0.0
    %5033 = vmatpush1.msra.mxu0 0.0
    %5034 = vmatprep.subr.mxu0 0.0
    %5035 = vmatpush1.msra.mxu0 0.0
    %5036 = vmatprep.subr.mxu0 0.0
    %5037 = vmatpush1.msra.mxu0 0.0
    %5038 = vmatprep.subr.mxu0 0.0
    %5039 = vmatpush1.msra.mxu0 0.0
    %5040 = vmatprep.subr.mxu0 0.0
    %5041 = vmatpush1.msra.mxu0 0.0
    %5042 = vmatprep.subr.mxu0 0.0
    %5043 = vmatpush1.msra.mxu0 0.0
    %5044 = vmatprep.subr.mxu0 0.0
    %5045 = vmatpush1.msra.mxu0 0.0
    %5046 = vmatprep.subr.mxu0 0.0
    %5047 = vmatpush1.msra.mxu0 0.0
    %5048 = vmatprep.subr.mxu0 0.0
    %5049 = vmatpush1.msra.mxu0 0.0
    %5050 = vmatprep.subr.mxu0 0.0
    %5051 = vmatpush1.msra.mxu0 0.0
    %5052 = vmatprep.subr.mxu0 0.0
    %5053 = vmatpush1.msra.mxu0 0.0
    %5054 = vmatprep.subr.mxu0 0.0
    %5055 = vmatpush1.msra.mxu0 0.0
    %5056 = vmatprep.subr.mxu0 0.0
    %5057 = vmatpush1.msra.mxu0 0.0
    %5058 = vmatprep.subr.mxu0 0.0
    %5059 = vmatpush1.msra.mxu0 0.0
    %5060 = vmatprep.subr.mxu0 0.0
    %5061 = vmatpush1.msra.mxu0 0.0
    %5062 = vmatprep.subr.mxu0 0.0
    %5063 = vmatpush1.msra.mxu0 0.0
    %5064 = vmatprep.subr.mxu0 0.0
    %5065 = vmatpush1.msra.mxu0 0.0
    %5066 = vmatprep.subr.mxu0 0.0
    %5067 = vmatpush1.msra.mxu0 0.0
    %5068 = vmatprep.subr.mxu0 0.0
    %5069 = vmatpush1.msra.mxu0 0.0
    %5070 = vmatprep.subr.mxu0 0.0
    %5071 = vmatpush1.msra.mxu0 0.0
    %5072 = vmatprep.subr.mxu0 0.0
    %5073 = vmatpush1.msra.mxu0 0.0
    %5074 = vmatprep.subr.mxu0 0.0
    %5075 = vmatpush1.msra.mxu0 0.0
    %5076 = vmatprep.subr.mxu0 0.0
    %5077 = vmatpush1.msra.mxu0 0.0
    %5078 = vmatprep.subr.mxu0 0.0
    %5079 = vmatpush1.msra.mxu0 0.0
    %5080 = vmatprep.subr.mxu0 0.0
    %5081 = vmatpush1.msra.mxu0 0.0
    %5082 = vmatprep.subr.mxu0 0.0
    %5083 = vmatpush1.msra.mxu0 0.0
    %5084 = vmatprep.subr.mxu0 0.0
    %5085 = vmatpush1.msra.mxu0 0.0
    %5086 = vmatprep.subr.mxu0 0.0
    %5087 = vmatpush1.msra.mxu0 0.0
    %5088 = vmatprep.mubr.f32.mxu0 0.0
    %5089 = vmatmul.mubr.f32.gmra.mrb[0].mxu0 %v5013
    %v5090 = vpop.f32.mrb[0].mxu0
    %v5091 = vadd.f32 0.0, %v5090
    %v5092 = vpop.f32.mrb[0].mxu0
    %5093 = vmatprep.mubr.f32.mxu0 0.0
    %5094 = vmatmul.mubr.f32.gmra.mrb[0].mxu0 %v5016
    %v5095 = vpop.f32.mrb[0].mxu0
    %v5096 = vadd.f32 0.0, %v5095
    %v5097 = vpop.f32.mrb[0].mxu0
    %5098 = vmatprep.mubr.f32.mxu0 0.0
    %5099 = vmatmul.mubr.f32.gmra.mrb[0].mxu0 %v5019
    %v5100 = vpop.f32.mrb[0].mxu0
    %v5101 = vadd.f32 0.0, %v5100
    %v5102 = vpop.f32.mrb[0].mxu0
    %5103 = vmatprep.mubr.f32.mxu0 0.0
    %5104 = vmatmul.mubr.f32.gmra.mrb[0].mxu0 %v5022
    %v5105 = vpop.f32.mrb[0].mxu0
    %v5106 = vadd.f32 0.0, %v5105
    %v5107 = vpop.f32.mrb[0].mxu0
    %5108 = vdwg.mxu0
    %5109 = vmatprep.subr.mxu0 0.0
    %5110 = vmatpush1.msra.mxu0 %v4294
    %5111 = vmatprep.subr.mxu0 0.0
    %5112 = vmatpush1.msra.mxu0 0.0
    %5113 = vmatprep.subr.mxu0 0.0
    %5114 = vmatpush1.msra.mxu0 0.0
    %5115 = vmatprep.subr.mxu0 0.0
    %5116 = vmatpush1.msra.mxu0 0.0
    %5117 = vmatprep.subr.mxu0 0.0
    %5118 = vmatpush1.msra.mxu0 0.0
    %5119 = vmatprep.subr.mxu0 0.0
    %5120 = vmatpush1.msra.mxu0 0.0
    %5121 = vmatprep.subr.mxu0 0.0
    %5122 = vmatpush1.msra.mxu0 0.0
    %5123 = vmatprep.subr.mxu0 0.0
    %5124 = vmatpush1.msra.mxu0 0.0
    %5125 = vmatprep.subr.mxu0 0.0
    %5126 = vmatpush1.msra.mxu0 0.0
    %5127 = vmatprep.subr.mxu0 0.0
    %5128 = vmatpush1.msra.mxu0 0.0
    %5129 = vmatprep.subr.mxu0 0.0
    %5130 = vmatpush1.msra.mxu0 0.0
    %5131 = vmatprep.subr.mxu0 0.0
    %5132 = vmatpush1.msra.mxu0 0.0
    %5133 = vmatprep.subr.mxu0 0.0
    %5134 = vmatpush1.msra.mxu0 0.0
    %5135 = vmatprep.subr.mxu0 0.0
    %5136 = vmatpush1.msra.mxu0 0.0
    %5137 = vmatprep.subr.mxu0 0.0
    %5138 = vmatpush1.msra.mxu0 0.0
    %5139 = vmatprep.subr.mxu0 0.0
    %5140 = vmatpush1.msra.mxu0 0.0
    %5141 = vmatprep.subr.mxu0 0.0
    %5142 = vmatpush1.msra.mxu0 0.0
    %5143 = vmatprep.subr.mxu0 0.0
    %5144 = vmatpush1.msra.mxu0 0.0
    %5145 = vmatprep.subr.mxu0 0.0
    %5146 = vmatpush1.msra.mxu0 0.0
    %5147 = vmatprep.subr.mxu0 0.0
    %5148 = vmatpush1.msra.mxu0 0.0
    %5149 = vmatprep.subr.mxu0 0.0
    %5150 = vmatpush1.msra.mxu0 0.0
    %5151 = vmatprep.subr.mxu0 0.0
    %5152 = vmatpush1.msra.mxu0 0.0
    %5153 = vmatprep.subr.mxu0 0.0
    %5154 = vmatpush1.msra.mxu0 0.0
    %5155 = vmatprep.subr.mxu0 0.0
    %5156 = vmatpush1.msra.mxu0 0.0
    %5157 = vmatprep.subr.mxu0 0.0
    %5158 = vmatpush1.msra.mxu0 0.0
    %5159 = vmatprep.subr.mxu0 0.0
    %5160 = vmatpush1.msra.mxu0 0.0
    %5161 = vmatprep.subr.mxu0 0.0
    %5162 = vmatpush1.msra.mxu0 0.0
    %5163 = vmatprep.subr.mxu0 0.0
    %5164 = vmatpush1.msra.mxu0 0.0
    %5165 = vmatprep.subr.mxu0 0.0
    %5166 = vmatpush1.msra.mxu0 0.0
    %5167 = vmatprep.subr.mxu0 0.0
    %5168 = vmatpush1.msra.mxu0 0.0
    %5169 = vmatprep.subr.mxu0 0.0
    %5170 = vmatpush1.msra.mxu0 0.0
    %5171 = vmatprep.subr.mxu0 0.0
    %5172 = vmatpush1.msra.mxu0 0.0
    %5173 = vmatprep.mubr.f32.mxu0 0.0
    %5174 = vmatmul.mubr.f32.gmra.mrb[0].mxu0 %v5013
    %v5175 = vpop.f32.mrb[0].mxu0
    %v5176 = vadd.f32 0.0, %v5175
    %v5177 = vpop.f32.mrb[0].mxu0
    %5178 = vmatprep.mubr.f32.mxu0 0.0
    %5179 = vmatmul.mubr.f32.gmra.mrb[0].mxu0 %v5016
    %v5180 = vpop.f32.mrb[0].mxu0
    %v5181 = vadd.f32 0.0, %v5180
    %v5182 = vpop.f32.mrb[0].mxu0
    %5183 = vmatprep.mubr.f32.mxu0 0.0
    %5184 = vmatmul.mubr.f32.gmra.mrb[0].mxu0 %v5019
    %v5185 = vpop.f32.mrb[0].mxu0
    %v5186 = vadd.f32 0.0, %v5185
    %v5187 = vpop.f32.mrb[0].mxu0
    %5188 = vmatprep.mubr.f32.mxu0 0.0
    %5189 = vmatmul.mubr.f32.gmra.mrb[0].mxu0 %v5022
    %v5190 = vpop.f32.mrb[0].mxu0
    %v5191 = vadd.f32 0.0, %v5190
    %v5192 = vpop.f32.mrb[0].mxu0
    %5193 = vdwg.mxu0
    %5194 = vmatprep.subr.mxu0 0.0
    %5195 = vmatpush1.msra.mxu0 %v4296
    %5196 = vmatprep.subr.mxu0 0.0
    %5197 = vmatpush1.msra.mxu0 0.0
    %5198 = vmatprep.subr.mxu0 0.0
    %5199 = vmatpush1.msra.mxu0 0.0
    %5200 = vmatprep.subr.mxu0 0.0
    %5201 = vmatpush1.msra.mxu0 0.0
    %5202 = vmatprep.subr.mxu0 0.0
    %5203 = vmatpush1.msra.mxu0 0.0
    %5204 = vmatprep.subr.mxu0 0.0
    %5205 = vmatpush1.msra.mxu0 0.0
    %5206 = vmatprep.subr.mxu0 0.0
    %5207 = vmatpush1.msra.mxu0 0.0
    %5208 = vmatprep.subr.mxu0 0.0
    %5209 = vmatpush1.msra.mxu0 0.0
    %5210 = vmatprep.subr.mxu0 0.0
    %5211 = vmatpush1.msra.mxu0 0.0
    %5212 = vmatprep.subr.mxu0 0.0
    %5213 = vmatpush1.msra.mxu0 0.0
    %5214 = vmatprep.subr.mxu0 0.0
    %5215 = vmatpush1.msra.mxu0 0.0
    %5216 = vmatprep.subr.mxu0 0.0
    %5217 = vmatpush1.msra.mxu0 0.0
    %5218 = vmatprep.subr.mxu0 0.0
    %5219 = vmatpush1.msra.mxu0 0.0
    %5220 = vmatprep.subr.mxu0 0.0
    %5221 = vmatpush1.msra.mxu0 0.0
    %5222 = vmatprep.subr.mxu0 0.0
    %5223 = vmatpush1.msra.mxu0 0.0
    %5224 = vmatprep.subr.mxu0 0.0
    %5225 = vmatpush1.msra.mxu0 0.0
    %5226 = vmatprep.subr.mxu0 0.0
    %5227 = vmatpush1.msra.mxu0 0.0
    %5228 = vmatprep.subr.mxu0 0.0
    %5229 = vmatpush1.msra.mxu0 0.0
    %5230 = vmatprep.subr.mxu0 0.0
    %5231 = vmatpush1.msra.mxu0 0.0
    %5232 = vmatprep.subr.mxu0 0.0
    %5233 = vmatpush1.msra.mxu0 0.0
    %5234 = vmatprep.subr.mxu0 0.0
    %5235 = vmatpush1.msra.mxu0 0.0
    %5236 = vmatprep.subr.mxu0 0.0
    %5237 = vmatpush1.msra.mxu0 0.0
    %5238 = vmatprep.subr.mxu0 0.0
    %5239 = vmatpush1.msra.mxu0 0.0
    %5240 = vmatprep.subr.mxu0 0.0
    %5241 = vmatpush1.msra.mxu0 0.0
    %5242 = vmatprep.subr.mxu0 0.0
    %5243 = vmatpush1.msra.mxu0 0.0
    %5244 = vmatprep.subr.mxu0 0.0
    %5245 = vmatpush1.msra.mxu0 0.0
    %5246 = vmatprep.subr.mxu0 0.0
    %5247 = vmatpush1.msra.mxu0 0.0
    %5248 = vmatprep.subr.mxu0 0.0
    %5249 = vmatpush1.msra.mxu0 0.0
    %5250 = vmatprep.subr.mxu0 0.0
    %5251 = vmatpush1.msra.mxu0 0.0
    %5252 = vmatprep.subr.mxu0 0.0
    %5253 = vmatpush1.msra.mxu0 0.0
    %5254 = vmatprep.subr.mxu0 0.0
    %5255 = vmatpush1.msra.mxu0 0.0
    %5256 = vmatprep.subr.mxu0 0.0
    %5257 = vmatpush1.msra.mxu0 0.0
    %5258 = vmatprep.mubr.f32.mxu0 0.0
    %5259 = vmatmul.mubr.f32.gmra.mrb[0].mxu0 %v5013
    %v5260 = vpop.f32.mrb[0].mxu0
    %v5261 = vadd.f32 %v4474, %v5260
    %v5262 = vpop.f32.mrb[0].mxu0
    %5263 = vmatprep.mubr.f32.mxu0 0.0
    %5264 = vmatmul.mubr.f32.gmra.mrb[0].mxu0 %v5016
    %v5265 = vpop.f32.mrb[0].mxu0
    %v5266 = vadd.f32 %v4474, %v5265
    %v5267 = vpop.f32.mrb[0].mxu0
    %5268 = vmatprep.mubr.f32.mxu0 0.0
    %5269 = vmatmul.mubr.f32.gmra.mrb[0].mxu0 %v5019
    %v5270 = vpop.f32.mrb[0].mxu0
    %v5271 = vadd.f32 %v4474, %v5270
    %v5272 = vpop.f32.mrb[0].mxu0
    %5273 = vmatprep.mubr.f32.mxu0 0.0
    %5274 = vmatmul.mubr.f32.gmra.mrb[0].mxu0 %v5022
    %v5275 = vpop.f32.mrb[0].mxu0
    %v5276 = vadd.f32 %v4474, %v5275
    %v5277 = vpop.f32.mrb[0].mxu0
    %5278 = vdwg.mxu0
    %v5279 = vld [vmem:[#allocation5 + $0x40] sm:$0xff]
    %v5280 = vld [vmem:[#allocation5 + $0x48] sm:$0xff]
    %v5281 = vld [vmem:[#allocation5 + $0x50] sm:$0xff]
    %v5282 = vld [vmem:[#allocation5 + $0x58] sm:$0xff]
    %v5283 = vadd.f32 %v5279, %v5091
    %v5284 = vadd.f32 %v5280, %v5096
    %v5285 = vadd.f32 %v5281, %v5101
    %v5286 = vadd.f32 %v5282, %v5106
    %v5287 = vxor.u32 %v5283, 2147483648
    %v5288 = vxor.u32 %v5284, 2147483648
    %v5289 = vxor.u32 %v5285, 2147483648
    %v5290 = vxor.u32 %v5286, 2147483648
    %v5291 = vmul.f32 %v5287, 1.442695
    %v5292 = vpow.pop %v5291
    %v5293 = vmul.f32 %v5288, 1.442695
    %v5294 = vpow.pop %v5293
    %v5295 = vmul.f32 %v5289, 1.442695
    %v5296 = vpow.pop %v5295
    %v5297 = vmul.f32 %v5290, 1.442695
    %v5298 = vpow.pop %v5297
    %v5299 = vadd.f32 %v5292, 1.0
    %v5300 = vadd.f32 %v5294, 1.0
    %v5301 = vadd.f32 %v5296, 1.0
    %v5302 = vadd.f32 %v5298, 1.0
    %v5303 = vrcp.pop %v5299
    %v5304 = vmul.f32 1.0, %v5303
    %v5305 = vrcp.pop %v5300
    %v5306 = vmul.f32 1.0, %v5305
    %v5307 = vrcp.pop %v5301
    %v5308 = vmul.f32 1.0, %v5307
    %v5309 = vrcp.pop %v5302
    %v5310 = vmul.f32 1.0, %v5309
    %v5311 = vld [vmem:[#allocation6 + $0x40] sm:$0xff]
    %v5312 = vld [vmem:[#allocation6 + $0x48] sm:$0xff]
    %v5313 = vld [vmem:[#allocation6 + $0x50] sm:$0xff]
    %v5314 = vld [vmem:[#allocation6 + $0x58] sm:$0xff]
    %v5315 = vadd.f32 %v5311, %v5176
    %v5316 = vadd.f32 %v5312, %v5181
    %v5317 = vadd.f32 %v5313, %v5186
    %v5318 = vadd.f32 %v5314, %v5191
    %v5319 = vxor.u32 %v5315, 2147483648
    %v5320 = vxor.u32 %v5316, 2147483648
    %v5321 = vxor.u32 %v5317, 2147483648
    %v5322 = vxor.u32 %v5318, 2147483648
    %v5323 = vmul.f32 %v5319, 1.442695
    %v5324 = vpow.pop %v5323
    %v5325 = vmul.f32 %v5320, 1.442695
    %v5326 = vpow.pop %v5325
    %v5327 = vmul.f32 %v5321, 1.442695
    %v5328 = vpow.pop %v5327
    %v5329 = vmul.f32 %v5322, 1.442695
    %v5330 = vpow.pop %v5329
    %v5331 = vadd.f32 %v5324, 1.0
    %v5332 = vadd.f32 %v5326, 1.0
    %v5333 = vadd.f32 %v5328, 1.0
    %v5334 = vadd.f32 %v5330, 1.0
    %v5335 = vrcp.pop %v5331
    %v5336 = vmul.f32 1.0, %v5335
    %v5337 = vrcp.pop %v5332
    %v5338 = vmul.f32 1.0, %v5337
    %v5339 = vrcp.pop %v5333
    %v5340 = vmul.f32 1.0, %v5339
    %v5341 = vrcp.pop %v5334
    %v5342 = vmul.f32 1.0, %v5341
    %v5343 = vld [vmem:[#allocation7 + $0x40] sm:$0xff]
    %v5344 = vld [vmem:[#allocation7 + $0x48] sm:$0xff]
    %v5345 = vld [vmem:[#allocation7 + $0x50] sm:$0xff]
    %v5346 = vld [vmem:[#allocation7 + $0x58] sm:$0xff]
    %v5347 = vmul.f32 %v5304, %v5261
    %v5348 = vmul.f32 %v5306, %v5266
    %v5349 = vmul.f32 %v5308, %v5271
    %v5350 = vmul.f32 %v5310, %v5276
    %v5351 = vadd.f32 %v5343, %v5347
    %v5352 = vadd.f32 %v5344, %v5348
    %v5353 = vadd.f32 %v5345, %v5349
    %v5354 = vadd.f32 %v5346, %v5350
    %v5355 = vtanh.pop %v5351
    %v5356 = vtanh.pop %v5352
    %v5357 = vtanh.pop %v5353
    %v5358 = vtanh.pop %v5354
    %v5359 = vsub.f32 %v5008, %v5355
    %v5360 = vsub.f32 %v5009, %v5356
    %v5361 = vsub.f32 %v5010, %v5357
    %v5362 = vsub.f32 %v5011, %v5358
    %v5363 = vmul.f32 %v5336, %v5359
    %v5364 = vmul.f32 %v5338, %v5360
    %v5365 = vmul.f32 %v5340, %v5361
    %v5366 = vmul.f32 %v5342, %v5362
    %v5367 = vadd.f32 %v5355, %v5363
    %v5368 = vadd.f32 %v5356, %v5364
    %v5369 = vadd.f32 %v5357, %v5365
    %v5370 = vadd.f32 %v5358, %v5366
    %v5371 = vld [vmem:[%s11] sm:$0xff]
    %v5372 = vld [vmem:[%s11 + $0x8] sm:$0xff]
    %v5373 = vld [vmem:[%s13] sm:$0x1]
    %v5375 = vlaneseq
    %v5376 = vshrl.u32 %v5375, 7
    %v5377 = vsub.s32 0, %v5376
    %v5378 = vrot.slane %v5373, %v5377
    %v5381 = vsel %vm275, %v4291, 0
    %5383 = vmatprep.subr.mxu0 0.0
    %5384 = vmatpush1.msra.mxu0 %v5371
    %5385 = vmatprep.subr.mxu0 0.0
    %5386 = vmatpush1.msra.mxu0 %v5372
    %5387 = vmatprep.subr.mxu0 0.0
    %5388 = vmatpush1.msra.mxu0 0.0
    %5389 = vmatprep.subr.mxu0 0.0
    %5390 = vmatpush1.msra.mxu0 0.0
    %5391 = vmatprep.subr.mxu0 0.0
    %5392 = vmatpush1.msra.mxu0 0.0
    %5393 = vmatprep.subr.mxu0 0.0
    %5394 = vmatpush1.msra.mxu0 0.0
    %5395 = vmatprep.subr.mxu0 0.0
    %5396 = vmatpush1.msra.mxu0 0.0
    %5397 = vmatprep.subr.mxu0 0.0
    %5398 = vmatpush1.msra.mxu0 0.0
    %5399 = vmatprep.subr.mxu0 0.0
    %5400 = vmatpush1.msra.mxu0 0.0
    %5401 = vmatprep.subr.mxu0 0.0
    %5402 = vmatpush1.msra.mxu0 0.0
    %5403 = vmatprep.subr.mxu0 0.0
    %5404 = vmatpush1.msra.mxu0 0.0
    %5405 = vmatprep.subr.mxu0 0.0
    %5406 = vmatpush1.msra.mxu0 0.0
    %5407 = vmatprep.subr.mxu0 0.0
    %5408 = vmatpush1.msra.mxu0 0.0
    %5409 = vmatprep.subr.mxu0 0.0
    %5410 = vmatpush1.msra.mxu0 0.0
    %5411 = vmatprep.subr.mxu0 0.0
    %5412 = vmatpush1.msra.mxu0 0.0
    %5413 = vmatprep.subr.mxu0 0.0
    %5414 = vmatpush1.msra.mxu0 0.0
    %5415 = vmatprep.subr.mxu0 0.0
    %5416 = vmatpush1.msra.mxu0 0.0
    %5417 = vmatprep.subr.mxu0 0.0
    %5418 = vmatpush1.msra.mxu0 0.0
    %5419 = vmatprep.subr.mxu0 0.0
    %5420 = vmatpush1.msra.mxu0 0.0
    %5421 = vmatprep.subr.mxu0 0.0
    %5422 = vmatpush1.msra.mxu0 0.0
    %5423 = vmatprep.subr.mxu0 0.0
    %5424 = vmatpush1.msra.mxu0 0.0
    %5425 = vmatprep.subr.mxu0 0.0
    %5426 = vmatpush1.msra.mxu0 0.0
    %5427 = vmatprep.subr.mxu0 0.0
    %5428 = vmatpush1.msra.mxu0 0.0
    %5429 = vmatprep.subr.mxu0 0.0
    %5430 = vmatpush1.msra.mxu0 0.0
    %5431 = vmatprep.subr.mxu0 0.0
    %5432 = vmatpush1.msra.mxu0 0.0
    %5433 = vmatprep.subr.mxu0 0.0
    %5434 = vmatpush1.msra.mxu0 0.0
    %5435 = vmatprep.subr.mxu0 0.0
    %5436 = vmatpush1.msra.mxu0 0.0
    %5437 = vmatprep.subr.mxu0 0.0
    %5438 = vmatpush1.msra.mxu0 0.0
    %5439 = vmatprep.subr.mxu0 0.0
    %5440 = vmatpush1.msra.mxu0 0.0
    %5441 = vmatprep.subr.mxu0 0.0
    %5442 = vmatpush1.msra.mxu0 0.0
    %5443 = vmatprep.subr.mxu0 0.0
    %5444 = vmatpush1.msra.mxu0 0.0
    %5445 = vmatprep.subr.mxu0 0.0
    %5446 = vmatpush1.msra.mxu0 0.0
    %5447 = vmatprep.mubr.f32.mxu0 0.0
    %5448 = vmatmul.mubr.f32.gmra.mrb[0].mxu0 %v5381
    %v5449 = vpop.f32.mrb[0].mxu0
    %v5450 = vadd.f32 %v5378, %v5449
    %v5451 = vpop.f32.mrb[0].mxu0
    %5452 = vdwg.mxu0
    %v5453 = vld [vmem:[%s12] sm:$0xff]
    %v5455 = vsel %vm900, %v5367, 0
    %5457 = vmatprep.subr.mxu0 0.0
    %5458 = vmatpush1.msra.mxu0 %v5453
    %5459 = vmatprep.subr.mxu0 0.0
    %5460 = vmatpush1.msra.mxu0 0.0
    %5461 = vmatprep.subr.mxu0 0.0
    %5462 = vmatpush1.msra.mxu0 0.0
    %5463 = vmatprep.subr.mxu0 0.0
    %5464 = vmatpush1.msra.mxu0 0.0
    %5465 = vmatprep.subr.mxu0 0.0
    %5466 = vmatpush1.msra.mxu0 0.0
    %5467 = vmatprep.subr.mxu0 0.0
    %5468 = vmatpush1.msra.mxu0 0.0
    %5469 = vmatprep.subr.mxu0 0.0
    %5470 = vmatpush1.msra.mxu0 0.0
    %5471 = vmatprep.subr.mxu0 0.0
    %5472 = vmatpush1.msra.mxu0 0.0
    %5473 = vmatprep.subr.mxu0 0.0
    %5474 = vmatpush1.msra.mxu0 0.0
    %5475 = vmatprep.subr.mxu0 0.0
    %5476 = vmatpush1.msra.mxu0 0.0
    %5477 = vmatprep.subr.mxu0 0.0
    %5478 = vmatpush1.msra.mxu0 0.0
    %5479 = vmatprep.subr.mxu0 0.0
    %5480 = vmatpush1.msra.mxu0 0.0
    %5481 = vmatprep.subr.mxu0 0.0
    %5482 = vmatpush1.msra.mxu0 0.0
    %5483 = vmatprep.subr.mxu0 0.0
    %5484 = vmatpush1.msra.mxu0 0.0
    %5485 = vmatprep.subr.mxu0 0.0
    %5486 = vmatpush1.msra.mxu0 0.0
    %5487 = vmatprep.subr.mxu0 0.0
    %5488 = vmatpush1.msra.mxu0 0.0
    %5489 = vmatprep.subr.mxu0 0.0
    %5490 = vmatpush1.msra.mxu0 0.0
    %5491 = vmatprep.subr.mxu0 0.0
    %5492 = vmatpush1.msra.mxu0 0.0
    %5493 = vmatprep.subr.mxu0 0.0
    %5494 = vmatpush1.msra.mxu0 0.0
    %5495 = vmatprep.subr.mxu0 0.0
    %5496 = vmatpush1.msra.mxu0 0.0
    %5497 = vmatprep.subr.mxu0 0.0
    %5498 = vmatpush1.msra.mxu0 0.0
    %5499 = vmatprep.subr.mxu0 0.0
    %5500 = vmatpush1.msra.mxu0 0.0
    %5501 = vmatprep.subr.mxu0 0.0
    %5502 = vmatpush1.msra.mxu0 0.0
    %5503 = vmatprep.subr.mxu0 0.0
    %5504 = vmatpush1.msra.mxu0 0.0
    %5505 = vmatprep.subr.mxu0 0.0
    %5506 = vmatpush1.msra.mxu0 0.0
    %5507 = vmatprep.subr.mxu0 0.0
    %5508 = vmatpush1.msra.mxu0 0.0
    %5509 = vmatprep.subr.mxu0 0.0
    %5510 = vmatpush1.msra.mxu0 0.0
    %5511 = vmatprep.subr.mxu0 0.0
    %5512 = vmatpush1.msra.mxu0 0.0
    %5513 = vmatprep.subr.mxu0 0.0
    %5514 = vmatpush1.msra.mxu0 0.0
    %5515 = vmatprep.subr.mxu0 0.0
    %5516 = vmatpush1.msra.mxu0 0.0
    %5517 = vmatprep.subr.mxu0 0.0
    %5518 = vmatpush1.msra.mxu0 0.0
    %5519 = vmatprep.subr.mxu0 0.0
    %5520 = vmatpush1.msra.mxu0 0.0
    %5521 = vmatprep.mubr.f32.mxu0 0.0
    %5522 = vmatmul.mubr.f32.gmra.mrb[0].mxu0 %v5455
    %v5523 = vpop.f32.mrb[0].mxu0
    %v5524 = vadd.f32 0.0, %v5523
    %v5525 = vpop.f32.mrb[0].mxu0
    %5526 = vdwg.mxu0
    %v5527 = vadd.f32 %v5450, %v5524
    %s5528 = scalar_lea.vmem %s12, 8
    %v5529 = vld [vmem:[%s5528] sm:$0xff]
    %v5531 = vsel %vm900, %v5368, 0
    %5533 = vmatprep.subr.mxu0 0.0
    %5534 = vmatpush1.msra.mxu0 %v5529
    %5535 = vmatprep.subr.mxu0 0.0
    %5536 = vmatpush1.msra.mxu0 0.0
    %5537 = vmatprep.subr.mxu0 0.0
    %5538 = vmatpush1.msra.mxu0 0.0
    %5539 = vmatprep.subr.mxu0 0.0
    %5540 = vmatpush1.msra.mxu0 0.0
    %5541 = vmatprep.subr.mxu0 0.0
    %5542 = vmatpush1.msra.mxu0 0.0
    %5543 = vmatprep.subr.mxu0 0.0
    %5544 = vmatpush1.msra.mxu0 0.0
    %5545 = vmatprep.subr.mxu0 0.0
    %5546 = vmatpush1.msra.mxu0 0.0
    %5547 = vmatprep.subr.mxu0 0.0
    %5548 = vmatpush1.msra.mxu0 0.0
    %5549 = vmatprep.subr.mxu0 0.0
    %5550 = vmatpush1.msra.mxu0 0.0
    %5551 = vmatprep.subr.mxu0 0.0
    %5552 = vmatpush1.msra.mxu0 0.0
    %5553 = vmatprep.subr.mxu0 0.0
    %5554 = vmatpush1.msra.mxu0 0.0
    %5555 = vmatprep.subr.mxu0 0.0
    %5556 = vmatpush1.msra.mxu0 0.0
    %5557 = vmatprep.subr.mxu0 0.0
    %5558 = vmatpush1.msra.mxu0 0.0
    %5559 = vmatprep.subr.mxu0 0.0
    %5560 = vmatpush1.msra.mxu0 0.0
    %5561 = vmatprep.subr.mxu0 0.0
    %5562 = vmatpush1.msra.mxu0 0.0
    %5563 = vmatprep.subr.mxu0 0.0
    %5564 = vmatpush1.msra.mxu0 0.0
    %5565 = vmatprep.subr.mxu0 0.0
    %5566 = vmatpush1.msra.mxu0 0.0
    %5567 = vmatprep.subr.mxu0 0.0
    %5568 = vmatpush1.msra.mxu0 0.0
    %5569 = vmatprep.subr.mxu0 0.0
    %5570 = vmatpush1.msra.mxu0 0.0
    %5571 = vmatprep.subr.mxu0 0.0
    %5572 = vmatpush1.msra.mxu0 0.0
    %5573 = vmatprep.subr.mxu0 0.0
    %5574 = vmatpush1.msra.mxu0 0.0
    %5575 = vmatprep.subr.mxu0 0.0
    %5576 = vmatpush1.msra.mxu0 0.0
    %5577 = vmatprep.subr.mxu0 0.0
    %5578 = vmatpush1.msra.mxu0 0.0
    %5579 = vmatprep.subr.mxu0 0.0
    %5580 = vmatpush1.msra.mxu0 0.0
    %5581 = vmatprep.subr.mxu0 0.0
    %5582 = vmatpush1.msra.mxu0 0.0
    %5583 = vmatprep.subr.mxu0 0.0
    %5584 = vmatpush1.msra.mxu0 0.0
    %5585 = vmatprep.subr.mxu0 0.0
    %5586 = vmatpush1.msra.mxu0 0.0
    %5587 = vmatprep.subr.mxu0 0.0
    %5588 = vmatpush1.msra.mxu0 0.0
    %5589 = vmatprep.subr.mxu0 0.0
    %5590 = vmatpush1.msra.mxu0 0.0
    %5591 = vmatprep.subr.mxu0 0.0
    %5592 = vmatpush1.msra.mxu0 0.0
    %5593 = vmatprep.subr.mxu0 0.0
    %5594 = vmatpush1.msra.mxu0 0.0
    %5595 = vmatprep.subr.mxu0 0.0
    %5596 = vmatpush1.msra.mxu0 0.0
    %5597 = vmatprep.mubr.f32.mxu0 0.0
    %5598 = vmatmul.mubr.f32.gmra.mrb[0].mxu0 %v5531
    %v5599 = vpop.f32.mrb[0].mxu0
    %v5600 = vadd.f32 0.0, %v5599
    %v5601 = vpop.f32.mrb[0].mxu0
    %5602 = vdwg.mxu0
    %v5603 = vadd.f32 %v5527, %v5600
    %s5604 = scalar_lea.vmem %s12, 16
    %v5605 = vld [vmem:[%s5604] sm:$0xff]
    %v5607 = vsel %vm900, %v5369, 0
    %5609 = vmatprep.subr.mxu0 0.0
    %5610 = vmatpush1.msra.mxu0 %v5605
    %5611 = vmatprep.subr.mxu0 0.0
    %5612 = vmatpush1.msra.mxu0 0.0
    %5613 = vmatprep.subr.mxu0 0.0
    %5614 = vmatpush1.msra.mxu0 0.0
    %5615 = vmatprep.subr.mxu0 0.0
    %5616 = vmatpush1.msra.mxu0 0.0
    %5617 = vmatprep.subr.mxu0 0.0
    %5618 = vmatpush1.msra.mxu0 0.0
    %5619 = vmatprep.subr.mxu0 0.0
    %5620 = vmatpush1.msra.mxu0 0.0
    %5621 = vmatprep.subr.mxu0 0.0
    %5622 = vmatpush1.msra.mxu0 0.0
    %5623 = vmatprep.subr.mxu0 0.0
    %5624 = vmatpush1.msra.mxu0 0.0
    %5625 = vmatprep.subr.mxu0 0.0
    %5626 = vmatpush1.msra.mxu0 0.0
    %5627 = vmatprep.subr.mxu0 0.0
    %5628 = vmatpush1.msra.mxu0 0.0
    %5629 = vmatprep.subr.mxu0 0.0
    %5630 = vmatpush1.msra.mxu0 0.0
    %5631 = vmatprep.subr.mxu0 0.0
    %5632 = vmatpush1.msra.mxu0 0.0
    %5633 = vmatprep.subr.mxu0 0.0
    %5634 = vmatpush1.msra.mxu0 0.0
    %5635 = vmatprep.subr.mxu0 0.0
    %5636 = vmatpush1.msra.mxu0 0.0
    %5637 = vmatprep.subr.mxu0 0.0
    %5638 = vmatpush1.msra.mxu0 0.0
    %5639 = vmatprep.subr.mxu0 0.0
    %5640 = vmatpush1.msra.mxu0 0.0
    %5641 = vmatprep.subr.mxu0 0.0
    %5642 = vmatpush1.msra.mxu0 0.0
    %5643 = vmatprep.subr.mxu0 0.0
    %5644 = vmatpush1.msra.mxu0 0.0
    %5645 = vmatprep.subr.mxu0 0.0
    %5646 = vmatpush1.msra.mxu0 0.0
    %5647 = vmatprep.subr.mxu0 0.0
    %5648 = vmatpush1.msra.mxu0 0.0
    %5649 = vmatprep.subr.mxu0 0.0
    %5650 = vmatpush1.msra.mxu0 0.0
    %5651 = vmatprep.subr.mxu0 0.0
    %5652 = vmatpush1.msra.mxu0 0.0
    %5653 = vmatprep.subr.mxu0 0.0
    %5654 = vmatpush1.msra.mxu0 0.0
    %5655 = vmatprep.subr.mxu0 0.0
    %5656 = vmatpush1.msra.mxu0 0.0
    %5657 = vmatprep.subr.mxu0 0.0
    %5658 = vmatpush1.msra.mxu0 0.0
    %5659 = vmatprep.subr.mxu0 0.0
    %5660 = vmatpush1.msra.mxu0 0.0
    %5661 = vmatprep.subr.mxu0 0.0
    %5662 = vmatpush1.msra.mxu0 0.0
    %5663 = vmatprep.subr.mxu0 0.0
    %5664 = vmatpush1.msra.mxu0 0.0
    %5665 = vmatprep.subr.mxu0 0.0
    %5666 = vmatpush1.msra.mxu0 0.0
    %5667 = vmatprep.subr.mxu0 0.0
    %5668 = vmatpush1.msra.mxu0 0.0
    %5669 = vmatprep.subr.mxu0 0.0
    %5670 = vmatpush1.msra.mxu0 0.0
    %5671 = vmatprep.subr.mxu0 0.0
    %5672 = vmatpush1.msra.mxu0 0.0
    %5673 = vmatprep.mubr.f32.mxu0 0.0
    %5674 = vmatmul.mubr.f32.gmra.mrb[0].mxu0 %v5607
    %v5675 = vpop.f32.mrb[0].mxu0
    %v5676 = vadd.f32 0.0, %v5675
    %v5677 = vpop.f32.mrb[0].mxu0
    %5678 = vdwg.mxu0
    %v5679 = vadd.f32 %v5603, %v5676
    %s5680 = scalar_lea.vmem %s12, 24
    %v5681 = vld [vmem:[%s5680] sm:$0xff]
    %v5683 = vsel %vm900, %v5370, 0
    %5685 = vmatprep.subr.mxu0 0.0
    %5686 = vmatpush1.msra.mxu0 %v5681
    %5687 = vmatprep.subr.mxu0 0.0
    %5688 = vmatpush1.msra.mxu0 0.0
    %5689 = vmatprep.subr.mxu0 0.0
    %5690 = vmatpush1.msra.mxu0 0.0
    %5691 = vmatprep.subr.mxu0 0.0
    %5692 = vmatpush1.msra.mxu0 0.0
    %5693 = vmatprep.subr.mxu0 0.0
    %5694 = vmatpush1.msra.mxu0 0.0
    %5695 = vmatprep.subr.mxu0 0.0
    %5696 = vmatpush1.msra.mxu0 0.0
    %5697 = vmatprep.subr.mxu0 0.0
    %5698 = vmatpush1.msra.mxu0 0.0
    %5699 = vmatprep.subr.mxu0 0.0
    %5700 = vmatpush1.msra.mxu0 0.0
    %5701 = vmatprep.subr.mxu0 0.0
    %5702 = vmatpush1.msra.mxu0 0.0
    %5703 = vmatprep.subr.mxu0 0.0
    %5704 = vmatpush1.msra.mxu0 0.0
    %5705 = vmatprep.subr.mxu0 0.0
    %5706 = vmatpush1.msra.mxu0 0.0
    %5707 = vmatprep.subr.mxu0 0.0
    %5708 = vmatpush1.msra.mxu0 0.0
    %5709 = vmatprep.subr.mxu0 0.0
    %5710 = vmatpush1.msra.mxu0 0.0
    %5711 = vmatprep.subr.mxu0 0.0
    %5712 = vmatpush1.msra.mxu0 0.0
    %5713 = vmatprep.subr.mxu0 0.0
    %5714 = vmatpush1.msra.mxu0 0.0
    %5715 = vmatprep.subr.mxu0 0.0
    %5716 = vmatpush1.msra.mxu0 0.0
    %5717 = vmatprep.subr.mxu0 0.0
    %5718 = vmatpush1.msra.mxu0 0.0
    %5719 = vmatprep.subr.mxu0 0.0
    %5720 = vmatpush1.msra.mxu0 0.0
    %5721 = vmatprep.subr.mxu0 0.0
    %5722 = vmatpush1.msra.mxu0 0.0
    %5723 = vmatprep.subr.mxu0 0.0
    %5724 = vmatpush1.msra.mxu0 0.0
    %5725 = vmatprep.subr.mxu0 0.0
    %5726 = vmatpush1.msra.mxu0 0.0
    %5727 = vmatprep.subr.mxu0 0.0
    %5728 = vmatpush1.msra.mxu0 0.0
    %5729 = vmatprep.subr.mxu0 0.0
    %5730 = vmatpush1.msra.mxu0 0.0
    %5731 = vmatprep.subr.mxu0 0.0
    %5732 = vmatpush1.msra.mxu0 0.0
    %5733 = vmatprep.subr.mxu0 0.0
    %5734 = vmatpush1.msra.mxu0 0.0
    %5735 = vmatprep.subr.mxu0 0.0
    %5736 = vmatpush1.msra.mxu0 0.0
    %5737 = vmatprep.subr.mxu0 0.0
    %5738 = vmatpush1.msra.mxu0 0.0
    %5739 = vmatprep.subr.mxu0 0.0
    %5740 = vmatpush1.msra.mxu0 0.0
    %5741 = vmatprep.subr.mxu0 0.0
    %5742 = vmatpush1.msra.mxu0 0.0
    %5743 = vmatprep.subr.mxu0 0.0
    %5744 = vmatpush1.msra.mxu0 0.0
    %5745 = vmatprep.subr.mxu0 0.0
    %5746 = vmatpush1.msra.mxu0 0.0
    %5747 = vmatprep.subr.mxu0 0.0
    %5748 = vmatpush1.msra.mxu0 0.0
    %5749 = vmatprep.mubr.f32.mxu0 0.0
    %5750 = vmatmul.mubr.f32.gmra.mrb[0].mxu0 %v5683
    %v5751 = vpop.f32.mrb[0].mxu0
    %v5752 = vadd.f32 0.0, %v5751
    %v5753 = vpop.f32.mrb[0].mxu0
    %5754 = vdwg.mxu0
    %v5755 = vadd.f32 %v5679, %v5752
    %v5756 = vld [vmem:[%s14] sm:$0xf]
    %v5757 = vld [vmem:[%s14 + $0x4] sm:$0xf]
    %v5758 = vld [vmem:[%s15] sm:$0xf]
    %5760 = vset.pattern.permute.xlu0 0
    %5761 = vperm.xlu0 %5760, %v5758
    %v5762 = vpop.permute.xlu0 %5761
    %v5764 = vmul.f32 %v5756, %v5762
    %v5765 = vmul.f32 %v5757, %v5762
    %vm5766 = vcmask 60416
    %v5767 = vsel %vm5766, %v5764, 0.0
    %v5768 = vrot.slane %v5767, 4
    %v5769 = vadd.f32 %v5767, %v5768
    %v5770 = vrot.slane %v5769, 2
    %v5771 = vadd.f32 %v5769, %v5770
    %v5772 = vrot.slane %v5771, 1
    %v5773 = vadd.f32 %v5771, %v5772
    %v5774 = vsel %vm5766, %v5765, 0.0
    %v5775 = vrot.slane %v5774, 4
    %v5776 = vadd.f32 %v5774, %v5775
    %v5777 = vrot.slane %v5776, 2
    %v5778 = vadd.f32 %v5776, %v5777
    %v5779 = vrot.slane %v5778, 1
    %v5780 = vadd.f32 %v5778, %v5779
    %v5781 = vld [vmem:[#allocation8] sm:$0x1]
    %v5783 = vlaneseq
    %v5784 = vshrl.u32 %v5783, 7
    %v5785 = vsub.s32 0, %v5784
    %v5786 = vrot.slane %v5781, %v5785
    %5787 = vset.pattern.permute.xlu0 0
    %5788 = vperm.xlu0 %5787, %v5786
    %v5789 = vpop.permute.xlu0 %5788
    %v5791 = vadd.f32 %v5773, %v5789
    %v5792 = vadd.f32 %v5780, %v5789
    %vm5795 = vcmask 1041409
    %v5796 = vsel %vm5795, %v5792, %v5791
    %v5798 = vadd.f32 %v5755, %v5796
    %v5799 = vxor.u32 %v5798, 2147483648
    %v5800 = vmul.f32 %v5799, 1.442695
    %v5801 = vpow.pop %v5800
    %v5802 = vadd.f32 %v5801, 1.0
    %v5803 = vrcp.pop %v5802
    %v5804 = vmul.f32 1.0, %v5803
    %vm5805 = vcmask 58368
    %5806 = vst.msk [vmem:[#allocation9] sm:$0x3] %vm5805, %v5804
    // Predicated region
    $region70: #{lstnet_forward.1} parent=1 // pred_check
      _
    $region71: #{lstnet_forward.1} parent=1 // pred_check_branch
      %5808 = sbr.rel (0) target = $region73
    $region72: #{lstnet_forward.1} parent=1 // pred_region
      %s5810 = ssub.s32 32, 32
      %5811 = vsyncadd [#allocation10], %s5810
      %s5813 = sshll.u32 [#allocation9], 4
      %s5814 = int_to_ptr.vmem [resolvable:$true] %s5813
      %5816 = dma.vmem_to_hbm [thread:$0]  %s5814, 32, %s17, [#allocation10]
    $region73: #{lstnet_forward.1} parent=1 // pred_fallthru
      _
    // Predicated region
    $region74: #{lstnet_forward.1} parent=1 // pred_check
      _
    $region75: #{lstnet_forward.1} parent=1 // pred_check_branch
      %5818 = sbr.rel (0) target = $region77
    $region76: #{lstnet_forward.1} parent=1 // pred_region
      %5819 = dma.done [#allocation10], 32
    $region77: #{lstnet_forward.1} parent=1 // pred_fallthru
      _
    %5820 = vsyncpa [#allocation10], 1

</llo_original>
